<compile_context>
chip_gen: v6e
topology: v6e:2x2x1
jax: 0.10.0
libtpu: 0.0.40
codegen_flags: <defaults>
</compile_context>

<pallas_src>
import numpy as np

import jax
import jax.numpy as jnp
from jax.experimental import pallas as pl
from jax.experimental.pallas import tpu as pltpu


# ---------------------------------------------------------------------------
# Kernel 1: conv1 + bias + maxpool2 + relu -> conv2 + bias + maxpool2 + relu
# ---------------------------------------------------------------------------

def _conv_stack_kernel(elhs_ref, olhs_ref, wa_ref, wb_ref, b1_ref,
                       em1_ref, e0_ref, ep1_ref, b2_ref,
                       o_ref, ez_ref, oz_ref):
    m = o_ref.shape[0]          # tb * 8 rows (8 rows per image: 7 valid + 1 pad)
    f32 = jnp.float32

    def pool_bias_relu(a0, a1, bias):
        # a0/a1: (m, 1024) conv rows h and h+1 of the 2x2 pool window; columns
        # are packed (pool_w_phase*512 + out_col*C + ch).  The 2x2 max-pool is
        # an elementwise max over the two aligned 512-lane halves of both rows;
        # bias add and ReLU commute with the (channel-constant) max.
        p = jnp.maximum(jnp.maximum(a0[:, :512], a0[:, 512:]),
                        jnp.maximum(a1[:, :512], a1[:, 512:]))
        return jnp.maximum(p + bias, 0.0)

    # per-image row index (0..7); row 7 is the garbage / zero-pad row
    row = jax.lax.broadcasted_iota(jnp.int32, (m, 1), 0) % 8
    pad_row = row == 7

    # ---- conv1 + pool + relu: even / odd pooled output rows -----------------
    elhs = elhs_ref[...]
    olhs = olhs_ref[...]
    wa = wa_ref[...]
    wb = wb_ref[...]
    b1 = b1_ref[...]

    z1_even = pool_bias_relu(jnp.dot(elhs, wa, preferred_element_type=f32),
                             jnp.dot(elhs, wb, preferred_element_type=f32), b1)
    z1_odd = pool_bias_relu(jnp.dot(olhs, wa, preferred_element_type=f32),
                            jnp.dot(olhs, wb, preferred_element_type=f32), b1)
    z1_even = jnp.where(pad_row, 0.0, z1_even).astype(jnp.bfloat16)
    z1_odd = jnp.where(pad_row, 0.0, z1_odd).astype(jnp.bfloat16)

    # ---- stage z1 in VMEM scratch in the layout conv2 consumes --------------
    #   ez[b*8 + p] = z1 row 2p   (p=7 row == z1 row 14 == bottom zero pad)
    #   oz[b*8 + p] = z1 row 2p-1 (p=0 row == z1 row -1 == top zero pad)
    ez_ref[pl.ds(0, m), :] = z1_even
    ez_ref[pl.ds(m, 8), :] = jnp.zeros((8, 512), jnp.bfloat16)
    oz_ref[pl.ds(1, m), :] = z1_odd
    oz_ref[pl.ds(0, 1), :] = jnp.zeros((1, 512), jnp.bfloat16)

    l_m1 = oz_ref[pl.ds(0, m), :]      # z1 row 2p-1
    l_0 = ez_ref[pl.ds(0, m), :]       # z1 row 2p
    l_p1 = oz_ref[pl.ds(1, m), :]      # z1 row 2p+1
    l_p2 = ez_ref[pl.ds(1, m), :]      # z1 row 2p+2

    # ---- conv2 + pool + relu -------------------------------------------------
    em1 = em1_ref[...]
    e0 = e0_ref[...]
    ep1 = ep1_ref[...]

    a0 = jnp.dot(l_m1, em1, preferred_element_type=f32)          # conv row 2p
    a0 = a0 + jnp.dot(l_0, e0, preferred_element_type=f32)
    a0 = a0 + jnp.dot(l_p1, ep1, preferred_element_type=f32)
    a1 = jnp.dot(l_0, em1, preferred_element_type=f32)           # conv row 2p+1
    a1 = a1 + jnp.dot(l_p1, e0, preferred_element_type=f32)
    a1 = a1 + jnp.dot(l_p2, ep1, preferred_element_type=f32)

    z2 = pool_bias_relu(a0, a1, b2_ref[...])
    z2 = jnp.where(pad_row, 0.0, z2)
    o_ref[...] = z2.astype(o_ref.dtype)


def conv_stack(even_lhs, odd_lhs, kp, *, tb=64):
    """even_lhs/odd_lhs: (N*8, 112) bf16 row-phase inputs -> z2 (N*8, 512) bf16."""
    rows = even_lhs.shape[0]
    n = rows // 8
    tb = min(tb, n)
    m = tb * 8
    grid = (pl.cdiv(n, tb),)
    return pl.pallas_call(
        _conv_stack_kernel,
        out_shape=jax.ShapeDtypeStruct((rows, 512), jnp.bfloat16),
        grid=grid,
        in_specs=[
            pl.BlockSpec((m, 112), lambda i: (i, 0)),         # even-row LHS
            pl.BlockSpec((m, 112), lambda i: (i, 0)),         # odd-row LHS
            pl.BlockSpec((112, 1024), lambda i: (0, 0)),      # conv1 band W (ph=0)
            pl.BlockSpec((112, 1024), lambda i: (0, 0)),      # conv1 band W (ph=1)
            pl.BlockSpec((1, 512), lambda i: (0, 0)),         # conv1 bias (tiled)
            pl.BlockSpec((512, 1024), lambda i: (0, 0)),      # conv2 band W (dh=0)
            pl.BlockSpec((512, 1024), lambda i: (0, 0)),      # conv2 band W (dh=1)
            pl.BlockSpec((512, 1024), lambda i: (0, 0)),      # conv2 band W (dh=2)
            pl.BlockSpec((1, 512), lambda i: (0, 0)),         # conv2 bias (tiled)
        ],
        out_specs=pl.BlockSpec((m, 512), lambda i: (i, 0)),
        scratch_shapes=[
            pltpu.VMEM((m + 8, 512), jnp.bfloat16),           # ez (z1 even rows)
            pltpu.VMEM((m + 8, 512), jnp.bfloat16),           # oz (z1 odd rows, +1)
        ],
        compiler_params=pltpu.CompilerParams(
            dimension_semantics=("parallel",),
            vmem_limit_bytes=64 * 1024 * 1024),
    )(even_lhs, odd_lhs, kp["wa"], kp["wb"], kp["b1t"],
      kp["e_m1"], kp["e_0"], kp["e_p1"], kp["b2t"])


# ---------------------------------------------------------------------------
# Kernel 2: fc1 + relu + (dropout identity) + fc2 + log_softmax
# ---------------------------------------------------------------------------

def _fc_head_kernel(z_ref, w1_ref, b1_ref, w2_ref, b2_ref, o_ref):
    h = jnp.dot(z_ref[...], w1_ref[...], preferred_element_type=jnp.float32)
    h = jnp.maximum(h + b1_ref[...], 0.0)                         # (tm, 128) f32
    logits = jnp.dot(h.astype(jnp.bfloat16), w2_ref[...],
                     preferred_element_type=jnp.float32) + b2_ref[...]
    m = jnp.max(logits, axis=-1, keepdims=True)
    e = jnp.exp(logits - m)
    s = jnp.sum(e, axis=-1, keepdims=True)
    o_ref[...] = (logits - m - jnp.log(s)).astype(o_ref.dtype)


def fc_head(z, w1, b1, w2, b2, *, tm=256):
    """z: (N, 4096) bf16 -> log-probabilities (N, 10) f32."""
    n, k = z.shape
    hdim = w1.shape[1]
    c = w2.shape[1]
    tm = min(tm, n)
    grid = (pl.cdiv(n, tm),)
    return pl.pallas_call(
        _fc_head_kernel,
        out_shape=jax.ShapeDtypeStruct((n, c), jnp.float32),
        grid=grid,
        in_specs=[
            pl.BlockSpec((tm, k), lambda i: (i, 0)),
            pl.BlockSpec((k, hdim), lambda i: (0, 0)),        # fc1 weights resident
            pl.BlockSpec((1, hdim), lambda i: (0, 0)),
            pl.BlockSpec((hdim, c), lambda i: (0, 0)),        # fc2 weights resident
            pl.BlockSpec((1, c), lambda i: (0, 0)),
        ],
        out_specs=pl.BlockSpec((tm, c), lambda i: (i, 0)),
        compiler_params=pltpu.CompilerParams(
            dimension_semantics=("parallel",)),
    )(z, w1, b1, w2, b2)


# ---------------------------------------------------------------------------
# Parameters (PyTorch shapes) and one-time conversion to kernel layouts
# ---------------------------------------------------------------------------

def init_params(key):
    ks = jax.random.split(key, 8)
    s = 0.05
    return {
        "conv1_w": s * jax.random.normal(ks[0], (32, 1, 3, 3), jnp.float32),
        "conv1_b": s * jax.random.normal(ks[1], (32,), jnp.float32),
        "conv2_w": s * jax.random.normal(ks[2], (64, 32, 3, 3), jnp.float32),
        "conv2_b": s * jax.random.normal(ks[3], (64,), jnp.float32),
        "fc1_w":   s * jax.random.normal(ks[4], (128, 64 * 7 * 7), jnp.float32),
        "fc1_b":   s * jax.random.normal(ks[5], (128,), jnp.float32),
        "fc2_w":   s * jax.random.normal(ks[6], (10, 128), jnp.float32),
        "fc2_b":   s * jax.random.normal(ks[7], (10,), jnp.float32),
    }


def prepare_params(params):
    """Host-side, one-time construction of the band matrices / permuted fc1."""
    w1 = np.asarray(params["conv1_w"], np.float32)   # (co=32, ci=1, kh, kw)
    b1 = np.asarray(params["conv1_b"], np.float32)
    w2 = np.asarray(params["conv2_w"], np.float32)   # (d=64, c=32, kh, kw)
    b2 = np.asarray(params["conv2_b"], np.float32)
    f1 = np.asarray(params["fc1_w"], np.float32)     # (128, 3136)
    f1b = np.asarray(params["fc1_b"], np.float32)
    f2 = np.asarray(params["fc2_w"], np.float32)     # (10, 128)
    f2b = np.asarray(params["fc2_b"], np.float32)

    # conv1 band matrices: d[dh][j, pw*512 + v*32 + co] = w1[co, 0, dh, j-(2v+pw)+1]
    d = np.zeros((3, 28, 1024), np.float32)
    for dh in range(3):
        for j in range(28):
            for v in range(14):
                for pw in range(2):
                    dw = j - (2 * v + pw) + 1
                    if 0 <= dw <= 2:
                        d[dh, j, pw * 512 + v * 32:pw * 512 + v * 32 + 32] = \
                            w1[:, 0, dh, dw]
    zero28 = np.zeros((28, 1024), np.float32)
    # LHS rows are [x[4t-1], x[4t], x[4t+1], x[4t+2]] (even) / shifted by 2 (odd)
    wa = np.concatenate([d[0], d[1], d[2], zero28], axis=0)   # pool row phase 0
    wb = np.concatenate([zero28, d[0], d[1], d[2]], axis=0)   # pool row phase 1

    # conv2 band matrices: e[dh][v*32 + c, pw*512 + q*64 + dch] = w2[dch, c, dh, v-(2q+pw)+1]
    e = np.zeros((3, 512, 1024), np.float32)
    for dh in range(3):
        for v in range(14):
            for q in range(7):
                for pw in range(2):
                    dw = v - (2 * q + pw) + 1
                    if 0 <= dw <= 2:
                        e[dh, v * 32:(v + 1) * 32,
                          pw * 512 + q * 64:pw * 512 + q * 64 + 64] = w2[:, :, dh, dw].T

    # conv biases tiled to the packed pooled-row layout (zeros in pad lanes)
    b1t = np.zeros((1, 512), np.float32)
    b1t[0, :448] = np.tile(b1, 14)
    b2t = np.zeros((1, 512), np.float32)
    b2t[0, :448] = np.tile(b2, 7)

    # fc1 weights permuted to consume z2 rows directly in the kernel layout
    # (8 rows of 512 lanes per image; row 7 and lanes 448:512 are zero pad).
    # This folds the PyTorch NCHW flatten into one-time weight prep.
    f1p = np.zeros((4096, 128), np.float32)
    for p in range(7):
        for q in range(7):
            for c in range(64):
                f1p[p * 512 + q * 64 + c, :] = f1[:, c * 49 + p * 7 + q]

    return {
        "wa": jnp.asarray(wa, jnp.bfloat16),
        "wb": jnp.asarray(wb, jnp.bfloat16),
        "b1t": jnp.asarray(b1t, jnp.float32),
        "e_m1": jnp.asarray(e[0], jnp.bfloat16),
        "e_0": jnp.asarray(e[1], jnp.bfloat16),
        "e_p1": jnp.asarray(e[2], jnp.bfloat16),
        "b2t": jnp.asarray(b2t, jnp.float32),
        "fc1_w": jnp.asarray(f1p, jnp.bfloat16),
        "fc1_b": jnp.asarray(f1b.reshape(1, 128), jnp.float32),
        "fc2_w": jnp.asarray(f2.T, jnp.bfloat16),
        "fc2_b": jnp.asarray(f2b.reshape(1, 10), jnp.float32),
    }


# ---------------------------------------------------------------------------
# Forward pass (XLA glue is only a tiny row-phase repack of the 28x28 input)
# ---------------------------------------------------------------------------

def convnet_forward(x_nchw, kp):
    n = x_nchw.shape[0]
    x = x_nchw.reshape(n, 28, 28).astype(jnp.bfloat16)
    # rows -1..32 (zero padded top/bottom); row r -> padded row r+1
    xp = jnp.pad(x, ((0, 0), (1, 5), (0, 0)))
    # even pooled rows u=2t need x rows 4t-1..4t+2 ; odd rows u=2t+1 need 4t+1..4t+4
    even_lhs = xp[:, 0:32, :].reshape(n * 8, 112)
    odd_lhs = xp[:, 2:34, :].reshape(n * 8, 112)

    z2 = conv_stack(even_lhs, odd_lhs, kp)               # (N*8, 512) bf16
    z2 = z2.reshape(n, 4096)                             # metadata-only reshape

    return fc_head(z2, kp["fc1_w"], kp["fc1_b"], kp["fc2_w"], kp["fc2_b"])


# ---------------------------------------------------------------------------
# Pure-JAX f32 reference of the PyTorch module (eval mode)
# ---------------------------------------------------------------------------

def reference_forward(x, params):
    n = x.shape[0]
    y = jax.lax.conv_general_dilated(
        x, params["conv1_w"], (1, 1), [(1, 1), (1, 1)],
        dimension_numbers=("NCHW", "OIHW", "NCHW"))
    y = y + params["conv1_b"][None, :, None, None]
    y = y.reshape(n, 32, 14, 2, 14, 2).max(axis=5).max(axis=3)
    y = jnp.maximum(y, 0.0)
    y = jax.lax.conv_general_dilated(
        y, params["conv2_w"], (1, 1), [(1, 1), (1, 1)],
        dimension_numbers=("NCHW", "OIHW", "NCHW"))
    y = y + params["conv2_b"][None, :, None, None]
    y = y.reshape(n, 64, 7, 2, 7, 2).max(axis=5).max(axis=3)
    y = jnp.maximum(y, 0.0)
    y = y.reshape(n, 64 * 7 * 7)
    y = jnp.maximum(y @ params["fc1_w"].T + params["fc1_b"], 0.0)
    y = y @ params["fc2_w"].T + params["fc2_b"]
    return jax.nn.log_softmax(y, axis=-1)


if __name__ == "__main__":
    key = jax.random.PRNGKey(0)
    pkey, xkey = jax.random.split(key)
    params = init_params(pkey)
    kparams = prepare_params(params)

    # forward implies 28x28 single-channel inputs (fc1 expects 64*7*7 after 2 pools)
    x = jax.random.normal(xkey, (2, 1, 28, 28), jnp.float32)

    fwd = jax.jit(convnet_forward)
    out = jax.block_until_ready(fwd(x, kparams))

    assert out.shape == (2, 10), out.shape
    assert bool(jnp.all(jnp.isfinite(out)))
    row_sums = jnp.exp(out).sum(axis=1)
    assert bool(jnp.all(jnp.abs(row_sums - 1.0) < 1e-3)), row_sums

    # cross-check against the f32 reference (bf16 matmul operands -> loose tol)
    ref = reference_forward(x, params)
    np.testing.assert_allclose(np.asarray(out), np.asarray(ref),
                               atol=5e-2, rtol=0.0)

    print("KERNEL_OK")
</pallas_src>

<mosaic_0001>
module attributes {stable_mosaic.version = 11 : i64} {
  func.func @_fc_head_kernel(%arg0: i32, %arg1: memref<2x4096xbf16, #tpu.memory_space<vmem>>, %arg2: memref<4096x128xbf16, #tpu.memory_space<vmem>>, %arg3: memref<1x128xf32, #tpu.memory_space<vmem>>, %arg4: memref<128x10xbf16, #tpu.memory_space<vmem>>, %arg5: memref<1x10xf32, #tpu.memory_space<vmem>>, %arg6: memref<2x10xf32, #tpu.memory_space<vmem>>) attributes {dimension_semantics = [#tpu.dimension_semantics<parallel>], iteration_bounds = array<i64: 1>, scalar_prefetch = 0 : i64, scratch_operands = 0 : i64, tpu.core_type = #tpu.core_type<tc>, window_params = [{transform_indices = @transform_0, window_bounds = array<i64: 2, 4096>}, {pipeline_mode = #tpu.pipeline_mode<synchronous>, transform_indices = @transform_1, window_bounds = array<i64: 4096, 128>}, {pipeline_mode = #tpu.pipeline_mode<synchronous>, transform_indices = @transform_2, window_bounds = array<i64: 1, 128>}, {pipeline_mode = #tpu.pipeline_mode<synchronous>, transform_indices = @transform_3, window_bounds = array<i64: 128, 10>}, {pipeline_mode = #tpu.pipeline_mode<synchronous>, transform_indices = @transform_4, window_bounds = array<i64: 1, 10>}, {transform_indices = @transform_5, window_bounds = array<i64: 2, 10>}]} {
    %c0 = arith.constant 0 : index
    %c0_0 = arith.constant 0 : index
    %0 = vector.load %arg1[%c0, %c0_0] : memref<2x4096xbf16, #tpu.memory_space<vmem>>, vector<2x4096xbf16>
    %c0_1 = arith.constant 0 : index
    %c0_2 = arith.constant 0 : index
    %1 = vector.load %arg2[%c0_1, %c0_2] : memref<4096x128xbf16, #tpu.memory_space<vmem>>, vector<4096x128xbf16>
    %cst = arith.constant dense<0.000000e+00> : vector<2x128xf32>
    %2 = tpu.matmul %0, %1, %cst {dimension_numbers = #tpu.dot_dimension_numbers<[1], [0], [0], [1], [0, 0, 1, 1], [], []>} : vector<2x4096xbf16>, vector<4096x128xbf16>, vector<2x128xf32> -> vector<2x128xf32>
    %c0_3 = arith.constant 0 : index
    %c0_4 = arith.constant 0 : index
    %3 = vector.load %arg3[%c0_3, %c0_4] : memref<1x128xf32, #tpu.memory_space<vmem>>, vector<1x128xf32>
    %4 = vector.broadcast %3 : vector<1x128xf32> to vector<2x128xf32>
    %5 = arith.addf %2, %4 : vector<2x128xf32>
    %cst_5 = arith.constant 0.000000e+00 : f32
    %6 = vector.broadcast %cst_5 : f32 to vector<2x128xf32>
    %7 = arith.maximumf %5, %6 : vector<2x128xf32>
    %8 = arith.truncf %7 : vector<2x128xf32> to vector<2x128xbf16>
    %c0_6 = arith.constant 0 : index
    %c0_7 = arith.constant 0 : index
    %9 = vector.load %arg4[%c0_6, %c0_7] : memref<128x10xbf16, #tpu.memory_space<vmem>>, vector<128x10xbf16>
    %cst_8 = arith.constant dense<0.000000e+00> : vector<2x10xf32>
    %10 = tpu.matmul %8, %9, %cst_8 {dimension_numbers = #tpu.dot_dimension_numbers<[1], [0], [0], [1], [0, 0, 1, 1], [], []>} : vector<2x128xbf16>, vector<128x10xbf16>, vector<2x10xf32> -> vector<2x10xf32>
    %c0_9 = arith.constant 0 : index
    %c0_10 = arith.constant 0 : index
    %11 = vector.load %arg5[%c0_9, %c0_10] : memref<1x10xf32, #tpu.memory_space<vmem>>, vector<1x10xf32>
    %12 = vector.broadcast %11 : vector<1x10xf32> to vector<2x10xf32>
    %13 = arith.addf %10, %12 : vector<2x10xf32>
    %cst_11 = arith.constant dense<0xFF800000> : vector<2xf32>
    %14 = vector.multi_reduction <maximumf>, %13, %cst_11 [1] : vector<2x10xf32> to vector<2xf32>
    %15 = vector.shape_cast %14 : vector<2xf32> to vector<2x1xf32>
    %16 = vector.broadcast %15 : vector<2x1xf32> to vector<2x10xf32>
    %17 = arith.subf %13, %16 : vector<2x10xf32>
    %18 = math.exp %17 : vector<2x10xf32>
    %cst_12 = arith.constant dense<0.000000e+00> : vector<2xf32>
    %19 = vector.multi_reduction <add>, %18, %cst_12 [1] : vector<2x10xf32> to vector<2xf32>
    %20 = vector.shape_cast %19 : vector<2xf32> to vector<2x1xf32>
    %21 = vector.broadcast %15 : vector<2x1xf32> to vector<2x10xf32>
    %22 = arith.subf %13, %21 : vector<2x10xf32>
    %23 = math.log %20 : vector<2x1xf32>
    %24 = vector.broadcast %23 : vector<2x1xf32> to vector<2x10xf32>
    %25 = arith.subf %22, %24 : vector<2x10xf32>
    %c0_13 = arith.constant 0 : index
    %c0_14 = arith.constant 0 : index
    %26 = vector.load %arg6[%c0_13, %c0_14] : memref<2x10xf32, #tpu.memory_space<vmem>>, vector<2x10xf32>
    tpu.vector_store %arg6[%c0_13, %c0_14], %25 {strides = array<i32>} : memref<2x10xf32, #tpu.memory_space<vmem>>, vector<2x10xf32>,
    return
  }
  func.func @transform_0(%arg0: i32) -> (i32, i32) {
    %c0_i32 = arith.constant 0 : i32
    %c0_i32_0 = arith.constant 0 : i32
    return %arg0, %c0_i32 : i32, i32
  }
  func.func @transform_1(%arg0: i32) -> (i32, i32) {
    %c0_i32 = arith.constant 0 : i32
    %c0_i32_0 = arith.constant 0 : i32
    %c0_i32_1 = arith.constant 0 : i32
    return %c0_i32, %c0_i32_0 : i32, i32
  }
  func.func @transform_2(%arg0: i32) -> (i32, i32) {
    %c0_i32 = arith.constant 0 : i32
    %c0_i32_0 = arith.constant 0 : i32
    %c0_i32_1 = arith.constant 0 : i32
    return %c0_i32, %c0_i32_0 : i32, i32
  }
  func.func @transform_3(%arg0: i32) -> (i32, i32) {
    %c0_i32 = arith.constant 0 : i32
    %c0_i32_0 = arith.constant 0 : i32
    %c0_i32_1 = arith.constant 0 : i32
    return %c0_i32, %c0_i32_0 : i32, i32
  }
  func.func @transform_4(%arg0: i32) -> (i32, i32) {
    %c0_i32 = arith.constant 0 : i32
    %c0_i32_0 = arith.constant 0 : i32
    %c0_i32_1 = arith.constant 0 : i32
    return %c0_i32, %c0_i32_0 : i32, i32
  }
  func.func @transform_5(%arg0: i32) -> (i32, i32) {
    %c0_i32 = arith.constant 0 : i32
    %c0_i32_0 = arith.constant 0 : i32
    return %arg0, %c0_i32 : i32, i32
  }
}

module attributes {stable_mosaic.version = 11 : i64} {
  func.func @_conv_stack_kernel(%arg0: i32, %arg1: memref<16x112xbf16, #tpu.memory_space<vmem>>, %arg2: memref<16x112xbf16, #tpu.memory_space<vmem>>, %arg3: memref<112x1024xbf16, #tpu.memory_space<vmem>>, %arg4: memref<112x1024xbf16, #tpu.memory_space<vmem>>, %arg5: memref<1x512xf32, #tpu.memory_space<vmem>>, %arg6: memref<512x1024xbf16, #tpu.memory_space<vmem>>, %arg7: memref<512x1024xbf16, #tpu.memory_space<vmem>>, %arg8: memref<512x1024xbf16, #tpu.memory_space<vmem>>, %arg9: memref<1x512xf32, #tpu.memory_space<vmem>>, %arg10: memref<16x512xbf16, #tpu.memory_space<vmem>>, %arg11: memref<24x512xbf16, #tpu.memory_space<vmem>>, %arg12: memref<24x512xbf16, #tpu.memory_space<vmem>>) attributes {dimension_semantics = [#tpu.dimension_semantics<parallel>], iteration_bounds = array<i64: 1>, scalar_prefetch = 0 : i64, scratch_operands = 2 : i64, tpu.core_type = #tpu.core_type<tc>, window_params = [{transform_indices = @transform_0, window_bounds = array<i64: 16, 112>}, {transform_indices = @transform_1, window_bounds = array<i64: 16, 112>}, {pipeline_mode = #tpu.pipeline_mode<synchronous>, transform_indices = @transform_2, window_bounds = array<i64: 112, 1024>}, {pipeline_mode = #tpu.pipeline_mode<synchronous>, transform_indices = @transform_3, window_bounds = array<i64: 112, 1024>}, {pipeline_mode = #tpu.pipeline_mode<synchronous>, transform_indices = @transform_4, window_bounds = array<i64: 1, 512>}, {pipeline_mode = #tpu.pipeline_mode<synchronous>, transform_indices = @transform_5, window_bounds = array<i64: 512, 1024>}, {pipeline_mode = #tpu.pipeline_mode<synchronous>, transform_indices = @transform_6, window_bounds = array<i64: 512, 1024>}, {pipeline_mode = #tpu.pipeline_mode<synchronous>, transform_indices = @transform_7, window_bounds = array<i64: 512, 1024>}, {pipeline_mode = #tpu.pipeline_mode<synchronous>, transform_indices = @transform_8, window_bounds = array<i64: 1, 512>}, {transform_indices = @transform_9, window_bounds = array<i64: 16, 512>}]} {
    %0 = tpu.iota {dimensions = array<i32: 0>} : vector<16x1xi32>
    %c8_i32 = arith.constant 8 : i32
    %c0_i32 = arith.constant 0 : i32
    %1 = arith.cmpi eq, %c8_i32, %c0_i32 : i32
    %c1_i32 = arith.constant 1 : i32
    %2 = arith.select %1, %c1_i32, %c8_i32 : i32
    %3 = vector.broadcast %2 : i32 to vector<16x1xi32>
    %4 = arith.remsi %0, %3 : vector<16x1xi32>
    %c0_i32_0 = arith.constant 0 : i32
    %5 = vector.broadcast %c0_i32_0 : i32 to vector<16x1xi32>
    %6 = arith.cmpi ne, %4, %5 : vector<16x1xi32>
    %c0_i32_1 = arith.constant 0 : i32
    %7 = vector.broadcast %c0_i32_1 : i32 to vector<16x1xi32>
    %8 = arith.cmpi slt, %4, %7 : vector<16x1xi32>
    %c0_i32_2 = arith.constant 0 : i32
    %9 = arith.cmpi slt, %2, %c0_i32_2 : i32
    %10 = vector.broadcast %9 : i1 to vector<16x1xi1>
    %11 = vector.broadcast %10 : vector<16x1xi1> to vector<16x1xi1>
    %12 = arith.xori %8, %11 : vector<16x1xi1>
    %13 = arith.andi %12, %6 : vector<16x1xi1>
    %14 = vector.broadcast %2 : i32 to vector<16x1xi32>
    %15 = arith.addi %4, %14 : vector<16x1xi32>
    %16 = arith.select %13, %15, %4 : vector<16x1xi1>, vector<16x1xi32>
    %c7_i32 = arith.constant 7 : i32
    %17 = vector.broadcast %c7_i32 : i32 to vector<16x1xi32>
    %18 = arith.cmpi eq, %16, %17 : vector<16x1xi32>
    %c0 = arith.constant 0 : index
    %c0_3 = arith.constant 0 : index
    %19 = vector.load %arg1[%c0, %c0_3] : memref<16x112xbf16, #tpu.memory_space<vmem>>, vector<16x112xbf16>
    %c0_4 = arith.constant 0 : index
    %c0_5 = arith.constant 0 : index
    %20 = vector.load %arg2[%c0_4, %c0_5] : memref<16x112xbf16, #tpu.memory_space<vmem>>, vector<16x112xbf16>
    %c0_6 = arith.constant 0 : index
    %c0_7 = arith.constant 0 : index
    %21 = vector.load %arg3[%c0_6, %c0_7] : memref<112x1024xbf16, #tpu.memory_space<vmem>>, vector<112x1024xbf16>
    %c0_8 = arith.constant 0 : index
    %c0_9 = arith.constant 0 : index
    %22 = vector.load %arg4[%c0_8, %c0_9] : memref<112x1024xbf16, #tpu.memory_space<vmem>>, vector<112x1024xbf16>
    %c0_10 = arith.constant 0 : index
    %c0_11 = arith.constant 0 : index
    %23 = vector.load %arg5[%c0_10, %c0_11] : memref<1x512xf32, #tpu.memory_space<vmem>>, vector<1x512xf32>
    %cst = arith.constant dense<0.000000e+00> : vector<16x1024xf32>
    %24 = tpu.matmul %19, %21, %cst {dimension_numbers = #tpu.dot_dimension_numbers<[1], [0], [0], [1], [0, 0, 1, 1], [], []>} : vector<16x112xbf16>, vector<112x1024xbf16>, vector<16x1024xf32> -> vector<16x1024xf32>
    %cst_12 = arith.constant dense<0.000000e+00> : vector<16x1024xf32>
    %25 = tpu.matmul %19, %22, %cst_12 {dimension_numbers = #tpu.dot_dimension_numbers<[1], [0], [0], [1], [0, 0, 1, 1], [], []>} : vector<16x112xbf16>, vector<112x1024xbf16>, vector<16x1024xf32> -> vector<16x1024xf32>
    %26 = vector.extract_strided_slice %24 {offsets = [0, 0], sizes = [16, 512], strides = [1, 1]} : vector<16x1024xf32> to vector<16x512xf32>
    %27 = vector.extract_strided_slice %24 {offsets = [0, 512], sizes = [16, 512], strides = [1, 1]} : vector<16x1024xf32> to vector<16x512xf32>
    %28 = arith.maximumf %26, %27 : vector<16x512xf32>
    %29 = vector.extract_strided_slice %25 {offsets = [0, 0], sizes = [16, 512], strides = [1, 1]} : vector<16x1024xf32> to vector<16x512xf32>
    %30 = vector.extract_strided_slice %25 {offsets = [0, 512], sizes = [16, 512], strides = [1, 1]} : vector<16x1024xf32> to vector<16x512xf32>
    %31 = arith.maximumf %29, %30 : vector<16x512xf32>
    %32 = arith.maximumf %28, %31 : vector<16x512xf32>
    %33 = vector.broadcast %23 : vector<1x512xf32> to vector<16x512xf32>
    %34 = arith.addf %32, %33 : vector<16x512xf32>
    %cst_13 = arith.constant 0.000000e+00 : f32
    %35 = vector.broadcast %cst_13 : f32 to vector<16x512xf32>
    %36 = arith.maximumf %34, %35 : vector<16x512xf32>
    %cst_14 = arith.constant dense<0.000000e+00> : vector<16x1024xf32>
    %37 = tpu.matmul %20, %21, %cst_14 {dimension_numbers = #tpu.dot_dimension_numbers<[1], [0], [0], [1], [0, 0, 1, 1], [], []>} : vector<16x112xbf16>, vector<112x1024xbf16>, vector<16x1024xf32> -> vector<16x1024xf32>
    %cst_15 = arith.constant dense<0.000000e+00> : vector<16x1024xf32>
    %38 = tpu.matmul %20, %22, %cst_15 {dimension_numbers = #tpu.dot_dimension_numbers<[1], [0], [0], [1], [0, 0, 1, 1], [], []>} : vector<16x112xbf16>, vector<112x1024xbf16>, vector<16x1024xf32> -> vector<16x1024xf32>
    %39 = vector.extract_strided_slice %37 {offsets = [0, 0], sizes = [16, 512], strides = [1, 1]} : vector<16x1024xf32> to vector<16x512xf32>
    %40 = vector.extract_strided_slice %37 {offsets = [0, 512], sizes = [16, 512], strides = [1, 1]} : vector<16x1024xf32> to vector<16x512xf32>
    %41 = arith.maximumf %39, %40 : vector<16x512xf32>
    %42 = vector.extract_strided_slice %38 {offsets = [0, 0], sizes = [16, 512], strides = [1, 1]} : vector<16x1024xf32> to vector<16x512xf32>
    %43 = vector.extract_strided_slice %38 {offsets = [0, 512], sizes = [16, 512], strides = [1, 1]} : vector<16x1024xf32> to vector<16x512xf32>
    %44 = arith.maximumf %42, %43 : vector<16x512xf32>
    %45 = arith.maximumf %41, %44 : vector<16x512xf32>
    %46 = vector.broadcast %23 : vector<1x512xf32> to vector<16x512xf32>
    %47 = arith.addf %45, %46 : vector<16x512xf32>
    %cst_16 = arith.constant 0.000000e+00 : f32
    %48 = vector.broadcast %cst_16 : f32 to vector<16x512xf32>
    %49 = arith.maximumf %47, %48 : vector<16x512xf32>
    %cst_17 = arith.constant 0.000000e+00 : f32
    %50 = vector.shape_cast %18 : vector<16x1xi1> to vector<16x1xi1>
    %51 = vector.broadcast %50 : vector<16x1xi1> to vector<16x512xi1>
    %52 = vector.broadcast %cst_17 : f32 to vector<16x512xf32>
    %53 = arith.select %51, %52, %36 : vector<16x512xi1>, vector<16x512xf32>
    %54 = arith.truncf %53 : vector<16x512xf32> to vector<16x512xbf16>
    %cst_18 = arith.constant 0.000000e+00 : f32
    %55 = vector.shape_cast %18 : vector<16x1xi1> to vector<16x1xi1>
    %56 = vector.broadcast %55 : vector<16x1xi1> to vector<16x512xi1>
    %57 = vector.broadcast %cst_18 : f32 to vector<16x512xf32>
    %58 = arith.select %56, %57, %49 : vector<16x512xi1>, vector<16x512xf32>
    %59 = arith.truncf %58 : vector<16x512xf32> to vector<16x512xbf16>
    %c0_19 = arith.constant 0 : index
    %c0_20 = arith.constant 0 : index
    %60 = vector.load %arg11[%c0_19, %c0_20] : memref<24x512xbf16, #tpu.memory_space<vmem>>, vector<16x512xbf16>
    tpu.vector_store %arg11[%c0_19, %c0_20], %54 {strides = array<i32>} : memref<24x512xbf16, #tpu.memory_space<vmem>>, vector<16x512xbf16>,
    %cst_21 = arith.constant 0.000000e+00 : bf16
    %61 = vector.broadcast %cst_21 : bf16 to vector<8x512xbf16>
    %c16 = arith.constant 16 : index
    %c0_22 = arith.constant 0 : index
    %62 = vector.load %arg11[%c16, %c0_22] : memref<24x512xbf16, #tpu.memory_space<vmem>>, vector<8x512xbf16>
    tpu.vector_store %arg11[%c16, %c0_22], %61 {strides = array<i32>} : memref<24x512xbf16, #tpu.memory_space<vmem>>, vector<8x512xbf16>,
    %c1 = arith.constant 1 : index
    %c0_23 = arith.constant 0 : index
    %63 = vector.load %arg12[%c1, %c0_23] : memref<24x512xbf16, #tpu.memory_space<vmem>>, vector<16x512xbf16>
    tpu.vector_store %arg12[%c1, %c0_23], %59 {strides = array<i32>} : memref<24x512xbf16, #tpu.memory_space<vmem>>, vector<16x512xbf16>,
    %cst_24 = arith.constant 0.000000e+00 : bf16
    %64 = vector.broadcast %cst_24 : bf16 to vector<1x512xbf16>
    %c0_25 = arith.constant 0 : index
    %c0_26 = arith.constant 0 : index
    %65 = vector.load %arg12[%c0_25, %c0_26] : memref<24x512xbf16, #tpu.memory_space<vmem>>, vector<1x512xbf16>
    tpu.vector_store %arg12[%c0_25, %c0_26], %64 {strides = array<i32>} : memref<24x512xbf16, #tpu.memory_space<vmem>>, vector<1x512xbf16>,
    %c0_27 = arith.constant 0 : index
    %c0_28 = arith.constant 0 : index
    %66 = vector.load %arg12[%c0_27, %c0_28] : memref<24x512xbf16, #tpu.memory_space<vmem>>, vector<16x512xbf16>
    %c0_29 = arith.constant 0 : index
    %c0_30 = arith.constant 0 : index
    %67 = vector.load %arg11[%c0_29, %c0_30] : memref<24x512xbf16, #tpu.memory_space<vmem>>, vector<16x512xbf16>
    %c1_31 = arith.constant 1 : index
    %c0_32 = arith.constant 0 : index
    %68 = vector.load %arg12[%c1_31, %c0_32] : memref<24x512xbf16, #tpu.memory_space<vmem>>, vector<16x512xbf16>
    %c1_33 = arith.constant 1 : index
    %c0_34 = arith.constant 0 : index
    %69 = vector.load %arg11[%c1_33, %c0_34] : memref<24x512xbf16, #tpu.memory_space<vmem>>, vector<16x512xbf16>
    %c0_35 = arith.constant 0 : index
    %c0_36 = arith.constant 0 : index
    %70 = vector.load %arg6[%c0_35, %c0_36] : memref<512x1024xbf16, #tpu.memory_space<vmem>>, vector<512x1024xbf16>
    %c0_37 = arith.constant 0 : index
    %c0_38 = arith.constant 0 : index
    %71 = vector.load %arg7[%c0_37, %c0_38] : memref<512x1024xbf16, #tpu.memory_space<vmem>>, vector<512x1024xbf16>
    %c0_39 = arith.constant 0 : index
    %c0_40 = arith.constant 0 : index
    %72 = vector.load %arg8[%c0_39, %c0_40] : memref<512x1024xbf16, #tpu.memory_space<vmem>>, vector<512x1024xbf16>
    %cst_41 = arith.constant dense<0.000000e+00> : vector<16x1024xf32>
    %73 = tpu.matmul %66, %70, %cst_41 {dimension_numbers = #tpu.dot_dimension_numbers<[1], [0], [0], [1], [0, 0, 1, 1], [], []>} : vector<16x512xbf16>, vector<512x1024xbf16>, vector<16x1024xf32> -> vector<16x1024xf32>
    %cst_42 = arith.constant dense<0.000000e+00> : vector<16x1024xf32>
    %74 = tpu.matmul %67, %71, %cst_42 {dimension_numbers = #tpu.dot_dimension_numbers<[1], [0], [0], [1], [0, 0, 1, 1], [], []>} : vector<16x512xbf16>, vector<512x1024xbf16>, vector<16x1024xf32> -> vector<16x1024xf32>
    %75 = arith.addf %73, %74 : vector<16x1024xf32>
    %cst_43 = arith.constant dense<0.000000e+00> : vector<16x1024xf32>
    %76 = tpu.matmul %68, %72, %cst_43 {dimension_numbers = #tpu.dot_dimension_numbers<[1], [0], [0], [1], [0, 0, 1, 1], [], []>} : vector<16x512xbf16>, vector<512x1024xbf16>, vector<16x1024xf32> -> vector<16x1024xf32>
    %77 = arith.addf %75, %76 : vector<16x1024xf32>
    %cst_44 = arith.constant dense<0.000000e+00> : vector<16x1024xf32>
    %78 = tpu.matmul %67, %70, %cst_44 {dimension_numbers = #tpu.dot_dimension_numbers<[1], [0], [0], [1], [0, 0, 1, 1], [], []>} : vector<16x512xbf16>, vector<512x1024xbf16>, vector<16x1024xf32> -> vector<16x1024xf32>
    %cst_45 = arith.constant dense<0.000000e+00> : vector<16x1024xf32>
    %79 = tpu.matmul %68, %71, %cst_45 {dimension_numbers = #tpu.dot_dimension_numbers<[1], [0], [0], [1], [0, 0, 1, 1], [], []>} : vector<16x512xbf16>, vector<512x1024xbf16>, vector<16x1024xf32> -> vector<16x1024xf32>
    %80 = arith.addf %78, %79 : vector<16x1024xf32>
    %cst_46 = arith.constant dense<0.000000e+00> : vector<16x1024xf32>
    %81 = tpu.matmul %69, %72, %cst_46 {dimension_numbers = #tpu.dot_dimension_numbers<[1], [0], [0], [1], [0, 0, 1, 1], [], []>} : vector<16x512xbf16>, vector<512x1024xbf16>, vector<16x1024xf32> -> vector<16x1024xf32>
    %82 = arith.addf %80, %81 : vector<16x1024xf32>
    %c0_47 = arith.constant 0 : index
    %c0_48 = arith.constant 0 : index
    %83 = vector.load %arg9[%c0_47, %c0_48] : memref<1x512xf32, #tpu.memory_space<vmem>>, vector<1x512xf32>
    %84 = vector.extract_strided_slice %77 {offsets = [0, 0], sizes = [16, 512], strides = [1, 1]} : vector<16x1024xf32> to vector<16x512xf32>
    %85 = vector.extract_strided_slice %77 {offsets = [0, 512], sizes = [16, 512], strides = [1, 1]} : vector<16x1024xf32> to vector<16x512xf32>
    %86 = arith.maximumf %84, %85 : vector<16x512xf32>
    %87 = vector.extract_strided_slice %82 {offsets = [0, 0], sizes = [16, 512], strides = [1, 1]} : vector<16x1024xf32> to vector<16x512xf32>
    %88 = vector.extract_strided_slice %82 {offsets = [0, 512], sizes = [16, 512], strides = [1, 1]} : vector<16x1024xf32> to vector<16x512xf32>
    %89 = arith.maximumf %87, %88 : vector<16x512xf32>
    %90 = arith.maximumf %86, %89 : vector<16x512xf32>
    %91 = vector.broadcast %83 : vector<1x512xf32> to vector<16x512xf32>
    %92 = arith.addf %90, %91 : vector<16x512xf32>
    %cst_49 = arith.constant 0.000000e+00 : f32
    %93 = vector.broadcast %cst_49 : f32 to vector<16x512xf32>
    %94 = arith.maximumf %92, %93 : vector<16x512xf32>
    %cst_50 = arith.constant 0.000000e+00 : f32
    %95 = vector.shape_cast %18 : vector<16x1xi1> to vector<16x1xi1>
    %96 = vector.broadcast %95 : vector<16x1xi1> to vector<16x512xi1>
    %97 = vector.broadcast %cst_50 : f32 to vector<16x512xf32>
    %98 = arith.select %96, %97, %94 : vector<16x512xi1>, vector<16x512xf32>
    %99 = arith.truncf %98 : vector<16x512xf32> to vector<16x512xbf16>
    %c0_51 = arith.constant 0 : index
    %c0_52 = arith.constant 0 : index
    %100 = vector.load %arg10[%c0_51, %c0_52] : memref<16x512xbf16, #tpu.memory_space<vmem>>, vector<16x512xbf16>
    tpu.vector_store %arg10[%c0_51, %c0_52], %99 {strides = array<i32>} : memref<16x512xbf16, #tpu.memory_space<vmem>>, vector<16x512xbf16>,
    return
  }
  func.func @transform_0(%arg0: i32) -> (i32, i32) {
    %c0_i32 = arith.constant 0 : i32
    %c0_i32_0 = arith.constant 0 : i32
    return %arg0, %c0_i32 : i32, i32
  }
  func.func @transform_1(%arg0: i32) -> (i32, i32) {
    %c0_i32 = arith.constant 0 : i32
    %c0_i32_0 = arith.constant 0 : i32
    return %arg0, %c0_i32 : i32, i32
  }
  func.func @transform_2(%arg0: i32) -> (i32, i32) {
    %c0_i32 = arith.constant 0 : i32
    %c0_i32_0 = arith.constant 0 : i32
    %c0_i32_1 = arith.constant 0 : i32
    return %c0_i32, %c0_i32_0 : i32, i32
  }
  func.func @transform_3(%arg0: i32) -> (i32, i32) {
    %c0_i32 = arith.constant 0 : i32
    %c0_i32_0 = arith.constant 0 : i32
    %c0_i32_1 = arith.constant 0 : i32
    return %c0_i32, %c0_i32_0 : i32, i32
  }
  func.func @transform_4(%arg0: i32) -> (i32, i32) {
    %c0_i32 = arith.constant 0 : i32
    %c0_i32_0 = arith.constant 0 : i32
    %c0_i32_1 = arith.constant 0 : i32
    return %c0_i32, %c0_i32_0 : i32, i32
  }
  func.func @transform_5(%arg0: i32) -> (i32, i32) {
    %c0_i32 = arith.constant 0 : i32
    %c0_i32_0 = arith.constant 0 : i32
    %c0_i32_1 = arith.constant 0 : i32
    return %c0_i32, %c0_i32_0 : i32, i32
  }
  func.func @transform_6(%arg0: i32) -> (i32, i32) {
    %c0_i32 = arith.constant 0 : i32
    %c0_i32_0 = arith.constant 0 : i32
    %c0_i32_1 = arith.constant 0 : i32
    return %c0_i32, %c0_i32_0 : i32, i32
  }
  func.func @transform_7(%arg0: i32) -> (i32, i32) {
    %c0_i32 = arith.constant 0 : i32
    %c0_i32_0 = arith.constant 0 : i32
    %c0_i32_1 = arith.constant 0 : i32
    return %c0_i32, %c0_i32_0 : i32, i32
  }
  func.func @transform_8(%arg0: i32) -> (i32, i32) {
    %c0_i32 = arith.constant 0 : i32
    %c0_i32_0 = arith.constant 0 : i32
    %c0_i32_1 = arith.constant 0 : i32
    return %c0_i32, %c0_i32_0 : i32, i32
  }
  func.func @transform_9(%arg0: i32) -> (i32, i32) {
    %c0_i32 = arith.constant 0 : i32
    %c0_i32_0 = arith.constant 0 : i32
    return %arg0, %c0_i32 : i32, i32
  }
}

</mosaic_0001>

<llo_original>
// kernel: convnet_forward.3
$region0: #{convnet_forward.3}
  #allocation0 [shape = 'u32[]', space=smem, size = 0x4, offset = 0x4, fixed_abs, tag = 'smem constant byte address 0x4 - core index']
  #allocation1 [shape = 'u32[144,128]{1,0:T(1,128)}', space=vmem, size = 0x12000, scoped, tag = 'internal scratch']
  %s0 = inlined_call_operand.vmem [shape: bf16[2,4096], index: 0, kind: input, shape index: {}]
  %s1 = inlined_call_operand.vmem [shape: bf16[4096,128], index: 1, kind: input, shape index: {}]
  %s2 = inlined_call_operand.vmem [shape: f32[1,128], index: 2, kind: input, shape index: {}]
  %s3 = inlined_call_operand.vmem [shape: bf16[128,10], index: 3, kind: input, shape index: {}]
  %s4 = inlined_call_operand.vmem [shape: f32[1,10], index: 4, kind: input, shape index: {}]
  %s5 = inlined_call_operand.hbm [shape: f32[2,10], index: 5, kind: output, shape index: {}]
  %s6 = sld [smem:[#allocation0]]
  $region30: #{convnet_forward.3} parent=0
    _
  %s8 = ssub.s32 1, %s6
  %s9 = scalar_select 0, %s8, %s6
  $region1: #{convnet_forward.3} parent=0
    #allocation2 [shape = 'u8[1024]{0}', space=vmem, size = 0x400, scoped, tag = 'output window, operand 0, single buffered']
    #allocation3 [shape = 's32[1]{0}', space=sflag, size = 0x4, scoped, tag = 'scoped memory for convnet_forward.3']
    %10 = vsyncpa [#allocation3], 0
    // Predicated region
    $region2: #{convnet_forward.3} parent=1 // pred_check
      _
    $region3: #{convnet_forward.3} parent=1 // pred_check_branch
      %12 = sbr.rel (0) target = $region5
    $region4: #{convnet_forward.3} parent=1 // pred_region
      _
    $region5: #{convnet_forward.3} parent=1 // pred_fallthru
      _
    // Predicated region
    $region6: #{convnet_forward.3} parent=1 // pred_check
      _
    $region7: #{convnet_forward.3} parent=1 // pred_check_branch
      %14 = sbr.rel (0) target = $region9
    $region8: #{convnet_forward.3} parent=1 // pred_region
      _
    $region9: #{convnet_forward.3} parent=1 // pred_fallthru
      _
    // Predicated region
    $region10: #{convnet_forward.3} parent=1 // pred_check
      _
    $region11: #{convnet_forward.3} parent=1 // pred_check_branch
      %16 = sbr.rel (0) target = $region13
    $region12: #{convnet_forward.3} parent=1 // pred_region
      _
    $region13: #{convnet_forward.3} parent=1 // pred_fallthru
      _
    // Predicated region
    $region14: #{convnet_forward.3} parent=1 // pred_check
      _
    $region15: #{convnet_forward.3} parent=1 // pred_check_branch
      %18 = sbr.rel (0) target = $region17
    $region16: #{convnet_forward.3} parent=1 // pred_region
      _
    $region17: #{convnet_forward.3} parent=1 // pred_fallthru
      _
    // Predicated region
    $region18: #{convnet_forward.3} parent=1 // pred_check
      _
    $region19: #{convnet_forward.3} parent=1 // pred_check_branch
      %20 = sbr.rel (0) target = $region21
    $region20: #{convnet_forward.3} parent=1 // pred_region
      _
    $region21: #{convnet_forward.3} parent=1 // pred_fallthru
      _
    %v22 = vld [vmem:[%s0] sm:$0xff]
    %v23 = vld [vmem:[%s0 + $0x8] sm:$0xff]
    %v24 = vld [vmem:[%s0 + $0x10] sm:$0xff]
    %v25 = vld [vmem:[%s0 + $0x18] sm:$0xff]
    %v26 = vld [vmem:[%s1] sm:$0xf]
    %v27 = vld [vmem:[%s1 + $0x4] sm:$0xf]
    %v28 = vld [vmem:[%s1 + $0x8] sm:$0xf]
    %v29 = vld [vmem:[%s1 + $0xc] sm:$0xf]
    %v30 = vld [vmem:[%s1 + $0x10] sm:$0xf]
    %v31 = vld [vmem:[%s1 + $0x14] sm:$0xf]
    %v32 = vld [vmem:[%s1 + $0x18] sm:$0xf]
    %v33 = vld [vmem:[%s1 + $0x1c] sm:$0xf]
    %v34 = vld [vmem:[%s1 + $0x20] sm:$0xf]
    %v35 = vld [vmem:[%s1 + $0x24] sm:$0xf]
    %v36 = vld [vmem:[%s1 + $0x28] sm:$0xf]
    %v37 = vld [vmem:[%s1 + $0x2c] sm:$0xf]
    %v38 = vld [vmem:[%s1 + $0x30] sm:$0xf]
    %v39 = vld [vmem:[%s1 + $0x34] sm:$0xf]
    %v40 = vld [vmem:[%s1 + $0x38] sm:$0xf]
    %v41 = vld [vmem:[%s1 + $0x3c] sm:$0xf]
    %v42 = vld [vmem:[%s1 + $0x40] sm:$0xf]
    %v43 = vld [vmem:[%s1 + $0x44] sm:$0xf]
    %v44 = vld [vmem:[%s1 + $0x48] sm:$0xf]
    %v45 = vld [vmem:[%s1 + $0x4c] sm:$0xf]
    %v46 = vld [vmem:[%s1 + $0x50] sm:$0xf]
    %v47 = vld [vmem:[%s1 + $0x54] sm:$0xf]
    %v48 = vld [vmem:[%s1 + $0x58] sm:$0xf]
    %v49 = vld [vmem:[%s1 + $0x5c] sm:$0xf]
    %v50 = vld [vmem:[%s1 + $0x60] sm:$0xf]
    %v51 = vld [vmem:[%s1 + $0x64] sm:$0xf]
    %v52 = vld [vmem:[%s1 + $0x68] sm:$0xf]
    %v53 = vld [vmem:[%s1 + $0x6c] sm:$0xf]
    %v54 = vld [vmem:[%s1 + $0x70] sm:$0xf]
    %v55 = vld [vmem:[%s1 + $0x74] sm:$0xf]
    %v56 = vld [vmem:[%s1 + $0x78] sm:$0xf]
    %v57 = vld [vmem:[%s1 + $0x7c] sm:$0xf]
    %v58 = vld [vmem:[%s1 + $0x80] sm:$0xf]
    %v59 = vld [vmem:[%s1 + $0x84] sm:$0xf]
    %v60 = vld [vmem:[%s1 + $0x88] sm:$0xf]
    %v61 = vld [vmem:[%s1 + $0x8c] sm:$0xf]
    %v62 = vld [vmem:[%s1 + $0x90] sm:$0xf]
    %v63 = vld [vmem:[%s1 + $0x94] sm:$0xf]
    %v64 = vld [vmem:[%s1 + $0x98] sm:$0xf]
    %v65 = vld [vmem:[%s1 + $0x9c] sm:$0xf]
    %v66 = vld [vmem:[%s1 + $0xa0] sm:$0xf]
    %v67 = vld [vmem:[%s1 + $0xa4] sm:$0xf]
    %v68 = vld [vmem:[%s1 + $0xa8] sm:$0xf]
    %v69 = vld [vmem:[%s1 + $0xac] sm:$0xf]
    %v70 = vld [vmem:[%s1 + $0xb0] sm:$0xf]
    %v71 = vld [vmem:[%s1 + $0xb4] sm:$0xf]
    %v72 = vld [vmem:[%s1 + $0xb8] sm:$0xf]
    %v73 = vld [vmem:[%s1 + $0xbc] sm:$0xf]
    %v74 = vld [vmem:[%s1 + $0xc0] sm:$0xf]
    %v75 = vld [vmem:[%s1 + $0xc4] sm:$0xf]
    %v76 = vld [vmem:[%s1 + $0xc8] sm:$0xf]
    %v77 = vld [vmem:[%s1 + $0xcc] sm:$0xf]
    %v78 = vld [vmem:[%s1 + $0xd0] sm:$0xf]
    %v79 = vld [vmem:[%s1 + $0xd4] sm:$0xf]
    %v80 = vld [vmem:[%s1 + $0xd8] sm:$0xf]
    %v81 = vld [vmem:[%s1 + $0xdc] sm:$0xf]
    %v82 = vld [vmem:[%s1 + $0xe0] sm:$0xf]
    %v83 = vld [vmem:[%s1 + $0xe4] sm:$0xf]
    %v84 = vld [vmem:[%s1 + $0xe8] sm:$0xf]
    %v85 = vld [vmem:[%s1 + $0xec] sm:$0xf]
    %v86 = vld [vmem:[%s1 + $0xf0] sm:$0xf]
    %v87 = vld [vmem:[%s1 + $0xf4] sm:$0xf]
    %v88 = vld [vmem:[%s1 + $0xf8] sm:$0xf]
    %v89 = vld [vmem:[%s1 + $0xfc] sm:$0xf]
    %v90 = vld [vmem:[%s1 + $0x100] sm:$0xf]
    %v91 = vld [vmem:[%s1 + $0x104] sm:$0xf]
    %v92 = vld [vmem:[%s1 + $0x108] sm:$0xf]
    %v93 = vld [vmem:[%s1 + $0x10c] sm:$0xf]
    %v94 = vld [vmem:[%s1 + $0x110] sm:$0xf]
    %v95 = vld [vmem:[%s1 + $0x114] sm:$0xf]
    %v96 = vld [vmem:[%s1 + $0x118] sm:$0xf]
    %v97 = vld [vmem:[%s1 + $0x11c] sm:$0xf]
    %v98 = vld [vmem:[%s1 + $0x120] sm:$0xf]
    %v99 = vld [vmem:[%s1 + $0x124] sm:$0xf]
    %v100 = vld [vmem:[%s1 + $0x128] sm:$0xf]
    %v101 = vld [vmem:[%s1 + $0x12c] sm:$0xf]
    %v102 = vld [vmem:[%s1 + $0x130] sm:$0xf]
    %v103 = vld [vmem:[%s1 + $0x134] sm:$0xf]
    %v104 = vld [vmem:[%s1 + $0x138] sm:$0xf]
    %v105 = vld [vmem:[%s1 + $0x13c] sm:$0xf]
    %v106 = vld [vmem:[%s1 + $0x140] sm:$0xf]
    %v107 = vld [vmem:[%s1 + $0x144] sm:$0xf]
    %v108 = vld [vmem:[%s1 + $0x148] sm:$0xf]
    %v109 = vld [vmem:[%s1 + $0x14c] sm:$0xf]
    %v110 = vld [vmem:[%s1 + $0x150] sm:$0xf]
    %v111 = vld [vmem:[%s1 + $0x154] sm:$0xf]
    %v112 = vld [vmem:[%s1 + $0x158] sm:$0xf]
    %v113 = vld [vmem:[%s1 + $0x15c] sm:$0xf]
    %v114 = vld [vmem:[%s1 + $0x160] sm:$0xf]
    %v115 = vld [vmem:[%s1 + $0x164] sm:$0xf]
    %v116 = vld [vmem:[%s1 + $0x168] sm:$0xf]
    %v117 = vld [vmem:[%s1 + $0x16c] sm:$0xf]
    %v118 = vld [vmem:[%s1 + $0x170] sm:$0xf]
    %v119 = vld [vmem:[%s1 + $0x174] sm:$0xf]
    %v120 = vld [vmem:[%s1 + $0x178] sm:$0xf]
    %v121 = vld [vmem:[%s1 + $0x17c] sm:$0xf]
    %v122 = vld [vmem:[%s1 + $0x180] sm:$0xf]
    %v123 = vld [vmem:[%s1 + $0x184] sm:$0xf]
    %v124 = vld [vmem:[%s1 + $0x188] sm:$0xf]
    %v125 = vld [vmem:[%s1 + $0x18c] sm:$0xf]
    %v126 = vld [vmem:[%s1 + $0x190] sm:$0xf]
    %v127 = vld [vmem:[%s1 + $0x194] sm:$0xf]
    %v128 = vld [vmem:[%s1 + $0x198] sm:$0xf]
    %v129 = vld [vmem:[%s1 + $0x19c] sm:$0xf]
    %v130 = vld [vmem:[%s1 + $0x1a0] sm:$0xf]
    %v131 = vld [vmem:[%s1 + $0x1a4] sm:$0xf]
    %v132 = vld [vmem:[%s1 + $0x1a8] sm:$0xf]
    %v133 = vld [vmem:[%s1 + $0x1ac] sm:$0xf]
    %v134 = vld [vmem:[%s1 + $0x1b0] sm:$0xf]
    %v135 = vld [vmem:[%s1 + $0x1b4] sm:$0xf]
    %v136 = vld [vmem:[%s1 + $0x1b8] sm:$0xf]
    %v137 = vld [vmem:[%s1 + $0x1bc] sm:$0xf]
    %v138 = vld [vmem:[%s1 + $0x1c0] sm:$0xf]
    %v139 = vld [vmem:[%s1 + $0x1c4] sm:$0xf]
    %v140 = vld [vmem:[%s1 + $0x1c8] sm:$0xf]
    %v141 = vld [vmem:[%s1 + $0x1cc] sm:$0xf]
    %v142 = vld [vmem:[%s1 + $0x1d0] sm:$0xf]
    %v143 = vld [vmem:[%s1 + $0x1d4] sm:$0xf]
    %v144 = vld [vmem:[%s1 + $0x1d8] sm:$0xf]
    %v145 = vld [vmem:[%s1 + $0x1dc] sm:$0xf]
    %v146 = vld [vmem:[%s1 + $0x1e0] sm:$0xf]
    %v147 = vld [vmem:[%s1 + $0x1e4] sm:$0xf]
    %v148 = vld [vmem:[%s1 + $0x1e8] sm:$0xf]
    %v149 = vld [vmem:[%s1 + $0x1ec] sm:$0xf]
    %v150 = vld [vmem:[%s1 + $0x1f0] sm:$0xf]
    %v151 = vld [vmem:[%s1 + $0x1f4] sm:$0xf]
    %v152 = vld [vmem:[%s1 + $0x1f8] sm:$0xf]
    %v153 = vld [vmem:[%s1 + $0x1fc] sm:$0xf]
    %v154 = vld [vmem:[%s1 + $0x200] sm:$0xf]
    %v155 = vld [vmem:[%s1 + $0x204] sm:$0xf]
    %v156 = vld [vmem:[%s1 + $0x208] sm:$0xf]
    %v157 = vld [vmem:[%s1 + $0x20c] sm:$0xf]
    %v158 = vld [vmem:[%s1 + $0x210] sm:$0xf]
    %v159 = vld [vmem:[%s1 + $0x214] sm:$0xf]
    %v160 = vld [vmem:[%s1 + $0x218] sm:$0xf]
    %v161 = vld [vmem:[%s1 + $0x21c] sm:$0xf]
    %v162 = vld [vmem:[%s1 + $0x220] sm:$0xf]
    %v163 = vld [vmem:[%s1 + $0x224] sm:$0xf]
    %v164 = vld [vmem:[%s1 + $0x228] sm:$0xf]
    %v165 = vld [vmem:[%s1 + $0x22c] sm:$0xf]
    %v166 = vld [vmem:[%s1 + $0x230] sm:$0xf]
    %v167 = vld [vmem:[%s1 + $0x234] sm:$0xf]
    %v168 = vld [vmem:[%s1 + $0x238] sm:$0xf]
    %v169 = vld [vmem:[%s1 + $0x23c] sm:$0xf]
    %v170 = vld [vmem:[%s1 + $0x240] sm:$0xf]
    %v171 = vld [vmem:[%s1 + $0x244] sm:$0xf]
    %v172 = vld [vmem:[%s1 + $0x248] sm:$0xf]
    %v173 = vld [vmem:[%s1 + $0x24c] sm:$0xf]
    %v174 = vld [vmem:[%s1 + $0x250] sm:$0xf]
    %v175 = vld [vmem:[%s1 + $0x254] sm:$0xf]
    %v176 = vld [vmem:[%s1 + $0x258] sm:$0xf]
    %v177 = vld [vmem:[%s1 + $0x25c] sm:$0xf]
    %v178 = vld [vmem:[%s1 + $0x260] sm:$0xf]
    %v179 = vld [vmem:[%s1 + $0x264] sm:$0xf]
    %v180 = vld [vmem:[%s1 + $0x268] sm:$0xf]
    %v181 = vld [vmem:[%s1 + $0x26c] sm:$0xf]
    %v182 = vld [vmem:[%s1 + $0x270] sm:$0xf]
    %v183 = vld [vmem:[%s1 + $0x274] sm:$0xf]
    %v184 = vld [vmem:[%s1 + $0x278] sm:$0xf]
    %v185 = vld [vmem:[%s1 + $0x27c] sm:$0xf]
    %v186 = vld [vmem:[%s1 + $0x280] sm:$0xf]
    %v187 = vld [vmem:[%s1 + $0x284] sm:$0xf]
    %v188 = vld [vmem:[%s1 + $0x288] sm:$0xf]
    %v189 = vld [vmem:[%s1 + $0x28c] sm:$0xf]
    %v190 = vld [vmem:[%s1 + $0x290] sm:$0xf]
    %v191 = vld [vmem:[%s1 + $0x294] sm:$0xf]
    %v192 = vld [vmem:[%s1 + $0x298] sm:$0xf]
    %v193 = vld [vmem:[%s1 + $0x29c] sm:$0xf]
    %v194 = vld [vmem:[%s1 + $0x2a0] sm:$0xf]
    %v195 = vld [vmem:[%s1 + $0x2a4] sm:$0xf]
    %v196 = vld [vmem:[%s1 + $0x2a8] sm:$0xf]
    %v197 = vld [vmem:[%s1 + $0x2ac] sm:$0xf]
    %v198 = vld [vmem:[%s1 + $0x2b0] sm:$0xf]
    %v199 = vld [vmem:[%s1 + $0x2b4] sm:$0xf]
    %v200 = vld [vmem:[%s1 + $0x2b8] sm:$0xf]
    %v201 = vld [vmem:[%s1 + $0x2bc] sm:$0xf]
    %v202 = vld [vmem:[%s1 + $0x2c0] sm:$0xf]
    %v203 = vld [vmem:[%s1 + $0x2c4] sm:$0xf]
    %v204 = vld [vmem:[%s1 + $0x2c8] sm:$0xf]
    %v205 = vld [vmem:[%s1 + $0x2cc] sm:$0xf]
    %v206 = vld [vmem:[%s1 + $0x2d0] sm:$0xf]
    %v207 = vld [vmem:[%s1 + $0x2d4] sm:$0xf]
    %v208 = vld [vmem:[%s1 + $0x2d8] sm:$0xf]
    %v209 = vld [vmem:[%s1 + $0x2dc] sm:$0xf]
    %v210 = vld [vmem:[%s1 + $0x2e0] sm:$0xf]
    %v211 = vld [vmem:[%s1 + $0x2e4] sm:$0xf]
    %v212 = vld [vmem:[%s1 + $0x2e8] sm:$0xf]
    %v213 = vld [vmem:[%s1 + $0x2ec] sm:$0xf]
    %v214 = vld [vmem:[%s1 + $0x2f0] sm:$0xf]
    %v215 = vld [vmem:[%s1 + $0x2f4] sm:$0xf]
    %v216 = vld [vmem:[%s1 + $0x2f8] sm:$0xf]
    %v217 = vld [vmem:[%s1 + $0x2fc] sm:$0xf]
    %v218 = vld [vmem:[%s1 + $0x300] sm:$0xf]
    %v219 = vld [vmem:[%s1 + $0x304] sm:$0xf]
    %v220 = vld [vmem:[%s1 + $0x308] sm:$0xf]
    %v221 = vld [vmem:[%s1 + $0x30c] sm:$0xf]
    %v222 = vld [vmem:[%s1 + $0x310] sm:$0xf]
    %v223 = vld [vmem:[%s1 + $0x314] sm:$0xf]
    %v224 = vld [vmem:[%s1 + $0x318] sm:$0xf]
    %v225 = vld [vmem:[%s1 + $0x31c] sm:$0xf]
    %v226 = vld [vmem:[%s1 + $0x320] sm:$0xf]
    %v227 = vld [vmem:[%s1 + $0x324] sm:$0xf]
    %v228 = vld [vmem:[%s1 + $0x328] sm:$0xf]
    %v229 = vld [vmem:[%s1 + $0x32c] sm:$0xf]
    %v230 = vld [vmem:[%s1 + $0x330] sm:$0xf]
    %v231 = vld [vmem:[%s1 + $0x334] sm:$0xf]
    %v232 = vld [vmem:[%s1 + $0x338] sm:$0xf]
    %v233 = vld [vmem:[%s1 + $0x33c] sm:$0xf]
    %v234 = vld [vmem:[%s1 + $0x340] sm:$0xf]
    %v235 = vld [vmem:[%s1 + $0x344] sm:$0xf]
    %v236 = vld [vmem:[%s1 + $0x348] sm:$0xf]
    %v237 = vld [vmem:[%s1 + $0x34c] sm:$0xf]
    %v238 = vld [vmem:[%s1 + $0x350] sm:$0xf]
    %v239 = vld [vmem:[%s1 + $0x354] sm:$0xf]
    %v240 = vld [vmem:[%s1 + $0x358] sm:$0xf]
    %v241 = vld [vmem:[%s1 + $0x35c] sm:$0xf]
    %v242 = vld [vmem:[%s1 + $0x360] sm:$0xf]
    %v243 = vld [vmem:[%s1 + $0x364] sm:$0xf]
    %v244 = vld [vmem:[%s1 + $0x368] sm:$0xf]
    %v245 = vld [vmem:[%s1 + $0x36c] sm:$0xf]
    %v246 = vld [vmem:[%s1 + $0x370] sm:$0xf]
    %v247 = vld [vmem:[%s1 + $0x374] sm:$0xf]
    %v248 = vld [vmem:[%s1 + $0x378] sm:$0xf]
    %v249 = vld [vmem:[%s1 + $0x37c] sm:$0xf]
    %v250 = vld [vmem:[%s1 + $0x380] sm:$0xf]
    %v251 = vld [vmem:[%s1 + $0x384] sm:$0xf]
    %v252 = vld [vmem:[%s1 + $0x388] sm:$0xf]
    %v253 = vld [vmem:[%s1 + $0x38c] sm:$0xf]
    %v254 = vld [vmem:[%s1 + $0x390] sm:$0xf]
    %v255 = vld [vmem:[%s1 + $0x394] sm:$0xf]
    %v256 = vld [vmem:[%s1 + $0x398] sm:$0xf]
    %v257 = vld [vmem:[%s1 + $0x39c] sm:$0xf]
    %v258 = vld [vmem:[%s1 + $0x3a0] sm:$0xf]
    %v259 = vld [vmem:[%s1 + $0x3a4] sm:$0xf]
    %v260 = vld [vmem:[%s1 + $0x3a8] sm:$0xf]
    %v261 = vld [vmem:[%s1 + $0x3ac] sm:$0xf]
    %v262 = vld [vmem:[%s1 + $0x3b0] sm:$0xf]
    %v263 = vld [vmem:[%s1 + $0x3b4] sm:$0xf]
    %v264 = vld [vmem:[%s1 + $0x3b8] sm:$0xf]
    %v265 = vld [vmem:[%s1 + $0x3bc] sm:$0xf]
    %v266 = vld [vmem:[%s1 + $0x3c0] sm:$0xf]
    %v267 = vld [vmem:[%s1 + $0x3c4] sm:$0xf]
    %v268 = vld [vmem:[%s1 + $0x3c8] sm:$0xf]
    %v269 = vld [vmem:[%s1 + $0x3cc] sm:$0xf]
    %v270 = vld [vmem:[%s1 + $0x3d0] sm:$0xf]
    %v271 = vld [vmem:[%s1 + $0x3d4] sm:$0xf]
    %v272 = vld [vmem:[%s1 + $0x3d8] sm:$0xf]
    %v273 = vld [vmem:[%s1 + $0x3dc] sm:$0xf]
    %v274 = vld [vmem:[%s1 + $0x3e0] sm:$0xf]
    %v275 = vld [vmem:[%s1 + $0x3e4] sm:$0xf]
    %v276 = vld [vmem:[%s1 + $0x3e8] sm:$0xf]
    %v277 = vld [vmem:[%s1 + $0x3ec] sm:$0xf]
    %v278 = vld [vmem:[%s1 + $0x3f0] sm:$0xf]
    %v279 = vld [vmem:[%s1 + $0x3f4] sm:$0xf]
    %v280 = vld [vmem:[%s1 + $0x3f8] sm:$0xf]
    %v281 = vld [vmem:[%s1 + $0x3fc] sm:$0xf]
    %v282 = vld [vmem:[%s1 + $0x400] sm:$0xf]
    %v283 = vld [vmem:[%s1 + $0x404] sm:$0xf]
    %v284 = vld [vmem:[%s1 + $0x408] sm:$0xf]
    %v285 = vld [vmem:[%s1 + $0x40c] sm:$0xf]
    %v286 = vld [vmem:[%s1 + $0x410] sm:$0xf]
    %v287 = vld [vmem:[%s1 + $0x414] sm:$0xf]
    %v288 = vld [vmem:[%s1 + $0x418] sm:$0xf]
    %v289 = vld [vmem:[%s1 + $0x41c] sm:$0xf]
    %v290 = vld [vmem:[%s1 + $0x420] sm:$0xf]
    %v291 = vld [vmem:[%s1 + $0x424] sm:$0xf]
    %v292 = vld [vmem:[%s1 + $0x428] sm:$0xf]
    %v293 = vld [vmem:[%s1 + $0x42c] sm:$0xf]
    %v294 = vld [vmem:[%s1 + $0x430] sm:$0xf]
    %v295 = vld [vmem:[%s1 + $0x434] sm:$0xf]
    %v296 = vld [vmem:[%s1 + $0x438] sm:$0xf]
    %v297 = vld [vmem:[%s1 + $0x43c] sm:$0xf]
    %v298 = vld [vmem:[%s1 + $0x440] sm:$0xf]
    %v299 = vld [vmem:[%s1 + $0x444] sm:$0xf]
    %v300 = vld [vmem:[%s1 + $0x448] sm:$0xf]
    %v301 = vld [vmem:[%s1 + $0x44c] sm:$0xf]
    %v302 = vld [vmem:[%s1 + $0x450] sm:$0xf]
    %v303 = vld [vmem:[%s1 + $0x454] sm:$0xf]
    %v304 = vld [vmem:[%s1 + $0x458] sm:$0xf]
    %v305 = vld [vmem:[%s1 + $0x45c] sm:$0xf]
    %v306 = vld [vmem:[%s1 + $0x460] sm:$0xf]
    %v307 = vld [vmem:[%s1 + $0x464] sm:$0xf]
    %v308 = vld [vmem:[%s1 + $0x468] sm:$0xf]
    %v309 = vld [vmem:[%s1 + $0x46c] sm:$0xf]
    %v310 = vld [vmem:[%s1 + $0x470] sm:$0xf]
    %v311 = vld [vmem:[%s1 + $0x474] sm:$0xf]
    %v312 = vld [vmem:[%s1 + $0x478] sm:$0xf]
    %v313 = vld [vmem:[%s1 + $0x47c] sm:$0xf]
    %v314 = vld [vmem:[%s1 + $0x480] sm:$0xf]
    %v315 = vld [vmem:[%s1 + $0x484] sm:$0xf]
    %v316 = vld [vmem:[%s1 + $0x488] sm:$0xf]
    %v317 = vld [vmem:[%s1 + $0x48c] sm:$0xf]
    %v318 = vld [vmem:[%s1 + $0x490] sm:$0xf]
    %v319 = vld [vmem:[%s1 + $0x494] sm:$0xf]
    %v320 = vld [vmem:[%s1 + $0x498] sm:$0xf]
    %v321 = vld [vmem:[%s1 + $0x49c] sm:$0xf]
    %v322 = vld [vmem:[%s1 + $0x4a0] sm:$0xf]
    %v323 = vld [vmem:[%s1 + $0x4a4] sm:$0xf]
    %v324 = vld [vmem:[%s1 + $0x4a8] sm:$0xf]
    %v325 = vld [vmem:[%s1 + $0x4ac] sm:$0xf]
    %v326 = vld [vmem:[%s1 + $0x4b0] sm:$0xf]
    %v327 = vld [vmem:[%s1 + $0x4b4] sm:$0xf]
    %v328 = vld [vmem:[%s1 + $0x4b8] sm:$0xf]
    %v329 = vld [vmem:[%s1 + $0x4bc] sm:$0xf]
    %v330 = vld [vmem:[%s1 + $0x4c0] sm:$0xf]
    %v331 = vld [vmem:[%s1 + $0x4c4] sm:$0xf]
    %v332 = vld [vmem:[%s1 + $0x4c8] sm:$0xf]
    %v333 = vld [vmem:[%s1 + $0x4cc] sm:$0xf]
    %v334 = vld [vmem:[%s1 + $0x4d0] sm:$0xf]
    %v335 = vld [vmem:[%s1 + $0x4d4] sm:$0xf]
    %v336 = vld [vmem:[%s1 + $0x4d8] sm:$0xf]
    %v337 = vld [vmem:[%s1 + $0x4dc] sm:$0xf]
    %v338 = vld [vmem:[%s1 + $0x4e0] sm:$0xf]
    %v339 = vld [vmem:[%s1 + $0x4e4] sm:$0xf]
    %v340 = vld [vmem:[%s1 + $0x4e8] sm:$0xf]
    %v341 = vld [vmem:[%s1 + $0x4ec] sm:$0xf]
    %v342 = vld [vmem:[%s1 + $0x4f0] sm:$0xf]
    %v343 = vld [vmem:[%s1 + $0x4f4] sm:$0xf]
    %v344 = vld [vmem:[%s1 + $0x4f8] sm:$0xf]
    %v345 = vld [vmem:[%s1 + $0x4fc] sm:$0xf]
    %v346 = vld [vmem:[%s1 + $0x500] sm:$0xf]
    %v347 = vld [vmem:[%s1 + $0x504] sm:$0xf]
    %v348 = vld [vmem:[%s1 + $0x508] sm:$0xf]
    %v349 = vld [vmem:[%s1 + $0x50c] sm:$0xf]
    %v350 = vld [vmem:[%s1 + $0x510] sm:$0xf]
    %v351 = vld [vmem:[%s1 + $0x514] sm:$0xf]
    %v352 = vld [vmem:[%s1 + $0x518] sm:$0xf]
    %v353 = vld [vmem:[%s1 + $0x51c] sm:$0xf]
    %v354 = vld [vmem:[%s1 + $0x520] sm:$0xf]
    %v355 = vld [vmem:[%s1 + $0x524] sm:$0xf]
    %v356 = vld [vmem:[%s1 + $0x528] sm:$0xf]
    %v357 = vld [vmem:[%s1 + $0x52c] sm:$0xf]
    %v358 = vld [vmem:[%s1 + $0x530] sm:$0xf]
    %v359 = vld [vmem:[%s1 + $0x534] sm:$0xf]
    %v360 = vld [vmem:[%s1 + $0x538] sm:$0xf]
    %v361 = vld [vmem:[%s1 + $0x53c] sm:$0xf]
    %v362 = vld [vmem:[%s1 + $0x540] sm:$0xf]
    %v363 = vld [vmem:[%s1 + $0x544] sm:$0xf]
    %v364 = vld [vmem:[%s1 + $0x548] sm:$0xf]
    %v365 = vld [vmem:[%s1 + $0x54c] sm:$0xf]
    %v366 = vld [vmem:[%s1 + $0x550] sm:$0xf]
    %v367 = vld [vmem:[%s1 + $0x554] sm:$0xf]
    %v368 = vld [vmem:[%s1 + $0x558] sm:$0xf]
    %v369 = vld [vmem:[%s1 + $0x55c] sm:$0xf]
    %v370 = vld [vmem:[%s1 + $0x560] sm:$0xf]
    %v371 = vld [vmem:[%s1 + $0x564] sm:$0xf]
    %v372 = vld [vmem:[%s1 + $0x568] sm:$0xf]
    %v373 = vld [vmem:[%s1 + $0x56c] sm:$0xf]
    %v374 = vld [vmem:[%s1 + $0x570] sm:$0xf]
    %v375 = vld [vmem:[%s1 + $0x574] sm:$0xf]
    %v376 = vld [vmem:[%s1 + $0x578] sm:$0xf]
    %v377 = vld [vmem:[%s1 + $0x57c] sm:$0xf]
    %v378 = vld [vmem:[%s1 + $0x580] sm:$0xf]
    %v379 = vld [vmem:[%s1 + $0x584] sm:$0xf]
    %v380 = vld [vmem:[%s1 + $0x588] sm:$0xf]
    %v381 = vld [vmem:[%s1 + $0x58c] sm:$0xf]
    %v382 = vld [vmem:[%s1 + $0x590] sm:$0xf]
    %v383 = vld [vmem:[%s1 + $0x594] sm:$0xf]
    %v384 = vld [vmem:[%s1 + $0x598] sm:$0xf]
    %v385 = vld [vmem:[%s1 + $0x59c] sm:$0xf]
    %v386 = vld [vmem:[%s1 + $0x5a0] sm:$0xf]
    %v387 = vld [vmem:[%s1 + $0x5a4] sm:$0xf]
    %v388 = vld [vmem:[%s1 + $0x5a8] sm:$0xf]
    %v389 = vld [vmem:[%s1 + $0x5ac] sm:$0xf]
    %v390 = vld [vmem:[%s1 + $0x5b0] sm:$0xf]
    %v391 = vld [vmem:[%s1 + $0x5b4] sm:$0xf]
    %v392 = vld [vmem:[%s1 + $0x5b8] sm:$0xf]
    %v393 = vld [vmem:[%s1 + $0x5bc] sm:$0xf]
    %v394 = vld [vmem:[%s1 + $0x5c0] sm:$0xf]
    %v395 = vld [vmem:[%s1 + $0x5c4] sm:$0xf]
    %v396 = vld [vmem:[%s1 + $0x5c8] sm:$0xf]
    %v397 = vld [vmem:[%s1 + $0x5cc] sm:$0xf]
    %v398 = vld [vmem:[%s1 + $0x5d0] sm:$0xf]
    %v399 = vld [vmem:[%s1 + $0x5d4] sm:$0xf]
    %v400 = vld [vmem:[%s1 + $0x5d8] sm:$0xf]
    %v401 = vld [vmem:[%s1 + $0x5dc] sm:$0xf]
    %v402 = vld [vmem:[%s1 + $0x5e0] sm:$0xf]
    %v403 = vld [vmem:[%s1 + $0x5e4] sm:$0xf]
    %v404 = vld [vmem:[%s1 + $0x5e8] sm:$0xf]
    %v405 = vld [vmem:[%s1 + $0x5ec] sm:$0xf]
    %v406 = vld [vmem:[%s1 + $0x5f0] sm:$0xf]
    %v407 = vld [vmem:[%s1 + $0x5f4] sm:$0xf]
    %v408 = vld [vmem:[%s1 + $0x5f8] sm:$0xf]
    %v409 = vld [vmem:[%s1 + $0x5fc] sm:$0xf]
    %v410 = vld [vmem:[%s1 + $0x600] sm:$0xf]
    %v411 = vld [vmem:[%s1 + $0x604] sm:$0xf]
    %v412 = vld [vmem:[%s1 + $0x608] sm:$0xf]
    %v413 = vld [vmem:[%s1 + $0x60c] sm:$0xf]
    %v414 = vld [vmem:[%s1 + $0x610] sm:$0xf]
    %v415 = vld [vmem:[%s1 + $0x614] sm:$0xf]
    %v416 = vld [vmem:[%s1 + $0x618] sm:$0xf]
    %v417 = vld [vmem:[%s1 + $0x61c] sm:$0xf]
    %v418 = vld [vmem:[%s1 + $0x620] sm:$0xf]
    %v419 = vld [vmem:[%s1 + $0x624] sm:$0xf]
    %v420 = vld [vmem:[%s1 + $0x628] sm:$0xf]
    %v421 = vld [vmem:[%s1 + $0x62c] sm:$0xf]
    %v422 = vld [vmem:[%s1 + $0x630] sm:$0xf]
    %v423 = vld [vmem:[%s1 + $0x634] sm:$0xf]
    %v424 = vld [vmem:[%s1 + $0x638] sm:$0xf]
    %v425 = vld [vmem:[%s1 + $0x63c] sm:$0xf]
    %v426 = vld [vmem:[%s1 + $0x640] sm:$0xf]
    %v427 = vld [vmem:[%s1 + $0x644] sm:$0xf]
    %v428 = vld [vmem:[%s1 + $0x648] sm:$0xf]
    %v429 = vld [vmem:[%s1 + $0x64c] sm:$0xf]
    %v430 = vld [vmem:[%s1 + $0x650] sm:$0xf]
    %v431 = vld [vmem:[%s1 + $0x654] sm:$0xf]
    %v432 = vld [vmem:[%s1 + $0x658] sm:$0xf]
    %v433 = vld [vmem:[%s1 + $0x65c] sm:$0xf]
    %v434 = vld [vmem:[%s1 + $0x660] sm:$0xf]
    %v435 = vld [vmem:[%s1 + $0x664] sm:$0xf]
    %v436 = vld [vmem:[%s1 + $0x668] sm:$0xf]
    %v437 = vld [vmem:[%s1 + $0x66c] sm:$0xf]
    %v438 = vld [vmem:[%s1 + $0x670] sm:$0xf]
    %v439 = vld [vmem:[%s1 + $0x674] sm:$0xf]
    %v440 = vld [vmem:[%s1 + $0x678] sm:$0xf]
    %v441 = vld [vmem:[%s1 + $0x67c] sm:$0xf]
    %v442 = vld [vmem:[%s1 + $0x680] sm:$0xf]
    %v443 = vld [vmem:[%s1 + $0x684] sm:$0xf]
    %v444 = vld [vmem:[%s1 + $0x688] sm:$0xf]
    %v445 = vld [vmem:[%s1 + $0x68c] sm:$0xf]
    %v446 = vld [vmem:[%s1 + $0x690] sm:$0xf]
    %v447 = vld [vmem:[%s1 + $0x694] sm:$0xf]
    %v448 = vld [vmem:[%s1 + $0x698] sm:$0xf]
    %v449 = vld [vmem:[%s1 + $0x69c] sm:$0xf]
    %v450 = vld [vmem:[%s1 + $0x6a0] sm:$0xf]
    %v451 = vld [vmem:[%s1 + $0x6a4] sm:$0xf]
    %v452 = vld [vmem:[%s1 + $0x6a8] sm:$0xf]
    %v453 = vld [vmem:[%s1 + $0x6ac] sm:$0xf]
    %v454 = vld [vmem:[%s1 + $0x6b0] sm:$0xf]
    %v455 = vld [vmem:[%s1 + $0x6b4] sm:$0xf]
    %v456 = vld [vmem:[%s1 + $0x6b8] sm:$0xf]
    %v457 = vld [vmem:[%s1 + $0x6bc] sm:$0xf]
    %v458 = vld [vmem:[%s1 + $0x6c0] sm:$0xf]
    %v459 = vld [vmem:[%s1 + $0x6c4] sm:$0xf]
    %v460 = vld [vmem:[%s1 + $0x6c8] sm:$0xf]
    %v461 = vld [vmem:[%s1 + $0x6cc] sm:$0xf]
    %v462 = vld [vmem:[%s1 + $0x6d0] sm:$0xf]
    %v463 = vld [vmem:[%s1 + $0x6d4] sm:$0xf]
    %v464 = vld [vmem:[%s1 + $0x6d8] sm:$0xf]
    %v465 = vld [vmem:[%s1 + $0x6dc] sm:$0xf]
    %v466 = vld [vmem:[%s1 + $0x6e0] sm:$0xf]
    %v467 = vld [vmem:[%s1 + $0x6e4] sm:$0xf]
    %v468 = vld [vmem:[%s1 + $0x6e8] sm:$0xf]
    %v469 = vld [vmem:[%s1 + $0x6ec] sm:$0xf]
    %v470 = vld [vmem:[%s1 + $0x6f0] sm:$0xf]
    %v471 = vld [vmem:[%s1 + $0x6f4] sm:$0xf]
    %v472 = vld [vmem:[%s1 + $0x6f8] sm:$0xf]
    %v473 = vld [vmem:[%s1 + $0x6fc] sm:$0xf]
    %v474 = vld [vmem:[%s1 + $0x700] sm:$0xf]
    %v475 = vld [vmem:[%s1 + $0x704] sm:$0xf]
    %v476 = vld [vmem:[%s1 + $0x708] sm:$0xf]
    %v477 = vld [vmem:[%s1 + $0x70c] sm:$0xf]
    %v478 = vld [vmem:[%s1 + $0x710] sm:$0xf]
    %v479 = vld [vmem:[%s1 + $0x714] sm:$0xf]
    %v480 = vld [vmem:[%s1 + $0x718] sm:$0xf]
    %v481 = vld [vmem:[%s1 + $0x71c] sm:$0xf]
    %v482 = vld [vmem:[%s1 + $0x720] sm:$0xf]
    %v483 = vld [vmem:[%s1 + $0x724] sm:$0xf]
    %v484 = vld [vmem:[%s1 + $0x728] sm:$0xf]
    %v485 = vld [vmem:[%s1 + $0x72c] sm:$0xf]
    %v486 = vld [vmem:[%s1 + $0x730] sm:$0xf]
    %v487 = vld [vmem:[%s1 + $0x734] sm:$0xf]
    %v488 = vld [vmem:[%s1 + $0x738] sm:$0xf]
    %v489 = vld [vmem:[%s1 + $0x73c] sm:$0xf]
    %v490 = vld [vmem:[%s1 + $0x740] sm:$0xf]
    %v491 = vld [vmem:[%s1 + $0x744] sm:$0xf]
    %v492 = vld [vmem:[%s1 + $0x748] sm:$0xf]
    %v493 = vld [vmem:[%s1 + $0x74c] sm:$0xf]
    %v494 = vld [vmem:[%s1 + $0x750] sm:$0xf]
    %v495 = vld [vmem:[%s1 + $0x754] sm:$0xf]
    %v496 = vld [vmem:[%s1 + $0x758] sm:$0xf]
    %v497 = vld [vmem:[%s1 + $0x75c] sm:$0xf]
    %v498 = vld [vmem:[%s1 + $0x760] sm:$0xf]
    %v499 = vld [vmem:[%s1 + $0x764] sm:$0xf]
    %v500 = vld [vmem:[%s1 + $0x768] sm:$0xf]
    %v501 = vld [vmem:[%s1 + $0x76c] sm:$0xf]
    %v502 = vld [vmem:[%s1 + $0x770] sm:$0xf]
    %v503 = vld [vmem:[%s1 + $0x774] sm:$0xf]
    %v504 = vld [vmem:[%s1 + $0x778] sm:$0xf]
    %v505 = vld [vmem:[%s1 + $0x77c] sm:$0xf]
    %v506 = vld [vmem:[%s1 + $0x780] sm:$0xf]
    %v507 = vld [vmem:[%s1 + $0x784] sm:$0xf]
    %v508 = vld [vmem:[%s1 + $0x788] sm:$0xf]
    %v509 = vld [vmem:[%s1 + $0x78c] sm:$0xf]
    %v510 = vld [vmem:[%s1 + $0x790] sm:$0xf]
    %v511 = vld [vmem:[%s1 + $0x794] sm:$0xf]
    %v512 = vld [vmem:[%s1 + $0x798] sm:$0xf]
    %v513 = vld [vmem:[%s1 + $0x79c] sm:$0xf]
    %v514 = vld [vmem:[%s1 + $0x7a0] sm:$0xf]
    %v515 = vld [vmem:[%s1 + $0x7a4] sm:$0xf]
    %v516 = vld [vmem:[%s1 + $0x7a8] sm:$0xf]
    %v517 = vld [vmem:[%s1 + $0x7ac] sm:$0xf]
    %v518 = vld [vmem:[%s1 + $0x7b0] sm:$0xf]
    %v519 = vld [vmem:[%s1 + $0x7b4] sm:$0xf]
    %v520 = vld [vmem:[%s1 + $0x7b8] sm:$0xf]
    %v521 = vld [vmem:[%s1 + $0x7bc] sm:$0xf]
    %v522 = vld [vmem:[%s1 + $0x7c0] sm:$0xf]
    %v523 = vld [vmem:[%s1 + $0x7c4] sm:$0xf]
    %v524 = vld [vmem:[%s1 + $0x7c8] sm:$0xf]
    %v525 = vld [vmem:[%s1 + $0x7cc] sm:$0xf]
    %v526 = vld [vmem:[%s1 + $0x7d0] sm:$0xf]
    %v527 = vld [vmem:[%s1 + $0x7d4] sm:$0xf]
    %v528 = vld [vmem:[%s1 + $0x7d8] sm:$0xf]
    %v529 = vld [vmem:[%s1 + $0x7dc] sm:$0xf]
    %v530 = vld [vmem:[%s1 + $0x7e0] sm:$0xf]
    %v531 = vld [vmem:[%s1 + $0x7e4] sm:$0xf]
    %v532 = vld [vmem:[%s1 + $0x7e8] sm:$0xf]
    %v533 = vld [vmem:[%s1 + $0x7ec] sm:$0xf]
    %v534 = vld [vmem:[%s1 + $0x7f0] sm:$0xf]
    %v535 = vld [vmem:[%s1 + $0x7f4] sm:$0xf]
    %v536 = vld [vmem:[%s1 + $0x7f8] sm:$0xf]
    %v537 = vld [vmem:[%s1 + $0x7fc] sm:$0xf]
    %v538 = vld [vmem:[%s2] sm:$0x1]
    %v540 = vlaneseq
    %v541 = vshrl.u32 %v540, 7
    %v542 = vsub.s32 0, %v541
    %v543 = vrot.slane %v538, %v542
    %v549 = vcombine.high %v22, %v22
    %v551 = vunpack.c.l.s4 1966171168
    %v552 = vunpack.c.0.s8 %v551
    %v553 = vlaneseq
    %v554 = vshrl.u32 %v553, 7
    %v555 = vsub.s32 %v552, %v554
    %v556 = vrot.slane %v22, %v555
    %v558 = vunpack.c.l.s4 1966171168
    %v559 = vunpack.c.0.s8 %v558
    %v560 = vlaneseq
    %v561 = vshrl.u32 %v560, 7
    %v562 = vsub.s32 %v559, %v561
    %v563 = vrot.slane %v549, %v562
    %v564 = vcombine.high %v556, %v556
    %v565 = vcombine.high %v563, %v563
    %v567 = vunpack.c.l.s4 1966171168
    %v568 = vunpack.c.0.s8 %v567
    %v569 = vlaneseq
    %v570 = vshrl.u32 %v569, 7
    %v571 = vsub.s32 %v568, %v570
    %v572 = vrot.slane %v556, %v571
    %v574 = vunpack.c.l.s4 1966171168
    %v575 = vunpack.c.0.s8 %v574
    %v576 = vlaneseq
    %v577 = vshrl.u32 %v576, 7
    %v578 = vsub.s32 %v575, %v577
    %v579 = vrot.slane %v563, %v578
    %v581 = vunpack.c.l.s4 1966171168
    %v582 = vunpack.c.0.s8 %v581
    %v583 = vlaneseq
    %v584 = vshrl.u32 %v583, 7
    %v585 = vsub.s32 %v582, %v584
    %v586 = vrot.slane %v564, %v585
    %v588 = vunpack.c.l.s4 1966171168
    %v589 = vunpack.c.0.s8 %v588
    %v590 = vlaneseq
    %v591 = vshrl.u32 %v590, 7
    %v592 = vsub.s32 %v589, %v591
    %v593 = vrot.slane %v565, %v592
    %v594 = vcombine.high %v572, %v572
    %v595 = vcombine.high %v579, %v579
    %v596 = vcombine.high %v586, %v586
    %v597 = vcombine.high %v593, %v593
    %v598 = vcombine.high %v23, %v23
    %v600 = vunpack.c.l.s4 1966171168
    %v601 = vunpack.c.0.s8 %v600
    %v602 = vlaneseq
    %v603 = vshrl.u32 %v602, 7
    %v604 = vsub.s32 %v601, %v603
    %v605 = vrot.slane %v23, %v604
    %v607 = vunpack.c.l.s4 1966171168
    %v608 = vunpack.c.0.s8 %v607
    %v609 = vlaneseq
    %v610 = vshrl.u32 %v609, 7
    %v611 = vsub.s32 %v608, %v610
    %v612 = vrot.slane %v598, %v611
    %v613 = vcombine.high %v605, %v605
    %v614 = vcombine.high %v612, %v612
    %v616 = vunpack.c.l.s4 1966171168
    %v617 = vunpack.c.0.s8 %v616
    %v618 = vlaneseq
    %v619 = vshrl.u32 %v618, 7
    %v620 = vsub.s32 %v617, %v619
    %v621 = vrot.slane %v605, %v620
    %v623 = vunpack.c.l.s4 1966171168
    %v624 = vunpack.c.0.s8 %v623
    %v625 = vlaneseq
    %v626 = vshrl.u32 %v625, 7
    %v627 = vsub.s32 %v624, %v626
    %v628 = vrot.slane %v612, %v627
    %v630 = vunpack.c.l.s4 1966171168
    %v631 = vunpack.c.0.s8 %v630
    %v632 = vlaneseq
    %v633 = vshrl.u32 %v632, 7
    %v634 = vsub.s32 %v631, %v633
    %v635 = vrot.slane %v613, %v634
    %v637 = vunpack.c.l.s4 1966171168
    %v638 = vunpack.c.0.s8 %v637
    %v639 = vlaneseq
    %v640 = vshrl.u32 %v639, 7
    %v641 = vsub.s32 %v638, %v640
    %v642 = vrot.slane %v614, %v641
    %v643 = vcombine.high %v621, %v621
    %v644 = vcombine.high %v628, %v628
    %v645 = vcombine.high %v635, %v635
    %v646 = vcombine.high %v642, %v642
    %v647 = vcombine.high %v24, %v24
    %v649 = vunpack.c.l.s4 1966171168
    %v650 = vunpack.c.0.s8 %v649
    %v651 = vlaneseq
    %v652 = vshrl.u32 %v651, 7
    %v653 = vsub.s32 %v650, %v652
    %v654 = vrot.slane %v24, %v653
    %v656 = vunpack.c.l.s4 1966171168
    %v657 = vunpack.c.0.s8 %v656
    %v658 = vlaneseq
    %v659 = vshrl.u32 %v658, 7
    %v660 = vsub.s32 %v657, %v659
    %v661 = vrot.slane %v647, %v660
    %v662 = vcombine.high %v654, %v654
    %v663 = vcombine.high %v661, %v661
    %v665 = vunpack.c.l.s4 1966171168
    %v666 = vunpack.c.0.s8 %v665
    %v667 = vlaneseq
    %v668 = vshrl.u32 %v667, 7
    %v669 = vsub.s32 %v666, %v668
    %v670 = vrot.slane %v654, %v669
    %v672 = vunpack.c.l.s4 1966171168
    %v673 = vunpack.c.0.s8 %v672
    %v674 = vlaneseq
    %v675 = vshrl.u32 %v674, 7
    %v676 = vsub.s32 %v673, %v675
    %v677 = vrot.slane %v661, %v676
    %v679 = vunpack.c.l.s4 1966171168
    %v680 = vunpack.c.0.s8 %v679
    %v681 = vlaneseq
    %v682 = vshrl.u32 %v681, 7
    %v683 = vsub.s32 %v680, %v682
    %v684 = vrot.slane %v662, %v683
    %v686 = vunpack.c.l.s4 1966171168
    %v687 = vunpack.c.0.s8 %v686
    %v688 = vlaneseq
    %v689 = vshrl.u32 %v688, 7
    %v690 = vsub.s32 %v687, %v689
    %v691 = vrot.slane %v663, %v690
    %v692 = vcombine.high %v670, %v670
    %v693 = vcombine.high %v677, %v677
    %v694 = vcombine.high %v684, %v684
    %v695 = vcombine.high %v691, %v691
    %v696 = vcombine.high %v25, %v25
    %v698 = vunpack.c.l.s4 1966171168
    %v699 = vunpack.c.0.s8 %v698
    %v700 = vlaneseq
    %v701 = vshrl.u32 %v700, 7
    %v702 = vsub.s32 %v699, %v701
    %v703 = vrot.slane %v25, %v702
    %v705 = vunpack.c.l.s4 1966171168
    %v706 = vunpack.c.0.s8 %v705
    %v707 = vlaneseq
    %v708 = vshrl.u32 %v707, 7
    %v709 = vsub.s32 %v706, %v708
    %v710 = vrot.slane %v696, %v709
    %v711 = vcombine.high %v703, %v703
    %v712 = vcombine.high %v710, %v710
    %v714 = vunpack.c.l.s4 1966171168
    %v715 = vunpack.c.0.s8 %v714
    %v716 = vlaneseq
    %v717 = vshrl.u32 %v716, 7
    %v718 = vsub.s32 %v715, %v717
    %v719 = vrot.slane %v703, %v718
    %v721 = vunpack.c.l.s4 1966171168
    %v722 = vunpack.c.0.s8 %v721
    %v723 = vlaneseq
    %v724 = vshrl.u32 %v723, 7
    %v725 = vsub.s32 %v722, %v724
    %v726 = vrot.slane %v710, %v725
    %v728 = vunpack.c.l.s4 1966171168
    %v729 = vunpack.c.0.s8 %v728
    %v730 = vlaneseq
    %v731 = vshrl.u32 %v730, 7
    %v732 = vsub.s32 %v729, %v731
    %v733 = vrot.slane %v711, %v732
    %v735 = vunpack.c.l.s4 1966171168
    %v736 = vunpack.c.0.s8 %v735
    %v737 = vlaneseq
    %v738 = vshrl.u32 %v737, 7
    %v739 = vsub.s32 %v736, %v738
    %v740 = vrot.slane %v712, %v739
    %v741 = vcombine.high %v719, %v719
    %v742 = vcombine.high %v726, %v726
    %v743 = vcombine.high %v733, %v733
    %v744 = vcombine.high %v740, %v740
    %v1289 = vunpack.c.l.b16 %v26
    %v1290 = vunpack.c.l.b16 %v27
    %v1291 = vunpack.c.l.b16 %v28
    %v1292 = vunpack.c.l.b16 %v29
    %v1293 = vunpack.c.l.b16 %v30
    %v1294 = vunpack.c.l.b16 %v31
    %v1295 = vunpack.c.l.b16 %v32
    %v1296 = vunpack.c.l.b16 %v33
    %v1297 = vunpack.c.l.b16 %v34
    %v1298 = vunpack.c.l.b16 %v35
    %v1299 = vunpack.c.l.b16 %v36
    %v1300 = vunpack.c.l.b16 %v37
    %v1301 = vunpack.c.l.b16 %v38
    %v1302 = vunpack.c.l.b16 %v39
    %v1303 = vunpack.c.l.b16 %v40
    %v1304 = vunpack.c.l.b16 %v41
    %v1305 = vunpack.c.l.b16 %v42
    %v1306 = vunpack.c.l.b16 %v43
    %v1307 = vunpack.c.l.b16 %v44
    %v1308 = vunpack.c.l.b16 %v45
    %v1309 = vunpack.c.l.b16 %v46
    %v1310 = vunpack.c.l.b16 %v47
    %v1311 = vunpack.c.l.b16 %v48
    %v1312 = vunpack.c.l.b16 %v49
    %v1313 = vunpack.c.l.b16 %v50
    %v1314 = vunpack.c.l.b16 %v51
    %v1315 = vunpack.c.l.b16 %v52
    %v1316 = vunpack.c.l.b16 %v53
    %v1317 = vunpack.c.l.b16 %v54
    %v1318 = vunpack.c.l.b16 %v55
    %v1319 = vunpack.c.l.b16 %v56
    %v1320 = vunpack.c.l.b16 %v57
    %v1321 = vunpack.c.l.b16 %v58
    %v1322 = vunpack.c.l.b16 %v59
    %v1323 = vunpack.c.l.b16 %v60
    %v1324 = vunpack.c.l.b16 %v61
    %v1325 = vunpack.c.l.b16 %v62
    %v1326 = vunpack.c.l.b16 %v63
    %v1327 = vunpack.c.l.b16 %v64
    %v1328 = vunpack.c.l.b16 %v65
    %v1329 = vunpack.c.l.b16 %v66
    %v1330 = vunpack.c.l.b16 %v67
    %v1331 = vunpack.c.l.b16 %v68
    %v1332 = vunpack.c.l.b16 %v69
    %v1333 = vunpack.c.l.b16 %v70
    %v1334 = vunpack.c.l.b16 %v71
    %v1335 = vunpack.c.l.b16 %v72
    %v1336 = vunpack.c.l.b16 %v73
    %v1337 = vunpack.c.l.b16 %v74
    %v1338 = vunpack.c.l.b16 %v75
    %v1339 = vunpack.c.l.b16 %v76
    %v1340 = vunpack.c.l.b16 %v77
    %v1341 = vunpack.c.l.b16 %v78
    %v1342 = vunpack.c.l.b16 %v79
    %v1343 = vunpack.c.l.b16 %v80
    %v1344 = vunpack.c.l.b16 %v81
    %v1345 = vunpack.c.l.b16 %v82
    %v1346 = vunpack.c.l.b16 %v83
    %v1347 = vunpack.c.l.b16 %v84
    %v1348 = vunpack.c.l.b16 %v85
    %v1349 = vunpack.c.l.b16 %v86
    %v1350 = vunpack.c.l.b16 %v87
    %v1351 = vunpack.c.l.b16 %v88
    %v1352 = vunpack.c.l.b16 %v89
    %v1353 = vunpack.c.l.b16 %v90
    %v1354 = vunpack.c.l.b16 %v91
    %v1355 = vunpack.c.l.b16 %v92
    %v1356 = vunpack.c.l.b16 %v93
    %v1357 = vunpack.c.l.b16 %v94
    %v1358 = vunpack.c.l.b16 %v95
    %v1359 = vunpack.c.l.b16 %v96
    %v1360 = vunpack.c.l.b16 %v97
    %v1361 = vunpack.c.l.b16 %v98
    %v1362 = vunpack.c.l.b16 %v99
    %v1363 = vunpack.c.l.b16 %v100
    %v1364 = vunpack.c.l.b16 %v101
    %v1365 = vunpack.c.l.b16 %v102
    %v1366 = vunpack.c.l.b16 %v103
    %v1367 = vunpack.c.l.b16 %v104
    %v1368 = vunpack.c.l.b16 %v105
    %v1369 = vunpack.c.l.b16 %v106
    %v1370 = vunpack.c.l.b16 %v107
    %v1371 = vunpack.c.l.b16 %v108
    %v1372 = vunpack.c.l.b16 %v109
    %v1373 = vunpack.c.l.b16 %v110
    %v1374 = vunpack.c.l.b16 %v111
    %v1375 = vunpack.c.l.b16 %v112
    %v1376 = vunpack.c.l.b16 %v113
    %v1377 = vunpack.c.l.b16 %v114
    %v1378 = vunpack.c.l.b16 %v115
    %v1379 = vunpack.c.l.b16 %v116
    %v1380 = vunpack.c.l.b16 %v117
    %v1381 = vunpack.c.l.b16 %v118
    %v1382 = vunpack.c.l.b16 %v119
    %v1383 = vunpack.c.l.b16 %v120
    %v1384 = vunpack.c.l.b16 %v121
    %v1385 = vunpack.c.l.b16 %v122
    %v1386 = vunpack.c.l.b16 %v123
    %v1387 = vunpack.c.l.b16 %v124
    %v1388 = vunpack.c.l.b16 %v125
    %v1389 = vunpack.c.l.b16 %v126
    %v1390 = vunpack.c.l.b16 %v127
    %v1391 = vunpack.c.l.b16 %v128
    %v1392 = vunpack.c.l.b16 %v129
    %v1393 = vunpack.c.l.b16 %v130
    %v1394 = vunpack.c.l.b16 %v131
    %v1395 = vunpack.c.l.b16 %v132
    %v1396 = vunpack.c.l.b16 %v133
    %v1397 = vunpack.c.l.b16 %v134
    %v1398 = vunpack.c.l.b16 %v135
    %v1399 = vunpack.c.l.b16 %v136
    %v1400 = vunpack.c.l.b16 %v137
    %v1401 = vunpack.c.l.b16 %v138
    %v1402 = vunpack.c.l.b16 %v139
    %v1403 = vunpack.c.l.b16 %v140
    %v1404 = vunpack.c.l.b16 %v141
    %v1405 = vunpack.c.l.b16 %v142
    %v1406 = vunpack.c.l.b16 %v143
    %v1407 = vunpack.c.l.b16 %v144
    %v1408 = vunpack.c.l.b16 %v145
    %v1409 = vunpack.c.l.b16 %v146
    %v1410 = vunpack.c.l.b16 %v147
    %v1411 = vunpack.c.l.b16 %v148
    %v1412 = vunpack.c.l.b16 %v149
    %v1413 = vunpack.c.l.b16 %v150
    %v1414 = vunpack.c.l.b16 %v151
    %v1415 = vunpack.c.l.b16 %v152
    %v1416 = vunpack.c.l.b16 %v153
    %v1417 = vunpack.c.l.b16 %v154
    %v1418 = vunpack.c.l.b16 %v155
    %v1419 = vunpack.c.l.b16 %v156
    %v1420 = vunpack.c.l.b16 %v157
    %v1421 = vunpack.c.l.b16 %v158
    %v1422 = vunpack.c.l.b16 %v159
    %v1423 = vunpack.c.l.b16 %v160
    %v1424 = vunpack.c.l.b16 %v161
    %v1425 = vunpack.c.l.b16 %v162
    %v1426 = vunpack.c.l.b16 %v163
    %v1427 = vunpack.c.l.b16 %v164
    %v1428 = vunpack.c.l.b16 %v165
    %v1429 = vunpack.c.l.b16 %v166
    %v1430 = vunpack.c.l.b16 %v167
    %v1431 = vunpack.c.l.b16 %v168
    %v1432 = vunpack.c.l.b16 %v169
    %v1433 = vunpack.c.l.b16 %v170
    %v1434 = vunpack.c.l.b16 %v171
    %v1435 = vunpack.c.l.b16 %v172
    %v1436 = vunpack.c.l.b16 %v173
    %v1437 = vunpack.c.l.b16 %v174
    %v1438 = vunpack.c.l.b16 %v175
    %v1439 = vunpack.c.l.b16 %v176
    %v1440 = vunpack.c.l.b16 %v177
    %v1441 = vunpack.c.l.b16 %v178
    %v1442 = vunpack.c.l.b16 %v179
    %v1443 = vunpack.c.l.b16 %v180
    %v1444 = vunpack.c.l.b16 %v181
    %v1445 = vunpack.c.l.b16 %v182
    %v1446 = vunpack.c.l.b16 %v183
    %v1447 = vunpack.c.l.b16 %v184
    %v1448 = vunpack.c.l.b16 %v185
    %v1449 = vunpack.c.l.b16 %v186
    %v1450 = vunpack.c.l.b16 %v187
    %v1451 = vunpack.c.l.b16 %v188
    %v1452 = vunpack.c.l.b16 %v189
    %v1453 = vunpack.c.l.b16 %v190
    %v1454 = vunpack.c.l.b16 %v191
    %v1455 = vunpack.c.l.b16 %v192
    %v1456 = vunpack.c.l.b16 %v193
    %v1457 = vunpack.c.l.b16 %v194
    %v1458 = vunpack.c.l.b16 %v195
    %v1459 = vunpack.c.l.b16 %v196
    %v1460 = vunpack.c.l.b16 %v197
    %v1461 = vunpack.c.l.b16 %v198
    %v1462 = vunpack.c.l.b16 %v199
    %v1463 = vunpack.c.l.b16 %v200
    %v1464 = vunpack.c.l.b16 %v201
    %v1465 = vunpack.c.l.b16 %v202
    %v1466 = vunpack.c.l.b16 %v203
    %v1467 = vunpack.c.l.b16 %v204
    %v1468 = vunpack.c.l.b16 %v205
    %v1469 = vunpack.c.l.b16 %v206
    %v1470 = vunpack.c.l.b16 %v207
    %v1471 = vunpack.c.l.b16 %v208
    %v1472 = vunpack.c.l.b16 %v209
    %v1473 = vunpack.c.l.b16 %v210
    %v1474 = vunpack.c.l.b16 %v211
    %v1475 = vunpack.c.l.b16 %v212
    %v1476 = vunpack.c.l.b16 %v213
    %v1477 = vunpack.c.l.b16 %v214
    %v1478 = vunpack.c.l.b16 %v215
    %v1479 = vunpack.c.l.b16 %v216
    %v1480 = vunpack.c.l.b16 %v217
    %v1481 = vunpack.c.l.b16 %v218
    %v1482 = vunpack.c.l.b16 %v219
    %v1483 = vunpack.c.l.b16 %v220
    %v1484 = vunpack.c.l.b16 %v221
    %v1485 = vunpack.c.l.b16 %v222
    %v1486 = vunpack.c.l.b16 %v223
    %v1487 = vunpack.c.l.b16 %v224
    %v1488 = vunpack.c.l.b16 %v225
    %v1489 = vunpack.c.l.b16 %v226
    %v1490 = vunpack.c.l.b16 %v227
    %v1491 = vunpack.c.l.b16 %v228
    %v1492 = vunpack.c.l.b16 %v229
    %v1493 = vunpack.c.l.b16 %v230
    %v1494 = vunpack.c.l.b16 %v231
    %v1495 = vunpack.c.l.b16 %v232
    %v1496 = vunpack.c.l.b16 %v233
    %v1497 = vunpack.c.l.b16 %v234
    %v1498 = vunpack.c.l.b16 %v235
    %v1499 = vunpack.c.l.b16 %v236
    %v1500 = vunpack.c.l.b16 %v237
    %v1501 = vunpack.c.l.b16 %v238
    %v1502 = vunpack.c.l.b16 %v239
    %v1503 = vunpack.c.l.b16 %v240
    %v1504 = vunpack.c.l.b16 %v241
    %v1505 = vunpack.c.l.b16 %v242
    %v1506 = vunpack.c.l.b16 %v243
    %v1507 = vunpack.c.l.b16 %v244
    %v1508 = vunpack.c.l.b16 %v245
    %v1509 = vunpack.c.l.b16 %v246
    %v1510 = vunpack.c.l.b16 %v247
    %v1511 = vunpack.c.l.b16 %v248
    %v1512 = vunpack.c.l.b16 %v249
    %v1513 = vunpack.c.l.b16 %v250
    %v1514 = vunpack.c.l.b16 %v251
    %v1515 = vunpack.c.l.b16 %v252
    %v1516 = vunpack.c.l.b16 %v253
    %v1517 = vunpack.c.l.b16 %v254
    %v1518 = vunpack.c.l.b16 %v255
    %v1519 = vunpack.c.l.b16 %v256
    %v1520 = vunpack.c.l.b16 %v257
    %v1521 = vunpack.c.l.b16 %v258
    %v1522 = vunpack.c.l.b16 %v259
    %v1523 = vunpack.c.l.b16 %v260
    %v1524 = vunpack.c.l.b16 %v261
    %v1525 = vunpack.c.l.b16 %v262
    %v1526 = vunpack.c.l.b16 %v263
    %v1527 = vunpack.c.l.b16 %v264
    %v1528 = vunpack.c.l.b16 %v265
    %v1529 = vunpack.c.l.b16 %v266
    %v1530 = vunpack.c.l.b16 %v267
    %v1531 = vunpack.c.l.b16 %v268
    %v1532 = vunpack.c.l.b16 %v269
    %v1533 = vunpack.c.l.b16 %v270
    %v1534 = vunpack.c.l.b16 %v271
    %v1535 = vunpack.c.l.b16 %v272
    %v1536 = vunpack.c.l.b16 %v273
    %v1537 = vunpack.c.l.b16 %v274
    %v1538 = vunpack.c.l.b16 %v275
    %v1539 = vunpack.c.l.b16 %v276
    %v1540 = vunpack.c.l.b16 %v277
    %v1541 = vunpack.c.l.b16 %v278
    %v1542 = vunpack.c.l.b16 %v279
    %v1543 = vunpack.c.l.b16 %v280
    %v1544 = vunpack.c.l.b16 %v281
    %v1545 = vunpack.c.l.b16 %v282
    %v1546 = vunpack.c.l.b16 %v283
    %v1547 = vunpack.c.l.b16 %v284
    %v1548 = vunpack.c.l.b16 %v285
    %v1549 = vunpack.c.l.b16 %v286
    %v1550 = vunpack.c.l.b16 %v287
    %v1551 = vunpack.c.l.b16 %v288
    %v1552 = vunpack.c.l.b16 %v289
    %v1553 = vunpack.c.l.b16 %v290
    %v1554 = vunpack.c.l.b16 %v291
    %v1555 = vunpack.c.l.b16 %v292
    %v1556 = vunpack.c.l.b16 %v293
    %v1557 = vunpack.c.l.b16 %v294
    %v1558 = vunpack.c.l.b16 %v295
    %v1559 = vunpack.c.l.b16 %v296
    %v1560 = vunpack.c.l.b16 %v297
    %v1561 = vunpack.c.l.b16 %v298
    %v1562 = vunpack.c.l.b16 %v299
    %v1563 = vunpack.c.l.b16 %v300
    %v1564 = vunpack.c.l.b16 %v301
    %v1565 = vunpack.c.l.b16 %v302
    %v1566 = vunpack.c.l.b16 %v303
    %v1567 = vunpack.c.l.b16 %v304
    %v1568 = vunpack.c.l.b16 %v305
    %v1569 = vunpack.c.l.b16 %v306
    %v1570 = vunpack.c.l.b16 %v307
    %v1571 = vunpack.c.l.b16 %v308
    %v1572 = vunpack.c.l.b16 %v309
    %v1573 = vunpack.c.l.b16 %v310
    %v1574 = vunpack.c.l.b16 %v311
    %v1575 = vunpack.c.l.b16 %v312
    %v1576 = vunpack.c.l.b16 %v313
    %v1577 = vunpack.c.l.b16 %v314
    %v1578 = vunpack.c.l.b16 %v315
    %v1579 = vunpack.c.l.b16 %v316
    %v1580 = vunpack.c.l.b16 %v317
    %v1581 = vunpack.c.l.b16 %v318
    %v1582 = vunpack.c.l.b16 %v319
    %v1583 = vunpack.c.l.b16 %v320
    %v1584 = vunpack.c.l.b16 %v321
    %v1585 = vunpack.c.l.b16 %v322
    %v1586 = vunpack.c.l.b16 %v323
    %v1587 = vunpack.c.l.b16 %v324
    %v1588 = vunpack.c.l.b16 %v325
    %v1589 = vunpack.c.l.b16 %v326
    %v1590 = vunpack.c.l.b16 %v327
    %v1591 = vunpack.c.l.b16 %v328
    %v1592 = vunpack.c.l.b16 %v329
    %v1593 = vunpack.c.l.b16 %v330
    %v1594 = vunpack.c.l.b16 %v331
    %v1595 = vunpack.c.l.b16 %v332
    %v1596 = vunpack.c.l.b16 %v333
    %v1597 = vunpack.c.l.b16 %v334
    %v1598 = vunpack.c.l.b16 %v335
    %v1599 = vunpack.c.l.b16 %v336
    %v1600 = vunpack.c.l.b16 %v337
    %v1601 = vunpack.c.l.b16 %v338
    %v1602 = vunpack.c.l.b16 %v339
    %v1603 = vunpack.c.l.b16 %v340
    %v1604 = vunpack.c.l.b16 %v341
    %v1605 = vunpack.c.l.b16 %v342
    %v1606 = vunpack.c.l.b16 %v343
    %v1607 = vunpack.c.l.b16 %v344
    %v1608 = vunpack.c.l.b16 %v345
    %v1609 = vunpack.c.l.b16 %v346
    %v1610 = vunpack.c.l.b16 %v347
    %v1611 = vunpack.c.l.b16 %v348
    %v1612 = vunpack.c.l.b16 %v349
    %v1613 = vunpack.c.l.b16 %v350
    %v1614 = vunpack.c.l.b16 %v351
    %v1615 = vunpack.c.l.b16 %v352
    %v1616 = vunpack.c.l.b16 %v353
    %v1617 = vunpack.c.l.b16 %v354
    %v1618 = vunpack.c.l.b16 %v355
    %v1619 = vunpack.c.l.b16 %v356
    %v1620 = vunpack.c.l.b16 %v357
    %v1621 = vunpack.c.l.b16 %v358
    %v1622 = vunpack.c.l.b16 %v359
    %v1623 = vunpack.c.l.b16 %v360
    %v1624 = vunpack.c.l.b16 %v361
    %v1625 = vunpack.c.l.b16 %v362
    %v1626 = vunpack.c.l.b16 %v363
    %v1627 = vunpack.c.l.b16 %v364
    %v1628 = vunpack.c.l.b16 %v365
    %v1629 = vunpack.c.l.b16 %v366
    %v1630 = vunpack.c.l.b16 %v367
    %v1631 = vunpack.c.l.b16 %v368
    %v1632 = vunpack.c.l.b16 %v369
    %v1633 = vunpack.c.l.b16 %v370
    %v1634 = vunpack.c.l.b16 %v371
    %v1635 = vunpack.c.l.b16 %v372
    %v1636 = vunpack.c.l.b16 %v373
    %v1637 = vunpack.c.l.b16 %v374
    %v1638 = vunpack.c.l.b16 %v375
    %v1639 = vunpack.c.l.b16 %v376
    %v1640 = vunpack.c.l.b16 %v377
    %v1641 = vunpack.c.l.b16 %v378
    %v1642 = vunpack.c.l.b16 %v379
    %v1643 = vunpack.c.l.b16 %v380
    %v1644 = vunpack.c.l.b16 %v381
    %v1645 = vunpack.c.l.b16 %v382
    %v1646 = vunpack.c.l.b16 %v383
    %v1647 = vunpack.c.l.b16 %v384
    %v1648 = vunpack.c.l.b16 %v385
    %v1649 = vunpack.c.l.b16 %v386
    %v1650 = vunpack.c.l.b16 %v387
    %v1651 = vunpack.c.l.b16 %v388
    %v1652 = vunpack.c.l.b16 %v389
    %v1653 = vunpack.c.l.b16 %v390
    %v1654 = vunpack.c.l.b16 %v391
    %v1655 = vunpack.c.l.b16 %v392
    %v1656 = vunpack.c.l.b16 %v393
    %v1657 = vunpack.c.l.b16 %v394
    %v1658 = vunpack.c.l.b16 %v395
    %v1659 = vunpack.c.l.b16 %v396
    %v1660 = vunpack.c.l.b16 %v397
    %v1661 = vunpack.c.l.b16 %v398
    %v1662 = vunpack.c.l.b16 %v399
    %v1663 = vunpack.c.l.b16 %v400
    %v1664 = vunpack.c.l.b16 %v401
    %v1665 = vunpack.c.l.b16 %v402
    %v1666 = vunpack.c.l.b16 %v403
    %v1667 = vunpack.c.l.b16 %v404
    %v1668 = vunpack.c.l.b16 %v405
    %v1669 = vunpack.c.l.b16 %v406
    %v1670 = vunpack.c.l.b16 %v407
    %v1671 = vunpack.c.l.b16 %v408
    %v1672 = vunpack.c.l.b16 %v409
    %v1673 = vunpack.c.l.b16 %v410
    %v1674 = vunpack.c.l.b16 %v411
    %v1675 = vunpack.c.l.b16 %v412
    %v1676 = vunpack.c.l.b16 %v413
    %v1677 = vunpack.c.l.b16 %v414
    %v1678 = vunpack.c.l.b16 %v415
    %v1679 = vunpack.c.l.b16 %v416
    %v1680 = vunpack.c.l.b16 %v417
    %v1681 = vunpack.c.l.b16 %v418
    %v1682 = vunpack.c.l.b16 %v419
    %v1683 = vunpack.c.l.b16 %v420
    %v1684 = vunpack.c.l.b16 %v421
    %v1685 = vunpack.c.l.b16 %v422
    %v1686 = vunpack.c.l.b16 %v423
    %v1687 = vunpack.c.l.b16 %v424
    %v1688 = vunpack.c.l.b16 %v425
    %v1689 = vunpack.c.l.b16 %v426
    %v1690 = vunpack.c.l.b16 %v427
    %v1691 = vunpack.c.l.b16 %v428
    %v1692 = vunpack.c.l.b16 %v429
    %v1693 = vunpack.c.l.b16 %v430
    %v1694 = vunpack.c.l.b16 %v431
    %v1695 = vunpack.c.l.b16 %v432
    %v1696 = vunpack.c.l.b16 %v433
    %v1697 = vunpack.c.l.b16 %v434
    %v1698 = vunpack.c.l.b16 %v435
    %v1699 = vunpack.c.l.b16 %v436
    %v1700 = vunpack.c.l.b16 %v437
    %v1701 = vunpack.c.l.b16 %v438
    %v1702 = vunpack.c.l.b16 %v439
    %v1703 = vunpack.c.l.b16 %v440
    %v1704 = vunpack.c.l.b16 %v441
    %v1705 = vunpack.c.l.b16 %v442
    %v1706 = vunpack.c.l.b16 %v443
    %v1707 = vunpack.c.l.b16 %v444
    %v1708 = vunpack.c.l.b16 %v445
    %v1709 = vunpack.c.l.b16 %v446
    %v1710 = vunpack.c.l.b16 %v447
    %v1711 = vunpack.c.l.b16 %v448
    %v1712 = vunpack.c.l.b16 %v449
    %v1713 = vunpack.c.l.b16 %v450
    %v1714 = vunpack.c.l.b16 %v451
    %v1715 = vunpack.c.l.b16 %v452
    %v1716 = vunpack.c.l.b16 %v453
    %v1717 = vunpack.c.l.b16 %v454
    %v1718 = vunpack.c.l.b16 %v455
    %v1719 = vunpack.c.l.b16 %v456
    %v1720 = vunpack.c.l.b16 %v457
    %v1721 = vunpack.c.l.b16 %v458
    %v1722 = vunpack.c.l.b16 %v459
    %v1723 = vunpack.c.l.b16 %v460
    %v1724 = vunpack.c.l.b16 %v461
    %v1725 = vunpack.c.l.b16 %v462
    %v1726 = vunpack.c.l.b16 %v463
    %v1727 = vunpack.c.l.b16 %v464
    %v1728 = vunpack.c.l.b16 %v465
    %v1729 = vunpack.c.l.b16 %v466
    %v1730 = vunpack.c.l.b16 %v467
    %v1731 = vunpack.c.l.b16 %v468
    %v1732 = vunpack.c.l.b16 %v469
    %v1733 = vunpack.c.l.b16 %v470
    %v1734 = vunpack.c.l.b16 %v471
    %v1735 = vunpack.c.l.b16 %v472
    %v1736 = vunpack.c.l.b16 %v473
    %v1737 = vunpack.c.l.b16 %v474
    %v1738 = vunpack.c.l.b16 %v475
    %v1739 = vunpack.c.l.b16 %v476
    %v1740 = vunpack.c.l.b16 %v477
    %v1741 = vunpack.c.l.b16 %v478
    %v1742 = vunpack.c.l.b16 %v479
    %v1743 = vunpack.c.l.b16 %v480
    %v1744 = vunpack.c.l.b16 %v481
    %v1745 = vunpack.c.l.b16 %v482
    %v1746 = vunpack.c.l.b16 %v483
    %v1747 = vunpack.c.l.b16 %v484
    %v1748 = vunpack.c.l.b16 %v485
    %v1749 = vunpack.c.l.b16 %v486
    %v1750 = vunpack.c.l.b16 %v487
    %v1751 = vunpack.c.l.b16 %v488
    %v1752 = vunpack.c.l.b16 %v489
    %v1753 = vunpack.c.l.b16 %v490
    %v1754 = vunpack.c.l.b16 %v491
    %v1755 = vunpack.c.l.b16 %v492
    %v1756 = vunpack.c.l.b16 %v493
    %v1757 = vunpack.c.l.b16 %v494
    %v1758 = vunpack.c.l.b16 %v495
    %v1759 = vunpack.c.l.b16 %v496
    %v1760 = vunpack.c.l.b16 %v497
    %v1761 = vunpack.c.l.b16 %v498
    %v1762 = vunpack.c.l.b16 %v499
    %v1763 = vunpack.c.l.b16 %v500
    %v1764 = vunpack.c.l.b16 %v501
    %v1765 = vunpack.c.l.b16 %v502
    %v1766 = vunpack.c.l.b16 %v503
    %v1767 = vunpack.c.l.b16 %v504
    %v1768 = vunpack.c.l.b16 %v505
    %v1769 = vunpack.c.l.b16 %v506
    %v1770 = vunpack.c.l.b16 %v507
    %v1771 = vunpack.c.l.b16 %v508
    %v1772 = vunpack.c.l.b16 %v509
    %v1773 = vunpack.c.l.b16 %v510
    %v1774 = vunpack.c.l.b16 %v511
    %v1775 = vunpack.c.l.b16 %v512
    %v1776 = vunpack.c.l.b16 %v513
    %v1777 = vunpack.c.l.b16 %v514
    %v1778 = vunpack.c.l.b16 %v515
    %v1779 = vunpack.c.l.b16 %v516
    %v1780 = vunpack.c.l.b16 %v517
    %v1781 = vunpack.c.l.b16 %v518
    %v1782 = vunpack.c.l.b16 %v519
    %v1783 = vunpack.c.l.b16 %v520
    %v1784 = vunpack.c.l.b16 %v521
    %v1785 = vunpack.c.l.b16 %v522
    %v1786 = vunpack.c.l.b16 %v523
    %v1787 = vunpack.c.l.b16 %v524
    %v1788 = vunpack.c.l.b16 %v525
    %v1789 = vunpack.c.l.b16 %v526
    %v1790 = vunpack.c.l.b16 %v527
    %v1791 = vunpack.c.l.b16 %v528
    %v1792 = vunpack.c.l.b16 %v529
    %v1793 = vunpack.c.l.b16 %v530
    %v1794 = vunpack.c.l.b16 %v531
    %v1795 = vunpack.c.l.b16 %v532
    %v1796 = vunpack.c.l.b16 %v533
    %v1797 = vunpack.c.l.b16 %v534
    %v1798 = vunpack.c.l.b16 %v535
    %v1799 = vunpack.c.l.b16 %v536
    %v1800 = vunpack.c.l.b16 %v537
    %v1801 = vpack.c.b16 %v1290, %v1289
    %v1802 = vpack.c.b16 %v1292, %v1291
    %v1803 = vpack.c.b16 %v1294, %v1293
    %v1804 = vpack.c.b16 %v1296, %v1295
    %v1805 = vpack.c.b16 %v1298, %v1297
    %v1806 = vpack.c.b16 %v1300, %v1299
    %v1807 = vpack.c.b16 %v1302, %v1301
    %v1808 = vpack.c.b16 %v1304, %v1303
    %v1809 = vpack.c.b16 %v1306, %v1305
    %v1810 = vpack.c.b16 %v1308, %v1307
    %v1811 = vpack.c.b16 %v1310, %v1309
    %v1812 = vpack.c.b16 %v1312, %v1311
    %v1813 = vpack.c.b16 %v1314, %v1313
    %v1814 = vpack.c.b16 %v1316, %v1315
    %v1815 = vpack.c.b16 %v1318, %v1317
    %v1816 = vpack.c.b16 %v1320, %v1319
    %v1817 = vpack.c.b16 %v1322, %v1321
    %v1818 = vpack.c.b16 %v1324, %v1323
    %v1819 = vpack.c.b16 %v1326, %v1325
    %v1820 = vpack.c.b16 %v1328, %v1327
    %v1821 = vpack.c.b16 %v1330, %v1329
    %v1822 = vpack.c.b16 %v1332, %v1331
    %v1823 = vpack.c.b16 %v1334, %v1333
    %v1824 = vpack.c.b16 %v1336, %v1335
    %v1825 = vpack.c.b16 %v1338, %v1337
    %v1826 = vpack.c.b16 %v1340, %v1339
    %v1827 = vpack.c.b16 %v1342, %v1341
    %v1828 = vpack.c.b16 %v1344, %v1343
    %v1829 = vpack.c.b16 %v1346, %v1345
    %v1830 = vpack.c.b16 %v1348, %v1347
    %v1831 = vpack.c.b16 %v1350, %v1349
    %v1832 = vpack.c.b16 %v1352, %v1351
    %v1833 = vpack.c.b16 %v1354, %v1353
    %v1834 = vpack.c.b16 %v1356, %v1355
    %v1835 = vpack.c.b16 %v1358, %v1357
    %v1836 = vpack.c.b16 %v1360, %v1359
    %v1837 = vpack.c.b16 %v1362, %v1361
    %v1838 = vpack.c.b16 %v1364, %v1363
    %v1839 = vpack.c.b16 %v1366, %v1365
    %v1840 = vpack.c.b16 %v1368, %v1367
    %v1841 = vpack.c.b16 %v1370, %v1369
    %v1842 = vpack.c.b16 %v1372, %v1371
    %v1843 = vpack.c.b16 %v1374, %v1373
    %v1844 = vpack.c.b16 %v1376, %v1375
    %v1845 = vpack.c.b16 %v1378, %v1377
    %v1846 = vpack.c.b16 %v1380, %v1379
    %v1847 = vpack.c.b16 %v1382, %v1381
    %v1848 = vpack.c.b16 %v1384, %v1383
    %v1849 = vpack.c.b16 %v1386, %v1385
    %v1850 = vpack.c.b16 %v1388, %v1387
    %v1851 = vpack.c.b16 %v1390, %v1389
    %v1852 = vpack.c.b16 %v1392, %v1391
    %v1853 = vpack.c.b16 %v1394, %v1393
    %v1854 = vpack.c.b16 %v1396, %v1395
    %v1855 = vpack.c.b16 %v1398, %v1397
    %v1856 = vpack.c.b16 %v1400, %v1399
    %v1857 = vpack.c.b16 %v1402, %v1401
    %v1858 = vpack.c.b16 %v1404, %v1403
    %v1859 = vpack.c.b16 %v1406, %v1405
    %v1860 = vpack.c.b16 %v1408, %v1407
    %v1861 = vpack.c.b16 %v1410, %v1409
    %v1862 = vpack.c.b16 %v1412, %v1411
    %v1863 = vpack.c.b16 %v1414, %v1413
    %v1864 = vpack.c.b16 %v1416, %v1415
    %v1865 = vpack.c.b16 %v1418, %v1417
    %v1866 = vpack.c.b16 %v1420, %v1419
    %v1867 = vpack.c.b16 %v1422, %v1421
    %v1868 = vpack.c.b16 %v1424, %v1423
    %v1869 = vpack.c.b16 %v1426, %v1425
    %v1870 = vpack.c.b16 %v1428, %v1427
    %v1871 = vpack.c.b16 %v1430, %v1429
    %v1872 = vpack.c.b16 %v1432, %v1431
    %v1873 = vpack.c.b16 %v1434, %v1433
    %v1874 = vpack.c.b16 %v1436, %v1435
    %v1875 = vpack.c.b16 %v1438, %v1437
    %v1876 = vpack.c.b16 %v1440, %v1439
    %v1877 = vpack.c.b16 %v1442, %v1441
    %v1878 = vpack.c.b16 %v1444, %v1443
    %v1879 = vpack.c.b16 %v1446, %v1445
    %v1880 = vpack.c.b16 %v1448, %v1447
    %v1881 = vpack.c.b16 %v1450, %v1449
    %v1882 = vpack.c.b16 %v1452, %v1451
    %v1883 = vpack.c.b16 %v1454, %v1453
    %v1884 = vpack.c.b16 %v1456, %v1455
    %v1885 = vpack.c.b16 %v1458, %v1457
    %v1886 = vpack.c.b16 %v1460, %v1459
    %v1887 = vpack.c.b16 %v1462, %v1461
    %v1888 = vpack.c.b16 %v1464, %v1463
    %v1889 = vpack.c.b16 %v1466, %v1465
    %v1890 = vpack.c.b16 %v1468, %v1467
    %v1891 = vpack.c.b16 %v1470, %v1469
    %v1892 = vpack.c.b16 %v1472, %v1471
    %v1893 = vpack.c.b16 %v1474, %v1473
    %v1894 = vpack.c.b16 %v1476, %v1475
    %v1895 = vpack.c.b16 %v1478, %v1477
    %v1896 = vpack.c.b16 %v1480, %v1479
    %v1897 = vpack.c.b16 %v1482, %v1481
    %v1898 = vpack.c.b16 %v1484, %v1483
    %v1899 = vpack.c.b16 %v1486, %v1485
    %v1900 = vpack.c.b16 %v1488, %v1487
    %v1901 = vpack.c.b16 %v1490, %v1489
    %v1902 = vpack.c.b16 %v1492, %v1491
    %v1903 = vpack.c.b16 %v1494, %v1493
    %v1904 = vpack.c.b16 %v1496, %v1495
    %v1905 = vpack.c.b16 %v1498, %v1497
    %v1906 = vpack.c.b16 %v1500, %v1499
    %v1907 = vpack.c.b16 %v1502, %v1501
    %v1908 = vpack.c.b16 %v1504, %v1503
    %v1909 = vpack.c.b16 %v1506, %v1505
    %v1910 = vpack.c.b16 %v1508, %v1507
    %v1911 = vpack.c.b16 %v1510, %v1509
    %v1912 = vpack.c.b16 %v1512, %v1511
    %v1913 = vpack.c.b16 %v1514, %v1513
    %v1914 = vpack.c.b16 %v1516, %v1515
    %v1915 = vpack.c.b16 %v1518, %v1517
    %v1916 = vpack.c.b16 %v1520, %v1519
    %v1917 = vpack.c.b16 %v1522, %v1521
    %v1918 = vpack.c.b16 %v1524, %v1523
    %v1919 = vpack.c.b16 %v1526, %v1525
    %v1920 = vpack.c.b16 %v1528, %v1527
    %v1921 = vpack.c.b16 %v1530, %v1529
    %v1922 = vpack.c.b16 %v1532, %v1531
    %v1923 = vpack.c.b16 %v1534, %v1533
    %v1924 = vpack.c.b16 %v1536, %v1535
    %v1925 = vpack.c.b16 %v1538, %v1537
    %v1926 = vpack.c.b16 %v1540, %v1539
    %v1927 = vpack.c.b16 %v1542, %v1541
    %v1928 = vpack.c.b16 %v1544, %v1543
    %v1929 = vpack.c.b16 %v1546, %v1545
    %v1930 = vpack.c.b16 %v1548, %v1547
    %v1931 = vpack.c.b16 %v1550, %v1549
    %v1932 = vpack.c.b16 %v1552, %v1551
    %v1933 = vpack.c.b16 %v1554, %v1553
    %v1934 = vpack.c.b16 %v1556, %v1555
    %v1935 = vpack.c.b16 %v1558, %v1557
    %v1936 = vpack.c.b16 %v1560, %v1559
    %v1937 = vpack.c.b16 %v1562, %v1561
    %v1938 = vpack.c.b16 %v1564, %v1563
    %v1939 = vpack.c.b16 %v1566, %v1565
    %v1940 = vpack.c.b16 %v1568, %v1567
    %v1941 = vpack.c.b16 %v1570, %v1569
    %v1942 = vpack.c.b16 %v1572, %v1571
    %v1943 = vpack.c.b16 %v1574, %v1573
    %v1944 = vpack.c.b16 %v1576, %v1575
    %v1945 = vpack.c.b16 %v1578, %v1577
    %v1946 = vpack.c.b16 %v1580, %v1579
    %v1947 = vpack.c.b16 %v1582, %v1581
    %v1948 = vpack.c.b16 %v1584, %v1583
    %v1949 = vpack.c.b16 %v1586, %v1585
    %v1950 = vpack.c.b16 %v1588, %v1587
    %v1951 = vpack.c.b16 %v1590, %v1589
    %v1952 = vpack.c.b16 %v1592, %v1591
    %v1953 = vpack.c.b16 %v1594, %v1593
    %v1954 = vpack.c.b16 %v1596, %v1595
    %v1955 = vpack.c.b16 %v1598, %v1597
    %v1956 = vpack.c.b16 %v1600, %v1599
    %v1957 = vpack.c.b16 %v1602, %v1601
    %v1958 = vpack.c.b16 %v1604, %v1603
    %v1959 = vpack.c.b16 %v1606, %v1605
    %v1960 = vpack.c.b16 %v1608, %v1607
    %v1961 = vpack.c.b16 %v1610, %v1609
    %v1962 = vpack.c.b16 %v1612, %v1611
    %v1963 = vpack.c.b16 %v1614, %v1613
    %v1964 = vpack.c.b16 %v1616, %v1615
    %v1965 = vpack.c.b16 %v1618, %v1617
    %v1966 = vpack.c.b16 %v1620, %v1619
    %v1967 = vpack.c.b16 %v1622, %v1621
    %v1968 = vpack.c.b16 %v1624, %v1623
    %v1969 = vpack.c.b16 %v1626, %v1625
    %v1970 = vpack.c.b16 %v1628, %v1627
    %v1971 = vpack.c.b16 %v1630, %v1629
    %v1972 = vpack.c.b16 %v1632, %v1631
    %v1973 = vpack.c.b16 %v1634, %v1633
    %v1974 = vpack.c.b16 %v1636, %v1635
    %v1975 = vpack.c.b16 %v1638, %v1637
    %v1976 = vpack.c.b16 %v1640, %v1639
    %v1977 = vpack.c.b16 %v1642, %v1641
    %v1978 = vpack.c.b16 %v1644, %v1643
    %v1979 = vpack.c.b16 %v1646, %v1645
    %v1980 = vpack.c.b16 %v1648, %v1647
    %v1981 = vpack.c.b16 %v1650, %v1649
    %v1982 = vpack.c.b16 %v1652, %v1651
    %v1983 = vpack.c.b16 %v1654, %v1653
    %v1984 = vpack.c.b16 %v1656, %v1655
    %v1985 = vpack.c.b16 %v1658, %v1657
    %v1986 = vpack.c.b16 %v1660, %v1659
    %v1987 = vpack.c.b16 %v1662, %v1661
    %v1988 = vpack.c.b16 %v1664, %v1663
    %v1989 = vpack.c.b16 %v1666, %v1665
    %v1990 = vpack.c.b16 %v1668, %v1667
    %v1991 = vpack.c.b16 %v1670, %v1669
    %v1992 = vpack.c.b16 %v1672, %v1671
    %v1993 = vpack.c.b16 %v1674, %v1673
    %v1994 = vpack.c.b16 %v1676, %v1675
    %v1995 = vpack.c.b16 %v1678, %v1677
    %v1996 = vpack.c.b16 %v1680, %v1679
    %v1997 = vpack.c.b16 %v1682, %v1681
    %v1998 = vpack.c.b16 %v1684, %v1683
    %v1999 = vpack.c.b16 %v1686, %v1685
    %v2000 = vpack.c.b16 %v1688, %v1687
    %v2001 = vpack.c.b16 %v1690, %v1689
    %v2002 = vpack.c.b16 %v1692, %v1691
    %v2003 = vpack.c.b16 %v1694, %v1693
    %v2004 = vpack.c.b16 %v1696, %v1695
    %v2005 = vpack.c.b16 %v1698, %v1697
    %v2006 = vpack.c.b16 %v1700, %v1699
    %v2007 = vpack.c.b16 %v1702, %v1701
    %v2008 = vpack.c.b16 %v1704, %v1703
    %v2009 = vpack.c.b16 %v1706, %v1705
    %v2010 = vpack.c.b16 %v1708, %v1707
    %v2011 = vpack.c.b16 %v1710, %v1709
    %v2012 = vpack.c.b16 %v1712, %v1711
    %v2013 = vpack.c.b16 %v1714, %v1713
    %v2014 = vpack.c.b16 %v1716, %v1715
    %v2015 = vpack.c.b16 %v1718, %v1717
    %v2016 = vpack.c.b16 %v1720, %v1719
    %v2017 = vpack.c.b16 %v1722, %v1721
    %v2018 = vpack.c.b16 %v1724, %v1723
    %v2019 = vpack.c.b16 %v1726, %v1725
    %v2020 = vpack.c.b16 %v1728, %v1727
    %v2021 = vpack.c.b16 %v1730, %v1729
    %v2022 = vpack.c.b16 %v1732, %v1731
    %v2023 = vpack.c.b16 %v1734, %v1733
    %v2024 = vpack.c.b16 %v1736, %v1735
    %v2025 = vpack.c.b16 %v1738, %v1737
    %v2026 = vpack.c.b16 %v1740, %v1739
    %v2027 = vpack.c.b16 %v1742, %v1741
    %v2028 = vpack.c.b16 %v1744, %v1743
    %v2029 = vpack.c.b16 %v1746, %v1745
    %v2030 = vpack.c.b16 %v1748, %v1747
    %v2031 = vpack.c.b16 %v1750, %v1749
    %v2032 = vpack.c.b16 %v1752, %v1751
    %v2033 = vpack.c.b16 %v1754, %v1753
    %v2034 = vpack.c.b16 %v1756, %v1755
    %v2035 = vpack.c.b16 %v1758, %v1757
    %v2036 = vpack.c.b16 %v1760, %v1759
    %v2037 = vpack.c.b16 %v1762, %v1761
    %v2038 = vpack.c.b16 %v1764, %v1763
    %v2039 = vpack.c.b16 %v1766, %v1765
    %v2040 = vpack.c.b16 %v1768, %v1767
    %v2041 = vpack.c.b16 %v1770, %v1769
    %v2042 = vpack.c.b16 %v1772, %v1771
    %v2043 = vpack.c.b16 %v1774, %v1773
    %v2044 = vpack.c.b16 %v1776, %v1775
    %v2045 = vpack.c.b16 %v1778, %v1777
    %v2046 = vpack.c.b16 %v1780, %v1779
    %v2047 = vpack.c.b16 %v1782, %v1781
    %v2048 = vpack.c.b16 %v1784, %v1783
    %v2049 = vpack.c.b16 %v1786, %v1785
    %v2050 = vpack.c.b16 %v1788, %v1787
    %v2051 = vpack.c.b16 %v1790, %v1789
    %v2052 = vpack.c.b16 %v1792, %v1791
    %v2053 = vpack.c.b16 %v1794, %v1793
    %v2054 = vpack.c.b16 %v1796, %v1795
    %v2055 = vpack.c.b16 %v1798, %v1797
    %v2056 = vpack.c.b16 %v1800, %v1799
    %2313 = vmatprep.subr.bf16.mxu0 0
    %2314 = vmatpush1.bf16.msra.mxu0 %v1808
    %2315 = vmatprep.subr.bf16.mxu0 0
    %2316 = vmatpush1.bf16.msra.mxu0 %v1807
    %2317 = vmatprep.subr.bf16.mxu0 0
    %2318 = vmatpush1.bf16.msra.mxu0 %v1806
    %2319 = vmatprep.subr.bf16.mxu0 0
    %2320 = vmatpush1.bf16.msra.mxu0 %v1805
    %2321 = vmatprep.subr.bf16.mxu0 0
    %2322 = vmatpush1.bf16.msra.mxu0 %v1804
    %2323 = vmatprep.subr.bf16.mxu0 0
    %2324 = vmatpush1.bf16.msra.mxu0 %v1803
    %2325 = vmatprep.subr.bf16.mxu0 0
    %2326 = vmatpush1.bf16.msra.mxu0 %v1802
    %2327 = vmatprep.subr.bf16.mxu0 0
    %2328 = vmatpush1.bf16.msra.mxu0 %v1801
    %2329 = vmatprep.subr.bf16.mxu0 0
    %2330 = vmatpush2.bf16.msra.mxu0 %v1816
    %2331 = vmatprep.subr.bf16.mxu0 0
    %2332 = vmatpush2.bf16.msra.mxu0 %v1815
    %2333 = vmatprep.subr.bf16.mxu0 0
    %2334 = vmatpush2.bf16.msra.mxu0 %v1814
    %2335 = vmatprep.subr.bf16.mxu0 0
    %2336 = vmatpush2.bf16.msra.mxu0 %v1813
    %2337 = vmatprep.subr.bf16.mxu0 0
    %2338 = vmatpush2.bf16.msra.mxu0 %v1812
    %2339 = vmatprep.subr.bf16.mxu0 0
    %2340 = vmatpush2.bf16.msra.mxu0 %v1811
    %2341 = vmatprep.subr.bf16.mxu0 0
    %2342 = vmatpush2.bf16.msra.mxu0 %v1810
    %2343 = vmatprep.subr.bf16.mxu0 0
    %2344 = vmatpush2.bf16.msra.mxu0 %v1809
    %2345 = vmatprep.mubr.bf16.mxu0 %v586
    %2346 = vmatmul.mubr.bf16.gmra.mxu0 %v572
    %v2347 = vpop.f32.mrf.mxu0
    %v2348 = vadd.f32 %v543, %v2347
    %v2349 = vpop.f32.mrf.mxu0
    %v2350 = vpop.f32.mrf.mxu0
    %v2351 = vpop.f32.mrf.mxu0
    %2352 = vdwg.mxu0
    %2353 = vmatprep.subr.bf16.mxu0 0
    %2354 = vmatpush1.bf16.msra.mxu0 %v1824
    %2355 = vmatprep.subr.bf16.mxu0 0
    %2356 = vmatpush1.bf16.msra.mxu0 %v1823
    %2357 = vmatprep.subr.bf16.mxu0 0
    %2358 = vmatpush1.bf16.msra.mxu0 %v1822
    %2359 = vmatprep.subr.bf16.mxu0 0
    %2360 = vmatpush1.bf16.msra.mxu0 %v1821
    %2361 = vmatprep.subr.bf16.mxu0 0
    %2362 = vmatpush1.bf16.msra.mxu0 %v1820
    %2363 = vmatprep.subr.bf16.mxu0 0
    %2364 = vmatpush1.bf16.msra.mxu0 %v1819
    %2365 = vmatprep.subr.bf16.mxu0 0
    %2366 = vmatpush1.bf16.msra.mxu0 %v1818
    %2367 = vmatprep.subr.bf16.mxu0 0
    %2368 = vmatpush1.bf16.msra.mxu0 %v1817
    %2369 = vmatprep.subr.bf16.mxu0 0
    %2370 = vmatpush2.bf16.msra.mxu0 %v1832
    %2371 = vmatprep.subr.bf16.mxu0 0
    %2372 = vmatpush2.bf16.msra.mxu0 %v1831
    %2373 = vmatprep.subr.bf16.mxu0 0
    %2374 = vmatpush2.bf16.msra.mxu0 %v1830
    %2375 = vmatprep.subr.bf16.mxu0 0
    %2376 = vmatpush2.bf16.msra.mxu0 %v1829
    %2377 = vmatprep.subr.bf16.mxu0 0
    %2378 = vmatpush2.bf16.msra.mxu0 %v1828
    %2379 = vmatprep.subr.bf16.mxu0 0
    %2380 = vmatpush2.bf16.msra.mxu0 %v1827
    %2381 = vmatprep.subr.bf16.mxu0 0
    %2382 = vmatpush2.bf16.msra.mxu0 %v1826
    %2383 = vmatprep.subr.bf16.mxu0 0
    %2384 = vmatpush2.bf16.msra.mxu0 %v1825
    %2385 = vmatprep.mubr.bf16.mxu0 %v596
    %2386 = vmatmul.mubr.bf16.gmra.mxu0 %v594
    %v2387 = vpop.f32.mrf.mxu0
    %v2388 = vadd.f32 %v2348, %v2387
    %v2389 = vpop.f32.mrf.mxu0
    %v2390 = vpop.f32.mrf.mxu0
    %v2391 = vpop.f32.mrf.mxu0
    %2392 = vdwg.mxu0
    %2393 = vmatprep.subr.bf16.mxu0 0
    %2394 = vmatpush1.bf16.msra.mxu0 %v1840
    %2395 = vmatprep.subr.bf16.mxu0 0
    %2396 = vmatpush1.bf16.msra.mxu0 %v1839
    %2397 = vmatprep.subr.bf16.mxu0 0
    %2398 = vmatpush1.bf16.msra.mxu0 %v1838
    %2399 = vmatprep.subr.bf16.mxu0 0
    %2400 = vmatpush1.bf16.msra.mxu0 %v1837
    %2401 = vmatprep.subr.bf16.mxu0 0
    %2402 = vmatpush1.bf16.msra.mxu0 %v1836
    %2403 = vmatprep.subr.bf16.mxu0 0
    %2404 = vmatpush1.bf16.msra.mxu0 %v1835
    %2405 = vmatprep.subr.bf16.mxu0 0
    %2406 = vmatpush1.bf16.msra.mxu0 %v1834
    %2407 = vmatprep.subr.bf16.mxu0 0
    %2408 = vmatpush1.bf16.msra.mxu0 %v1833
    %2409 = vmatprep.subr.bf16.mxu0 0
    %2410 = vmatpush2.bf16.msra.mxu0 %v1848
    %2411 = vmatprep.subr.bf16.mxu0 0
    %2412 = vmatpush2.bf16.msra.mxu0 %v1847
    %2413 = vmatprep.subr.bf16.mxu0 0
    %2414 = vmatpush2.bf16.msra.mxu0 %v1846
    %2415 = vmatprep.subr.bf16.mxu0 0
    %2416 = vmatpush2.bf16.msra.mxu0 %v1845
    %2417 = vmatprep.subr.bf16.mxu0 0
    %2418 = vmatpush2.bf16.msra.mxu0 %v1844
    %2419 = vmatprep.subr.bf16.mxu0 0
    %2420 = vmatpush2.bf16.msra.mxu0 %v1843
    %2421 = vmatprep.subr.bf16.mxu0 0
    %2422 = vmatpush2.bf16.msra.mxu0 %v1842
    %2423 = vmatprep.subr.bf16.mxu0 0
    %2424 = vmatpush2.bf16.msra.mxu0 %v1841
    %2425 = vmatprep.mubr.bf16.mxu0 %v593
    %2426 = vmatmul.mubr.bf16.gmra.mxu0 %v579
    %v2427 = vpop.f32.mrf.mxu0
    %v2428 = vadd.f32 %v2388, %v2427
    %v2429 = vpop.f32.mrf.mxu0
    %v2430 = vpop.f32.mrf.mxu0
    %v2431 = vpop.f32.mrf.mxu0
    %2432 = vdwg.mxu0
    %2433 = vmatprep.subr.bf16.mxu0 0
    %2434 = vmatpush1.bf16.msra.mxu0 %v1856
    %2435 = vmatprep.subr.bf16.mxu0 0
    %2436 = vmatpush1.bf16.msra.mxu0 %v1855
    %2437 = vmatprep.subr.bf16.mxu0 0
    %2438 = vmatpush1.bf16.msra.mxu0 %v1854
    %2439 = vmatprep.subr.bf16.mxu0 0
    %2440 = vmatpush1.bf16.msra.mxu0 %v1853
    %2441 = vmatprep.subr.bf16.mxu0 0
    %2442 = vmatpush1.bf16.msra.mxu0 %v1852
    %2443 = vmatprep.subr.bf16.mxu0 0
    %2444 = vmatpush1.bf16.msra.mxu0 %v1851
    %2445 = vmatprep.subr.bf16.mxu0 0
    %2446 = vmatpush1.bf16.msra.mxu0 %v1850
    %2447 = vmatprep.subr.bf16.mxu0 0
    %2448 = vmatpush1.bf16.msra.mxu0 %v1849
    %2449 = vmatprep.subr.bf16.mxu0 0
    %2450 = vmatpush2.bf16.msra.mxu0 %v1864
    %2451 = vmatprep.subr.bf16.mxu0 0
    %2452 = vmatpush2.bf16.msra.mxu0 %v1863
    %2453 = vmatprep.subr.bf16.mxu0 0
    %2454 = vmatpush2.bf16.msra.mxu0 %v1862
    %2455 = vmatprep.subr.bf16.mxu0 0
    %2456 = vmatpush2.bf16.msra.mxu0 %v1861
    %2457 = vmatprep.subr.bf16.mxu0 0
    %2458 = vmatpush2.bf16.msra.mxu0 %v1860
    %2459 = vmatprep.subr.bf16.mxu0 0
    %2460 = vmatpush2.bf16.msra.mxu0 %v1859
    %2461 = vmatprep.subr.bf16.mxu0 0
    %2462 = vmatpush2.bf16.msra.mxu0 %v1858
    %2463 = vmatprep.subr.bf16.mxu0 0
    %2464 = vmatpush2.bf16.msra.mxu0 %v1857
    %2465 = vmatprep.mubr.bf16.mxu0 %v597
    %2466 = vmatmul.mubr.bf16.gmra.mxu0 %v595
    %v2467 = vpop.f32.mrf.mxu0
    %v2468 = vadd.f32 %v2428, %v2467
    %v2469 = vpop.f32.mrf.mxu0
    %v2470 = vpop.f32.mrf.mxu0
    %v2471 = vpop.f32.mrf.mxu0
    %2472 = vdwg.mxu0
    %2473 = vmatprep.subr.bf16.mxu0 0
    %2474 = vmatpush1.bf16.msra.mxu0 %v1872
    %2475 = vmatprep.subr.bf16.mxu0 0
    %2476 = vmatpush1.bf16.msra.mxu0 %v1871
    %2477 = vmatprep.subr.bf16.mxu0 0
    %2478 = vmatpush1.bf16.msra.mxu0 %v1870
    %2479 = vmatprep.subr.bf16.mxu0 0
    %2480 = vmatpush1.bf16.msra.mxu0 %v1869
    %2481 = vmatprep.subr.bf16.mxu0 0
    %2482 = vmatpush1.bf16.msra.mxu0 %v1868
    %2483 = vmatprep.subr.bf16.mxu0 0
    %2484 = vmatpush1.bf16.msra.mxu0 %v1867
    %2485 = vmatprep.subr.bf16.mxu0 0
    %2486 = vmatpush1.bf16.msra.mxu0 %v1866
    %2487 = vmatprep.subr.bf16.mxu0 0
    %2488 = vmatpush1.bf16.msra.mxu0 %v1865
    %2489 = vmatprep.subr.bf16.mxu0 0
    %2490 = vmatpush2.bf16.msra.mxu0 %v1880
    %2491 = vmatprep.subr.bf16.mxu0 0
    %2492 = vmatpush2.bf16.msra.mxu0 %v1879
    %2493 = vmatprep.subr.bf16.mxu0 0
    %2494 = vmatpush2.bf16.msra.mxu0 %v1878
    %2495 = vmatprep.subr.bf16.mxu0 0
    %2496 = vmatpush2.bf16.msra.mxu0 %v1877
    %2497 = vmatprep.subr.bf16.mxu0 0
    %2498 = vmatpush2.bf16.msra.mxu0 %v1876
    %2499 = vmatprep.subr.bf16.mxu0 0
    %2500 = vmatpush2.bf16.msra.mxu0 %v1875
    %2501 = vmatprep.subr.bf16.mxu0 0
    %2502 = vmatpush2.bf16.msra.mxu0 %v1874
    %2503 = vmatprep.subr.bf16.mxu0 0
    %2504 = vmatpush2.bf16.msra.mxu0 %v1873
    %2505 = vmatprep.mubr.bf16.mxu0 %v635
    %2506 = vmatmul.mubr.bf16.gmra.mxu0 %v621
    %v2507 = vpop.f32.mrf.mxu0
    %v2508 = vadd.f32 %v2468, %v2507
    %v2509 = vpop.f32.mrf.mxu0
    %v2510 = vpop.f32.mrf.mxu0
    %v2511 = vpop.f32.mrf.mxu0
    %2512 = vdwg.mxu0
    %2513 = vmatprep.subr.bf16.mxu0 0
    %2514 = vmatpush1.bf16.msra.mxu0 %v1888
    %2515 = vmatprep.subr.bf16.mxu0 0
    %2516 = vmatpush1.bf16.msra.mxu0 %v1887
    %2517 = vmatprep.subr.bf16.mxu0 0
    %2518 = vmatpush1.bf16.msra.mxu0 %v1886
    %2519 = vmatprep.subr.bf16.mxu0 0
    %2520 = vmatpush1.bf16.msra.mxu0 %v1885
    %2521 = vmatprep.subr.bf16.mxu0 0
    %2522 = vmatpush1.bf16.msra.mxu0 %v1884
    %2523 = vmatprep.subr.bf16.mxu0 0
    %2524 = vmatpush1.bf16.msra.mxu0 %v1883
    %2525 = vmatprep.subr.bf16.mxu0 0
    %2526 = vmatpush1.bf16.msra.mxu0 %v1882
    %2527 = vmatprep.subr.bf16.mxu0 0
    %2528 = vmatpush1.bf16.msra.mxu0 %v1881
    %2529 = vmatprep.subr.bf16.mxu0 0
    %2530 = vmatpush2.bf16.msra.mxu0 %v1896
    %2531 = vmatprep.subr.bf16.mxu0 0
    %2532 = vmatpush2.bf16.msra.mxu0 %v1895
    %2533 = vmatprep.subr.bf16.mxu0 0
    %2534 = vmatpush2.bf16.msra.mxu0 %v1894
    %2535 = vmatprep.subr.bf16.mxu0 0
    %2536 = vmatpush2.bf16.msra.mxu0 %v1893
    %2537 = vmatprep.subr.bf16.mxu0 0
    %2538 = vmatpush2.bf16.msra.mxu0 %v1892
    %2539 = vmatprep.subr.bf16.mxu0 0
    %2540 = vmatpush2.bf16.msra.mxu0 %v1891
    %2541 = vmatprep.subr.bf16.mxu0 0
    %2542 = vmatpush2.bf16.msra.mxu0 %v1890
    %2543 = vmatprep.subr.bf16.mxu0 0
    %2544 = vmatpush2.bf16.msra.mxu0 %v1889
    %2545 = vmatprep.mubr.bf16.mxu0 %v645
    %2546 = vmatmul.mubr.bf16.gmra.mxu0 %v643
    %v2547 = vpop.f32.mrf.mxu0
    %v2548 = vadd.f32 %v2508, %v2547
    %v2549 = vpop.f32.mrf.mxu0
    %v2550 = vpop.f32.mrf.mxu0
    %v2551 = vpop.f32.mrf.mxu0
    %2552 = vdwg.mxu0
    %2553 = vmatprep.subr.bf16.mxu0 0
    %2554 = vmatpush1.bf16.msra.mxu0 %v1904
    %2555 = vmatprep.subr.bf16.mxu0 0
    %2556 = vmatpush1.bf16.msra.mxu0 %v1903
    %2557 = vmatprep.subr.bf16.mxu0 0
    %2558 = vmatpush1.bf16.msra.mxu0 %v1902
    %2559 = vmatprep.subr.bf16.mxu0 0
    %2560 = vmatpush1.bf16.msra.mxu0 %v1901
    %2561 = vmatprep.subr.bf16.mxu0 0
    %2562 = vmatpush1.bf16.msra.mxu0 %v1900
    %2563 = vmatprep.subr.bf16.mxu0 0
    %2564 = vmatpush1.bf16.msra.mxu0 %v1899
    %2565 = vmatprep.subr.bf16.mxu0 0
    %2566 = vmatpush1.bf16.msra.mxu0 %v1898
    %2567 = vmatprep.subr.bf16.mxu0 0
    %2568 = vmatpush1.bf16.msra.mxu0 %v1897
    %2569 = vmatprep.subr.bf16.mxu0 0
    %2570 = vmatpush2.bf16.msra.mxu0 %v1912
    %2571 = vmatprep.subr.bf16.mxu0 0
    %2572 = vmatpush2.bf16.msra.mxu0 %v1911
    %2573 = vmatprep.subr.bf16.mxu0 0
    %2574 = vmatpush2.bf16.msra.mxu0 %v1910
    %2575 = vmatprep.subr.bf16.mxu0 0
    %2576 = vmatpush2.bf16.msra.mxu0 %v1909
    %2577 = vmatprep.subr.bf16.mxu0 0
    %2578 = vmatpush2.bf16.msra.mxu0 %v1908
    %2579 = vmatprep.subr.bf16.mxu0 0
    %2580 = vmatpush2.bf16.msra.mxu0 %v1907
    %2581 = vmatprep.subr.bf16.mxu0 0
    %2582 = vmatpush2.bf16.msra.mxu0 %v1906
    %2583 = vmatprep.subr.bf16.mxu0 0
    %2584 = vmatpush2.bf16.msra.mxu0 %v1905
    %2585 = vmatprep.mubr.bf16.mxu0 %v642
    %2586 = vmatmul.mubr.bf16.gmra.mxu0 %v628
    %v2587 = vpop.f32.mrf.mxu0
    %v2588 = vadd.f32 %v2548, %v2587
    %v2589 = vpop.f32.mrf.mxu0
    %v2590 = vpop.f32.mrf.mxu0
    %v2591 = vpop.f32.mrf.mxu0
    %2592 = vdwg.mxu0
    %2593 = vmatprep.subr.bf16.mxu0 0
    %2594 = vmatpush1.bf16.msra.mxu0 %v1920
    %2595 = vmatprep.subr.bf16.mxu0 0
    %2596 = vmatpush1.bf16.msra.mxu0 %v1919
    %2597 = vmatprep.subr.bf16.mxu0 0
    %2598 = vmatpush1.bf16.msra.mxu0 %v1918
    %2599 = vmatprep.subr.bf16.mxu0 0
    %2600 = vmatpush1.bf16.msra.mxu0 %v1917
    %2601 = vmatprep.subr.bf16.mxu0 0
    %2602 = vmatpush1.bf16.msra.mxu0 %v1916
    %2603 = vmatprep.subr.bf16.mxu0 0
    %2604 = vmatpush1.bf16.msra.mxu0 %v1915
    %2605 = vmatprep.subr.bf16.mxu0 0
    %2606 = vmatpush1.bf16.msra.mxu0 %v1914
    %2607 = vmatprep.subr.bf16.mxu0 0
    %2608 = vmatpush1.bf16.msra.mxu0 %v1913
    %2609 = vmatprep.subr.bf16.mxu0 0
    %2610 = vmatpush2.bf16.msra.mxu0 %v1928
    %2611 = vmatprep.subr.bf16.mxu0 0
    %2612 = vmatpush2.bf16.msra.mxu0 %v1927
    %2613 = vmatprep.subr.bf16.mxu0 0
    %2614 = vmatpush2.bf16.msra.mxu0 %v1926
    %2615 = vmatprep.subr.bf16.mxu0 0
    %2616 = vmatpush2.bf16.msra.mxu0 %v1925
    %2617 = vmatprep.subr.bf16.mxu0 0
    %2618 = vmatpush2.bf16.msra.mxu0 %v1924
    %2619 = vmatprep.subr.bf16.mxu0 0
    %2620 = vmatpush2.bf16.msra.mxu0 %v1923
    %2621 = vmatprep.subr.bf16.mxu0 0
    %2622 = vmatpush2.bf16.msra.mxu0 %v1922
    %2623 = vmatprep.subr.bf16.mxu0 0
    %2624 = vmatpush2.bf16.msra.mxu0 %v1921
    %2625 = vmatprep.mubr.bf16.mxu0 %v646
    %2626 = vmatmul.mubr.bf16.gmra.mxu0 %v644
    %v2627 = vpop.f32.mrf.mxu0
    %v2628 = vadd.f32 %v2588, %v2627
    %v2629 = vpop.f32.mrf.mxu0
    %v2630 = vpop.f32.mrf.mxu0
    %v2631 = vpop.f32.mrf.mxu0
    %2632 = vdwg.mxu0
    %2633 = vmatprep.subr.bf16.mxu0 0
    %2634 = vmatpush1.bf16.msra.mxu0 %v1936
    %2635 = vmatprep.subr.bf16.mxu0 0
    %2636 = vmatpush1.bf16.msra.mxu0 %v1935
    %2637 = vmatprep.subr.bf16.mxu0 0
    %2638 = vmatpush1.bf16.msra.mxu0 %v1934
    %2639 = vmatprep.subr.bf16.mxu0 0
    %2640 = vmatpush1.bf16.msra.mxu0 %v1933
    %2641 = vmatprep.subr.bf16.mxu0 0
    %2642 = vmatpush1.bf16.msra.mxu0 %v1932
    %2643 = vmatprep.subr.bf16.mxu0 0
    %2644 = vmatpush1.bf16.msra.mxu0 %v1931
    %2645 = vmatprep.subr.bf16.mxu0 0
    %2646 = vmatpush1.bf16.msra.mxu0 %v1930
    %2647 = vmatprep.subr.bf16.mxu0 0
    %2648 = vmatpush1.bf16.msra.mxu0 %v1929
    %2649 = vmatprep.subr.bf16.mxu0 0
    %2650 = vmatpush2.bf16.msra.mxu0 %v1944
    %2651 = vmatprep.subr.bf16.mxu0 0
    %2652 = vmatpush2.bf16.msra.mxu0 %v1943
    %2653 = vmatprep.subr.bf16.mxu0 0
    %2654 = vmatpush2.bf16.msra.mxu0 %v1942
    %2655 = vmatprep.subr.bf16.mxu0 0
    %2656 = vmatpush2.bf16.msra.mxu0 %v1941
    %2657 = vmatprep.subr.bf16.mxu0 0
    %2658 = vmatpush2.bf16.msra.mxu0 %v1940
    %2659 = vmatprep.subr.bf16.mxu0 0
    %2660 = vmatpush2.bf16.msra.mxu0 %v1939
    %2661 = vmatprep.subr.bf16.mxu0 0
    %2662 = vmatpush2.bf16.msra.mxu0 %v1938
    %2663 = vmatprep.subr.bf16.mxu0 0
    %2664 = vmatpush2.bf16.msra.mxu0 %v1937
    %2665 = vmatprep.mubr.bf16.mxu0 %v684
    %2666 = vmatmul.mubr.bf16.gmra.mxu0 %v670
    %v2667 = vpop.f32.mrf.mxu0
    %v2668 = vadd.f32 %v2628, %v2667
    %v2669 = vpop.f32.mrf.mxu0
    %v2670 = vpop.f32.mrf.mxu0
    %v2671 = vpop.f32.mrf.mxu0
    %2672 = vdwg.mxu0
    %2673 = vmatprep.subr.bf16.mxu0 0
    %2674 = vmatpush1.bf16.msra.mxu0 %v1952
    %2675 = vmatprep.subr.bf16.mxu0 0
    %2676 = vmatpush1.bf16.msra.mxu0 %v1951
    %2677 = vmatprep.subr.bf16.mxu0 0
    %2678 = vmatpush1.bf16.msra.mxu0 %v1950
    %2679 = vmatprep.subr.bf16.mxu0 0
    %2680 = vmatpush1.bf16.msra.mxu0 %v1949
    %2681 = vmatprep.subr.bf16.mxu0 0
    %2682 = vmatpush1.bf16.msra.mxu0 %v1948
    %2683 = vmatprep.subr.bf16.mxu0 0
    %2684 = vmatpush1.bf16.msra.mxu0 %v1947
    %2685 = vmatprep.subr.bf16.mxu0 0
    %2686 = vmatpush1.bf16.msra.mxu0 %v1946
    %2687 = vmatprep.subr.bf16.mxu0 0
    %2688 = vmatpush1.bf16.msra.mxu0 %v1945
    %2689 = vmatprep.subr.bf16.mxu0 0
    %2690 = vmatpush2.bf16.msra.mxu0 %v1960
    %2691 = vmatprep.subr.bf16.mxu0 0
    %2692 = vmatpush2.bf16.msra.mxu0 %v1959
    %2693 = vmatprep.subr.bf16.mxu0 0
    %2694 = vmatpush2.bf16.msra.mxu0 %v1958
    %2695 = vmatprep.subr.bf16.mxu0 0
    %2696 = vmatpush2.bf16.msra.mxu0 %v1957
    %2697 = vmatprep.subr.bf16.mxu0 0
    %2698 = vmatpush2.bf16.msra.mxu0 %v1956
    %2699 = vmatprep.subr.bf16.mxu0 0
    %2700 = vmatpush2.bf16.msra.mxu0 %v1955
    %2701 = vmatprep.subr.bf16.mxu0 0
    %2702 = vmatpush2.bf16.msra.mxu0 %v1954
    %2703 = vmatprep.subr.bf16.mxu0 0
    %2704 = vmatpush2.bf16.msra.mxu0 %v1953
    %2705 = vmatprep.mubr.bf16.mxu0 %v694
    %2706 = vmatmul.mubr.bf16.gmra.mxu0 %v692
    %v2707 = vpop.f32.mrf.mxu0
    %v2708 = vadd.f32 %v2668, %v2707
    %v2709 = vpop.f32.mrf.mxu0
    %v2710 = vpop.f32.mrf.mxu0
    %v2711 = vpop.f32.mrf.mxu0
    %2712 = vdwg.mxu0
    %2713 = vmatprep.subr.bf16.mxu0 0
    %2714 = vmatpush1.bf16.msra.mxu0 %v1968
    %2715 = vmatprep.subr.bf16.mxu0 0
    %2716 = vmatpush1.bf16.msra.mxu0 %v1967
    %2717 = vmatprep.subr.bf16.mxu0 0
    %2718 = vmatpush1.bf16.msra.mxu0 %v1966
    %2719 = vmatprep.subr.bf16.mxu0 0
    %2720 = vmatpush1.bf16.msra.mxu0 %v1965
    %2721 = vmatprep.subr.bf16.mxu0 0
    %2722 = vmatpush1.bf16.msra.mxu0 %v1964
    %2723 = vmatprep.subr.bf16.mxu0 0
    %2724 = vmatpush1.bf16.msra.mxu0 %v1963
    %2725 = vmatprep.subr.bf16.mxu0 0
    %2726 = vmatpush1.bf16.msra.mxu0 %v1962
    %2727 = vmatprep.subr.bf16.mxu0 0
    %2728 = vmatpush1.bf16.msra.mxu0 %v1961
    %2729 = vmatprep.subr.bf16.mxu0 0
    %2730 = vmatpush2.bf16.msra.mxu0 %v1976
    %2731 = vmatprep.subr.bf16.mxu0 0
    %2732 = vmatpush2.bf16.msra.mxu0 %v1975
    %2733 = vmatprep.subr.bf16.mxu0 0
    %2734 = vmatpush2.bf16.msra.mxu0 %v1974
    %2735 = vmatprep.subr.bf16.mxu0 0
    %2736 = vmatpush2.bf16.msra.mxu0 %v1973
    %2737 = vmatprep.subr.bf16.mxu0 0
    %2738 = vmatpush2.bf16.msra.mxu0 %v1972
    %2739 = vmatprep.subr.bf16.mxu0 0
    %2740 = vmatpush2.bf16.msra.mxu0 %v1971
    %2741 = vmatprep.subr.bf16.mxu0 0
    %2742 = vmatpush2.bf16.msra.mxu0 %v1970
    %2743 = vmatprep.subr.bf16.mxu0 0
    %2744 = vmatpush2.bf16.msra.mxu0 %v1969
    %2745 = vmatprep.mubr.bf16.mxu0 %v691
    %2746 = vmatmul.mubr.bf16.gmra.mxu0 %v677
    %v2747 = vpop.f32.mrf.mxu0
    %v2748 = vadd.f32 %v2708, %v2747
    %v2749 = vpop.f32.mrf.mxu0
    %v2750 = vpop.f32.mrf.mxu0
    %v2751 = vpop.f32.mrf.mxu0
    %2752 = vdwg.mxu0
    %2753 = vmatprep.subr.bf16.mxu0 0
    %2754 = vmatpush1.bf16.msra.mxu0 %v1984
    %2755 = vmatprep.subr.bf16.mxu0 0
    %2756 = vmatpush1.bf16.msra.mxu0 %v1983
    %2757 = vmatprep.subr.bf16.mxu0 0
    %2758 = vmatpush1.bf16.msra.mxu0 %v1982
    %2759 = vmatprep.subr.bf16.mxu0 0
    %2760 = vmatpush1.bf16.msra.mxu0 %v1981
    %2761 = vmatprep.subr.bf16.mxu0 0
    %2762 = vmatpush1.bf16.msra.mxu0 %v1980
    %2763 = vmatprep.subr.bf16.mxu0 0
    %2764 = vmatpush1.bf16.msra.mxu0 %v1979
    %2765 = vmatprep.subr.bf16.mxu0 0
    %2766 = vmatpush1.bf16.msra.mxu0 %v1978
    %2767 = vmatprep.subr.bf16.mxu0 0
    %2768 = vmatpush1.bf16.msra.mxu0 %v1977
    %2769 = vmatprep.subr.bf16.mxu0 0
    %2770 = vmatpush2.bf16.msra.mxu0 %v1992
    %2771 = vmatprep.subr.bf16.mxu0 0
    %2772 = vmatpush2.bf16.msra.mxu0 %v1991
    %2773 = vmatprep.subr.bf16.mxu0 0
    %2774 = vmatpush2.bf16.msra.mxu0 %v1990
    %2775 = vmatprep.subr.bf16.mxu0 0
    %2776 = vmatpush2.bf16.msra.mxu0 %v1989
    %2777 = vmatprep.subr.bf16.mxu0 0
    %2778 = vmatpush2.bf16.msra.mxu0 %v1988
    %2779 = vmatprep.subr.bf16.mxu0 0
    %2780 = vmatpush2.bf16.msra.mxu0 %v1987
    %2781 = vmatprep.subr.bf16.mxu0 0
    %2782 = vmatpush2.bf16.msra.mxu0 %v1986
    %2783 = vmatprep.subr.bf16.mxu0 0
    %2784 = vmatpush2.bf16.msra.mxu0 %v1985
    %2785 = vmatprep.mubr.bf16.mxu0 %v695
    %2786 = vmatmul.mubr.bf16.gmra.mxu0 %v693
    %v2787 = vpop.f32.mrf.mxu0
    %v2788 = vadd.f32 %v2748, %v2787
    %v2789 = vpop.f32.mrf.mxu0
    %v2790 = vpop.f32.mrf.mxu0
    %v2791 = vpop.f32.mrf.mxu0
    %2792 = vdwg.mxu0
    %2793 = vmatprep.subr.bf16.mxu0 0
    %2794 = vmatpush1.bf16.msra.mxu0 %v2000
    %2795 = vmatprep.subr.bf16.mxu0 0
    %2796 = vmatpush1.bf16.msra.mxu0 %v1999
    %2797 = vmatprep.subr.bf16.mxu0 0
    %2798 = vmatpush1.bf16.msra.mxu0 %v1998
    %2799 = vmatprep.subr.bf16.mxu0 0
    %2800 = vmatpush1.bf16.msra.mxu0 %v1997
    %2801 = vmatprep.subr.bf16.mxu0 0
    %2802 = vmatpush1.bf16.msra.mxu0 %v1996
    %2803 = vmatprep.subr.bf16.mxu0 0
    %2804 = vmatpush1.bf16.msra.mxu0 %v1995
    %2805 = vmatprep.subr.bf16.mxu0 0
    %2806 = vmatpush1.bf16.msra.mxu0 %v1994
    %2807 = vmatprep.subr.bf16.mxu0 0
    %2808 = vmatpush1.bf16.msra.mxu0 %v1993
    %2809 = vmatprep.subr.bf16.mxu0 0
    %2810 = vmatpush2.bf16.msra.mxu0 %v2008
    %2811 = vmatprep.subr.bf16.mxu0 0
    %2812 = vmatpush2.bf16.msra.mxu0 %v2007
    %2813 = vmatprep.subr.bf16.mxu0 0
    %2814 = vmatpush2.bf16.msra.mxu0 %v2006
    %2815 = vmatprep.subr.bf16.mxu0 0
    %2816 = vmatpush2.bf16.msra.mxu0 %v2005
    %2817 = vmatprep.subr.bf16.mxu0 0
    %2818 = vmatpush2.bf16.msra.mxu0 %v2004
    %2819 = vmatprep.subr.bf16.mxu0 0
    %2820 = vmatpush2.bf16.msra.mxu0 %v2003
    %2821 = vmatprep.subr.bf16.mxu0 0
    %2822 = vmatpush2.bf16.msra.mxu0 %v2002
    %2823 = vmatprep.subr.bf16.mxu0 0
    %2824 = vmatpush2.bf16.msra.mxu0 %v2001
    %2825 = vmatprep.mubr.bf16.mxu0 %v733
    %2826 = vmatmul.mubr.bf16.gmra.mxu0 %v719
    %v2827 = vpop.f32.mrf.mxu0
    %v2828 = vadd.f32 %v2788, %v2827
    %v2829 = vpop.f32.mrf.mxu0
    %v2830 = vpop.f32.mrf.mxu0
    %v2831 = vpop.f32.mrf.mxu0
    %2832 = vdwg.mxu0
    %2833 = vmatprep.subr.bf16.mxu0 0
    %2834 = vmatpush1.bf16.msra.mxu0 %v2016
    %2835 = vmatprep.subr.bf16.mxu0 0
    %2836 = vmatpush1.bf16.msra.mxu0 %v2015
    %2837 = vmatprep.subr.bf16.mxu0 0
    %2838 = vmatpush1.bf16.msra.mxu0 %v2014
    %2839 = vmatprep.subr.bf16.mxu0 0
    %2840 = vmatpush1.bf16.msra.mxu0 %v2013
    %2841 = vmatprep.subr.bf16.mxu0 0
    %2842 = vmatpush1.bf16.msra.mxu0 %v2012
    %2843 = vmatprep.subr.bf16.mxu0 0
    %2844 = vmatpush1.bf16.msra.mxu0 %v2011
    %2845 = vmatprep.subr.bf16.mxu0 0
    %2846 = vmatpush1.bf16.msra.mxu0 %v2010
    %2847 = vmatprep.subr.bf16.mxu0 0
    %2848 = vmatpush1.bf16.msra.mxu0 %v2009
    %2849 = vmatprep.subr.bf16.mxu0 0
    %2850 = vmatpush2.bf16.msra.mxu0 %v2024
    %2851 = vmatprep.subr.bf16.mxu0 0
    %2852 = vmatpush2.bf16.msra.mxu0 %v2023
    %2853 = vmatprep.subr.bf16.mxu0 0
    %2854 = vmatpush2.bf16.msra.mxu0 %v2022
    %2855 = vmatprep.subr.bf16.mxu0 0
    %2856 = vmatpush2.bf16.msra.mxu0 %v2021
    %2857 = vmatprep.subr.bf16.mxu0 0
    %2858 = vmatpush2.bf16.msra.mxu0 %v2020
    %2859 = vmatprep.subr.bf16.mxu0 0
    %2860 = vmatpush2.bf16.msra.mxu0 %v2019
    %2861 = vmatprep.subr.bf16.mxu0 0
    %2862 = vmatpush2.bf16.msra.mxu0 %v2018
    %2863 = vmatprep.subr.bf16.mxu0 0
    %2864 = vmatpush2.bf16.msra.mxu0 %v2017
    %2865 = vmatprep.mubr.bf16.mxu0 %v743
    %2866 = vmatmul.mubr.bf16.gmra.mxu0 %v741
    %v2867 = vpop.f32.mrf.mxu0
    %v2868 = vadd.f32 %v2828, %v2867
    %v2869 = vpop.f32.mrf.mxu0
    %v2870 = vpop.f32.mrf.mxu0
    %v2871 = vpop.f32.mrf.mxu0
    %2872 = vdwg.mxu0
    %2873 = vmatprep.subr.bf16.mxu0 0
    %2874 = vmatpush1.bf16.msra.mxu0 %v2032
    %2875 = vmatprep.subr.bf16.mxu0 0
    %2876 = vmatpush1.bf16.msra.mxu0 %v2031
    %2877 = vmatprep.subr.bf16.mxu0 0
    %2878 = vmatpush1.bf16.msra.mxu0 %v2030
    %2879 = vmatprep.subr.bf16.mxu0 0
    %2880 = vmatpush1.bf16.msra.mxu0 %v2029
    %2881 = vmatprep.subr.bf16.mxu0 0
    %2882 = vmatpush1.bf16.msra.mxu0 %v2028
    %2883 = vmatprep.subr.bf16.mxu0 0
    %2884 = vmatpush1.bf16.msra.mxu0 %v2027
    %2885 = vmatprep.subr.bf16.mxu0 0
    %2886 = vmatpush1.bf16.msra.mxu0 %v2026
    %2887 = vmatprep.subr.bf16.mxu0 0
    %2888 = vmatpush1.bf16.msra.mxu0 %v2025
    %2889 = vmatprep.subr.bf16.mxu0 0
    %2890 = vmatpush2.bf16.msra.mxu0 %v2040
    %2891 = vmatprep.subr.bf16.mxu0 0
    %2892 = vmatpush2.bf16.msra.mxu0 %v2039
    %2893 = vmatprep.subr.bf16.mxu0 0
    %2894 = vmatpush2.bf16.msra.mxu0 %v2038
    %2895 = vmatprep.subr.bf16.mxu0 0
    %2896 = vmatpush2.bf16.msra.mxu0 %v2037
    %2897 = vmatprep.subr.bf16.mxu0 0
    %2898 = vmatpush2.bf16.msra.mxu0 %v2036
    %2899 = vmatprep.subr.bf16.mxu0 0
    %2900 = vmatpush2.bf16.msra.mxu0 %v2035
    %2901 = vmatprep.subr.bf16.mxu0 0
    %2902 = vmatpush2.bf16.msra.mxu0 %v2034
    %2903 = vmatprep.subr.bf16.mxu0 0
    %2904 = vmatpush2.bf16.msra.mxu0 %v2033
    %2905 = vmatprep.mubr.bf16.mxu0 %v740
    %2906 = vmatmul.mubr.bf16.gmra.mxu0 %v726
    %v2907 = vpop.f32.mrf.mxu0
    %v2908 = vadd.f32 %v2868, %v2907
    %v2909 = vpop.f32.mrf.mxu0
    %v2910 = vpop.f32.mrf.mxu0
    %v2911 = vpop.f32.mrf.mxu0
    %2912 = vdwg.mxu0
    %2913 = vmatprep.subr.bf16.mxu0 0
    %2914 = vmatpush1.bf16.msra.mxu0 %v2048
    %2915 = vmatprep.subr.bf16.mxu0 0
    %2916 = vmatpush1.bf16.msra.mxu0 %v2047
    %2917 = vmatprep.subr.bf16.mxu0 0
    %2918 = vmatpush1.bf16.msra.mxu0 %v2046
    %2919 = vmatprep.subr.bf16.mxu0 0
    %2920 = vmatpush1.bf16.msra.mxu0 %v2045
    %2921 = vmatprep.subr.bf16.mxu0 0
    %2922 = vmatpush1.bf16.msra.mxu0 %v2044
    %2923 = vmatprep.subr.bf16.mxu0 0
    %2924 = vmatpush1.bf16.msra.mxu0 %v2043
    %2925 = vmatprep.subr.bf16.mxu0 0
    %2926 = vmatpush1.bf16.msra.mxu0 %v2042
    %2927 = vmatprep.subr.bf16.mxu0 0
    %2928 = vmatpush1.bf16.msra.mxu0 %v2041
    %2929 = vmatprep.subr.bf16.mxu0 0
    %2930 = vmatpush2.bf16.msra.mxu0 %v2056
    %2931 = vmatprep.subr.bf16.mxu0 0
    %2932 = vmatpush2.bf16.msra.mxu0 %v2055
    %2933 = vmatprep.subr.bf16.mxu0 0
    %2934 = vmatpush2.bf16.msra.mxu0 %v2054
    %2935 = vmatprep.subr.bf16.mxu0 0
    %2936 = vmatpush2.bf16.msra.mxu0 %v2053
    %2937 = vmatprep.subr.bf16.mxu0 0
    %2938 = vmatpush2.bf16.msra.mxu0 %v2052
    %2939 = vmatprep.subr.bf16.mxu0 0
    %2940 = vmatpush2.bf16.msra.mxu0 %v2051
    %2941 = vmatprep.subr.bf16.mxu0 0
    %2942 = vmatpush2.bf16.msra.mxu0 %v2050
    %2943 = vmatprep.subr.bf16.mxu0 0
    %2944 = vmatpush2.bf16.msra.mxu0 %v2049
    %2945 = vmatprep.mubr.bf16.mxu0 %v744
    %2946 = vmatmul.mubr.bf16.gmra.mxu0 %v742
    %v2947 = vpop.f32.mrf.mxu0
    %v2948 = vadd.f32 %v2908, %v2947
    %v2949 = vpop.f32.mrf.mxu0
    %v2950 = vpop.f32.mrf.mxu0
    %v2951 = vpop.f32.mrf.mxu0
    %2952 = vdwg.mxu0
    %v2953 = vmax.f32 %v2948, 0.0
    %v2954 = vpack.c.bf16 %v2953, %v2953
    %v2955 = vld [vmem:[%s3] sm:$0xf]
    %v2956 = vld [vmem:[%s3 + $0x4] sm:$0xf]
    %v2957 = vld [vmem:[%s3 + $0x8] sm:$0xf]
    %v2958 = vld [vmem:[%s3 + $0xc] sm:$0xf]
    %v2959 = vld [vmem:[%s3 + $0x10] sm:$0xf]
    %v2960 = vld [vmem:[%s3 + $0x14] sm:$0xf]
    %v2961 = vld [vmem:[%s3 + $0x18] sm:$0xf]
    %v2962 = vld [vmem:[%s3 + $0x1c] sm:$0xf]
    %v2963 = vld [vmem:[%s3 + $0x20] sm:$0xf]
    %v2964 = vld [vmem:[%s3 + $0x24] sm:$0xf]
    %v2965 = vld [vmem:[%s3 + $0x28] sm:$0xf]
    %v2966 = vld [vmem:[%s3 + $0x2c] sm:$0xf]
    %v2967 = vld [vmem:[%s3 + $0x30] sm:$0xf]
    %v2968 = vld [vmem:[%s3 + $0x34] sm:$0xf]
    %v2969 = vld [vmem:[%s3 + $0x38] sm:$0xf]
    %v2970 = vld [vmem:[%s3 + $0x3c] sm:$0xf]
    %v2971 = vld [vmem:[%s4] sm:$0x1]
    %v2973 = vlaneseq
    %v2974 = vshrl.u32 %v2973, 7
    %v2975 = vsub.s32 0, %v2974
    %v2976 = vrot.slane %v2971, %v2975
    %v2994 = vunpack.c.l.b16 %v2955
    %v2995 = vunpack.c.l.b16 %v2956
    %v2996 = vunpack.c.l.b16 %v2957
    %v2997 = vunpack.c.l.b16 %v2958
    %v2998 = vunpack.c.l.b16 %v2959
    %v2999 = vunpack.c.l.b16 %v2960
    %v3000 = vunpack.c.l.b16 %v2961
    %v3001 = vunpack.c.l.b16 %v2962
    %v3002 = vunpack.c.l.b16 %v2963
    %v3003 = vunpack.c.l.b16 %v2964
    %v3004 = vunpack.c.l.b16 %v2965
    %v3005 = vunpack.c.l.b16 %v2966
    %v3006 = vunpack.c.l.b16 %v2967
    %v3007 = vunpack.c.l.b16 %v2968
    %v3008 = vunpack.c.l.b16 %v2969
    %v3009 = vunpack.c.l.b16 %v2970
    %v3010 = vpack.c.b16 %v2995, %v2994
    %v3011 = vpack.c.b16 %v2997, %v2996
    %v3012 = vpack.c.b16 %v2999, %v2998
    %v3013 = vpack.c.b16 %v3001, %v3000
    %v3014 = vpack.c.b16 %v3003, %v3002
    %v3015 = vpack.c.b16 %v3005, %v3004
    %v3016 = vpack.c.b16 %v3007, %v3006
    %v3017 = vpack.c.b16 %v3009, %v3008
    %3026 = vmatprep.subr.bf16.mxu0 0
    %3027 = vmatpush1.bf16.msra.mxu0 %v3017
    %3028 = vmatprep.subr.bf16.mxu0 0
    %3029 = vmatpush1.bf16.msra.mxu0 %v3016
    %3030 = vmatprep.subr.bf16.mxu0 0
    %3031 = vmatpush1.bf16.msra.mxu0 %v3015
    %3032 = vmatprep.subr.bf16.mxu0 0
    %3033 = vmatpush1.bf16.msra.mxu0 %v3014
    %3034 = vmatprep.subr.bf16.mxu0 0
    %3035 = vmatpush1.bf16.msra.mxu0 %v3013
    %3036 = vmatprep.subr.bf16.mxu0 0
    %3037 = vmatpush1.bf16.msra.mxu0 %v3012
    %3038 = vmatprep.subr.bf16.mxu0 0
    %3039 = vmatpush1.bf16.msra.mxu0 %v3011
    %3040 = vmatprep.subr.bf16.mxu0 0
    %3041 = vmatpush1.bf16.msra.mxu0 %v3010
    %3042 = vmatprep.subr.bf16.mxu0 0
    %3043 = vmatpush2.bf16.msra.mxu0 0
    %3044 = vmatprep.subr.bf16.mxu0 0
    %3045 = vmatpush2.bf16.msra.mxu0 0
    %3046 = vmatprep.subr.bf16.mxu0 0
    %3047 = vmatpush2.bf16.msra.mxu0 0
    %3048 = vmatprep.subr.bf16.mxu0 0
    %3049 = vmatpush2.bf16.msra.mxu0 0
    %3050 = vmatprep.subr.bf16.mxu0 0
    %3051 = vmatpush2.bf16.msra.mxu0 0
    %3052 = vmatprep.subr.bf16.mxu0 0
    %3053 = vmatpush2.bf16.msra.mxu0 0
    %3054 = vmatprep.subr.bf16.mxu0 0
    %3055 = vmatpush2.bf16.msra.mxu0 0
    %3056 = vmatprep.subr.bf16.mxu0 0
    %3057 = vmatpush2.bf16.msra.mxu0 0
    %3058 = vmatprep.mubr.bf16.mxu0 0
    %3059 = vmatmul.mubr.bf16.gmra.mxu0 %v2954
    %v3060 = vpop.f32.mrf.mxu0
    %v3061 = vadd.f32 %v2976, %v3060
    %v3062 = vpop.f32.mrf.mxu0
    %v3063 = vpop.f32.mrf.mxu0
    %v3064 = vpop.f32.mrf.mxu0
    %3065 = vdwg.mxu0
    %vm3066 = vcmask 74752
    %v3067 = vsel %vm3066, %v3061, -inf
    %3068 = vmax.xlane.f32.xlu0 %v3067
    %v3069 = vpop.xlane.xlu0 %3068
    %v3070 = vsub.f32 %v3061, %v3069
    %v3071 = vmul.f32 %v3070, 1.442695
    %v3072 = vpow.pop %v3071
    %v3073 = vsel %vm3066, %v3072, 0.0
    %3074 = vadd.xlane.f32.xlu0 %v3073
    %v3075 = vpop.xlane.xlu0 %3074
    %v3076 = vlog2.pop %v3075
    %v3077 = vmul.f32 %v3076, 0.6931472
    %v3078 = vsub.f32 %v3070, %v3077
    %3079 = vst.msk [vmem:[#allocation2] sm:$0x3] %vm3066, %v3078
    // Predicated region
    $region22: #{convnet_forward.3} parent=1 // pred_check
      _
    $region23: #{convnet_forward.3} parent=1 // pred_check_branch
      %3081 = sbr.rel (0) target = $region25
    $region24: #{convnet_forward.3} parent=1 // pred_region
      %s3083 = ssub.s32 32, 32
      %3084 = vsyncadd [#allocation3], %s3083
      %s3086 = sshll.u32 [#allocation2], 4
      %s3087 = int_to_ptr.vmem [resolvable:$true] %s3086
      %3089 = dma.vmem_to_hbm [thread:$0]  %s3087, 32, %s5, [#allocation3]
    $region25: #{convnet_forward.3} parent=1 // pred_fallthru
      _
    // Predicated region
    $region26: #{convnet_forward.3} parent=1 // pred_check
      _
    $region27: #{convnet_forward.3} parent=1 // pred_check_branch
      %3091 = sbr.rel (0) target = $region29
    $region28: #{convnet_forward.3} parent=1 // pred_region
      %3092 = dma.done [#allocation3], 32
    $region29: #{convnet_forward.3} parent=1 // pred_fallthru
      _
    %3093 = vsyncpa [#allocation3], 1

// kernel: convnet_forward.2
$region0: #{convnet_forward.2}
  #allocation0 [shape = 'u32[]', space=smem, size = 0x4, offset = 0x4, fixed_abs, tag = 'smem constant byte address 0x4 - core index']
  #allocation1 [shape = 'u32[144,128]{1,0:T(1,128)}', space=vmem, size = 0x12000, scoped, tag = 'internal scratch']
  #allocation2 [shape = 'bf16[24,512]{1,0:T(8,128)(2,1)}', space=vmem, size = 0x6000, scoped, tag = 'scratch operand']
  #allocation3 [shape = 'bf16[24,512]{1,0:T(8,128)(2,1)}', space=vmem, size = 0x6000, scoped, tag = 'scratch operand']
  %s0 = inlined_call_operand.vmem [shape: bf16[16,112], index: 0, kind: input, shape index: {}]
  %s1 = inlined_call_operand.vmem [shape: bf16[16,112], index: 1, kind: input, shape index: {}]
  %s2 = inlined_call_operand.vmem [shape: bf16[112,1024], index: 2, kind: input, shape index: {}]
  %s3 = inlined_call_operand.hbm [shape: bf16[112,1024], index: 3, kind: input, shape index: {}]
  %s4 = inlined_call_operand.vmem [shape: f32[1,512], index: 4, kind: input, shape index: {}]
  %s5 = inlined_call_operand.hbm [shape: bf16[512,1024], index: 5, kind: input, shape index: {}]
  %s6 = inlined_call_operand.hbm [shape: bf16[512,1024], index: 6, kind: input, shape index: {}]
  %s7 = inlined_call_operand.hbm [shape: bf16[512,1024], index: 7, kind: input, shape index: {}]
  %s8 = inlined_call_operand.vmem [shape: f32[1,512], index: 8, kind: input, shape index: {}]
  %s9 = inlined_call_operand.vmem [shape: bf16[16,512], index: 9, kind: output, shape index: {}]
  %s10 = sld [smem:[#allocation0]]
  $region62: #{convnet_forward.2} parent=0
    _
  %s12 = ssub.s32 1, %s10
  %s13 = scalar_select 0, %s12, %s10
  $region1: #{convnet_forward.2} parent=0
    #allocation4 [shape = 'u8[229376]{0}', space=vmem, size = 0x38000, scoped, tag = 'input window, operand 3, single buffered']
    #allocation5 [shape = 's32[1]{0}', space=sflag, size = 0x4, scoped, tag = 'scoped memory for convnet_forward.2']
    #allocation6 [shape = 'u8[1048576]{0}', space=vmem, size = 0x100000, scoped, tag = 'input window, operand 5, single buffered']
    #allocation7 [shape = 's32[1]{0}', space=sflag, size = 0x4, scoped, tag = 'scoped memory for convnet_forward.2']
    #allocation8 [shape = 'u8[1048576]{0}', space=vmem, size = 0x100000, scoped, tag = 'input window, operand 6, single buffered']
    #allocation9 [shape = 'u8[1048576]{0}', space=vmem, size = 0x100000, scoped, tag = 'input window, operand 7, single buffered']
    #allocation10 [shape = 's32[1]{0}', space=sflag, size = 0x4, scoped, tag = 'scoped memory for convnet_forward.2']
    %14 = vsyncpa [#allocation5], 0
    %15 = vsyncpa [#allocation7], 0
    %16 = vsyncpa [#allocation10], 0
    // Predicated region
    $region2: #{convnet_forward.2} parent=1 // pred_check
      _
    $region3: #{convnet_forward.2} parent=1 // pred_check_branch
      %18 = sbr.rel (0) target = $region5
    $region4: #{convnet_forward.2} parent=1 // pred_region
      _
    $region5: #{convnet_forward.2} parent=1 // pred_fallthru
      _
    // Predicated region
    $region6: #{convnet_forward.2} parent=1 // pred_check
      _
    $region7: #{convnet_forward.2} parent=1 // pred_check_branch
      %20 = sbr.rel (0) target = $region9
    $region8: #{convnet_forward.2} parent=1 // pred_region
      _
    $region9: #{convnet_forward.2} parent=1 // pred_fallthru
      _
    // Predicated region
    $region10: #{convnet_forward.2} parent=1 // pred_check
      _
    $region11: #{convnet_forward.2} parent=1 // pred_check_branch
      %22 = sbr.rel (0) target = $region13
    $region12: #{convnet_forward.2} parent=1 // pred_region
      _
    $region13: #{convnet_forward.2} parent=1 // pred_fallthru
      _
    // Predicated region
    $region14: #{convnet_forward.2} parent=1 // pred_check
      _
    $region15: #{convnet_forward.2} parent=1 // pred_check_branch
      %24 = sbr.rel (0) target = $region17
    $region16: #{convnet_forward.2} parent=1 // pred_region
      %s26 = ssub.s32 7168, 7168
      %27 = vsyncadd [#allocation5], %s26
      %s28 = sshll.u32 [#allocation4], 4
      %s29 = int_to_ptr.vmem [resolvable:$true] %s28
      %34 = dma.hbm_to_vmem [thread:$0]  %s3, 7168, %s29, [#allocation5], 512, 512, 32
    $region17: #{convnet_forward.2} parent=1 // pred_fallthru
      _
    // Predicated region
    $region18: #{convnet_forward.2} parent=1 // pred_check
      _
    $region19: #{convnet_forward.2} parent=1 // pred_check_branch
      %36 = sbr.rel (0) target = $region21
    $region20: #{convnet_forward.2} parent=1 // pred_region
      _
    $region21: #{convnet_forward.2} parent=1 // pred_fallthru
      _
    // Predicated region
    $region22: #{convnet_forward.2} parent=1 // pred_check
      _
    $region23: #{convnet_forward.2} parent=1 // pred_check_branch
      %38 = sbr.rel (0) target = $region25
    $region24: #{convnet_forward.2} parent=1 // pred_region
      %s40 = ssub.s32 32768, 32768
      %41 = vsyncadd [#allocation7], %s40
      %s42 = sshll.u32 [#allocation6], 4
      %s43 = int_to_ptr.vmem [resolvable:$true] %s42
      %48 = dma.hbm_to_vmem [thread:$0]  %s5, 32768, %s43, [#allocation7], 512, 512, 32
    $region25: #{convnet_forward.2} parent=1 // pred_fallthru
      _
    // Predicated region
    $region26: #{convnet_forward.2} parent=1 // pred_check
      _
    $region27: #{convnet_forward.2} parent=1 // pred_check_branch
      %50 = sbr.rel (0) target = $region29
    $region28: #{convnet_forward.2} parent=1 // pred_region
      %s52 = ssub.s32 32768, 32768
      %53 = vsyncadd [#allocation7], %s52
      %s54 = sshll.u32 [#allocation8], 4
      %s55 = int_to_ptr.vmem [resolvable:$true] %s54
      %60 = dma.hbm_to_vmem [thread:$0]  %s6, 32768, %s55, [#allocation7], 512, 512, 32
    $region29: #{convnet_forward.2} parent=1 // pred_fallthru
      _
    // Predicated region
    $region30: #{convnet_forward.2} parent=1 // pred_check
      _
    $region31: #{convnet_forward.2} parent=1 // pred_check_branch
      %62 = sbr.rel (0) target = $region33
    $region32: #{convnet_forward.2} parent=1 // pred_region
      %s64 = ssub.s32 32768, 32768
      %65 = vsyncadd [#allocation10], %s64
      %s66 = sshll.u32 [#allocation9], 4
      %s67 = int_to_ptr.vmem [resolvable:$true] %s66
      %72 = dma.hbm_to_vmem [thread:$0]  %s7, 32768, %s67, [#allocation10], 512, 512, 32
    $region33: #{convnet_forward.2} parent=1 // pred_fallthru
      _
    // Predicated region
    $region34: #{convnet_forward.2} parent=1 // pred_check
      _
    $region35: #{convnet_forward.2} parent=1 // pred_check_branch
      %74 = sbr.rel (0) target = $region37
    $region36: #{convnet_forward.2} parent=1 // pred_region
      _
    $region37: #{convnet_forward.2} parent=1 // pred_fallthru
      _
    // Predicated region
    $region38: #{convnet_forward.2} parent=1 // pred_check
      _
    $region39: #{convnet_forward.2} parent=1 // pred_check_branch
      %76 = sbr.rel (0) target = $region41
    $region40: #{convnet_forward.2} parent=1 // pred_region
      %77 = dma.done [#allocation5], 7168
    $region41: #{convnet_forward.2} parent=1 // pred_fallthru
      _
    // Predicated region
    $region42: #{convnet_forward.2} parent=1 // pred_check
      _
    $region43: #{convnet_forward.2} parent=1 // pred_check_branch
      %79 = sbr.rel (0) target = $region45
    $region44: #{convnet_forward.2} parent=1 // pred_region
      %80 = dma.done [#allocation7], 32768
    $region45: #{convnet_forward.2} parent=1 // pred_fallthru
      _
    // Predicated region
    $region46: #{convnet_forward.2} parent=1 // pred_check
      _
    $region47: #{convnet_forward.2} parent=1 // pred_check_branch
      %82 = sbr.rel (0) target = $region49
    $region48: #{convnet_forward.2} parent=1 // pred_region
      %83 = dma.done [#allocation7], 32768
    $region49: #{convnet_forward.2} parent=1 // pred_fallthru
      _
    // Predicated region
    $region50: #{convnet_forward.2} parent=1 // pred_check
      _
    $region51: #{convnet_forward.2} parent=1 // pred_check_branch
      %85 = sbr.rel (0) target = $region53
    $region52: #{convnet_forward.2} parent=1 // pred_region
      %86 = dma.done [#allocation10], 32768
    $region53: #{convnet_forward.2} parent=1 // pred_fallthru
      _
    %v88 = vlaneseq
    %v89 = vshrl.u32 %v88, 7
    %v90 = vadd.s32 %v89, 8
    %vm91 = vcmp.lt.s32.totalorder %v89, 0
    %v92 = vsub.s32 0, %v89
    %v93 = vsel %vm91, %v92, %v89
    %v94 = vshrl.u32 %v93, 3
    %v95 = vand.u32 %v93, 7
    %v96 = vsub.s32 0, %v95
    %v97 = vsel %vm91, %v96, %v95
    %vm98 = vcmp.lt.s32.totalorder %v90, 0
    %v99 = vsub.s32 0, %v90
    %v100 = vsel %vm98, %v99, %v90
    %v101 = vshrl.u32 %v100, 3
    %v102 = vand.u32 %v100, 7
    %v103 = vsub.s32 0, %v102
    %v104 = vsel %vm98, %v103, %v102
    %vm105 = vcmp.ne.s32.totalorder %v97, 0
    %vm106 = vcmp.ne.s32.totalorder %v104, 0
    %vm107 = vcmp.lt.s32.totalorder %v97, 0
    %vm108 = vcmp.lt.s32.totalorder %v104, 0
    %vm109 = vmand %vm107, %vm105
    %vm110 = vmand %vm108, %vm106
    %v111 = vadd.s32 %v97, 8
    %v112 = vadd.s32 %v104, 8
    %v113 = vsel %vm109, %v111, %v97
    %v114 = vsel %vm110, %v112, %v104
    %vm115 = vcmp.eq.s32.totalorder %v113, 7
    %vm116 = vcmp.eq.s32.totalorder %v114, 7
    %v117 = vld [vmem:[%s0] sm:$0xf]
    %v118 = vld [vmem:[%s0 + $0x4] sm:$0xf]
    %v119 = vld [vmem:[%s1] sm:$0xf]
    %v120 = vld [vmem:[%s1 + $0x4] sm:$0xf]
    %v121 = vld [vmem:[%s2] sm:$0xff]
    %v122 = vld [vmem:[%s2 + $0x8] sm:$0xff]
    %v123 = vld [vmem:[%s2 + $0x10] sm:$0xff]
    %v124 = vld [vmem:[%s2 + $0x18] sm:$0xff]
    %v125 = vld [vmem:[%s2 + $0x20] sm:$0xff]
    %v126 = vld [vmem:[%s2 + $0x28] sm:$0xff]
    %v127 = vld [vmem:[%s2 + $0x30] sm:$0xff]
    %v128 = vld [vmem:[%s2 + $0x38] sm:$0xff]
    %v129 = vld [vmem:[%s2 + $0x40] sm:$0xff]
    %v130 = vld [vmem:[%s2 + $0x48] sm:$0xff]
    %v131 = vld [vmem:[%s2 + $0x50] sm:$0xff]
    %v132 = vld [vmem:[%s2 + $0x58] sm:$0xff]
    %v133 = vld [vmem:[%s2 + $0x60] sm:$0xff]
    %v134 = vld [vmem:[%s2 + $0x68] sm:$0xff]
    %v135 = vld [vmem:[%s2 + $0x70] sm:$0xff]
    %v136 = vld [vmem:[%s2 + $0x78] sm:$0xff]
    %v137 = vld [vmem:[%s2 + $0x80] sm:$0xff]
    %v138 = vld [vmem:[%s2 + $0x88] sm:$0xff]
    %v139 = vld [vmem:[%s2 + $0x90] sm:$0xff]
    %v140 = vld [vmem:[%s2 + $0x98] sm:$0xff]
    %v141 = vld [vmem:[%s2 + $0xa0] sm:$0xff]
    %v142 = vld [vmem:[%s2 + $0xa8] sm:$0xff]
    %v143 = vld [vmem:[%s2 + $0xb0] sm:$0xff]
    %v144 = vld [vmem:[%s2 + $0xb8] sm:$0xff]
    %v145 = vld [vmem:[%s2 + $0xc0] sm:$0xff]
    %v146 = vld [vmem:[%s2 + $0xc8] sm:$0xff]
    %v147 = vld [vmem:[%s2 + $0xd0] sm:$0xff]
    %v148 = vld [vmem:[%s2 + $0xd8] sm:$0xff]
    %v149 = vld [vmem:[%s2 + $0xe0] sm:$0xff]
    %v150 = vld [vmem:[%s2 + $0xe8] sm:$0xff]
    %v151 = vld [vmem:[%s2 + $0xf0] sm:$0xff]
    %v152 = vld [vmem:[%s2 + $0xf8] sm:$0xff]
    %v153 = vld [vmem:[%s2 + $0x100] sm:$0xff]
    %v154 = vld [vmem:[%s2 + $0x108] sm:$0xff]
    %v155 = vld [vmem:[%s2 + $0x110] sm:$0xff]
    %v156 = vld [vmem:[%s2 + $0x118] sm:$0xff]
    %v157 = vld [vmem:[%s2 + $0x120] sm:$0xff]
    %v158 = vld [vmem:[%s2 + $0x128] sm:$0xff]
    %v159 = vld [vmem:[%s2 + $0x130] sm:$0xff]
    %v160 = vld [vmem:[%s2 + $0x138] sm:$0xff]
    %v161 = vld [vmem:[%s2 + $0x140] sm:$0xff]
    %v162 = vld [vmem:[%s2 + $0x148] sm:$0xff]
    %v163 = vld [vmem:[%s2 + $0x150] sm:$0xff]
    %v164 = vld [vmem:[%s2 + $0x158] sm:$0xff]
    %v165 = vld [vmem:[%s2 + $0x160] sm:$0xff]
    %v166 = vld [vmem:[%s2 + $0x168] sm:$0xff]
    %v167 = vld [vmem:[%s2 + $0x170] sm:$0xff]
    %v168 = vld [vmem:[%s2 + $0x178] sm:$0xff]
    %v169 = vld [vmem:[%s2 + $0x180] sm:$0xff]
    %v170 = vld [vmem:[%s2 + $0x188] sm:$0xff]
    %v171 = vld [vmem:[%s2 + $0x190] sm:$0xff]
    %v172 = vld [vmem:[%s2 + $0x198] sm:$0xff]
    %v173 = vld [vmem:[%s2 + $0x1a0] sm:$0xff]
    %v174 = vld [vmem:[%s2 + $0x1a8] sm:$0xff]
    %v175 = vld [vmem:[%s2 + $0x1b0] sm:$0xff]
    %v176 = vld [vmem:[%s2 + $0x1b8] sm:$0xff]
    %v177 = vld [vmem:[#allocation4] sm:$0xff]
    %v178 = vld [vmem:[#allocation4 + $0x8] sm:$0xff]
    %v179 = vld [vmem:[#allocation4 + $0x10] sm:$0xff]
    %v180 = vld [vmem:[#allocation4 + $0x18] sm:$0xff]
    %v181 = vld [vmem:[#allocation4 + $0x20] sm:$0xff]
    %v182 = vld [vmem:[#allocation4 + $0x28] sm:$0xff]
    %v183 = vld [vmem:[#allocation4 + $0x30] sm:$0xff]
    %v184 = vld [vmem:[#allocation4 + $0x38] sm:$0xff]
    %v185 = vld [vmem:[#allocation4 + $0x40] sm:$0xff]
    %v186 = vld [vmem:[#allocation4 + $0x48] sm:$0xff]
    %v187 = vld [vmem:[#allocation4 + $0x50] sm:$0xff]
    %v188 = vld [vmem:[#allocation4 + $0x58] sm:$0xff]
    %v189 = vld [vmem:[#allocation4 + $0x60] sm:$0xff]
    %v190 = vld [vmem:[#allocation4 + $0x68] sm:$0xff]
    %v191 = vld [vmem:[#allocation4 + $0x70] sm:$0xff]
    %v192 = vld [vmem:[#allocation4 + $0x78] sm:$0xff]
    %v193 = vld [vmem:[#allocation4 + $0x80] sm:$0xff]
    %v194 = vld [vmem:[#allocation4 + $0x88] sm:$0xff]
    %v195 = vld [vmem:[#allocation4 + $0x90] sm:$0xff]
    %v196 = vld [vmem:[#allocation4 + $0x98] sm:$0xff]
    %v197 = vld [vmem:[#allocation4 + $0xa0] sm:$0xff]
    %v198 = vld [vmem:[#allocation4 + $0xa8] sm:$0xff]
    %v199 = vld [vmem:[#allocation4 + $0xb0] sm:$0xff]
    %v200 = vld [vmem:[#allocation4 + $0xb8] sm:$0xff]
    %v201 = vld [vmem:[#allocation4 + $0xc0] sm:$0xff]
    %v202 = vld [vmem:[#allocation4 + $0xc8] sm:$0xff]
    %v203 = vld [vmem:[#allocation4 + $0xd0] sm:$0xff]
    %v204 = vld [vmem:[#allocation4 + $0xd8] sm:$0xff]
    %v205 = vld [vmem:[#allocation4 + $0xe0] sm:$0xff]
    %v206 = vld [vmem:[#allocation4 + $0xe8] sm:$0xff]
    %v207 = vld [vmem:[#allocation4 + $0xf0] sm:$0xff]
    %v208 = vld [vmem:[#allocation4 + $0xf8] sm:$0xff]
    %v209 = vld [vmem:[#allocation4 + $0x100] sm:$0xff]
    %v210 = vld [vmem:[#allocation4 + $0x108] sm:$0xff]
    %v211 = vld [vmem:[#allocation4 + $0x110] sm:$0xff]
    %v212 = vld [vmem:[#allocation4 + $0x118] sm:$0xff]
    %v213 = vld [vmem:[#allocation4 + $0x120] sm:$0xff]
    %v214 = vld [vmem:[#allocation4 + $0x128] sm:$0xff]
    %v215 = vld [vmem:[#allocation4 + $0x130] sm:$0xff]
    %v216 = vld [vmem:[#allocation4 + $0x138] sm:$0xff]
    %v217 = vld [vmem:[#allocation4 + $0x140] sm:$0xff]
    %v218 = vld [vmem:[#allocation4 + $0x148] sm:$0xff]
    %v219 = vld [vmem:[#allocation4 + $0x150] sm:$0xff]
    %v220 = vld [vmem:[#allocation4 + $0x158] sm:$0xff]
    %v221 = vld [vmem:[#allocation4 + $0x160] sm:$0xff]
    %v222 = vld [vmem:[#allocation4 + $0x168] sm:$0xff]
    %v223 = vld [vmem:[#allocation4 + $0x170] sm:$0xff]
    %v224 = vld [vmem:[#allocation4 + $0x178] sm:$0xff]
    %v225 = vld [vmem:[#allocation4 + $0x180] sm:$0xff]
    %v226 = vld [vmem:[#allocation4 + $0x188] sm:$0xff]
    %v227 = vld [vmem:[#allocation4 + $0x190] sm:$0xff]
    %v228 = vld [vmem:[#allocation4 + $0x198] sm:$0xff]
    %v229 = vld [vmem:[#allocation4 + $0x1a0] sm:$0xff]
    %v230 = vld [vmem:[#allocation4 + $0x1a8] sm:$0xff]
    %v231 = vld [vmem:[#allocation4 + $0x1b0] sm:$0xff]
    %v232 = vld [vmem:[#allocation4 + $0x1b8] sm:$0xff]
    %v233 = vld [vmem:[%s4] sm:$0xf]
    %v236 = vunpack.c.l.b16 %v117
    %v237 = vunpack.c.l.b16 %v118
    %v238 = vpack.c.b16 %v237, %v236
    %v295 = vunpack.c.l.b16 %v121
    %v296 = vunpack.c.h.b16 %v121
    %v297 = vunpack.c.l.b16 %v122
    %v298 = vunpack.c.h.b16 %v122
    %v299 = vunpack.c.l.b16 %v123
    %v300 = vunpack.c.h.b16 %v123
    %v301 = vunpack.c.l.b16 %v124
    %v302 = vunpack.c.h.b16 %v124
    %v303 = vunpack.c.l.b16 %v125
    %v304 = vunpack.c.h.b16 %v125
    %v305 = vunpack.c.l.b16 %v126
    %v306 = vunpack.c.h.b16 %v126
    %v307 = vunpack.c.l.b16 %v127
    %v308 = vunpack.c.h.b16 %v127
    %v309 = vunpack.c.l.b16 %v128
    %v310 = vunpack.c.h.b16 %v128
    %v311 = vunpack.c.l.b16 %v129
    %v312 = vunpack.c.h.b16 %v129
    %v313 = vunpack.c.l.b16 %v130
    %v314 = vunpack.c.h.b16 %v130
    %v315 = vunpack.c.l.b16 %v131
    %v316 = vunpack.c.h.b16 %v131
    %v317 = vunpack.c.l.b16 %v132
    %v318 = vunpack.c.h.b16 %v132
    %v319 = vunpack.c.l.b16 %v133
    %v320 = vunpack.c.h.b16 %v133
    %v321 = vunpack.c.l.b16 %v134
    %v322 = vunpack.c.h.b16 %v134
    %v323 = vunpack.c.l.b16 %v135
    %v324 = vunpack.c.h.b16 %v135
    %v325 = vunpack.c.l.b16 %v136
    %v326 = vunpack.c.h.b16 %v136
    %v327 = vunpack.c.l.b16 %v137
    %v328 = vunpack.c.h.b16 %v137
    %v329 = vunpack.c.l.b16 %v138
    %v330 = vunpack.c.h.b16 %v138
    %v331 = vunpack.c.l.b16 %v139
    %v332 = vunpack.c.h.b16 %v139
    %v333 = vunpack.c.l.b16 %v140
    %v334 = vunpack.c.h.b16 %v140
    %v335 = vunpack.c.l.b16 %v141
    %v336 = vunpack.c.h.b16 %v141
    %v337 = vunpack.c.l.b16 %v142
    %v338 = vunpack.c.h.b16 %v142
    %v339 = vunpack.c.l.b16 %v143
    %v340 = vunpack.c.h.b16 %v143
    %v341 = vunpack.c.l.b16 %v144
    %v342 = vunpack.c.h.b16 %v144
    %v343 = vunpack.c.l.b16 %v145
    %v344 = vunpack.c.h.b16 %v145
    %v345 = vunpack.c.l.b16 %v146
    %v346 = vunpack.c.h.b16 %v146
    %v347 = vunpack.c.l.b16 %v147
    %v348 = vunpack.c.h.b16 %v147
    %v349 = vunpack.c.l.b16 %v148
    %v350 = vunpack.c.h.b16 %v148
    %v351 = vunpack.c.l.b16 %v149
    %v352 = vunpack.c.h.b16 %v149
    %v353 = vunpack.c.l.b16 %v150
    %v354 = vunpack.c.h.b16 %v150
    %v355 = vunpack.c.l.b16 %v151
    %v356 = vunpack.c.h.b16 %v151
    %v357 = vunpack.c.l.b16 %v152
    %v358 = vunpack.c.h.b16 %v152
    %v359 = vunpack.c.l.b16 %v153
    %v360 = vunpack.c.h.b16 %v153
    %v361 = vunpack.c.l.b16 %v154
    %v362 = vunpack.c.h.b16 %v154
    %v363 = vunpack.c.l.b16 %v155
    %v364 = vunpack.c.h.b16 %v155
    %v365 = vunpack.c.l.b16 %v156
    %v366 = vunpack.c.h.b16 %v156
    %v367 = vunpack.c.l.b16 %v157
    %v368 = vunpack.c.h.b16 %v157
    %v369 = vunpack.c.l.b16 %v158
    %v370 = vunpack.c.h.b16 %v158
    %v371 = vunpack.c.l.b16 %v159
    %v372 = vunpack.c.h.b16 %v159
    %v373 = vunpack.c.l.b16 %v160
    %v374 = vunpack.c.h.b16 %v160
    %v375 = vunpack.c.l.b16 %v161
    %v376 = vunpack.c.h.b16 %v161
    %v377 = vunpack.c.l.b16 %v162
    %v378 = vunpack.c.h.b16 %v162
    %v379 = vunpack.c.l.b16 %v163
    %v380 = vunpack.c.h.b16 %v163
    %v381 = vunpack.c.l.b16 %v164
    %v382 = vunpack.c.h.b16 %v164
    %v383 = vunpack.c.l.b16 %v165
    %v384 = vunpack.c.h.b16 %v165
    %v385 = vunpack.c.l.b16 %v166
    %v386 = vunpack.c.h.b16 %v166
    %v387 = vunpack.c.l.b16 %v167
    %v388 = vunpack.c.h.b16 %v167
    %v389 = vunpack.c.l.b16 %v168
    %v390 = vunpack.c.h.b16 %v168
    %v391 = vunpack.c.l.b16 %v169
    %v392 = vunpack.c.h.b16 %v169
    %v393 = vunpack.c.l.b16 %v170
    %v394 = vunpack.c.h.b16 %v170
    %v395 = vunpack.c.l.b16 %v171
    %v396 = vunpack.c.h.b16 %v171
    %v397 = vunpack.c.l.b16 %v172
    %v398 = vunpack.c.h.b16 %v172
    %v399 = vunpack.c.l.b16 %v173
    %v400 = vunpack.c.h.b16 %v173
    %v401 = vunpack.c.l.b16 %v174
    %v402 = vunpack.c.h.b16 %v174
    %v403 = vunpack.c.l.b16 %v175
    %v404 = vunpack.c.h.b16 %v175
    %v405 = vunpack.c.l.b16 %v176
    %v406 = vunpack.c.h.b16 %v176
    %v407 = vpack.c.b16 %v303, %v295
    %v408 = vpack.c.b16 %v304, %v296
    %v409 = vpack.c.b16 %v305, %v297
    %v410 = vpack.c.b16 %v306, %v298
    %v411 = vpack.c.b16 %v307, %v299
    %v412 = vpack.c.b16 %v308, %v300
    %v413 = vpack.c.b16 %v309, %v301
    %v414 = vpack.c.b16 %v310, %v302
    %v415 = vpack.c.b16 %v319, %v311
    %v416 = vpack.c.b16 %v320, %v312
    %v417 = vpack.c.b16 %v321, %v313
    %v418 = vpack.c.b16 %v322, %v314
    %v419 = vpack.c.b16 %v323, %v315
    %v420 = vpack.c.b16 %v324, %v316
    %v421 = vpack.c.b16 %v325, %v317
    %v422 = vpack.c.b16 %v326, %v318
    %v423 = vpack.c.b16 %v335, %v327
    %v424 = vpack.c.b16 %v336, %v328
    %v425 = vpack.c.b16 %v337, %v329
    %v426 = vpack.c.b16 %v338, %v330
    %v427 = vpack.c.b16 %v339, %v331
    %v428 = vpack.c.b16 %v340, %v332
    %v429 = vpack.c.b16 %v341, %v333
    %v430 = vpack.c.b16 %v342, %v334
    %v431 = vpack.c.b16 %v351, %v343
    %v432 = vpack.c.b16 %v352, %v344
    %v433 = vpack.c.b16 %v353, %v345
    %v434 = vpack.c.b16 %v354, %v346
    %v435 = vpack.c.b16 %v355, %v347
    %v436 = vpack.c.b16 %v356, %v348
    %v437 = vpack.c.b16 %v357, %v349
    %v438 = vpack.c.b16 %v358, %v350
    %v439 = vpack.c.b16 %v367, %v359
    %v440 = vpack.c.b16 %v368, %v360
    %v441 = vpack.c.b16 %v369, %v361
    %v442 = vpack.c.b16 %v370, %v362
    %v443 = vpack.c.b16 %v371, %v363
    %v444 = vpack.c.b16 %v372, %v364
    %v445 = vpack.c.b16 %v373, %v365
    %v446 = vpack.c.b16 %v374, %v366
    %v447 = vpack.c.b16 %v383, %v375
    %v448 = vpack.c.b16 %v384, %v376
    %v449 = vpack.c.b16 %v385, %v377
    %v450 = vpack.c.b16 %v386, %v378
    %v451 = vpack.c.b16 %v387, %v379
    %v452 = vpack.c.b16 %v388, %v380
    %v453 = vpack.c.b16 %v389, %v381
    %v454 = vpack.c.b16 %v390, %v382
    %v455 = vpack.c.b16 %v399, %v391
    %v456 = vpack.c.b16 %v400, %v392
    %v457 = vpack.c.b16 %v401, %v393
    %v458 = vpack.c.b16 %v402, %v394
    %v459 = vpack.c.b16 %v403, %v395
    %v460 = vpack.c.b16 %v404, %v396
    %v461 = vpack.c.b16 %v405, %v397
    %v462 = vpack.c.b16 %v406, %v398
    %vm519 = vcmask 916480
    %v521 = vsel %vm519, %v238, 0
    %523 = vmatprep.subr.bf16.mxu0 0
    %524 = vmatpush1.bf16.msra.mxu0 0
    %525 = vmatprep.subr.bf16.mxu0 %v456
    %526 = vmatpush1.bf16.msra.mxu0 %v455
    %527 = vmatprep.subr.bf16.mxu0 %v448
    %528 = vmatpush1.bf16.msra.mxu0 %v447
    %529 = vmatprep.subr.bf16.mxu0 %v440
    %530 = vmatpush1.bf16.msra.mxu0 %v439
    %531 = vmatprep.subr.bf16.mxu0 %v432
    %532 = vmatpush1.bf16.msra.mxu0 %v431
    %533 = vmatprep.subr.bf16.mxu0 %v424
    %534 = vmatpush1.bf16.msra.mxu0 %v423
    %535 = vmatprep.subr.bf16.mxu0 %v416
    %536 = vmatpush1.bf16.msra.mxu0 %v415
    %537 = vmatprep.subr.bf16.mxu0 %v408
    %538 = vmatpush1.bf16.msra.mxu0 %v407
    %539 = vmatprep.subr.bf16.mxu0 0
    %540 = vmatpush2.bf16.msra.mxu0 0
    %541 = vmatprep.subr.bf16.mxu0 0
    %542 = vmatpush2.bf16.msra.mxu0 0
    %543 = vmatprep.subr.bf16.mxu0 0
    %544 = vmatpush2.bf16.msra.mxu0 0
    %545 = vmatprep.subr.bf16.mxu0 0
    %546 = vmatpush2.bf16.msra.mxu0 0
    %547 = vmatprep.subr.bf16.mxu0 0
    %548 = vmatpush2.bf16.msra.mxu0 0
    %549 = vmatprep.subr.bf16.mxu0 0
    %550 = vmatpush2.bf16.msra.mxu0 0
    %551 = vmatprep.subr.bf16.mxu0 0
    %552 = vmatpush2.bf16.msra.mxu0 0
    %553 = vmatprep.subr.bf16.mxu0 0
    %554 = vmatpush2.bf16.msra.mxu0 0
    %555 = vmatprep.mubr.bf16.mxu0 0
    %556 = vmatmul.mubr.bf16.gmra.mxu0 %v521
    %v557 = vpop.f32.mrf.mxu0
    %v558 = vadd.f32 0.0, %v557
    %v559 = vpop.f32.mrf.mxu0
    %v560 = vadd.f32 0.0, %v559
    %v561 = vpop.f32.mrf.mxu0
    %v562 = vadd.f32 0.0, %v561
    %v563 = vpop.f32.mrf.mxu0
    %v564 = vadd.f32 0.0, %v563
    %565 = vdwg.mxu0
    %566 = vmatprep.subr.bf16.mxu0 0
    %567 = vmatpush1.bf16.msra.mxu0 0
    %568 = vmatprep.subr.bf16.mxu0 %v458
    %569 = vmatpush1.bf16.msra.mxu0 %v457
    %570 = vmatprep.subr.bf16.mxu0 %v450
    %571 = vmatpush1.bf16.msra.mxu0 %v449
    %572 = vmatprep.subr.bf16.mxu0 %v442
    %573 = vmatpush1.bf16.msra.mxu0 %v441
    %574 = vmatprep.subr.bf16.mxu0 %v434
    %575 = vmatpush1.bf16.msra.mxu0 %v433
    %576 = vmatprep.subr.bf16.mxu0 %v426
    %577 = vmatpush1.bf16.msra.mxu0 %v425
    %578 = vmatprep.subr.bf16.mxu0 %v418
    %579 = vmatpush1.bf16.msra.mxu0 %v417
    %580 = vmatprep.subr.bf16.mxu0 %v410
    %581 = vmatpush1.bf16.msra.mxu0 %v409
    %582 = vmatprep.subr.bf16.mxu0 0
    %583 = vmatpush2.bf16.msra.mxu0 0
    %584 = vmatprep.subr.bf16.mxu0 0
    %585 = vmatpush2.bf16.msra.mxu0 0
    %586 = vmatprep.subr.bf16.mxu0 0
    %587 = vmatpush2.bf16.msra.mxu0 0
    %588 = vmatprep.subr.bf16.mxu0 0
    %589 = vmatpush2.bf16.msra.mxu0 0
    %590 = vmatprep.subr.bf16.mxu0 0
    %591 = vmatpush2.bf16.msra.mxu0 0
    %592 = vmatprep.subr.bf16.mxu0 0
    %593 = vmatpush2.bf16.msra.mxu0 0
    %594 = vmatprep.subr.bf16.mxu0 0
    %595 = vmatpush2.bf16.msra.mxu0 0
    %596 = vmatprep.subr.bf16.mxu0 0
    %597 = vmatpush2.bf16.msra.mxu0 0
    %598 = vmatprep.mubr.bf16.mxu0 0
    %599 = vmatmul.mubr.bf16.gmra.mxu0 %v521
    %v600 = vpop.f32.mrf.mxu0
    %v601 = vadd.f32 0.0, %v600
    %v602 = vpop.f32.mrf.mxu0
    %v603 = vadd.f32 0.0, %v602
    %v604 = vpop.f32.mrf.mxu0
    %v605 = vadd.f32 0.0, %v604
    %v606 = vpop.f32.mrf.mxu0
    %v607 = vadd.f32 0.0, %v606
    %608 = vdwg.mxu0
    %609 = vmatprep.subr.bf16.mxu0 0
    %610 = vmatpush1.bf16.msra.mxu0 0
    %611 = vmatprep.subr.bf16.mxu0 %v460
    %612 = vmatpush1.bf16.msra.mxu0 %v459
    %613 = vmatprep.subr.bf16.mxu0 %v452
    %614 = vmatpush1.bf16.msra.mxu0 %v451
    %615 = vmatprep.subr.bf16.mxu0 %v444
    %616 = vmatpush1.bf16.msra.mxu0 %v443
    %617 = vmatprep.subr.bf16.mxu0 %v436
    %618 = vmatpush1.bf16.msra.mxu0 %v435
    %619 = vmatprep.subr.bf16.mxu0 %v428
    %620 = vmatpush1.bf16.msra.mxu0 %v427
    %621 = vmatprep.subr.bf16.mxu0 %v420
    %622 = vmatpush1.bf16.msra.mxu0 %v419
    %623 = vmatprep.subr.bf16.mxu0 %v412
    %624 = vmatpush1.bf16.msra.mxu0 %v411
    %625 = vmatprep.subr.bf16.mxu0 0
    %626 = vmatpush2.bf16.msra.mxu0 0
    %627 = vmatprep.subr.bf16.mxu0 0
    %628 = vmatpush2.bf16.msra.mxu0 0
    %629 = vmatprep.subr.bf16.mxu0 0
    %630 = vmatpush2.bf16.msra.mxu0 0
    %631 = vmatprep.subr.bf16.mxu0 0
    %632 = vmatpush2.bf16.msra.mxu0 0
    %633 = vmatprep.subr.bf16.mxu0 0
    %634 = vmatpush2.bf16.msra.mxu0 0
    %635 = vmatprep.subr.bf16.mxu0 0
    %636 = vmatpush2.bf16.msra.mxu0 0
    %637 = vmatprep.subr.bf16.mxu0 0
    %638 = vmatpush2.bf16.msra.mxu0 0
    %639 = vmatprep.subr.bf16.mxu0 0
    %640 = vmatpush2.bf16.msra.mxu0 0
    %641 = vmatprep.mubr.bf16.mxu0 0
    %642 = vmatmul.mubr.bf16.gmra.mxu0 %v521
    %v643 = vpop.f32.mrf.mxu0
    %v644 = vadd.f32 0.0, %v643
    %v645 = vpop.f32.mrf.mxu0
    %v646 = vadd.f32 0.0, %v645
    %v647 = vpop.f32.mrf.mxu0
    %v648 = vadd.f32 0.0, %v647
    %v649 = vpop.f32.mrf.mxu0
    %v650 = vadd.f32 0.0, %v649
    %651 = vdwg.mxu0
    %652 = vmatprep.subr.bf16.mxu0 0
    %653 = vmatpush1.bf16.msra.mxu0 0
    %654 = vmatprep.subr.bf16.mxu0 %v462
    %655 = vmatpush1.bf16.msra.mxu0 %v461
    %656 = vmatprep.subr.bf16.mxu0 %v454
    %657 = vmatpush1.bf16.msra.mxu0 %v453
    %658 = vmatprep.subr.bf16.mxu0 %v446
    %659 = vmatpush1.bf16.msra.mxu0 %v445
    %660 = vmatprep.subr.bf16.mxu0 %v438
    %661 = vmatpush1.bf16.msra.mxu0 %v437
    %662 = vmatprep.subr.bf16.mxu0 %v430
    %663 = vmatpush1.bf16.msra.mxu0 %v429
    %664 = vmatprep.subr.bf16.mxu0 %v422
    %665 = vmatpush1.bf16.msra.mxu0 %v421
    %666 = vmatprep.subr.bf16.mxu0 %v414
    %667 = vmatpush1.bf16.msra.mxu0 %v413
    %668 = vmatprep.subr.bf16.mxu0 0
    %669 = vmatpush2.bf16.msra.mxu0 0
    %670 = vmatprep.subr.bf16.mxu0 0
    %671 = vmatpush2.bf16.msra.mxu0 0
    %672 = vmatprep.subr.bf16.mxu0 0
    %673 = vmatpush2.bf16.msra.mxu0 0
    %674 = vmatprep.subr.bf16.mxu0 0
    %675 = vmatpush2.bf16.msra.mxu0 0
    %676 = vmatprep.subr.bf16.mxu0 0
    %677 = vmatpush2.bf16.msra.mxu0 0
    %678 = vmatprep.subr.bf16.mxu0 0
    %679 = vmatpush2.bf16.msra.mxu0 0
    %680 = vmatprep.subr.bf16.mxu0 0
    %681 = vmatpush2.bf16.msra.mxu0 0
    %682 = vmatprep.subr.bf16.mxu0 0
    %683 = vmatpush2.bf16.msra.mxu0 0
    %684 = vmatprep.mubr.bf16.mxu0 0
    %685 = vmatmul.mubr.bf16.gmra.mxu0 %v521
    %v686 = vpop.f32.mrf.mxu0
    %v687 = vadd.f32 0.0, %v686
    %v688 = vpop.f32.mrf.mxu0
    %v689 = vadd.f32 0.0, %v688
    %v690 = vpop.f32.mrf.mxu0
    %v691 = vadd.f32 0.0, %v690
    %v692 = vpop.f32.mrf.mxu0
    %v693 = vadd.f32 0.0, %v692
    %694 = vdwg.mxu0
    %v751 = vunpack.c.l.b16 %v177
    %v752 = vunpack.c.h.b16 %v177
    %v753 = vunpack.c.l.b16 %v178
    %v754 = vunpack.c.h.b16 %v178
    %v755 = vunpack.c.l.b16 %v179
    %v756 = vunpack.c.h.b16 %v179
    %v757 = vunpack.c.l.b16 %v180
    %v758 = vunpack.c.h.b16 %v180
    %v759 = vunpack.c.l.b16 %v181
    %v760 = vunpack.c.h.b16 %v181
    %v761 = vunpack.c.l.b16 %v182
    %v762 = vunpack.c.h.b16 %v182
    %v763 = vunpack.c.l.b16 %v183
    %v764 = vunpack.c.h.b16 %v183
    %v765 = vunpack.c.l.b16 %v184
    %v766 = vunpack.c.h.b16 %v184
    %v767 = vunpack.c.l.b16 %v185
    %v768 = vunpack.c.h.b16 %v185
    %v769 = vunpack.c.l.b16 %v186
    %v770 = vunpack.c.h.b16 %v186
    %v771 = vunpack.c.l.b16 %v187
    %v772 = vunpack.c.h.b16 %v187
    %v773 = vunpack.c.l.b16 %v188
    %v774 = vunpack.c.h.b16 %v188
    %v775 = vunpack.c.l.b16 %v189
    %v776 = vunpack.c.h.b16 %v189
    %v777 = vunpack.c.l.b16 %v190
    %v778 = vunpack.c.h.b16 %v190
    %v779 = vunpack.c.l.b16 %v191
    %v780 = vunpack.c.h.b16 %v191
    %v781 = vunpack.c.l.b16 %v192
    %v782 = vunpack.c.h.b16 %v192
    %v783 = vunpack.c.l.b16 %v193
    %v784 = vunpack.c.h.b16 %v193
    %v785 = vunpack.c.l.b16 %v194
    %v786 = vunpack.c.h.b16 %v194
    %v787 = vunpack.c.l.b16 %v195
    %v788 = vunpack.c.h.b16 %v195
    %v789 = vunpack.c.l.b16 %v196
    %v790 = vunpack.c.h.b16 %v196
    %v791 = vunpack.c.l.b16 %v197
    %v792 = vunpack.c.h.b16 %v197
    %v793 = vunpack.c.l.b16 %v198
    %v794 = vunpack.c.h.b16 %v198
    %v795 = vunpack.c.l.b16 %v199
    %v796 = vunpack.c.h.b16 %v199
    %v797 = vunpack.c.l.b16 %v200
    %v798 = vunpack.c.h.b16 %v200
    %v799 = vunpack.c.l.b16 %v201
    %v800 = vunpack.c.h.b16 %v201
    %v801 = vunpack.c.l.b16 %v202
    %v802 = vunpack.c.h.b16 %v202
    %v803 = vunpack.c.l.b16 %v203
    %v804 = vunpack.c.h.b16 %v203
    %v805 = vunpack.c.l.b16 %v204
    %v806 = vunpack.c.h.b16 %v204
    %v807 = vunpack.c.l.b16 %v205
    %v808 = vunpack.c.h.b16 %v205
    %v809 = vunpack.c.l.b16 %v206
    %v810 = vunpack.c.h.b16 %v206
    %v811 = vunpack.c.l.b16 %v207
    %v812 = vunpack.c.h.b16 %v207
    %v813 = vunpack.c.l.b16 %v208
    %v814 = vunpack.c.h.b16 %v208
    %v815 = vunpack.c.l.b16 %v209
    %v816 = vunpack.c.h.b16 %v209
    %v817 = vunpack.c.l.b16 %v210
    %v818 = vunpack.c.h.b16 %v210
    %v819 = vunpack.c.l.b16 %v211
    %v820 = vunpack.c.h.b16 %v211
    %v821 = vunpack.c.l.b16 %v212
    %v822 = vunpack.c.h.b16 %v212
    %v823 = vunpack.c.l.b16 %v213
    %v824 = vunpack.c.h.b16 %v213
    %v825 = vunpack.c.l.b16 %v214
    %v826 = vunpack.c.h.b16 %v214
    %v827 = vunpack.c.l.b16 %v215
    %v828 = vunpack.c.h.b16 %v215
    %v829 = vunpack.c.l.b16 %v216
    %v830 = vunpack.c.h.b16 %v216
    %v831 = vunpack.c.l.b16 %v217
    %v832 = vunpack.c.h.b16 %v217
    %v833 = vunpack.c.l.b16 %v218
    %v834 = vunpack.c.h.b16 %v218
    %v835 = vunpack.c.l.b16 %v219
    %v836 = vunpack.c.h.b16 %v219
    %v837 = vunpack.c.l.b16 %v220
    %v838 = vunpack.c.h.b16 %v220
    %v839 = vunpack.c.l.b16 %v221
    %v840 = vunpack.c.h.b16 %v221
    %v841 = vunpack.c.l.b16 %v222
    %v842 = vunpack.c.h.b16 %v222
    %v843 = vunpack.c.l.b16 %v223
    %v844 = vunpack.c.h.b16 %v223
    %v845 = vunpack.c.l.b16 %v224
    %v846 = vunpack.c.h.b16 %v224
    %v847 = vunpack.c.l.b16 %v225
    %v848 = vunpack.c.h.b16 %v225
    %v849 = vunpack.c.l.b16 %v226
    %v850 = vunpack.c.h.b16 %v226
    %v851 = vunpack.c.l.b16 %v227
    %v852 = vunpack.c.h.b16 %v227
    %v853 = vunpack.c.l.b16 %v228
    %v854 = vunpack.c.h.b16 %v228
    %v855 = vunpack.c.l.b16 %v229
    %v856 = vunpack.c.h.b16 %v229
    %v857 = vunpack.c.l.b16 %v230
    %v858 = vunpack.c.h.b16 %v230
    %v859 = vunpack.c.l.b16 %v231
    %v860 = vunpack.c.h.b16 %v231
    %v861 = vunpack.c.l.b16 %v232
    %v862 = vunpack.c.h.b16 %v232
    %v863 = vpack.c.b16 %v759, %v751
    %v864 = vpack.c.b16 %v760, %v752
    %v865 = vpack.c.b16 %v761, %v753
    %v866 = vpack.c.b16 %v762, %v754
    %v867 = vpack.c.b16 %v763, %v755
    %v868 = vpack.c.b16 %v764, %v756
    %v869 = vpack.c.b16 %v765, %v757
    %v870 = vpack.c.b16 %v766, %v758
    %v871 = vpack.c.b16 %v775, %v767
    %v872 = vpack.c.b16 %v776, %v768
    %v873 = vpack.c.b16 %v777, %v769
    %v874 = vpack.c.b16 %v778, %v770
    %v875 = vpack.c.b16 %v779, %v771
    %v876 = vpack.c.b16 %v780, %v772
    %v877 = vpack.c.b16 %v781, %v773
    %v878 = vpack.c.b16 %v782, %v774
    %v879 = vpack.c.b16 %v791, %v783
    %v880 = vpack.c.b16 %v792, %v784
    %v881 = vpack.c.b16 %v793, %v785
    %v882 = vpack.c.b16 %v794, %v786
    %v883 = vpack.c.b16 %v795, %v787
    %v884 = vpack.c.b16 %v796, %v788
    %v885 = vpack.c.b16 %v797, %v789
    %v886 = vpack.c.b16 %v798, %v790
    %v887 = vpack.c.b16 %v807, %v799
    %v888 = vpack.c.b16 %v808, %v800
    %v889 = vpack.c.b16 %v809, %v801
    %v890 = vpack.c.b16 %v810, %v802
    %v891 = vpack.c.b16 %v811, %v803
    %v892 = vpack.c.b16 %v812, %v804
    %v893 = vpack.c.b16 %v813, %v805
    %v894 = vpack.c.b16 %v814, %v806
    %v895 = vpack.c.b16 %v823, %v815
    %v896 = vpack.c.b16 %v824, %v816
    %v897 = vpack.c.b16 %v825, %v817
    %v898 = vpack.c.b16 %v826, %v818
    %v899 = vpack.c.b16 %v827, %v819
    %v900 = vpack.c.b16 %v828, %v820
    %v901 = vpack.c.b16 %v829, %v821
    %v902 = vpack.c.b16 %v830, %v822
    %v903 = vpack.c.b16 %v839, %v831
    %v904 = vpack.c.b16 %v840, %v832
    %v905 = vpack.c.b16 %v841, %v833
    %v906 = vpack.c.b16 %v842, %v834
    %v907 = vpack.c.b16 %v843, %v835
    %v908 = vpack.c.b16 %v844, %v836
    %v909 = vpack.c.b16 %v845, %v837
    %v910 = vpack.c.b16 %v846, %v838
    %v911 = vpack.c.b16 %v855, %v847
    %v912 = vpack.c.b16 %v856, %v848
    %v913 = vpack.c.b16 %v857, %v849
    %v914 = vpack.c.b16 %v858, %v850
    %v915 = vpack.c.b16 %v859, %v851
    %v916 = vpack.c.b16 %v860, %v852
    %v917 = vpack.c.b16 %v861, %v853
    %v918 = vpack.c.b16 %v862, %v854
    %975 = vmatprep.subr.bf16.mxu0 0
    %976 = vmatpush1.bf16.msra.mxu0 0
    %977 = vmatprep.subr.bf16.mxu0 %v912
    %978 = vmatpush1.bf16.msra.mxu0 %v911
    %979 = vmatprep.subr.bf16.mxu0 %v904
    %980 = vmatpush1.bf16.msra.mxu0 %v903
    %981 = vmatprep.subr.bf16.mxu0 %v896
    %982 = vmatpush1.bf16.msra.mxu0 %v895
    %983 = vmatprep.subr.bf16.mxu0 %v888
    %984 = vmatpush1.bf16.msra.mxu0 %v887
    %985 = vmatprep.subr.bf16.mxu0 %v880
    %986 = vmatpush1.bf16.msra.mxu0 %v879
    %987 = vmatprep.subr.bf16.mxu0 %v872
    %988 = vmatpush1.bf16.msra.mxu0 %v871
    %989 = vmatprep.subr.bf16.mxu0 %v864
    %990 = vmatpush1.bf16.msra.mxu0 %v863
    %991 = vmatprep.subr.bf16.mxu0 0
    %992 = vmatpush2.bf16.msra.mxu0 0
    %993 = vmatprep.subr.bf16.mxu0 0
    %994 = vmatpush2.bf16.msra.mxu0 0
    %995 = vmatprep.subr.bf16.mxu0 0
    %996 = vmatpush2.bf16.msra.mxu0 0
    %997 = vmatprep.subr.bf16.mxu0 0
    %998 = vmatpush2.bf16.msra.mxu0 0
    %999 = vmatprep.subr.bf16.mxu0 0
    %1000 = vmatpush2.bf16.msra.mxu0 0
    %1001 = vmatprep.subr.bf16.mxu0 0
    %1002 = vmatpush2.bf16.msra.mxu0 0
    %1003 = vmatprep.subr.bf16.mxu0 0
    %1004 = vmatpush2.bf16.msra.mxu0 0
    %1005 = vmatprep.subr.bf16.mxu0 0
    %1006 = vmatpush2.bf16.msra.mxu0 0
    %1007 = vmatprep.mubr.bf16.mxu0 0
    %1008 = vmatmul.mubr.bf16.gmra.mxu0 %v521
    %v1009 = vpop.f32.mrf.mxu0
    %v1010 = vadd.f32 0.0, %v1009
    %v1011 = vpop.f32.mrf.mxu0
    %v1012 = vadd.f32 0.0, %v1011
    %v1013 = vpop.f32.mrf.mxu0
    %v1014 = vadd.f32 0.0, %v1013
    %v1015 = vpop.f32.mrf.mxu0
    %v1016 = vadd.f32 0.0, %v1015
    %1017 = vdwg.mxu0
    %1018 = vmatprep.subr.bf16.mxu0 0
    %1019 = vmatpush1.bf16.msra.mxu0 0
    %1020 = vmatprep.subr.bf16.mxu0 %v914
    %1021 = vmatpush1.bf16.msra.mxu0 %v913
    %1022 = vmatprep.subr.bf16.mxu0 %v906
    %1023 = vmatpush1.bf16.msra.mxu0 %v905
    %1024 = vmatprep.subr.bf16.mxu0 %v898
    %1025 = vmatpush1.bf16.msra.mxu0 %v897
    %1026 = vmatprep.subr.bf16.mxu0 %v890
    %1027 = vmatpush1.bf16.msra.mxu0 %v889
    %1028 = vmatprep.subr.bf16.mxu0 %v882
    %1029 = vmatpush1.bf16.msra.mxu0 %v881
    %1030 = vmatprep.subr.bf16.mxu0 %v874
    %1031 = vmatpush1.bf16.msra.mxu0 %v873
    %1032 = vmatprep.subr.bf16.mxu0 %v866
    %1033 = vmatpush1.bf16.msra.mxu0 %v865
    %1034 = vmatprep.subr.bf16.mxu0 0
    %1035 = vmatpush2.bf16.msra.mxu0 0
    %1036 = vmatprep.subr.bf16.mxu0 0
    %1037 = vmatpush2.bf16.msra.mxu0 0
    %1038 = vmatprep.subr.bf16.mxu0 0
    %1039 = vmatpush2.bf16.msra.mxu0 0
    %1040 = vmatprep.subr.bf16.mxu0 0
    %1041 = vmatpush2.bf16.msra.mxu0 0
    %1042 = vmatprep.subr.bf16.mxu0 0
    %1043 = vmatpush2.bf16.msra.mxu0 0
    %1044 = vmatprep.subr.bf16.mxu0 0
    %1045 = vmatpush2.bf16.msra.mxu0 0
    %1046 = vmatprep.subr.bf16.mxu0 0
    %1047 = vmatpush2.bf16.msra.mxu0 0
    %1048 = vmatprep.subr.bf16.mxu0 0
    %1049 = vmatpush2.bf16.msra.mxu0 0
    %1050 = vmatprep.mubr.bf16.mxu0 0
    %1051 = vmatmul.mubr.bf16.gmra.mxu0 %v521
    %v1052 = vpop.f32.mrf.mxu0
    %v1053 = vadd.f32 0.0, %v1052
    %v1054 = vpop.f32.mrf.mxu0
    %v1055 = vadd.f32 0.0, %v1054
    %v1056 = vpop.f32.mrf.mxu0
    %v1057 = vadd.f32 0.0, %v1056
    %v1058 = vpop.f32.mrf.mxu0
    %v1059 = vadd.f32 0.0, %v1058
    %1060 = vdwg.mxu0
    %1061 = vmatprep.subr.bf16.mxu0 0
    %1062 = vmatpush1.bf16.msra.mxu0 0
    %1063 = vmatprep.subr.bf16.mxu0 %v916
    %1064 = vmatpush1.bf16.msra.mxu0 %v915
    %1065 = vmatprep.subr.bf16.mxu0 %v908
    %1066 = vmatpush1.bf16.msra.mxu0 %v907
    %1067 = vmatprep.subr.bf16.mxu0 %v900
    %1068 = vmatpush1.bf16.msra.mxu0 %v899
    %1069 = vmatprep.subr.bf16.mxu0 %v892
    %1070 = vmatpush1.bf16.msra.mxu0 %v891
    %1071 = vmatprep.subr.bf16.mxu0 %v884
    %1072 = vmatpush1.bf16.msra.mxu0 %v883
    %1073 = vmatprep.subr.bf16.mxu0 %v876
    %1074 = vmatpush1.bf16.msra.mxu0 %v875
    %1075 = vmatprep.subr.bf16.mxu0 %v868
    %1076 = vmatpush1.bf16.msra.mxu0 %v867
    %1077 = vmatprep.subr.bf16.mxu0 0
    %1078 = vmatpush2.bf16.msra.mxu0 0
    %1079 = vmatprep.subr.bf16.mxu0 0
    %1080 = vmatpush2.bf16.msra.mxu0 0
    %1081 = vmatprep.subr.bf16.mxu0 0
    %1082 = vmatpush2.bf16.msra.mxu0 0
    %1083 = vmatprep.subr.bf16.mxu0 0
    %1084 = vmatpush2.bf16.msra.mxu0 0
    %1085 = vmatprep.subr.bf16.mxu0 0
    %1086 = vmatpush2.bf16.msra.mxu0 0
    %1087 = vmatprep.subr.bf16.mxu0 0
    %1088 = vmatpush2.bf16.msra.mxu0 0
    %1089 = vmatprep.subr.bf16.mxu0 0
    %1090 = vmatpush2.bf16.msra.mxu0 0
    %1091 = vmatprep.subr.bf16.mxu0 0
    %1092 = vmatpush2.bf16.msra.mxu0 0
    %1093 = vmatprep.mubr.bf16.mxu0 0
    %1094 = vmatmul.mubr.bf16.gmra.mxu0 %v521
    %v1095 = vpop.f32.mrf.mxu0
    %v1096 = vadd.f32 0.0, %v1095
    %v1097 = vpop.f32.mrf.mxu0
    %v1098 = vadd.f32 0.0, %v1097
    %v1099 = vpop.f32.mrf.mxu0
    %v1100 = vadd.f32 0.0, %v1099
    %v1101 = vpop.f32.mrf.mxu0
    %v1102 = vadd.f32 0.0, %v1101
    %1103 = vdwg.mxu0
    %1104 = vmatprep.subr.bf16.mxu0 0
    %1105 = vmatpush1.bf16.msra.mxu0 0
    %1106 = vmatprep.subr.bf16.mxu0 %v918
    %1107 = vmatpush1.bf16.msra.mxu0 %v917
    %1108 = vmatprep.subr.bf16.mxu0 %v910
    %1109 = vmatpush1.bf16.msra.mxu0 %v909
    %1110 = vmatprep.subr.bf16.mxu0 %v902
    %1111 = vmatpush1.bf16.msra.mxu0 %v901
    %1112 = vmatprep.subr.bf16.mxu0 %v894
    %1113 = vmatpush1.bf16.msra.mxu0 %v893
    %1114 = vmatprep.subr.bf16.mxu0 %v886
    %1115 = vmatpush1.bf16.msra.mxu0 %v885
    %1116 = vmatprep.subr.bf16.mxu0 %v878
    %1117 = vmatpush1.bf16.msra.mxu0 %v877
    %1118 = vmatprep.subr.bf16.mxu0 %v870
    %1119 = vmatpush1.bf16.msra.mxu0 %v869
    %1120 = vmatprep.subr.bf16.mxu0 0
    %1121 = vmatpush2.bf16.msra.mxu0 0
    %1122 = vmatprep.subr.bf16.mxu0 0
    %1123 = vmatpush2.bf16.msra.mxu0 0
    %1124 = vmatprep.subr.bf16.mxu0 0
    %1125 = vmatpush2.bf16.msra.mxu0 0
    %1126 = vmatprep.subr.bf16.mxu0 0
    %1127 = vmatpush2.bf16.msra.mxu0 0
    %1128 = vmatprep.subr.bf16.mxu0 0
    %1129 = vmatpush2.bf16.msra.mxu0 0
    %1130 = vmatprep.subr.bf16.mxu0 0
    %1131 = vmatpush2.bf16.msra.mxu0 0
    %1132 = vmatprep.subr.bf16.mxu0 0
    %1133 = vmatpush2.bf16.msra.mxu0 0
    %1134 = vmatprep.subr.bf16.mxu0 0
    %1135 = vmatpush2.bf16.msra.mxu0 0
    %1136 = vmatprep.mubr.bf16.mxu0 0
    %1137 = vmatmul.mubr.bf16.gmra.mxu0 %v521
    %v1138 = vpop.f32.mrf.mxu0
    %v1139 = vadd.f32 0.0, %v1138
    %v1140 = vpop.f32.mrf.mxu0
    %v1141 = vadd.f32 0.0, %v1140
    %v1142 = vpop.f32.mrf.mxu0
    %v1143 = vadd.f32 0.0, %v1142
    %v1144 = vpop.f32.mrf.mxu0
    %v1145 = vadd.f32 0.0, %v1144
    %1146 = vdwg.mxu0
    %v1147 = vmax.f32 %v558, %v644
    %v1148 = vmax.f32 %v560, %v646
    %v1149 = vmax.f32 %v601, %v687
    %v1150 = vmax.f32 %v603, %v689
    %v1151 = vmax.f32 %v562, %v648
    %v1152 = vmax.f32 %v564, %v650
    %v1153 = vmax.f32 %v605, %v691
    %v1154 = vmax.f32 %v607, %v693
    %v1155 = vmax.f32 %v1010, %v1096
    %v1156 = vmax.f32 %v1012, %v1098
    %v1157 = vmax.f32 %v1053, %v1139
    %v1158 = vmax.f32 %v1055, %v1141
    %v1159 = vmax.f32 %v1014, %v1100
    %v1160 = vmax.f32 %v1016, %v1102
    %v1161 = vmax.f32 %v1057, %v1143
    %v1162 = vmax.f32 %v1059, %v1145
    %v1163 = vmax.f32 %v1147, %v1155
    %v1164 = vmax.f32 %v1148, %v1156
    %v1165 = vmax.f32 %v1149, %v1157
    %v1166 = vmax.f32 %v1150, %v1158
    %v1167 = vmax.f32 %v1151, %v1159
    %v1168 = vmax.f32 %v1152, %v1160
    %v1169 = vmax.f32 %v1153, %v1161
    %v1170 = vmax.f32 %v1154, %v1162
    %v1172 = vlaneseq
    %v1173 = vshrl.u32 %v1172, 7
    %v1174 = vsub.s32 0, %v1173
    %v1175 = vrot.slane %v233, %v1174
    %v1176 = vlaneseq
    %v1177 = vshrl.u32 %v1176, 7
    %v1178 = vsub.s32 1, %v1177
    %v1179 = vrot.slane %v233, %v1178
    %v1180 = vlaneseq
    %v1181 = vshrl.u32 %v1180, 7
    %v1182 = vsub.s32 2, %v1181
    %v1183 = vrot.slane %v233, %v1182
    %v1184 = vlaneseq
    %v1185 = vshrl.u32 %v1184, 7
    %v1186 = vsub.s32 3, %v1185
    %v1187 = vrot.slane %v233, %v1186
    %v1192 = vadd.f32 %v1163, %v1175
    %v1193 = vadd.f32 %v1164, %v1179
    %v1194 = vadd.f32 %v1165, %v1183
    %v1195 = vadd.f32 %v1166, %v1187
    %v1196 = vadd.f32 %v1167, %v1175
    %v1197 = vadd.f32 %v1168, %v1179
    %v1198 = vadd.f32 %v1169, %v1183
    %v1199 = vadd.f32 %v1170, %v1187
    %v1200 = vmax.f32 %v1192, 0.0
    %v1201 = vmax.f32 %v1193, 0.0
    %v1202 = vmax.f32 %v1194, 0.0
    %v1203 = vmax.f32 %v1195, 0.0
    %v1204 = vmax.f32 %v1196, 0.0
    %v1205 = vmax.f32 %v1197, 0.0
    %v1206 = vmax.f32 %v1198, 0.0
    %v1207 = vmax.f32 %v1199, 0.0
    %v1210 = vunpack.c.l.b16 %v119
    %v1211 = vunpack.c.l.b16 %v120
    %v1212 = vpack.c.b16 %v1211, %v1210
    %v1214 = vsel %vm519, %v1212, 0
    %1216 = vmatprep.subr.bf16.mxu0 0
    %1217 = vmatpush1.bf16.msra.mxu0 0
    %1218 = vmatprep.subr.bf16.mxu0 %v456
    %1219 = vmatpush1.bf16.msra.mxu0 %v455
    %1220 = vmatprep.subr.bf16.mxu0 %v448
    %1221 = vmatpush1.bf16.msra.mxu0 %v447
    %1222 = vmatprep.subr.bf16.mxu0 %v440
    %1223 = vmatpush1.bf16.msra.mxu0 %v439
    %1224 = vmatprep.subr.bf16.mxu0 %v432
    %1225 = vmatpush1.bf16.msra.mxu0 %v431
    %1226 = vmatprep.subr.bf16.mxu0 %v424
    %1227 = vmatpush1.bf16.msra.mxu0 %v423
    %1228 = vmatprep.subr.bf16.mxu0 %v416
    %1229 = vmatpush1.bf16.msra.mxu0 %v415
    %1230 = vmatprep.subr.bf16.mxu0 %v408
    %1231 = vmatpush1.bf16.msra.mxu0 %v407
    %1232 = vmatprep.subr.bf16.mxu0 0
    %1233 = vmatpush2.bf16.msra.mxu0 0
    %1234 = vmatprep.subr.bf16.mxu0 0
    %1235 = vmatpush2.bf16.msra.mxu0 0
    %1236 = vmatprep.subr.bf16.mxu0 0
    %1237 = vmatpush2.bf16.msra.mxu0 0
    %1238 = vmatprep.subr.bf16.mxu0 0
    %1239 = vmatpush2.bf16.msra.mxu0 0
    %1240 = vmatprep.subr.bf16.mxu0 0
    %1241 = vmatpush2.bf16.msra.mxu0 0
    %1242 = vmatprep.subr.bf16.mxu0 0
    %1243 = vmatpush2.bf16.msra.mxu0 0
    %1244 = vmatprep.subr.bf16.mxu0 0
    %1245 = vmatpush2.bf16.msra.mxu0 0
    %1246 = vmatprep.subr.bf16.mxu0 0
    %1247 = vmatpush2.bf16.msra.mxu0 0
    %1248 = vmatprep.mubr.bf16.mxu0 0
    %1249 = vmatmul.mubr.bf16.gmra.mxu0 %v1214
    %v1250 = vpop.f32.mrf.mxu0
    %v1251 = vadd.f32 0.0, %v1250
    %v1252 = vpop.f32.mrf.mxu0
    %v1253 = vadd.f32 0.0, %v1252
    %v1254 = vpop.f32.mrf.mxu0
    %v1255 = vadd.f32 0.0, %v1254
    %v1256 = vpop.f32.mrf.mxu0
    %v1257 = vadd.f32 0.0, %v1256
    %1258 = vdwg.mxu0
    %1259 = vmatprep.subr.bf16.mxu0 0
    %1260 = vmatpush1.bf16.msra.mxu0 0
    %1261 = vmatprep.subr.bf16.mxu0 %v458
    %1262 = vmatpush1.bf16.msra.mxu0 %v457
    %1263 = vmatprep.subr.bf16.mxu0 %v450
    %1264 = vmatpush1.bf16.msra.mxu0 %v449
    %1265 = vmatprep.subr.bf16.mxu0 %v442
    %1266 = vmatpush1.bf16.msra.mxu0 %v441
    %1267 = vmatprep.subr.bf16.mxu0 %v434
    %1268 = vmatpush1.bf16.msra.mxu0 %v433
    %1269 = vmatprep.subr.bf16.mxu0 %v426
    %1270 = vmatpush1.bf16.msra.mxu0 %v425
    %1271 = vmatprep.subr.bf16.mxu0 %v418
    %1272 = vmatpush1.bf16.msra.mxu0 %v417
    %1273 = vmatprep.subr.bf16.mxu0 %v410
    %1274 = vmatpush1.bf16.msra.mxu0 %v409
    %1275 = vmatprep.subr.bf16.mxu0 0
    %1276 = vmatpush2.bf16.msra.mxu0 0
    %1277 = vmatprep.subr.bf16.mxu0 0
    %1278 = vmatpush2.bf16.msra.mxu0 0
    %1279 = vmatprep.subr.bf16.mxu0 0
    %1280 = vmatpush2.bf16.msra.mxu0 0
    %1281 = vmatprep.subr.bf16.mxu0 0
    %1282 = vmatpush2.bf16.msra.mxu0 0
    %1283 = vmatprep.subr.bf16.mxu0 0
    %1284 = vmatpush2.bf16.msra.mxu0 0
    %1285 = vmatprep.subr.bf16.mxu0 0
    %1286 = vmatpush2.bf16.msra.mxu0 0
    %1287 = vmatprep.subr.bf16.mxu0 0
    %1288 = vmatpush2.bf16.msra.mxu0 0
    %1289 = vmatprep.subr.bf16.mxu0 0
    %1290 = vmatpush2.bf16.msra.mxu0 0
    %1291 = vmatprep.mubr.bf16.mxu0 0
    %1292 = vmatmul.mubr.bf16.gmra.mxu0 %v1214
    %v1293 = vpop.f32.mrf.mxu0
    %v1294 = vadd.f32 0.0, %v1293
    %v1295 = vpop.f32.mrf.mxu0
    %v1296 = vadd.f32 0.0, %v1295
    %v1297 = vpop.f32.mrf.mxu0
    %v1298 = vadd.f32 0.0, %v1297
    %v1299 = vpop.f32.mrf.mxu0
    %v1300 = vadd.f32 0.0, %v1299
    %1301 = vdwg.mxu0
    %1302 = vmatprep.subr.bf16.mxu0 0
    %1303 = vmatpush1.bf16.msra.mxu0 0
    %1304 = vmatprep.subr.bf16.mxu0 %v460
    %1305 = vmatpush1.bf16.msra.mxu0 %v459
    %1306 = vmatprep.subr.bf16.mxu0 %v452
    %1307 = vmatpush1.bf16.msra.mxu0 %v451
    %1308 = vmatprep.subr.bf16.mxu0 %v444
    %1309 = vmatpush1.bf16.msra.mxu0 %v443
    %1310 = vmatprep.subr.bf16.mxu0 %v436
    %1311 = vmatpush1.bf16.msra.mxu0 %v435
    %1312 = vmatprep.subr.bf16.mxu0 %v428
    %1313 = vmatpush1.bf16.msra.mxu0 %v427
    %1314 = vmatprep.subr.bf16.mxu0 %v420
    %1315 = vmatpush1.bf16.msra.mxu0 %v419
    %1316 = vmatprep.subr.bf16.mxu0 %v412
    %1317 = vmatpush1.bf16.msra.mxu0 %v411
    %1318 = vmatprep.subr.bf16.mxu0 0
    %1319 = vmatpush2.bf16.msra.mxu0 0
    %1320 = vmatprep.subr.bf16.mxu0 0
    %1321 = vmatpush2.bf16.msra.mxu0 0
    %1322 = vmatprep.subr.bf16.mxu0 0
    %1323 = vmatpush2.bf16.msra.mxu0 0
    %1324 = vmatprep.subr.bf16.mxu0 0
    %1325 = vmatpush2.bf16.msra.mxu0 0
    %1326 = vmatprep.subr.bf16.mxu0 0
    %1327 = vmatpush2.bf16.msra.mxu0 0
    %1328 = vmatprep.subr.bf16.mxu0 0
    %1329 = vmatpush2.bf16.msra.mxu0 0
    %1330 = vmatprep.subr.bf16.mxu0 0
    %1331 = vmatpush2.bf16.msra.mxu0 0
    %1332 = vmatprep.subr.bf16.mxu0 0
    %1333 = vmatpush2.bf16.msra.mxu0 0
    %1334 = vmatprep.mubr.bf16.mxu0 0
    %1335 = vmatmul.mubr.bf16.gmra.mxu0 %v1214
    %v1336 = vpop.f32.mrf.mxu0
    %v1337 = vadd.f32 0.0, %v1336
    %v1338 = vpop.f32.mrf.mxu0
    %v1339 = vadd.f32 0.0, %v1338
    %v1340 = vpop.f32.mrf.mxu0
    %v1341 = vadd.f32 0.0, %v1340
    %v1342 = vpop.f32.mrf.mxu0
    %v1343 = vadd.f32 0.0, %v1342
    %1344 = vdwg.mxu0
    %1345 = vmatprep.subr.bf16.mxu0 0
    %1346 = vmatpush1.bf16.msra.mxu0 0
    %1347 = vmatprep.subr.bf16.mxu0 %v462
    %1348 = vmatpush1.bf16.msra.mxu0 %v461
    %1349 = vmatprep.subr.bf16.mxu0 %v454
    %1350 = vmatpush1.bf16.msra.mxu0 %v453
    %1351 = vmatprep.subr.bf16.mxu0 %v446
    %1352 = vmatpush1.bf16.msra.mxu0 %v445
    %1353 = vmatprep.subr.bf16.mxu0 %v438
    %1354 = vmatpush1.bf16.msra.mxu0 %v437
    %1355 = vmatprep.subr.bf16.mxu0 %v430
    %1356 = vmatpush1.bf16.msra.mxu0 %v429
    %1357 = vmatprep.subr.bf16.mxu0 %v422
    %1358 = vmatpush1.bf16.msra.mxu0 %v421
    %1359 = vmatprep.subr.bf16.mxu0 %v414
    %1360 = vmatpush1.bf16.msra.mxu0 %v413
    %1361 = vmatprep.subr.bf16.mxu0 0
    %1362 = vmatpush2.bf16.msra.mxu0 0
    %1363 = vmatprep.subr.bf16.mxu0 0
    %1364 = vmatpush2.bf16.msra.mxu0 0
    %1365 = vmatprep.subr.bf16.mxu0 0
    %1366 = vmatpush2.bf16.msra.mxu0 0
    %1367 = vmatprep.subr.bf16.mxu0 0
    %1368 = vmatpush2.bf16.msra.mxu0 0
    %1369 = vmatprep.subr.bf16.mxu0 0
    %1370 = vmatpush2.bf16.msra.mxu0 0
    %1371 = vmatprep.subr.bf16.mxu0 0
    %1372 = vmatpush2.bf16.msra.mxu0 0
    %1373 = vmatprep.subr.bf16.mxu0 0
    %1374 = vmatpush2.bf16.msra.mxu0 0
    %1375 = vmatprep.subr.bf16.mxu0 0
    %1376 = vmatpush2.bf16.msra.mxu0 0
    %1377 = vmatprep.mubr.bf16.mxu0 0
    %1378 = vmatmul.mubr.bf16.gmra.mxu0 %v1214
    %v1379 = vpop.f32.mrf.mxu0
    %v1380 = vadd.f32 0.0, %v1379
    %v1381 = vpop.f32.mrf.mxu0
    %v1382 = vadd.f32 0.0, %v1381
    %v1383 = vpop.f32.mrf.mxu0
    %v1384 = vadd.f32 0.0, %v1383
    %v1385 = vpop.f32.mrf.mxu0
    %v1386 = vadd.f32 0.0, %v1385
    %1387 = vdwg.mxu0
    %1388 = vmatprep.subr.bf16.mxu0 0
    %1389 = vmatpush1.bf16.msra.mxu0 0
    %1390 = vmatprep.subr.bf16.mxu0 %v912
    %1391 = vmatpush1.bf16.msra.mxu0 %v911
    %1392 = vmatprep.subr.bf16.mxu0 %v904
    %1393 = vmatpush1.bf16.msra.mxu0 %v903
    %1394 = vmatprep.subr.bf16.mxu0 %v896
    %1395 = vmatpush1.bf16.msra.mxu0 %v895
    %1396 = vmatprep.subr.bf16.mxu0 %v888
    %1397 = vmatpush1.bf16.msra.mxu0 %v887
    %1398 = vmatprep.subr.bf16.mxu0 %v880
    %1399 = vmatpush1.bf16.msra.mxu0 %v879
    %1400 = vmatprep.subr.bf16.mxu0 %v872
    %1401 = vmatpush1.bf16.msra.mxu0 %v871
    %1402 = vmatprep.subr.bf16.mxu0 %v864
    %1403 = vmatpush1.bf16.msra.mxu0 %v863
    %1404 = vmatprep.subr.bf16.mxu0 0
    %1405 = vmatpush2.bf16.msra.mxu0 0
    %1406 = vmatprep.subr.bf16.mxu0 0
    %1407 = vmatpush2.bf16.msra.mxu0 0
    %1408 = vmatprep.subr.bf16.mxu0 0
    %1409 = vmatpush2.bf16.msra.mxu0 0
    %1410 = vmatprep.subr.bf16.mxu0 0
    %1411 = vmatpush2.bf16.msra.mxu0 0
    %1412 = vmatprep.subr.bf16.mxu0 0
    %1413 = vmatpush2.bf16.msra.mxu0 0
    %1414 = vmatprep.subr.bf16.mxu0 0
    %1415 = vmatpush2.bf16.msra.mxu0 0
    %1416 = vmatprep.subr.bf16.mxu0 0
    %1417 = vmatpush2.bf16.msra.mxu0 0
    %1418 = vmatprep.subr.bf16.mxu0 0
    %1419 = vmatpush2.bf16.msra.mxu0 0
    %1420 = vmatprep.mubr.bf16.mxu0 0
    %1421 = vmatmul.mubr.bf16.gmra.mxu0 %v1214
    %v1422 = vpop.f32.mrf.mxu0
    %v1423 = vadd.f32 0.0, %v1422
    %v1424 = vpop.f32.mrf.mxu0
    %v1425 = vadd.f32 0.0, %v1424
    %v1426 = vpop.f32.mrf.mxu0
    %v1427 = vadd.f32 0.0, %v1426
    %v1428 = vpop.f32.mrf.mxu0
    %v1429 = vadd.f32 0.0, %v1428
    %1430 = vdwg.mxu0
    %1431 = vmatprep.subr.bf16.mxu0 0
    %1432 = vmatpush1.bf16.msra.mxu0 0
    %1433 = vmatprep.subr.bf16.mxu0 %v914
    %1434 = vmatpush1.bf16.msra.mxu0 %v913
    %1435 = vmatprep.subr.bf16.mxu0 %v906
    %1436 = vmatpush1.bf16.msra.mxu0 %v905
    %1437 = vmatprep.subr.bf16.mxu0 %v898
    %1438 = vmatpush1.bf16.msra.mxu0 %v897
    %1439 = vmatprep.subr.bf16.mxu0 %v890
    %1440 = vmatpush1.bf16.msra.mxu0 %v889
    %1441 = vmatprep.subr.bf16.mxu0 %v882
    %1442 = vmatpush1.bf16.msra.mxu0 %v881
    %1443 = vmatprep.subr.bf16.mxu0 %v874
    %1444 = vmatpush1.bf16.msra.mxu0 %v873
    %1445 = vmatprep.subr.bf16.mxu0 %v866
    %1446 = vmatpush1.bf16.msra.mxu0 %v865
    %1447 = vmatprep.subr.bf16.mxu0 0
    %1448 = vmatpush2.bf16.msra.mxu0 0
    %1449 = vmatprep.subr.bf16.mxu0 0
    %1450 = vmatpush2.bf16.msra.mxu0 0
    %1451 = vmatprep.subr.bf16.mxu0 0
    %1452 = vmatpush2.bf16.msra.mxu0 0
    %1453 = vmatprep.subr.bf16.mxu0 0
    %1454 = vmatpush2.bf16.msra.mxu0 0
    %1455 = vmatprep.subr.bf16.mxu0 0
    %1456 = vmatpush2.bf16.msra.mxu0 0
    %1457 = vmatprep.subr.bf16.mxu0 0
    %1458 = vmatpush2.bf16.msra.mxu0 0
    %1459 = vmatprep.subr.bf16.mxu0 0
    %1460 = vmatpush2.bf16.msra.mxu0 0
    %1461 = vmatprep.subr.bf16.mxu0 0
    %1462 = vmatpush2.bf16.msra.mxu0 0
    %1463 = vmatprep.mubr.bf16.mxu0 0
    %1464 = vmatmul.mubr.bf16.gmra.mxu0 %v1214
    %v1465 = vpop.f32.mrf.mxu0
    %v1466 = vadd.f32 0.0, %v1465
    %v1467 = vpop.f32.mrf.mxu0
    %v1468 = vadd.f32 0.0, %v1467
    %v1469 = vpop.f32.mrf.mxu0
    %v1470 = vadd.f32 0.0, %v1469
    %v1471 = vpop.f32.mrf.mxu0
    %v1472 = vadd.f32 0.0, %v1471
    %1473 = vdwg.mxu0
    %1474 = vmatprep.subr.bf16.mxu0 0
    %1475 = vmatpush1.bf16.msra.mxu0 0
    %1476 = vmatprep.subr.bf16.mxu0 %v916
    %1477 = vmatpush1.bf16.msra.mxu0 %v915
    %1478 = vmatprep.subr.bf16.mxu0 %v908
    %1479 = vmatpush1.bf16.msra.mxu0 %v907
    %1480 = vmatprep.subr.bf16.mxu0 %v900
    %1481 = vmatpush1.bf16.msra.mxu0 %v899
    %1482 = vmatprep.subr.bf16.mxu0 %v892
    %1483 = vmatpush1.bf16.msra.mxu0 %v891
    %1484 = vmatprep.subr.bf16.mxu0 %v884
    %1485 = vmatpush1.bf16.msra.mxu0 %v883
    %1486 = vmatprep.subr.bf16.mxu0 %v876
    %1487 = vmatpush1.bf16.msra.mxu0 %v875
    %1488 = vmatprep.subr.bf16.mxu0 %v868
    %1489 = vmatpush1.bf16.msra.mxu0 %v867
    %1490 = vmatprep.subr.bf16.mxu0 0
    %1491 = vmatpush2.bf16.msra.mxu0 0
    %1492 = vmatprep.subr.bf16.mxu0 0
    %1493 = vmatpush2.bf16.msra.mxu0 0
    %1494 = vmatprep.subr.bf16.mxu0 0
    %1495 = vmatpush2.bf16.msra.mxu0 0
    %1496 = vmatprep.subr.bf16.mxu0 0
    %1497 = vmatpush2.bf16.msra.mxu0 0
    %1498 = vmatprep.subr.bf16.mxu0 0
    %1499 = vmatpush2.bf16.msra.mxu0 0
    %1500 = vmatprep.subr.bf16.mxu0 0
    %1501 = vmatpush2.bf16.msra.mxu0 0
    %1502 = vmatprep.subr.bf16.mxu0 0
    %1503 = vmatpush2.bf16.msra.mxu0 0
    %1504 = vmatprep.subr.bf16.mxu0 0
    %1505 = vmatpush2.bf16.msra.mxu0 0
    %1506 = vmatprep.mubr.bf16.mxu0 0
    %1507 = vmatmul.mubr.bf16.gmra.mxu0 %v1214
    %v1508 = vpop.f32.mrf.mxu0
    %v1509 = vadd.f32 0.0, %v1508
    %v1510 = vpop.f32.mrf.mxu0
    %v1511 = vadd.f32 0.0, %v1510
    %v1512 = vpop.f32.mrf.mxu0
    %v1513 = vadd.f32 0.0, %v1512
    %v1514 = vpop.f32.mrf.mxu0
    %v1515 = vadd.f32 0.0, %v1514
    %1516 = vdwg.mxu0
    %1517 = vmatprep.subr.bf16.mxu0 0
    %1518 = vmatpush1.bf16.msra.mxu0 0
    %1519 = vmatprep.subr.bf16.mxu0 %v918
    %1520 = vmatpush1.bf16.msra.mxu0 %v917
    %1521 = vmatprep.subr.bf16.mxu0 %v910
    %1522 = vmatpush1.bf16.msra.mxu0 %v909
    %1523 = vmatprep.subr.bf16.mxu0 %v902
    %1524 = vmatpush1.bf16.msra.mxu0 %v901
    %1525 = vmatprep.subr.bf16.mxu0 %v894
    %1526 = vmatpush1.bf16.msra.mxu0 %v893
    %1527 = vmatprep.subr.bf16.mxu0 %v886
    %1528 = vmatpush1.bf16.msra.mxu0 %v885
    %1529 = vmatprep.subr.bf16.mxu0 %v878
    %1530 = vmatpush1.bf16.msra.mxu0 %v877
    %1531 = vmatprep.subr.bf16.mxu0 %v870
    %1532 = vmatpush1.bf16.msra.mxu0 %v869
    %1533 = vmatprep.subr.bf16.mxu0 0
    %1534 = vmatpush2.bf16.msra.mxu0 0
    %1535 = vmatprep.subr.bf16.mxu0 0
    %1536 = vmatpush2.bf16.msra.mxu0 0
    %1537 = vmatprep.subr.bf16.mxu0 0
    %1538 = vmatpush2.bf16.msra.mxu0 0
    %1539 = vmatprep.subr.bf16.mxu0 0
    %1540 = vmatpush2.bf16.msra.mxu0 0
    %1541 = vmatprep.subr.bf16.mxu0 0
    %1542 = vmatpush2.bf16.msra.mxu0 0
    %1543 = vmatprep.subr.bf16.mxu0 0
    %1544 = vmatpush2.bf16.msra.mxu0 0
    %1545 = vmatprep.subr.bf16.mxu0 0
    %1546 = vmatpush2.bf16.msra.mxu0 0
    %1547 = vmatprep.subr.bf16.mxu0 0
    %1548 = vmatpush2.bf16.msra.mxu0 0
    %1549 = vmatprep.mubr.bf16.mxu0 0
    %1550 = vmatmul.mubr.bf16.gmra.mxu0 %v1214
    %v1551 = vpop.f32.mrf.mxu0
    %v1552 = vadd.f32 0.0, %v1551
    %v1553 = vpop.f32.mrf.mxu0
    %v1554 = vadd.f32 0.0, %v1553
    %v1555 = vpop.f32.mrf.mxu0
    %v1556 = vadd.f32 0.0, %v1555
    %v1557 = vpop.f32.mrf.mxu0
    %v1558 = vadd.f32 0.0, %v1557
    %1559 = vdwg.mxu0
    %v1560 = vmax.f32 %v1251, %v1337
    %v1561 = vmax.f32 %v1253, %v1339
    %v1562 = vmax.f32 %v1294, %v1380
    %v1563 = vmax.f32 %v1296, %v1382
    %v1564 = vmax.f32 %v1255, %v1341
    %v1565 = vmax.f32 %v1257, %v1343
    %v1566 = vmax.f32 %v1298, %v1384
    %v1567 = vmax.f32 %v1300, %v1386
    %v1568 = vmax.f32 %v1423, %v1509
    %v1569 = vmax.f32 %v1425, %v1511
    %v1570 = vmax.f32 %v1466, %v1552
    %v1571 = vmax.f32 %v1468, %v1554
    %v1572 = vmax.f32 %v1427, %v1513
    %v1573 = vmax.f32 %v1429, %v1515
    %v1574 = vmax.f32 %v1470, %v1556
    %v1575 = vmax.f32 %v1472, %v1558
    %v1576 = vmax.f32 %v1560, %v1568
    %v1577 = vmax.f32 %v1561, %v1569
    %v1578 = vmax.f32 %v1562, %v1570
    %v1579 = vmax.f32 %v1563, %v1571
    %v1580 = vmax.f32 %v1564, %v1572
    %v1581 = vmax.f32 %v1565, %v1573
    %v1582 = vmax.f32 %v1566, %v1574
    %v1583 = vmax.f32 %v1567, %v1575
    %v1584 = vadd.f32 %v1576, %v1175
    %v1585 = vadd.f32 %v1577, %v1179
    %v1586 = vadd.f32 %v1578, %v1183
    %v1587 = vadd.f32 %v1579, %v1187
    %v1588 = vadd.f32 %v1580, %v1175
    %v1589 = vadd.f32 %v1581, %v1179
    %v1590 = vadd.f32 %v1582, %v1183
    %v1591 = vadd.f32 %v1583, %v1187
    %v1592 = vmax.f32 %v1584, 0.0
    %v1593 = vmax.f32 %v1585, 0.0
    %v1594 = vmax.f32 %v1586, 0.0
    %v1595 = vmax.f32 %v1587, 0.0
    %v1596 = vmax.f32 %v1588, 0.0
    %v1597 = vmax.f32 %v1589, 0.0
    %v1598 = vmax.f32 %v1590, 0.0
    %v1599 = vmax.f32 %v1591, 0.0
    %v1600 = vsel %vm115, 1, 0
    %v1601 = vsel %vm116, 1, 0
    %vm1602 = vcmp.eq.s32.totalorder %v1600, 1
    %vm1603 = vcmp.eq.s32.totalorder %v1601, 1
    %v1604 = vsel %vm1602, 0.0, %v1200
    %v1605 = vsel %vm1602, 0.0, %v1201
    %v1606 = vsel %vm1602, 0.0, %v1202
    %v1607 = vsel %vm1602, 0.0, %v1203
    %v1608 = vsel %vm1603, 0.0, %v1204
    %v1609 = vsel %vm1603, 0.0, %v1205
    %v1610 = vsel %vm1603, 0.0, %v1206
    %v1611 = vsel %vm1603, 0.0, %v1207
    %v1612 = vpack.c.bf16 %v1608, %v1604
    %v1613 = vpack.c.bf16 %v1609, %v1605
    %v1614 = vpack.c.bf16 %v1610, %v1606
    %v1615 = vpack.c.bf16 %v1611, %v1607
    %v1616 = vsel %vm1602, 0.0, %v1592
    %v1617 = vsel %vm1602, 0.0, %v1593
    %v1618 = vsel %vm1602, 0.0, %v1594
    %v1619 = vsel %vm1602, 0.0, %v1595
    %v1620 = vsel %vm1603, 0.0, %v1596
    %v1621 = vsel %vm1603, 0.0, %v1597
    %v1622 = vsel %vm1603, 0.0, %v1598
    %v1623 = vsel %vm1603, 0.0, %v1599
    %v1624 = vpack.c.bf16 %v1620, %v1616
    %v1625 = vpack.c.bf16 %v1621, %v1617
    %v1626 = vpack.c.bf16 %v1622, %v1618
    %v1627 = vpack.c.bf16 %v1623, %v1619
    %v1632 = vunpack.c.l.b16 %v1612
    %v1633 = vunpack.c.l.b16 %v1613
    %v1634 = vunpack.c.l.b16 %v1614
    %v1635 = vunpack.c.l.b16 %v1615
    %v1636 = vunpack.c.h.b16 %v1612
    %v1637 = vunpack.c.h.b16 %v1613
    %v1638 = vunpack.c.h.b16 %v1614
    %v1639 = vunpack.c.h.b16 %v1615
    %v1640 = vpack.c.b16 %v1633, %v1632
    %v1641 = vpack.c.b16 %v1635, %v1634
    %v1642 = vpack.c.b16 %v1637, %v1636
    %v1643 = vpack.c.b16 %v1639, %v1638
    %1648 = vst [vmem:[#allocation2] sm:$0xff] %v1640
    %1649 = vst [vmem:[#allocation2 + $0x8] sm:$0xff] %v1641
    %1650 = vst [vmem:[#allocation2 + $0x10] sm:$0xff] %v1642
    %1651 = vst [vmem:[#allocation2 + $0x18] sm:$0xff] %v1643
    %1652 = vst [vmem:[#allocation2 + $0x20] sm:$0xff] 0
    %1653 = vst [vmem:[#allocation2 + $0x28] sm:$0xff] 0
    %v1658 = vunpack.c.l.b16 %v1624
    %v1659 = vunpack.c.l.b16 %v1625
    %v1660 = vunpack.c.l.b16 %v1626
    %v1661 = vunpack.c.l.b16 %v1627
    %v1662 = vunpack.c.h.b16 %v1624
    %v1663 = vunpack.c.h.b16 %v1625
    %v1664 = vunpack.c.h.b16 %v1626
    %v1665 = vunpack.c.h.b16 %v1627
    %v1666 = vpack.c.b16 %v1659, %v1658
    %v1667 = vpack.c.b16 %v1661, %v1660
    %v1668 = vpack.c.b16 %v1663, %v1662
    %v1669 = vpack.c.b16 %v1665, %v1664
    %vm1670 = vsmask.f32 256
    %vm1671 = vsmask.f32 4368
    %vm1672 = vmor %vm1670, %vm1671
    %v1674 = vshrl.u32 %v1666, 16
    %v1676 = vrot.slane %v1674, 7
    %v1677 = vshll.u32 %v1666, 16
    %v1679 = vor.u32 %v1676, %v1677
    %v1681 = vshrl.u32 %v1667, 16
    %v1683 = vrot.slane %v1681, 7
    %v1684 = vshll.u32 %v1667, 16
    %v1686 = vor.u32 %v1683, %v1684
    %v1687 = vrot.slane %v1676, 4
    %v1689 = vshrl.u32 %v1668, 16
    %v1691 = vrot.slane %v1689, 7
    %v1692 = vshll.u32 %v1668, 16
    %v1694 = vor.u32 %v1691, %v1692
    %v1695 = vsel %vm1672, %v1687, %v1694
    %v1696 = vrot.slane %v1683, 4
    %v1698 = vshrl.u32 %v1669, 16
    %v1700 = vrot.slane %v1698, 7
    %v1701 = vshll.u32 %v1669, 16
    %v1703 = vor.u32 %v1700, %v1701
    %v1704 = vsel %vm1672, %v1696, %v1703
    %v1705 = vrot.slane %v1691, 4
    %v1706 = vrot.slane %v1700, 4
    %vm1713 = vcmask 1043456
    %vm1714 = vsmask.f32 7938
    %vm1715 = vmand %vm1713, %vm1714
    %vm1716 = vcmask 1047556
    %vm1717 = vsmask.f32 7954
    %vm1718 = vmand %vm1716, %vm1717
    %vm1719 = vmor %vm1718, %vm1715
    %v1720 = vld [vmem:[#allocation3] sm:$0xff]
    %v1721 = vsel %vm1719, %v1679, %v1720
    %1722 = vst [vmem:[#allocation3] sm:$0xff] %v1721
    %v1723 = vld [vmem:[#allocation3 + $0x8] sm:$0xff]
    %v1724 = vsel %vm1719, %v1686, %v1723
    %1725 = vst [vmem:[#allocation3 + $0x8] sm:$0xff] %v1724
    %1726 = vst [vmem:[#allocation3 + $0x10] sm:$0xff] %v1695
    %1727 = vst [vmem:[#allocation3 + $0x18] sm:$0xff] %v1704
    %vm1728 = vcmask 1040384
    %vm1729 = vmand %vm1728, %vm1670
    %vm1730 = vcmask 1044484
    %vm1731 = vsmask.f32 4352
    %vm1732 = vmand %vm1730, %vm1731
    %vm1733 = vmor %vm1732, %vm1729
    %v1734 = vld [vmem:[#allocation3 + $0x20] sm:$0x11]
    %v1735 = vsel %vm1733, %v1705, %v1734
    %1736 = vst [vmem:[#allocation3 + $0x20] sm:$0x11] %v1735
    %v1737 = vld [vmem:[#allocation3 + $0x28] sm:$0x11]
    %v1738 = vsel %vm1733, %v1706, %v1737
    %1739 = vst [vmem:[#allocation3 + $0x28] sm:$0x11] %v1738
    %v1740 = vld [vmem:[#allocation3] sm:$0x11]
    %v1741 = vsel %vm1733, 0, %v1740
    %1742 = vst [vmem:[#allocation3] sm:$0x11] %v1741
    %v1743 = vld [vmem:[#allocation3 + $0x8] sm:$0x11]
    %v1744 = vsel %vm1733, 0, %v1743
    %1745 = vst [vmem:[#allocation3 + $0x8] sm:$0x11] %v1744
    %v1746 = vld [vmem:[#allocation3] sm:$0xff]
    %v1747 = vld [vmem:[#allocation3 + $0x8] sm:$0xff]
    %v1748 = vld [vmem:[#allocation3 + $0x10] sm:$0xff]
    %v1749 = vld [vmem:[#allocation3 + $0x18] sm:$0xff]
    %v1750 = vld [vmem:[#allocation2] sm:$0xff]
    %v1751 = vld [vmem:[#allocation2 + $0x8] sm:$0xff]
    %v1752 = vld [vmem:[#allocation2 + $0x10] sm:$0xff]
    %v1753 = vld [vmem:[#allocation2 + $0x18] sm:$0xff]
    %v1754 = vld [vmem:[#allocation3] sm:$0xff]
    %v1755 = vld [vmem:[#allocation3 + $0x8] sm:$0xff]
    %v1756 = vld [vmem:[#allocation3 + $0x10] sm:$0xff]
    %v1757 = vld [vmem:[#allocation3 + $0x18] sm:$0xff]
    %v1758 = vld [vmem:[#allocation3 + $0x20] sm:$0x11]
    %v1759 = vld [vmem:[#allocation3 + $0x28] sm:$0x11]
    %v1760 = vld [vmem:[#allocation2] sm:$0xff]
    %v1761 = vld [vmem:[#allocation2 + $0x8] sm:$0xff]
    %v1762 = vld [vmem:[#allocation2 + $0x10] sm:$0xff]
    %v1763 = vld [vmem:[#allocation2 + $0x18] sm:$0xff]
    %v1764 = vld [vmem:[#allocation2 + $0x20] sm:$0x11]
    %v1765 = vld [vmem:[#allocation2 + $0x28] sm:$0x11]
    %v1766 = vld [vmem:[#allocation6] sm:$0xff]
    %v1767 = vld [vmem:[#allocation6 + $0x8] sm:$0xff]
    %v1768 = vld [vmem:[#allocation6 + $0x10] sm:$0xff]
    %v1769 = vld [vmem:[#allocation6 + $0x18] sm:$0xff]
    %v1770 = vld [vmem:[#allocation6 + $0x20] sm:$0xff]
    %v1771 = vld [vmem:[#allocation6 + $0x28] sm:$0xff]
    %v1772 = vld [vmem:[#allocation6 + $0x30] sm:$0xff]
    %v1773 = vld [vmem:[#allocation6 + $0x38] sm:$0xff]
    %v1774 = vld [vmem:[#allocation6 + $0x40] sm:$0xff]
    %v1775 = vld [vmem:[#allocation6 + $0x48] sm:$0xff]
    %v1776 = vld [vmem:[#allocation6 + $0x50] sm:$0xff]
    %v1777 = vld [vmem:[#allocation6 + $0x58] sm:$0xff]
    %v1778 = vld [vmem:[#allocation6 + $0x60] sm:$0xff]
    %v1779 = vld [vmem:[#allocation6 + $0x68] sm:$0xff]
    %v1780 = vld [vmem:[#allocation6 + $0x70] sm:$0xff]
    %v1781 = vld [vmem:[#allocation6 + $0x78] sm:$0xff]
    %v1782 = vld [vmem:[#allocation6 + $0x80] sm:$0xff]
    %v1783 = vld [vmem:[#allocation6 + $0x88] sm:$0xff]
    %v1784 = vld [vmem:[#allocation6 + $0x90] sm:$0xff]
    %v1785 = vld [vmem:[#allocation6 + $0x98] sm:$0xff]
    %v1786 = vld [vmem:[#allocation6 + $0xa0] sm:$0xff]
    %v1787 = vld [vmem:[#allocation6 + $0xa8] sm:$0xff]
    %v1788 = vld [vmem:[#allocation6 + $0xb0] sm:$0xff]
    %v1789 = vld [vmem:[#allocation6 + $0xb8] sm:$0xff]
    %v1790 = vld [vmem:[#allocation6 + $0xc0] sm:$0xff]
    %v1791 = vld [vmem:[#allocation6 + $0xc8] sm:$0xff]
    %v1792 = vld [vmem:[#allocation6 + $0xd0] sm:$0xff]
    %v1793 = vld [vmem:[#allocation6 + $0xd8] sm:$0xff]
    %v1794 = vld [vmem:[#allocation6 + $0xe0] sm:$0xff]
    %v1795 = vld [vmem:[#allocation6 + $0xe8] sm:$0xff]
    %v1796 = vld [vmem:[#allocation6 + $0xf0] sm:$0xff]
    %v1797 = vld [vmem:[#allocation6 + $0xf8] sm:$0xff]
    %v1798 = vld [vmem:[#allocation6 + $0x100] sm:$0xff]
    %v1799 = vld [vmem:[#allocation6 + $0x108] sm:$0xff]
    %v1800 = vld [vmem:[#allocation6 + $0x110] sm:$0xff]
    %v1801 = vld [vmem:[#allocation6 + $0x118] sm:$0xff]
    %v1802 = vld [vmem:[#allocation6 + $0x120] sm:$0xff]
    %v1803 = vld [vmem:[#allocation6 + $0x128] sm:$0xff]
    %v1804 = vld [vmem:[#allocation6 + $0x130] sm:$0xff]
    %v1805 = vld [vmem:[#allocation6 + $0x138] sm:$0xff]
    %v1806 = vld [vmem:[#allocation6 + $0x140] sm:$0xff]
    %v1807 = vld [vmem:[#allocation6 + $0x148] sm:$0xff]
    %v1808 = vld [vmem:[#allocation6 + $0x150] sm:$0xff]
    %v1809 = vld [vmem:[#allocation6 + $0x158] sm:$0xff]
    %v1810 = vld [vmem:[#allocation6 + $0x160] sm:$0xff]
    %v1811 = vld [vmem:[#allocation6 + $0x168] sm:$0xff]
    %v1812 = vld [vmem:[#allocation6 + $0x170] sm:$0xff]
    %v1813 = vld [vmem:[#allocation6 + $0x178] sm:$0xff]
    %v1814 = vld [vmem:[#allocation6 + $0x180] sm:$0xff]
    %v1815 = vld [vmem:[#allocation6 + $0x188] sm:$0xff]
    %v1816 = vld [vmem:[#allocation6 + $0x190] sm:$0xff]
    %v1817 = vld [vmem:[#allocation6 + $0x198] sm:$0xff]
    %v1818 = vld [vmem:[#allocation6 + $0x1a0] sm:$0xff]
    %v1819 = vld [vmem:[#allocation6 + $0x1a8] sm:$0xff]
    %v1820 = vld [vmem:[#allocation6 + $0x1b0] sm:$0xff]
    %v1821 = vld [vmem:[#allocation6 + $0x1b8] sm:$0xff]
    %v1822 = vld [vmem:[#allocation6 + $0x1c0] sm:$0xff]
    %v1823 = vld [vmem:[#allocation6 + $0x1c8] sm:$0xff]
    %v1824 = vld [vmem:[#allocation6 + $0x1d0] sm:$0xff]
    %v1825 = vld [vmem:[#allocation6 + $0x1d8] sm:$0xff]
    %v1826 = vld [vmem:[#allocation6 + $0x1e0] sm:$0xff]
    %v1827 = vld [vmem:[#allocation6 + $0x1e8] sm:$0xff]
    %v1828 = vld [vmem:[#allocation6 + $0x1f0] sm:$0xff]
    %v1829 = vld [vmem:[#allocation6 + $0x1f8] sm:$0xff]
    %v1830 = vld [vmem:[#allocation6 + $0x200] sm:$0xff]
    %v1831 = vld [vmem:[#allocation6 + $0x208] sm:$0xff]
    %v1832 = vld [vmem:[#allocation6 + $0x210] sm:$0xff]
    %v1833 = vld [vmem:[#allocation6 + $0x218] sm:$0xff]
    %v1834 = vld [vmem:[#allocation6 + $0x220] sm:$0xff]
    %v1835 = vld [vmem:[#allocation6 + $0x228] sm:$0xff]
    %v1836 = vld [vmem:[#allocation6 + $0x230] sm:$0xff]
    %v1837 = vld [vmem:[#allocation6 + $0x238] sm:$0xff]
    %v1838 = vld [vmem:[#allocation6 + $0x240] sm:$0xff]
    %v1839 = vld [vmem:[#allocation6 + $0x248] sm:$0xff]
    %v1840 = vld [vmem:[#allocation6 + $0x250] sm:$0xff]
    %v1841 = vld [vmem:[#allocation6 + $0x258] sm:$0xff]
    %v1842 = vld [vmem:[#allocation6 + $0x260] sm:$0xff]
    %v1843 = vld [vmem:[#allocation6 + $0x268] sm:$0xff]
    %v1844 = vld [vmem:[#allocation6 + $0x270] sm:$0xff]
    %v1845 = vld [vmem:[#allocation6 + $0x278] sm:$0xff]
    %v1846 = vld [vmem:[#allocation6 + $0x280] sm:$0xff]
    %v1847 = vld [vmem:[#allocation6 + $0x288] sm:$0xff]
    %v1848 = vld [vmem:[#allocation6 + $0x290] sm:$0xff]
    %v1849 = vld [vmem:[#allocation6 + $0x298] sm:$0xff]
    %v1850 = vld [vmem:[#allocation6 + $0x2a0] sm:$0xff]
    %v1851 = vld [vmem:[#allocation6 + $0x2a8] sm:$0xff]
    %v1852 = vld [vmem:[#allocation6 + $0x2b0] sm:$0xff]
    %v1853 = vld [vmem:[#allocation6 + $0x2b8] sm:$0xff]
    %v1854 = vld [vmem:[#allocation6 + $0x2c0] sm:$0xff]
    %v1855 = vld [vmem:[#allocation6 + $0x2c8] sm:$0xff]
    %v1856 = vld [vmem:[#allocation6 + $0x2d0] sm:$0xff]
    %v1857 = vld [vmem:[#allocation6 + $0x2d8] sm:$0xff]
    %v1858 = vld [vmem:[#allocation6 + $0x2e0] sm:$0xff]
    %v1859 = vld [vmem:[#allocation6 + $0x2e8] sm:$0xff]
    %v1860 = vld [vmem:[#allocation6 + $0x2f0] sm:$0xff]
    %v1861 = vld [vmem:[#allocation6 + $0x2f8] sm:$0xff]
    %v1862 = vld [vmem:[#allocation6 + $0x300] sm:$0xff]
    %v1863 = vld [vmem:[#allocation6 + $0x308] sm:$0xff]
    %v1864 = vld [vmem:[#allocation6 + $0x310] sm:$0xff]
    %v1865 = vld [vmem:[#allocation6 + $0x318] sm:$0xff]
    %v1866 = vld [vmem:[#allocation6 + $0x320] sm:$0xff]
    %v1867 = vld [vmem:[#allocation6 + $0x328] sm:$0xff]
    %v1868 = vld [vmem:[#allocation6 + $0x330] sm:$0xff]
    %v1869 = vld [vmem:[#allocation6 + $0x338] sm:$0xff]
    %v1870 = vld [vmem:[#allocation6 + $0x340] sm:$0xff]
    %v1871 = vld [vmem:[#allocation6 + $0x348] sm:$0xff]
    %v1872 = vld [vmem:[#allocation6 + $0x350] sm:$0xff]
    %v1873 = vld [vmem:[#allocation6 + $0x358] sm:$0xff]
    %v1874 = vld [vmem:[#allocation6 + $0x360] sm:$0xff]
    %v1875 = vld [vmem:[#allocation6 + $0x368] sm:$0xff]
    %v1876 = vld [vmem:[#allocation6 + $0x370] sm:$0xff]
    %v1877 = vld [vmem:[#allocation6 + $0x378] sm:$0xff]
    %v1878 = vld [vmem:[#allocation6 + $0x380] sm:$0xff]
    %v1879 = vld [vmem:[#allocation6 + $0x388] sm:$0xff]
    %v1880 = vld [vmem:[#allocation6 + $0x390] sm:$0xff]
    %v1881 = vld [vmem:[#allocation6 + $0x398] sm:$0xff]
    %v1882 = vld [vmem:[#allocation6 + $0x3a0] sm:$0xff]
    %v1883 = vld [vmem:[#allocation6 + $0x3a8] sm:$0xff]
    %v1884 = vld [vmem:[#allocation6 + $0x3b0] sm:$0xff]
    %v1885 = vld [vmem:[#allocation6 + $0x3b8] sm:$0xff]
    %v1886 = vld [vmem:[#allocation6 + $0x3c0] sm:$0xff]
    %v1887 = vld [vmem:[#allocation6 + $0x3c8] sm:$0xff]
    %v1888 = vld [vmem:[#allocation6 + $0x3d0] sm:$0xff]
    %v1889 = vld [vmem:[#allocation6 + $0x3d8] sm:$0xff]
    %v1890 = vld [vmem:[#allocation6 + $0x3e0] sm:$0xff]
    %v1891 = vld [vmem:[#allocation6 + $0x3e8] sm:$0xff]
    %v1892 = vld [vmem:[#allocation6 + $0x3f0] sm:$0xff]
    %v1893 = vld [vmem:[#allocation6 + $0x3f8] sm:$0xff]
    %v1894 = vld [vmem:[#allocation6 + $0x400] sm:$0xff]
    %v1895 = vld [vmem:[#allocation6 + $0x408] sm:$0xff]
    %v1896 = vld [vmem:[#allocation6 + $0x410] sm:$0xff]
    %v1897 = vld [vmem:[#allocation6 + $0x418] sm:$0xff]
    %v1898 = vld [vmem:[#allocation6 + $0x420] sm:$0xff]
    %v1899 = vld [vmem:[#allocation6 + $0x428] sm:$0xff]
    %v1900 = vld [vmem:[#allocation6 + $0x430] sm:$0xff]
    %v1901 = vld [vmem:[#allocation6 + $0x438] sm:$0xff]
    %v1902 = vld [vmem:[#allocation6 + $0x440] sm:$0xff]
    %v1903 = vld [vmem:[#allocation6 + $0x448] sm:$0xff]
    %v1904 = vld [vmem:[#allocation6 + $0x450] sm:$0xff]
    %v1905 = vld [vmem:[#allocation6 + $0x458] sm:$0xff]
    %v1906 = vld [vmem:[#allocation6 + $0x460] sm:$0xff]
    %v1907 = vld [vmem:[#allocation6 + $0x468] sm:$0xff]
    %v1908 = vld [vmem:[#allocation6 + $0x470] sm:$0xff]
    %v1909 = vld [vmem:[#allocation6 + $0x478] sm:$0xff]
    %v1910 = vld [vmem:[#allocation6 + $0x480] sm:$0xff]
    %v1911 = vld [vmem:[#allocation6 + $0x488] sm:$0xff]
    %v1912 = vld [vmem:[#allocation6 + $0x490] sm:$0xff]
    %v1913 = vld [vmem:[#allocation6 + $0x498] sm:$0xff]
    %v1914 = vld [vmem:[#allocation6 + $0x4a0] sm:$0xff]
    %v1915 = vld [vmem:[#allocation6 + $0x4a8] sm:$0xff]
    %v1916 = vld [vmem:[#allocation6 + $0x4b0] sm:$0xff]
    %v1917 = vld [vmem:[#allocation6 + $0x4b8] sm:$0xff]
    %v1918 = vld [vmem:[#allocation6 + $0x4c0] sm:$0xff]
    %v1919 = vld [vmem:[#allocation6 + $0x4c8] sm:$0xff]
    %v1920 = vld [vmem:[#allocation6 + $0x4d0] sm:$0xff]
    %v1921 = vld [vmem:[#allocation6 + $0x4d8] sm:$0xff]
    %v1922 = vld [vmem:[#allocation6 + $0x4e0] sm:$0xff]
    %v1923 = vld [vmem:[#allocation6 + $0x4e8] sm:$0xff]
    %v1924 = vld [vmem:[#allocation6 + $0x4f0] sm:$0xff]
    %v1925 = vld [vmem:[#allocation6 + $0x4f8] sm:$0xff]
    %v1926 = vld [vmem:[#allocation6 + $0x500] sm:$0xff]
    %v1927 = vld [vmem:[#allocation6 + $0x508] sm:$0xff]
    %v1928 = vld [vmem:[#allocation6 + $0x510] sm:$0xff]
    %v1929 = vld [vmem:[#allocation6 + $0x518] sm:$0xff]
    %v1930 = vld [vmem:[#allocation6 + $0x520] sm:$0xff]
    %v1931 = vld [vmem:[#allocation6 + $0x528] sm:$0xff]
    %v1932 = vld [vmem:[#allocation6 + $0x530] sm:$0xff]
    %v1933 = vld [vmem:[#allocation6 + $0x538] sm:$0xff]
    %v1934 = vld [vmem:[#allocation6 + $0x540] sm:$0xff]
    %v1935 = vld [vmem:[#allocation6 + $0x548] sm:$0xff]
    %v1936 = vld [vmem:[#allocation6 + $0x550] sm:$0xff]
    %v1937 = vld [vmem:[#allocation6 + $0x558] sm:$0xff]
    %v1938 = vld [vmem:[#allocation6 + $0x560] sm:$0xff]
    %v1939 = vld [vmem:[#allocation6 + $0x568] sm:$0xff]
    %v1940 = vld [vmem:[#allocation6 + $0x570] sm:$0xff]
    %v1941 = vld [vmem:[#allocation6 + $0x578] sm:$0xff]
    %v1942 = vld [vmem:[#allocation6 + $0x580] sm:$0xff]
    %v1943 = vld [vmem:[#allocation6 + $0x588] sm:$0xff]
    %v1944 = vld [vmem:[#allocation6 + $0x590] sm:$0xff]
    %v1945 = vld [vmem:[#allocation6 + $0x598] sm:$0xff]
    %v1946 = vld [vmem:[#allocation6 + $0x5a0] sm:$0xff]
    %v1947 = vld [vmem:[#allocation6 + $0x5a8] sm:$0xff]
    %v1948 = vld [vmem:[#allocation6 + $0x5b0] sm:$0xff]
    %v1949 = vld [vmem:[#allocation6 + $0x5b8] sm:$0xff]
    %v1950 = vld [vmem:[#allocation6 + $0x5c0] sm:$0xff]
    %v1951 = vld [vmem:[#allocation6 + $0x5c8] sm:$0xff]
    %v1952 = vld [vmem:[#allocation6 + $0x5d0] sm:$0xff]
    %v1953 = vld [vmem:[#allocation6 + $0x5d8] sm:$0xff]
    %v1954 = vld [vmem:[#allocation6 + $0x5e0] sm:$0xff]
    %v1955 = vld [vmem:[#allocation6 + $0x5e8] sm:$0xff]
    %v1956 = vld [vmem:[#allocation6 + $0x5f0] sm:$0xff]
    %v1957 = vld [vmem:[#allocation6 + $0x5f8] sm:$0xff]
    %v1958 = vld [vmem:[#allocation6 + $0x600] sm:$0xff]
    %v1959 = vld [vmem:[#allocation6 + $0x608] sm:$0xff]
    %v1960 = vld [vmem:[#allocation6 + $0x610] sm:$0xff]
    %v1961 = vld [vmem:[#allocation6 + $0x618] sm:$0xff]
    %v1962 = vld [vmem:[#allocation6 + $0x620] sm:$0xff]
    %v1963 = vld [vmem:[#allocation6 + $0x628] sm:$0xff]
    %v1964 = vld [vmem:[#allocation6 + $0x630] sm:$0xff]
    %v1965 = vld [vmem:[#allocation6 + $0x638] sm:$0xff]
    %v1966 = vld [vmem:[#allocation6 + $0x640] sm:$0xff]
    %v1967 = vld [vmem:[#allocation6 + $0x648] sm:$0xff]
    %v1968 = vld [vmem:[#allocation6 + $0x650] sm:$0xff]
    %v1969 = vld [vmem:[#allocation6 + $0x658] sm:$0xff]
    %v1970 = vld [vmem:[#allocation6 + $0x660] sm:$0xff]
    %v1971 = vld [vmem:[#allocation6 + $0x668] sm:$0xff]
    %v1972 = vld [vmem:[#allocation6 + $0x670] sm:$0xff]
    %v1973 = vld [vmem:[#allocation6 + $0x678] sm:$0xff]
    %v1974 = vld [vmem:[#allocation6 + $0x680] sm:$0xff]
    %v1975 = vld [vmem:[#allocation6 + $0x688] sm:$0xff]
    %v1976 = vld [vmem:[#allocation6 + $0x690] sm:$0xff]
    %v1977 = vld [vmem:[#allocation6 + $0x698] sm:$0xff]
    %v1978 = vld [vmem:[#allocation6 + $0x6a0] sm:$0xff]
    %v1979 = vld [vmem:[#allocation6 + $0x6a8] sm:$0xff]
    %v1980 = vld [vmem:[#allocation6 + $0x6b0] sm:$0xff]
    %v1981 = vld [vmem:[#allocation6 + $0x6b8] sm:$0xff]
    %v1982 = vld [vmem:[#allocation6 + $0x6c0] sm:$0xff]
    %v1983 = vld [vmem:[#allocation6 + $0x6c8] sm:$0xff]
    %v1984 = vld [vmem:[#allocation6 + $0x6d0] sm:$0xff]
    %v1985 = vld [vmem:[#allocation6 + $0x6d8] sm:$0xff]
    %v1986 = vld [vmem:[#allocation6 + $0x6e0] sm:$0xff]
    %v1987 = vld [vmem:[#allocation6 + $0x6e8] sm:$0xff]
    %v1988 = vld [vmem:[#allocation6 + $0x6f0] sm:$0xff]
    %v1989 = vld [vmem:[#allocation6 + $0x6f8] sm:$0xff]
    %v1990 = vld [vmem:[#allocation6 + $0x700] sm:$0xff]
    %v1991 = vld [vmem:[#allocation6 + $0x708] sm:$0xff]
    %v1992 = vld [vmem:[#allocation6 + $0x710] sm:$0xff]
    %v1993 = vld [vmem:[#allocation6 + $0x718] sm:$0xff]
    %v1994 = vld [vmem:[#allocation6 + $0x720] sm:$0xff]
    %v1995 = vld [vmem:[#allocation6 + $0x728] sm:$0xff]
    %v1996 = vld [vmem:[#allocation6 + $0x730] sm:$0xff]
    %v1997 = vld [vmem:[#allocation6 + $0x738] sm:$0xff]
    %v1998 = vld [vmem:[#allocation6 + $0x740] sm:$0xff]
    %v1999 = vld [vmem:[#allocation6 + $0x748] sm:$0xff]
    %v2000 = vld [vmem:[#allocation6 + $0x750] sm:$0xff]
    %v2001 = vld [vmem:[#allocation6 + $0x758] sm:$0xff]
    %v2002 = vld [vmem:[#allocation6 + $0x760] sm:$0xff]
    %v2003 = vld [vmem:[#allocation6 + $0x768] sm:$0xff]
    %v2004 = vld [vmem:[#allocation6 + $0x770] sm:$0xff]
    %v2005 = vld [vmem:[#allocation6 + $0x778] sm:$0xff]
    %v2006 = vld [vmem:[#allocation6 + $0x780] sm:$0xff]
    %v2007 = vld [vmem:[#allocation6 + $0x788] sm:$0xff]
    %v2008 = vld [vmem:[#allocation6 + $0x790] sm:$0xff]
    %v2009 = vld [vmem:[#allocation6 + $0x798] sm:$0xff]
    %v2010 = vld [vmem:[#allocation6 + $0x7a0] sm:$0xff]
    %v2011 = vld [vmem:[#allocation6 + $0x7a8] sm:$0xff]
    %v2012 = vld [vmem:[#allocation6 + $0x7b0] sm:$0xff]
    %v2013 = vld [vmem:[#allocation6 + $0x7b8] sm:$0xff]
    %v2014 = vld [vmem:[#allocation6 + $0x7c0] sm:$0xff]
    %v2015 = vld [vmem:[#allocation6 + $0x7c8] sm:$0xff]
    %v2016 = vld [vmem:[#allocation6 + $0x7d0] sm:$0xff]
    %v2017 = vld [vmem:[#allocation6 + $0x7d8] sm:$0xff]
    %v2018 = vld [vmem:[#allocation6 + $0x7e0] sm:$0xff]
    %v2019 = vld [vmem:[#allocation6 + $0x7e8] sm:$0xff]
    %v2020 = vld [vmem:[#allocation6 + $0x7f0] sm:$0xff]
    %v2021 = vld [vmem:[#allocation6 + $0x7f8] sm:$0xff]
    %v2022 = vld [vmem:[#allocation8] sm:$0xff]
    %v2023 = vld [vmem:[#allocation8 + $0x8] sm:$0xff]
    %v2024 = vld [vmem:[#allocation8 + $0x10] sm:$0xff]
    %v2025 = vld [vmem:[#allocation8 + $0x18] sm:$0xff]
    %v2026 = vld [vmem:[#allocation8 + $0x20] sm:$0xff]
    %v2027 = vld [vmem:[#allocation8 + $0x28] sm:$0xff]
    %v2028 = vld [vmem:[#allocation8 + $0x30] sm:$0xff]
    %v2029 = vld [vmem:[#allocation8 + $0x38] sm:$0xff]
    %v2030 = vld [vmem:[#allocation8 + $0x40] sm:$0xff]
    %v2031 = vld [vmem:[#allocation8 + $0x48] sm:$0xff]
    %v2032 = vld [vmem:[#allocation8 + $0x50] sm:$0xff]
    %v2033 = vld [vmem:[#allocation8 + $0x58] sm:$0xff]
    %v2034 = vld [vmem:[#allocation8 + $0x60] sm:$0xff]
    %v2035 = vld [vmem:[#allocation8 + $0x68] sm:$0xff]
    %v2036 = vld [vmem:[#allocation8 + $0x70] sm:$0xff]
    %v2037 = vld [vmem:[#allocation8 + $0x78] sm:$0xff]
    %v2038 = vld [vmem:[#allocation8 + $0x80] sm:$0xff]
    %v2039 = vld [vmem:[#allocation8 + $0x88] sm:$0xff]
    %v2040 = vld [vmem:[#allocation8 + $0x90] sm:$0xff]
    %v2041 = vld [vmem:[#allocation8 + $0x98] sm:$0xff]
    %v2042 = vld [vmem:[#allocation8 + $0xa0] sm:$0xff]
    %v2043 = vld [vmem:[#allocation8 + $0xa8] sm:$0xff]
    %v2044 = vld [vmem:[#allocation8 + $0xb0] sm:$0xff]
    %v2045 = vld [vmem:[#allocation8 + $0xb8] sm:$0xff]
    %v2046 = vld [vmem:[#allocation8 + $0xc0] sm:$0xff]
    %v2047 = vld [vmem:[#allocation8 + $0xc8] sm:$0xff]
    %v2048 = vld [vmem:[#allocation8 + $0xd0] sm:$0xff]
    %v2049 = vld [vmem:[#allocation8 + $0xd8] sm:$0xff]
    %v2050 = vld [vmem:[#allocation8 + $0xe0] sm:$0xff]
    %v2051 = vld [vmem:[#allocation8 + $0xe8] sm:$0xff]
    %v2052 = vld [vmem:[#allocation8 + $0xf0] sm:$0xff]
    %v2053 = vld [vmem:[#allocation8 + $0xf8] sm:$0xff]
    %v2054 = vld [vmem:[#allocation8 + $0x100] sm:$0xff]
    %v2055 = vld [vmem:[#allocation8 + $0x108] sm:$0xff]
    %v2056 = vld [vmem:[#allocation8 + $0x110] sm:$0xff]
    %v2057 = vld [vmem:[#allocation8 + $0x118] sm:$0xff]
    %v2058 = vld [vmem:[#allocation8 + $0x120] sm:$0xff]
    %v2059 = vld [vmem:[#allocation8 + $0x128] sm:$0xff]
    %v2060 = vld [vmem:[#allocation8 + $0x130] sm:$0xff]
    %v2061 = vld [vmem:[#allocation8 + $0x138] sm:$0xff]
    %v2062 = vld [vmem:[#allocation8 + $0x140] sm:$0xff]
    %v2063 = vld [vmem:[#allocation8 + $0x148] sm:$0xff]
    %v2064 = vld [vmem:[#allocation8 + $0x150] sm:$0xff]
    %v2065 = vld [vmem:[#allocation8 + $0x158] sm:$0xff]
    %v2066 = vld [vmem:[#allocation8 + $0x160] sm:$0xff]
    %v2067 = vld [vmem:[#allocation8 + $0x168] sm:$0xff]
    %v2068 = vld [vmem:[#allocation8 + $0x170] sm:$0xff]
    %v2069 = vld [vmem:[#allocation8 + $0x178] sm:$0xff]
    %v2070 = vld [vmem:[#allocation8 + $0x180] sm:$0xff]
    %v2071 = vld [vmem:[#allocation8 + $0x188] sm:$0xff]
    %v2072 = vld [vmem:[#allocation8 + $0x190] sm:$0xff]
    %v2073 = vld [vmem:[#allocation8 + $0x198] sm:$0xff]
    %v2074 = vld [vmem:[#allocation8 + $0x1a0] sm:$0xff]
    %v2075 = vld [vmem:[#allocation8 + $0x1a8] sm:$0xff]
    %v2076 = vld [vmem:[#allocation8 + $0x1b0] sm:$0xff]
    %v2077 = vld [vmem:[#allocation8 + $0x1b8] sm:$0xff]
    %v2078 = vld [vmem:[#allocation8 + $0x1c0] sm:$0xff]
    %v2079 = vld [vmem:[#allocation8 + $0x1c8] sm:$0xff]
    %v2080 = vld [vmem:[#allocation8 + $0x1d0] sm:$0xff]
    %v2081 = vld [vmem:[#allocation8 + $0x1d8] sm:$0xff]
    %v2082 = vld [vmem:[#allocation8 + $0x1e0] sm:$0xff]
    %v2083 = vld [vmem:[#allocation8 + $0x1e8] sm:$0xff]
    %v2084 = vld [vmem:[#allocation8 + $0x1f0] sm:$0xff]
    %v2085 = vld [vmem:[#allocation8 + $0x1f8] sm:$0xff]
    %v2086 = vld [vmem:[#allocation8 + $0x200] sm:$0xff]
    %v2087 = vld [vmem:[#allocation8 + $0x208] sm:$0xff]
    %v2088 = vld [vmem:[#allocation8 + $0x210] sm:$0xff]
    %v2089 = vld [vmem:[#allocation8 + $0x218] sm:$0xff]
    %v2090 = vld [vmem:[#allocation8 + $0x220] sm:$0xff]
    %v2091 = vld [vmem:[#allocation8 + $0x228] sm:$0xff]
    %v2092 = vld [vmem:[#allocation8 + $0x230] sm:$0xff]
    %v2093 = vld [vmem:[#allocation8 + $0x238] sm:$0xff]
    %v2094 = vld [vmem:[#allocation8 + $0x240] sm:$0xff]
    %v2095 = vld [vmem:[#allocation8 + $0x248] sm:$0xff]
    %v2096 = vld [vmem:[#allocation8 + $0x250] sm:$0xff]
    %v2097 = vld [vmem:[#allocation8 + $0x258] sm:$0xff]
    %v2098 = vld [vmem:[#allocation8 + $0x260] sm:$0xff]
    %v2099 = vld [vmem:[#allocation8 + $0x268] sm:$0xff]
    %v2100 = vld [vmem:[#allocation8 + $0x270] sm:$0xff]
    %v2101 = vld [vmem:[#allocation8 + $0x278] sm:$0xff]
    %v2102 = vld [vmem:[#allocation8 + $0x280] sm:$0xff]
    %v2103 = vld [vmem:[#allocation8 + $0x288] sm:$0xff]
    %v2104 = vld [vmem:[#allocation8 + $0x290] sm:$0xff]
    %v2105 = vld [vmem:[#allocation8 + $0x298] sm:$0xff]
    %v2106 = vld [vmem:[#allocation8 + $0x2a0] sm:$0xff]
    %v2107 = vld [vmem:[#allocation8 + $0x2a8] sm:$0xff]
    %v2108 = vld [vmem:[#allocation8 + $0x2b0] sm:$0xff]
    %v2109 = vld [vmem:[#allocation8 + $0x2b8] sm:$0xff]
    %v2110 = vld [vmem:[#allocation8 + $0x2c0] sm:$0xff]
    %v2111 = vld [vmem:[#allocation8 + $0x2c8] sm:$0xff]
    %v2112 = vld [vmem:[#allocation8 + $0x2d0] sm:$0xff]
    %v2113 = vld [vmem:[#allocation8 + $0x2d8] sm:$0xff]
    %v2114 = vld [vmem:[#allocation8 + $0x2e0] sm:$0xff]
    %v2115 = vld [vmem:[#allocation8 + $0x2e8] sm:$0xff]
    %v2116 = vld [vmem:[#allocation8 + $0x2f0] sm:$0xff]
    %v2117 = vld [vmem:[#allocation8 + $0x2f8] sm:$0xff]
    %v2118 = vld [vmem:[#allocation8 + $0x300] sm:$0xff]
    %v2119 = vld [vmem:[#allocation8 + $0x308] sm:$0xff]
    %v2120 = vld [vmem:[#allocation8 + $0x310] sm:$0xff]
    %v2121 = vld [vmem:[#allocation8 + $0x318] sm:$0xff]
    %v2122 = vld [vmem:[#allocation8 + $0x320] sm:$0xff]
    %v2123 = vld [vmem:[#allocation8 + $0x328] sm:$0xff]
    %v2124 = vld [vmem:[#allocation8 + $0x330] sm:$0xff]
    %v2125 = vld [vmem:[#allocation8 + $0x338] sm:$0xff]
    %v2126 = vld [vmem:[#allocation8 + $0x340] sm:$0xff]
    %v2127 = vld [vmem:[#allocation8 + $0x348] sm:$0xff]
    %v2128 = vld [vmem:[#allocation8 + $0x350] sm:$0xff]
    %v2129 = vld [vmem:[#allocation8 + $0x358] sm:$0xff]
    %v2130 = vld [vmem:[#allocation8 + $0x360] sm:$0xff]
    %v2131 = vld [vmem:[#allocation8 + $0x368] sm:$0xff]
    %v2132 = vld [vmem:[#allocation8 + $0x370] sm:$0xff]
    %v2133 = vld [vmem:[#allocation8 + $0x378] sm:$0xff]
    %v2134 = vld [vmem:[#allocation8 + $0x380] sm:$0xff]
    %v2135 = vld [vmem:[#allocation8 + $0x388] sm:$0xff]
    %v2136 = vld [vmem:[#allocation8 + $0x390] sm:$0xff]
    %v2137 = vld [vmem:[#allocation8 + $0x398] sm:$0xff]
    %v2138 = vld [vmem:[#allocation8 + $0x3a0] sm:$0xff]
    %v2139 = vld [vmem:[#allocation8 + $0x3a8] sm:$0xff]
    %v2140 = vld [vmem:[#allocation8 + $0x3b0] sm:$0xff]
    %v2141 = vld [vmem:[#allocation8 + $0x3b8] sm:$0xff]
    %v2142 = vld [vmem:[#allocation8 + $0x3c0] sm:$0xff]
    %v2143 = vld [vmem:[#allocation8 + $0x3c8] sm:$0xff]
    %v2144 = vld [vmem:[#allocation8 + $0x3d0] sm:$0xff]
    %v2145 = vld [vmem:[#allocation8 + $0x3d8] sm:$0xff]
    %v2146 = vld [vmem:[#allocation8 + $0x3e0] sm:$0xff]
    %v2147 = vld [vmem:[#allocation8 + $0x3e8] sm:$0xff]
    %v2148 = vld [vmem:[#allocation8 + $0x3f0] sm:$0xff]
    %v2149 = vld [vmem:[#allocation8 + $0x3f8] sm:$0xff]
    %v2150 = vld [vmem:[#allocation8 + $0x400] sm:$0xff]
    %v2151 = vld [vmem:[#allocation8 + $0x408] sm:$0xff]
    %v2152 = vld [vmem:[#allocation8 + $0x410] sm:$0xff]
    %v2153 = vld [vmem:[#allocation8 + $0x418] sm:$0xff]
    %v2154 = vld [vmem:[#allocation8 + $0x420] sm:$0xff]
    %v2155 = vld [vmem:[#allocation8 + $0x428] sm:$0xff]
    %v2156 = vld [vmem:[#allocation8 + $0x430] sm:$0xff]
    %v2157 = vld [vmem:[#allocation8 + $0x438] sm:$0xff]
    %v2158 = vld [vmem:[#allocation8 + $0x440] sm:$0xff]
    %v2159 = vld [vmem:[#allocation8 + $0x448] sm:$0xff]
    %v2160 = vld [vmem:[#allocation8 + $0x450] sm:$0xff]
    %v2161 = vld [vmem:[#allocation8 + $0x458] sm:$0xff]
    %v2162 = vld [vmem:[#allocation8 + $0x460] sm:$0xff]
    %v2163 = vld [vmem:[#allocation8 + $0x468] sm:$0xff]
    %v2164 = vld [vmem:[#allocation8 + $0x470] sm:$0xff]
    %v2165 = vld [vmem:[#allocation8 + $0x478] sm:$0xff]
    %v2166 = vld [vmem:[#allocation8 + $0x480] sm:$0xff]
    %v2167 = vld [vmem:[#allocation8 + $0x488] sm:$0xff]
    %v2168 = vld [vmem:[#allocation8 + $0x490] sm:$0xff]
    %v2169 = vld [vmem:[#allocation8 + $0x498] sm:$0xff]
    %v2170 = vld [vmem:[#allocation8 + $0x4a0] sm:$0xff]
    %v2171 = vld [vmem:[#allocation8 + $0x4a8] sm:$0xff]
    %v2172 = vld [vmem:[#allocation8 + $0x4b0] sm:$0xff]
    %v2173 = vld [vmem:[#allocation8 + $0x4b8] sm:$0xff]
    %v2174 = vld [vmem:[#allocation8 + $0x4c0] sm:$0xff]
    %v2175 = vld [vmem:[#allocation8 + $0x4c8] sm:$0xff]
    %v2176 = vld [vmem:[#allocation8 + $0x4d0] sm:$0xff]
    %v2177 = vld [vmem:[#allocation8 + $0x4d8] sm:$0xff]
    %v2178 = vld [vmem:[#allocation8 + $0x4e0] sm:$0xff]
    %v2179 = vld [vmem:[#allocation8 + $0x4e8] sm:$0xff]
    %v2180 = vld [vmem:[#allocation8 + $0x4f0] sm:$0xff]
    %v2181 = vld [vmem:[#allocation8 + $0x4f8] sm:$0xff]
    %v2182 = vld [vmem:[#allocation8 + $0x500] sm:$0xff]
    %v2183 = vld [vmem:[#allocation8 + $0x508] sm:$0xff]
    %v2184 = vld [vmem:[#allocation8 + $0x510] sm:$0xff]
    %v2185 = vld [vmem:[#allocation8 + $0x518] sm:$0xff]
    %v2186 = vld [vmem:[#allocation8 + $0x520] sm:$0xff]
    %v2187 = vld [vmem:[#allocation8 + $0x528] sm:$0xff]
    %v2188 = vld [vmem:[#allocation8 + $0x530] sm:$0xff]
    %v2189 = vld [vmem:[#allocation8 + $0x538] sm:$0xff]
    %v2190 = vld [vmem:[#allocation8 + $0x540] sm:$0xff]
    %v2191 = vld [vmem:[#allocation8 + $0x548] sm:$0xff]
    %v2192 = vld [vmem:[#allocation8 + $0x550] sm:$0xff]
    %v2193 = vld [vmem:[#allocation8 + $0x558] sm:$0xff]
    %v2194 = vld [vmem:[#allocation8 + $0x560] sm:$0xff]
    %v2195 = vld [vmem:[#allocation8 + $0x568] sm:$0xff]
    %v2196 = vld [vmem:[#allocation8 + $0x570] sm:$0xff]
    %v2197 = vld [vmem:[#allocation8 + $0x578] sm:$0xff]
    %v2198 = vld [vmem:[#allocation8 + $0x580] sm:$0xff]
    %v2199 = vld [vmem:[#allocation8 + $0x588] sm:$0xff]
    %v2200 = vld [vmem:[#allocation8 + $0x590] sm:$0xff]
    %v2201 = vld [vmem:[#allocation8 + $0x598] sm:$0xff]
    %v2202 = vld [vmem:[#allocation8 + $0x5a0] sm:$0xff]
    %v2203 = vld [vmem:[#allocation8 + $0x5a8] sm:$0xff]
    %v2204 = vld [vmem:[#allocation8 + $0x5b0] sm:$0xff]
    %v2205 = vld [vmem:[#allocation8 + $0x5b8] sm:$0xff]
    %v2206 = vld [vmem:[#allocation8 + $0x5c0] sm:$0xff]
    %v2207 = vld [vmem:[#allocation8 + $0x5c8] sm:$0xff]
    %v2208 = vld [vmem:[#allocation8 + $0x5d0] sm:$0xff]
    %v2209 = vld [vmem:[#allocation8 + $0x5d8] sm:$0xff]
    %v2210 = vld [vmem:[#allocation8 + $0x5e0] sm:$0xff]
    %v2211 = vld [vmem:[#allocation8 + $0x5e8] sm:$0xff]
    %v2212 = vld [vmem:[#allocation8 + $0x5f0] sm:$0xff]
    %v2213 = vld [vmem:[#allocation8 + $0x5f8] sm:$0xff]
    %v2214 = vld [vmem:[#allocation8 + $0x600] sm:$0xff]
    %v2215 = vld [vmem:[#allocation8 + $0x608] sm:$0xff]
    %v2216 = vld [vmem:[#allocation8 + $0x610] sm:$0xff]
    %v2217 = vld [vmem:[#allocation8 + $0x618] sm:$0xff]
    %v2218 = vld [vmem:[#allocation8 + $0x620] sm:$0xff]
    %v2219 = vld [vmem:[#allocation8 + $0x628] sm:$0xff]
    %v2220 = vld [vmem:[#allocation8 + $0x630] sm:$0xff]
    %v2221 = vld [vmem:[#allocation8 + $0x638] sm:$0xff]
    %v2222 = vld [vmem:[#allocation8 + $0x640] sm:$0xff]
    %v2223 = vld [vmem:[#allocation8 + $0x648] sm:$0xff]
    %v2224 = vld [vmem:[#allocation8 + $0x650] sm:$0xff]
    %v2225 = vld [vmem:[#allocation8 + $0x658] sm:$0xff]
    %v2226 = vld [vmem:[#allocation8 + $0x660] sm:$0xff]
    %v2227 = vld [vmem:[#allocation8 + $0x668] sm:$0xff]
    %v2228 = vld [vmem:[#allocation8 + $0x670] sm:$0xff]
    %v2229 = vld [vmem:[#allocation8 + $0x678] sm:$0xff]
    %v2230 = vld [vmem:[#allocation8 + $0x680] sm:$0xff]
    %v2231 = vld [vmem:[#allocation8 + $0x688] sm:$0xff]
    %v2232 = vld [vmem:[#allocation8 + $0x690] sm:$0xff]
    %v2233 = vld [vmem:[#allocation8 + $0x698] sm:$0xff]
    %v2234 = vld [vmem:[#allocation8 + $0x6a0] sm:$0xff]
    %v2235 = vld [vmem:[#allocation8 + $0x6a8] sm:$0xff]
    %v2236 = vld [vmem:[#allocation8 + $0x6b0] sm:$0xff]
    %v2237 = vld [vmem:[#allocation8 + $0x6b8] sm:$0xff]
    %v2238 = vld [vmem:[#allocation8 + $0x6c0] sm:$0xff]
    %v2239 = vld [vmem:[#allocation8 + $0x6c8] sm:$0xff]
    %v2240 = vld [vmem:[#allocation8 + $0x6d0] sm:$0xff]
    %v2241 = vld [vmem:[#allocation8 + $0x6d8] sm:$0xff]
    %v2242 = vld [vmem:[#allocation8 + $0x6e0] sm:$0xff]
    %v2243 = vld [vmem:[#allocation8 + $0x6e8] sm:$0xff]
    %v2244 = vld [vmem:[#allocation8 + $0x6f0] sm:$0xff]
    %v2245 = vld [vmem:[#allocation8 + $0x6f8] sm:$0xff]
    %v2246 = vld [vmem:[#allocation8 + $0x700] sm:$0xff]
    %v2247 = vld [vmem:[#allocation8 + $0x708] sm:$0xff]
    %v2248 = vld [vmem:[#allocation8 + $0x710] sm:$0xff]
    %v2249 = vld [vmem:[#allocation8 + $0x718] sm:$0xff]
    %v2250 = vld [vmem:[#allocation8 + $0x720] sm:$0xff]
    %v2251 = vld [vmem:[#allocation8 + $0x728] sm:$0xff]
    %v2252 = vld [vmem:[#allocation8 + $0x730] sm:$0xff]
    %v2253 = vld [vmem:[#allocation8 + $0x738] sm:$0xff]
    %v2254 = vld [vmem:[#allocation8 + $0x740] sm:$0xff]
    %v2255 = vld [vmem:[#allocation8 + $0x748] sm:$0xff]
    %v2256 = vld [vmem:[#allocation8 + $0x750] sm:$0xff]
    %v2257 = vld [vmem:[#allocation8 + $0x758] sm:$0xff]
    %v2258 = vld [vmem:[#allocation8 + $0x760] sm:$0xff]
    %v2259 = vld [vmem:[#allocation8 + $0x768] sm:$0xff]
    %v2260 = vld [vmem:[#allocation8 + $0x770] sm:$0xff]
    %v2261 = vld [vmem:[#allocation8 + $0x778] sm:$0xff]
    %v2262 = vld [vmem:[#allocation8 + $0x780] sm:$0xff]
    %v2263 = vld [vmem:[#allocation8 + $0x788] sm:$0xff]
    %v2264 = vld [vmem:[#allocation8 + $0x790] sm:$0xff]
    %v2265 = vld [vmem:[#allocation8 + $0x798] sm:$0xff]
    %v2266 = vld [vmem:[#allocation8 + $0x7a0] sm:$0xff]
    %v2267 = vld [vmem:[#allocation8 + $0x7a8] sm:$0xff]
    %v2268 = vld [vmem:[#allocation8 + $0x7b0] sm:$0xff]
    %v2269 = vld [vmem:[#allocation8 + $0x7b8] sm:$0xff]
    %v2270 = vld [vmem:[#allocation8 + $0x7c0] sm:$0xff]
    %v2271 = vld [vmem:[#allocation8 + $0x7c8] sm:$0xff]
    %v2272 = vld [vmem:[#allocation8 + $0x7d0] sm:$0xff]
    %v2273 = vld [vmem:[#allocation8 + $0x7d8] sm:$0xff]
    %v2274 = vld [vmem:[#allocation8 + $0x7e0] sm:$0xff]
    %v2275 = vld [vmem:[#allocation8 + $0x7e8] sm:$0xff]
    %v2276 = vld [vmem:[#allocation8 + $0x7f0] sm:$0xff]
    %v2277 = vld [vmem:[#allocation8 + $0x7f8] sm:$0xff]
    %v2278 = vld [vmem:[#allocation9] sm:$0xff]
    %v2279 = vld [vmem:[#allocation9 + $0x8] sm:$0xff]
    %v2280 = vld [vmem:[#allocation9 + $0x10] sm:$0xff]
    %v2281 = vld [vmem:[#allocation9 + $0x18] sm:$0xff]
    %v2282 = vld [vmem:[#allocation9 + $0x20] sm:$0xff]
    %v2283 = vld [vmem:[#allocation9 + $0x28] sm:$0xff]
    %v2284 = vld [vmem:[#allocation9 + $0x30] sm:$0xff]
    %v2285 = vld [vmem:[#allocation9 + $0x38] sm:$0xff]
    %v2286 = vld [vmem:[#allocation9 + $0x40] sm:$0xff]
    %v2287 = vld [vmem:[#allocation9 + $0x48] sm:$0xff]
    %v2288 = vld [vmem:[#allocation9 + $0x50] sm:$0xff]
    %v2289 = vld [vmem:[#allocation9 + $0x58] sm:$0xff]
    %v2290 = vld [vmem:[#allocation9 + $0x60] sm:$0xff]
    %v2291 = vld [vmem:[#allocation9 + $0x68] sm:$0xff]
    %v2292 = vld [vmem:[#allocation9 + $0x70] sm:$0xff]
    %v2293 = vld [vmem:[#allocation9 + $0x78] sm:$0xff]
    %v2294 = vld [vmem:[#allocation9 + $0x80] sm:$0xff]
    %v2295 = vld [vmem:[#allocation9 + $0x88] sm:$0xff]
    %v2296 = vld [vmem:[#allocation9 + $0x90] sm:$0xff]
    %v2297 = vld [vmem:[#allocation9 + $0x98] sm:$0xff]
    %v2298 = vld [vmem:[#allocation9 + $0xa0] sm:$0xff]
    %v2299 = vld [vmem:[#allocation9 + $0xa8] sm:$0xff]
    %v2300 = vld [vmem:[#allocation9 + $0xb0] sm:$0xff]
    %v2301 = vld [vmem:[#allocation9 + $0xb8] sm:$0xff]
    %v2302 = vld [vmem:[#allocation9 + $0xc0] sm:$0xff]
    %v2303 = vld [vmem:[#allocation9 + $0xc8] sm:$0xff]
    %v2304 = vld [vmem:[#allocation9 + $0xd0] sm:$0xff]
    %v2305 = vld [vmem:[#allocation9 + $0xd8] sm:$0xff]
    %v2306 = vld [vmem:[#allocation9 + $0xe0] sm:$0xff]
    %v2307 = vld [vmem:[#allocation9 + $0xe8] sm:$0xff]
    %v2308 = vld [vmem:[#allocation9 + $0xf0] sm:$0xff]
    %v2309 = vld [vmem:[#allocation9 + $0xf8] sm:$0xff]
    %v2310 = vld [vmem:[#allocation9 + $0x100] sm:$0xff]
    %v2311 = vld [vmem:[#allocation9 + $0x108] sm:$0xff]
    %v2312 = vld [vmem:[#allocation9 + $0x110] sm:$0xff]
    %v2313 = vld [vmem:[#allocation9 + $0x118] sm:$0xff]
    %v2314 = vld [vmem:[#allocation9 + $0x120] sm:$0xff]
    %v2315 = vld [vmem:[#allocation9 + $0x128] sm:$0xff]
    %v2316 = vld [vmem:[#allocation9 + $0x130] sm:$0xff]
    %v2317 = vld [vmem:[#allocation9 + $0x138] sm:$0xff]
    %v2318 = vld [vmem:[#allocation9 + $0x140] sm:$0xff]
    %v2319 = vld [vmem:[#allocation9 + $0x148] sm:$0xff]
    %v2320 = vld [vmem:[#allocation9 + $0x150] sm:$0xff]
    %v2321 = vld [vmem:[#allocation9 + $0x158] sm:$0xff]
    %v2322 = vld [vmem:[#allocation9 + $0x160] sm:$0xff]
    %v2323 = vld [vmem:[#allocation9 + $0x168] sm:$0xff]
    %v2324 = vld [vmem:[#allocation9 + $0x170] sm:$0xff]
    %v2325 = vld [vmem:[#allocation9 + $0x178] sm:$0xff]
    %v2326 = vld [vmem:[#allocation9 + $0x180] sm:$0xff]
    %v2327 = vld [vmem:[#allocation9 + $0x188] sm:$0xff]
    %v2328 = vld [vmem:[#allocation9 + $0x190] sm:$0xff]
    %v2329 = vld [vmem:[#allocation9 + $0x198] sm:$0xff]
    %v2330 = vld [vmem:[#allocation9 + $0x1a0] sm:$0xff]
    %v2331 = vld [vmem:[#allocation9 + $0x1a8] sm:$0xff]
    %v2332 = vld [vmem:[#allocation9 + $0x1b0] sm:$0xff]
    %v2333 = vld [vmem:[#allocation9 + $0x1b8] sm:$0xff]
    %v2334 = vld [vmem:[#allocation9 + $0x1c0] sm:$0xff]
    %v2335 = vld [vmem:[#allocation9 + $0x1c8] sm:$0xff]
    %v2336 = vld [vmem:[#allocation9 + $0x1d0] sm:$0xff]
    %v2337 = vld [vmem:[#allocation9 + $0x1d8] sm:$0xff]
    %v2338 = vld [vmem:[#allocation9 + $0x1e0] sm:$0xff]
    %v2339 = vld [vmem:[#allocation9 + $0x1e8] sm:$0xff]
    %v2340 = vld [vmem:[#allocation9 + $0x1f0] sm:$0xff]
    %v2341 = vld [vmem:[#allocation9 + $0x1f8] sm:$0xff]
    %v2342 = vld [vmem:[#allocation9 + $0x200] sm:$0xff]
    %v2343 = vld [vmem:[#allocation9 + $0x208] sm:$0xff]
    %v2344 = vld [vmem:[#allocation9 + $0x210] sm:$0xff]
    %v2345 = vld [vmem:[#allocation9 + $0x218] sm:$0xff]
    %v2346 = vld [vmem:[#allocation9 + $0x220] sm:$0xff]
    %v2347 = vld [vmem:[#allocation9 + $0x228] sm:$0xff]
    %v2348 = vld [vmem:[#allocation9 + $0x230] sm:$0xff]
    %v2349 = vld [vmem:[#allocation9 + $0x238] sm:$0xff]
    %v2350 = vld [vmem:[#allocation9 + $0x240] sm:$0xff]
    %v2351 = vld [vmem:[#allocation9 + $0x248] sm:$0xff]
    %v2352 = vld [vmem:[#allocation9 + $0x250] sm:$0xff]
    %v2353 = vld [vmem:[#allocation9 + $0x258] sm:$0xff]
    %v2354 = vld [vmem:[#allocation9 + $0x260] sm:$0xff]
    %v2355 = vld [vmem:[#allocation9 + $0x268] sm:$0xff]
    %v2356 = vld [vmem:[#allocation9 + $0x270] sm:$0xff]
    %v2357 = vld [vmem:[#allocation9 + $0x278] sm:$0xff]
    %v2358 = vld [vmem:[#allocation9 + $0x280] sm:$0xff]
    %v2359 = vld [vmem:[#allocation9 + $0x288] sm:$0xff]
    %v2360 = vld [vmem:[#allocation9 + $0x290] sm:$0xff]
    %v2361 = vld [vmem:[#allocation9 + $0x298] sm:$0xff]
    %v2362 = vld [vmem:[#allocation9 + $0x2a0] sm:$0xff]
    %v2363 = vld [vmem:[#allocation9 + $0x2a8] sm:$0xff]
    %v2364 = vld [vmem:[#allocation9 + $0x2b0] sm:$0xff]
    %v2365 = vld [vmem:[#allocation9 + $0x2b8] sm:$0xff]
    %v2366 = vld [vmem:[#allocation9 + $0x2c0] sm:$0xff]
    %v2367 = vld [vmem:[#allocation9 + $0x2c8] sm:$0xff]
    %v2368 = vld [vmem:[#allocation9 + $0x2d0] sm:$0xff]
    %v2369 = vld [vmem:[#allocation9 + $0x2d8] sm:$0xff]
    %v2370 = vld [vmem:[#allocation9 + $0x2e0] sm:$0xff]
    %v2371 = vld [vmem:[#allocation9 + $0x2e8] sm:$0xff]
    %v2372 = vld [vmem:[#allocation9 + $0x2f0] sm:$0xff]
    %v2373 = vld [vmem:[#allocation9 + $0x2f8] sm:$0xff]
    %v2374 = vld [vmem:[#allocation9 + $0x300] sm:$0xff]
    %v2375 = vld [vmem:[#allocation9 + $0x308] sm:$0xff]
    %v2376 = vld [vmem:[#allocation9 + $0x310] sm:$0xff]
    %v2377 = vld [vmem:[#allocation9 + $0x318] sm:$0xff]
    %v2378 = vld [vmem:[#allocation9 + $0x320] sm:$0xff]
    %v2379 = vld [vmem:[#allocation9 + $0x328] sm:$0xff]
    %v2380 = vld [vmem:[#allocation9 + $0x330] sm:$0xff]
    %v2381 = vld [vmem:[#allocation9 + $0x338] sm:$0xff]
    %v2382 = vld [vmem:[#allocation9 + $0x340] sm:$0xff]
    %v2383 = vld [vmem:[#allocation9 + $0x348] sm:$0xff]
    %v2384 = vld [vmem:[#allocation9 + $0x350] sm:$0xff]
    %v2385 = vld [vmem:[#allocation9 + $0x358] sm:$0xff]
    %v2386 = vld [vmem:[#allocation9 + $0x360] sm:$0xff]
    %v2387 = vld [vmem:[#allocation9 + $0x368] sm:$0xff]
    %v2388 = vld [vmem:[#allocation9 + $0x370] sm:$0xff]
    %v2389 = vld [vmem:[#allocation9 + $0x378] sm:$0xff]
    %v2390 = vld [vmem:[#allocation9 + $0x380] sm:$0xff]
    %v2391 = vld [vmem:[#allocation9 + $0x388] sm:$0xff]
    %v2392 = vld [vmem:[#allocation9 + $0x390] sm:$0xff]
    %v2393 = vld [vmem:[#allocation9 + $0x398] sm:$0xff]
    %v2394 = vld [vmem:[#allocation9 + $0x3a0] sm:$0xff]
    %v2395 = vld [vmem:[#allocation9 + $0x3a8] sm:$0xff]
    %v2396 = vld [vmem:[#allocation9 + $0x3b0] sm:$0xff]
    %v2397 = vld [vmem:[#allocation9 + $0x3b8] sm:$0xff]
    %v2398 = vld [vmem:[#allocation9 + $0x3c0] sm:$0xff]
    %v2399 = vld [vmem:[#allocation9 + $0x3c8] sm:$0xff]
    %v2400 = vld [vmem:[#allocation9 + $0x3d0] sm:$0xff]
    %v2401 = vld [vmem:[#allocation9 + $0x3d8] sm:$0xff]
    %v2402 = vld [vmem:[#allocation9 + $0x3e0] sm:$0xff]
    %v2403 = vld [vmem:[#allocation9 + $0x3e8] sm:$0xff]
    %v2404 = vld [vmem:[#allocation9 + $0x3f0] sm:$0xff]
    %v2405 = vld [vmem:[#allocation9 + $0x3f8] sm:$0xff]
    %v2406 = vld [vmem:[#allocation9 + $0x400] sm:$0xff]
    %v2407 = vld [vmem:[#allocation9 + $0x408] sm:$0xff]
    %v2408 = vld [vmem:[#allocation9 + $0x410] sm:$0xff]
    %v2409 = vld [vmem:[#allocation9 + $0x418] sm:$0xff]
    %v2410 = vld [vmem:[#allocation9 + $0x420] sm:$0xff]
    %v2411 = vld [vmem:[#allocation9 + $0x428] sm:$0xff]
    %v2412 = vld [vmem:[#allocation9 + $0x430] sm:$0xff]
    %v2413 = vld [vmem:[#allocation9 + $0x438] sm:$0xff]
    %v2414 = vld [vmem:[#allocation9 + $0x440] sm:$0xff]
    %v2415 = vld [vmem:[#allocation9 + $0x448] sm:$0xff]
    %v2416 = vld [vmem:[#allocation9 + $0x450] sm:$0xff]
    %v2417 = vld [vmem:[#allocation9 + $0x458] sm:$0xff]
    %v2418 = vld [vmem:[#allocation9 + $0x460] sm:$0xff]
    %v2419 = vld [vmem:[#allocation9 + $0x468] sm:$0xff]
    %v2420 = vld [vmem:[#allocation9 + $0x470] sm:$0xff]
    %v2421 = vld [vmem:[#allocation9 + $0x478] sm:$0xff]
    %v2422 = vld [vmem:[#allocation9 + $0x480] sm:$0xff]
    %v2423 = vld [vmem:[#allocation9 + $0x488] sm:$0xff]
    %v2424 = vld [vmem:[#allocation9 + $0x490] sm:$0xff]
    %v2425 = vld [vmem:[#allocation9 + $0x498] sm:$0xff]
    %v2426 = vld [vmem:[#allocation9 + $0x4a0] sm:$0xff]
    %v2427 = vld [vmem:[#allocation9 + $0x4a8] sm:$0xff]
    %v2428 = vld [vmem:[#allocation9 + $0x4b0] sm:$0xff]
    %v2429 = vld [vmem:[#allocation9 + $0x4b8] sm:$0xff]
    %v2430 = vld [vmem:[#allocation9 + $0x4c0] sm:$0xff]
    %v2431 = vld [vmem:[#allocation9 + $0x4c8] sm:$0xff]
    %v2432 = vld [vmem:[#allocation9 + $0x4d0] sm:$0xff]
    %v2433 = vld [vmem:[#allocation9 + $0x4d8] sm:$0xff]
    %v2434 = vld [vmem:[#allocation9 + $0x4e0] sm:$0xff]
    %v2435 = vld [vmem:[#allocation9 + $0x4e8] sm:$0xff]
    %v2436 = vld [vmem:[#allocation9 + $0x4f0] sm:$0xff]
    %v2437 = vld [vmem:[#allocation9 + $0x4f8] sm:$0xff]
    %v2438 = vld [vmem:[#allocation9 + $0x500] sm:$0xff]
    %v2439 = vld [vmem:[#allocation9 + $0x508] sm:$0xff]
    %v2440 = vld [vmem:[#allocation9 + $0x510] sm:$0xff]
    %v2441 = vld [vmem:[#allocation9 + $0x518] sm:$0xff]
    %v2442 = vld [vmem:[#allocation9 + $0x520] sm:$0xff]
    %v2443 = vld [vmem:[#allocation9 + $0x528] sm:$0xff]
    %v2444 = vld [vmem:[#allocation9 + $0x530] sm:$0xff]
    %v2445 = vld [vmem:[#allocation9 + $0x538] sm:$0xff]
    %v2446 = vld [vmem:[#allocation9 + $0x540] sm:$0xff]
    %v2447 = vld [vmem:[#allocation9 + $0x548] sm:$0xff]
    %v2448 = vld [vmem:[#allocation9 + $0x550] sm:$0xff]
    %v2449 = vld [vmem:[#allocation9 + $0x558] sm:$0xff]
    %v2450 = vld [vmem:[#allocation9 + $0x560] sm:$0xff]
    %v2451 = vld [vmem:[#allocation9 + $0x568] sm:$0xff]
    %v2452 = vld [vmem:[#allocation9 + $0x570] sm:$0xff]
    %v2453 = vld [vmem:[#allocation9 + $0x578] sm:$0xff]
    %v2454 = vld [vmem:[#allocation9 + $0x580] sm:$0xff]
    %v2455 = vld [vmem:[#allocation9 + $0x588] sm:$0xff]
    %v2456 = vld [vmem:[#allocation9 + $0x590] sm:$0xff]
    %v2457 = vld [vmem:[#allocation9 + $0x598] sm:$0xff]
    %v2458 = vld [vmem:[#allocation9 + $0x5a0] sm:$0xff]
    %v2459 = vld [vmem:[#allocation9 + $0x5a8] sm:$0xff]
    %v2460 = vld [vmem:[#allocation9 + $0x5b0] sm:$0xff]
    %v2461 = vld [vmem:[#allocation9 + $0x5b8] sm:$0xff]
    %v2462 = vld [vmem:[#allocation9 + $0x5c0] sm:$0xff]
    %v2463 = vld [vmem:[#allocation9 + $0x5c8] sm:$0xff]
    %v2464 = vld [vmem:[#allocation9 + $0x5d0] sm:$0xff]
    %v2465 = vld [vmem:[#allocation9 + $0x5d8] sm:$0xff]
    %v2466 = vld [vmem:[#allocation9 + $0x5e0] sm:$0xff]
    %v2467 = vld [vmem:[#allocation9 + $0x5e8] sm:$0xff]
    %v2468 = vld [vmem:[#allocation9 + $0x5f0] sm:$0xff]
    %v2469 = vld [vmem:[#allocation9 + $0x5f8] sm:$0xff]
    %v2470 = vld [vmem:[#allocation9 + $0x600] sm:$0xff]
    %v2471 = vld [vmem:[#allocation9 + $0x608] sm:$0xff]
    %v2472 = vld [vmem:[#allocation9 + $0x610] sm:$0xff]
    %v2473 = vld [vmem:[#allocation9 + $0x618] sm:$0xff]
    %v2474 = vld [vmem:[#allocation9 + $0x620] sm:$0xff]
    %v2475 = vld [vmem:[#allocation9 + $0x628] sm:$0xff]
    %v2476 = vld [vmem:[#allocation9 + $0x630] sm:$0xff]
    %v2477 = vld [vmem:[#allocation9 + $0x638] sm:$0xff]
    %v2478 = vld [vmem:[#allocation9 + $0x640] sm:$0xff]
    %v2479 = vld [vmem:[#allocation9 + $0x648] sm:$0xff]
    %v2480 = vld [vmem:[#allocation9 + $0x650] sm:$0xff]
    %v2481 = vld [vmem:[#allocation9 + $0x658] sm:$0xff]
    %v2482 = vld [vmem:[#allocation9 + $0x660] sm:$0xff]
    %v2483 = vld [vmem:[#allocation9 + $0x668] sm:$0xff]
    %v2484 = vld [vmem:[#allocation9 + $0x670] sm:$0xff]
    %v2485 = vld [vmem:[#allocation9 + $0x678] sm:$0xff]
    %v2486 = vld [vmem:[#allocation9 + $0x680] sm:$0xff]
    %v2487 = vld [vmem:[#allocation9 + $0x688] sm:$0xff]
    %v2488 = vld [vmem:[#allocation9 + $0x690] sm:$0xff]
    %v2489 = vld [vmem:[#allocation9 + $0x698] sm:$0xff]
    %v2490 = vld [vmem:[#allocation9 + $0x6a0] sm:$0xff]
    %v2491 = vld [vmem:[#allocation9 + $0x6a8] sm:$0xff]
    %v2492 = vld [vmem:[#allocation9 + $0x6b0] sm:$0xff]
    %v2493 = vld [vmem:[#allocation9 + $0x6b8] sm:$0xff]
    %v2494 = vld [vmem:[#allocation9 + $0x6c0] sm:$0xff]
    %v2495 = vld [vmem:[#allocation9 + $0x6c8] sm:$0xff]
    %v2496 = vld [vmem:[#allocation9 + $0x6d0] sm:$0xff]
    %v2497 = vld [vmem:[#allocation9 + $0x6d8] sm:$0xff]
    %v2498 = vld [vmem:[#allocation9 + $0x6e0] sm:$0xff]
    %v2499 = vld [vmem:[#allocation9 + $0x6e8] sm:$0xff]
    %v2500 = vld [vmem:[#allocation9 + $0x6f0] sm:$0xff]
    %v2501 = vld [vmem:[#allocation9 + $0x6f8] sm:$0xff]
    %v2502 = vld [vmem:[#allocation9 + $0x700] sm:$0xff]
    %v2503 = vld [vmem:[#allocation9 + $0x708] sm:$0xff]
    %v2504 = vld [vmem:[#allocation9 + $0x710] sm:$0xff]
    %v2505 = vld [vmem:[#allocation9 + $0x718] sm:$0xff]
    %v2506 = vld [vmem:[#allocation9 + $0x720] sm:$0xff]
    %v2507 = vld [vmem:[#allocation9 + $0x728] sm:$0xff]
    %v2508 = vld [vmem:[#allocation9 + $0x730] sm:$0xff]
    %v2509 = vld [vmem:[#allocation9 + $0x738] sm:$0xff]
    %v2510 = vld [vmem:[#allocation9 + $0x740] sm:$0xff]
    %v2511 = vld [vmem:[#allocation9 + $0x748] sm:$0xff]
    %v2512 = vld [vmem:[#allocation9 + $0x750] sm:$0xff]
    %v2513 = vld [vmem:[#allocation9 + $0x758] sm:$0xff]
    %v2514 = vld [vmem:[#allocation9 + $0x760] sm:$0xff]
    %v2515 = vld [vmem:[#allocation9 + $0x768] sm:$0xff]
    %v2516 = vld [vmem:[#allocation9 + $0x770] sm:$0xff]
    %v2517 = vld [vmem:[#allocation9 + $0x778] sm:$0xff]
    %v2518 = vld [vmem:[#allocation9 + $0x780] sm:$0xff]
    %v2519 = vld [vmem:[#allocation9 + $0x788] sm:$0xff]
    %v2520 = vld [vmem:[#allocation9 + $0x790] sm:$0xff]
    %v2521 = vld [vmem:[#allocation9 + $0x798] sm:$0xff]
    %v2522 = vld [vmem:[#allocation9 + $0x7a0] sm:$0xff]
    %v2523 = vld [vmem:[#allocation9 + $0x7a8] sm:$0xff]
    %v2524 = vld [vmem:[#allocation9 + $0x7b0] sm:$0xff]
    %v2525 = vld [vmem:[#allocation9 + $0x7b8] sm:$0xff]
    %v2526 = vld [vmem:[#allocation9 + $0x7c0] sm:$0xff]
    %v2527 = vld [vmem:[#allocation9 + $0x7c8] sm:$0xff]
    %v2528 = vld [vmem:[#allocation9 + $0x7d0] sm:$0xff]
    %v2529 = vld [vmem:[#allocation9 + $0x7d8] sm:$0xff]
    %v2530 = vld [vmem:[#allocation9 + $0x7e0] sm:$0xff]
    %v2531 = vld [vmem:[#allocation9 + $0x7e8] sm:$0xff]
    %v2532 = vld [vmem:[#allocation9 + $0x7f0] sm:$0xff]
    %v2533 = vld [vmem:[#allocation9 + $0x7f8] sm:$0xff]
    %v2538 = vunpack.c.l.b16 %v1750
    %v2539 = vunpack.c.h.b16 %v1750
    %v2540 = vunpack.c.l.b16 %v1751
    %v2541 = vunpack.c.h.b16 %v1751
    %v2542 = vunpack.c.l.b16 %v1752
    %v2543 = vunpack.c.h.b16 %v1752
    %v2544 = vunpack.c.l.b16 %v1753
    %v2545 = vunpack.c.h.b16 %v1753
    %v2546 = vpack.c.b16 %v2542, %v2538
    %v2547 = vpack.c.b16 %v2543, %v2539
    %v2548 = vpack.c.b16 %v2544, %v2540
    %v2549 = vpack.c.b16 %v2545, %v2541
    %v2810 = vunpack.c.l.b16 %v2022
    %v2811 = vunpack.c.h.b16 %v2022
    %v2812 = vunpack.c.l.b16 %v2023
    %v2813 = vunpack.c.h.b16 %v2023
    %v2814 = vunpack.c.l.b16 %v2024
    %v2815 = vunpack.c.h.b16 %v2024
    %v2816 = vunpack.c.l.b16 %v2025
    %v2817 = vunpack.c.h.b16 %v2025
    %v2818 = vunpack.c.l.b16 %v2026
    %v2819 = vunpack.c.h.b16 %v2026
    %v2820 = vunpack.c.l.b16 %v2027
    %v2821 = vunpack.c.h.b16 %v2027
    %v2822 = vunpack.c.l.b16 %v2028
    %v2823 = vunpack.c.h.b16 %v2028
    %v2824 = vunpack.c.l.b16 %v2029
    %v2825 = vunpack.c.h.b16 %v2029
    %v2826 = vunpack.c.l.b16 %v2030
    %v2827 = vunpack.c.h.b16 %v2030
    %v2828 = vunpack.c.l.b16 %v2031
    %v2829 = vunpack.c.h.b16 %v2031
    %v2830 = vunpack.c.l.b16 %v2032
    %v2831 = vunpack.c.h.b16 %v2032
    %v2832 = vunpack.c.l.b16 %v2033
    %v2833 = vunpack.c.h.b16 %v2033
    %v2834 = vunpack.c.l.b16 %v2034
    %v2835 = vunpack.c.h.b16 %v2034
    %v2836 = vunpack.c.l.b16 %v2035
    %v2837 = vunpack.c.h.b16 %v2035
    %v2838 = vunpack.c.l.b16 %v2036
    %v2839 = vunpack.c.h.b16 %v2036
    %v2840 = vunpack.c.l.b16 %v2037
    %v2841 = vunpack.c.h.b16 %v2037
    %v2842 = vunpack.c.l.b16 %v2038
    %v2843 = vunpack.c.h.b16 %v2038
    %v2844 = vunpack.c.l.b16 %v2039
    %v2845 = vunpack.c.h.b16 %v2039
    %v2846 = vunpack.c.l.b16 %v2040
    %v2847 = vunpack.c.h.b16 %v2040
    %v2848 = vunpack.c.l.b16 %v2041
    %v2849 = vunpack.c.h.b16 %v2041
    %v2850 = vunpack.c.l.b16 %v2042
    %v2851 = vunpack.c.h.b16 %v2042
    %v2852 = vunpack.c.l.b16 %v2043
    %v2853 = vunpack.c.h.b16 %v2043
    %v2854 = vunpack.c.l.b16 %v2044
    %v2855 = vunpack.c.h.b16 %v2044
    %v2856 = vunpack.c.l.b16 %v2045
    %v2857 = vunpack.c.h.b16 %v2045
    %v2858 = vunpack.c.l.b16 %v2046
    %v2859 = vunpack.c.h.b16 %v2046
    %v2860 = vunpack.c.l.b16 %v2047
    %v2861 = vunpack.c.h.b16 %v2047
    %v2862 = vunpack.c.l.b16 %v2048
    %v2863 = vunpack.c.h.b16 %v2048
    %v2864 = vunpack.c.l.b16 %v2049
    %v2865 = vunpack.c.h.b16 %v2049
    %v2866 = vunpack.c.l.b16 %v2050
    %v2867 = vunpack.c.h.b16 %v2050
    %v2868 = vunpack.c.l.b16 %v2051
    %v2869 = vunpack.c.h.b16 %v2051
    %v2870 = vunpack.c.l.b16 %v2052
    %v2871 = vunpack.c.h.b16 %v2052
    %v2872 = vunpack.c.l.b16 %v2053
    %v2873 = vunpack.c.h.b16 %v2053
    %v2874 = vunpack.c.l.b16 %v2054
    %v2875 = vunpack.c.h.b16 %v2054
    %v2876 = vunpack.c.l.b16 %v2055
    %v2877 = vunpack.c.h.b16 %v2055
    %v2878 = vunpack.c.l.b16 %v2056
    %v2879 = vunpack.c.h.b16 %v2056
    %v2880 = vunpack.c.l.b16 %v2057
    %v2881 = vunpack.c.h.b16 %v2057
    %v2882 = vunpack.c.l.b16 %v2058
    %v2883 = vunpack.c.h.b16 %v2058
    %v2884 = vunpack.c.l.b16 %v2059
    %v2885 = vunpack.c.h.b16 %v2059
    %v2886 = vunpack.c.l.b16 %v2060
    %v2887 = vunpack.c.h.b16 %v2060
    %v2888 = vunpack.c.l.b16 %v2061
    %v2889 = vunpack.c.h.b16 %v2061
    %v2890 = vunpack.c.l.b16 %v2062
    %v2891 = vunpack.c.h.b16 %v2062
    %v2892 = vunpack.c.l.b16 %v2063
    %v2893 = vunpack.c.h.b16 %v2063
    %v2894 = vunpack.c.l.b16 %v2064
    %v2895 = vunpack.c.h.b16 %v2064
    %v2896 = vunpack.c.l.b16 %v2065
    %v2897 = vunpack.c.h.b16 %v2065
    %v2898 = vunpack.c.l.b16 %v2066
    %v2899 = vunpack.c.h.b16 %v2066
    %v2900 = vunpack.c.l.b16 %v2067
    %v2901 = vunpack.c.h.b16 %v2067
    %v2902 = vunpack.c.l.b16 %v2068
    %v2903 = vunpack.c.h.b16 %v2068
    %v2904 = vunpack.c.l.b16 %v2069
    %v2905 = vunpack.c.h.b16 %v2069
    %v2906 = vunpack.c.l.b16 %v2070
    %v2907 = vunpack.c.h.b16 %v2070
    %v2908 = vunpack.c.l.b16 %v2071
    %v2909 = vunpack.c.h.b16 %v2071
    %v2910 = vunpack.c.l.b16 %v2072
    %v2911 = vunpack.c.h.b16 %v2072
    %v2912 = vunpack.c.l.b16 %v2073
    %v2913 = vunpack.c.h.b16 %v2073
    %v2914 = vunpack.c.l.b16 %v2074
    %v2915 = vunpack.c.h.b16 %v2074
    %v2916 = vunpack.c.l.b16 %v2075
    %v2917 = vunpack.c.h.b16 %v2075
    %v2918 = vunpack.c.l.b16 %v2076
    %v2919 = vunpack.c.h.b16 %v2076
    %v2920 = vunpack.c.l.b16 %v2077
    %v2921 = vunpack.c.h.b16 %v2077
    %v2922 = vunpack.c.l.b16 %v2078
    %v2923 = vunpack.c.h.b16 %v2078
    %v2924 = vunpack.c.l.b16 %v2079
    %v2925 = vunpack.c.h.b16 %v2079
    %v2926 = vunpack.c.l.b16 %v2080
    %v2927 = vunpack.c.h.b16 %v2080
    %v2928 = vunpack.c.l.b16 %v2081
    %v2929 = vunpack.c.h.b16 %v2081
    %v2930 = vunpack.c.l.b16 %v2082
    %v2931 = vunpack.c.h.b16 %v2082
    %v2932 = vunpack.c.l.b16 %v2083
    %v2933 = vunpack.c.h.b16 %v2083
    %v2934 = vunpack.c.l.b16 %v2084
    %v2935 = vunpack.c.h.b16 %v2084
    %v2936 = vunpack.c.l.b16 %v2085
    %v2937 = vunpack.c.h.b16 %v2085
    %v2938 = vunpack.c.l.b16 %v2086
    %v2939 = vunpack.c.h.b16 %v2086
    %v2940 = vunpack.c.l.b16 %v2087
    %v2941 = vunpack.c.h.b16 %v2087
    %v2942 = vunpack.c.l.b16 %v2088
    %v2943 = vunpack.c.h.b16 %v2088
    %v2944 = vunpack.c.l.b16 %v2089
    %v2945 = vunpack.c.h.b16 %v2089
    %v2946 = vunpack.c.l.b16 %v2090
    %v2947 = vunpack.c.h.b16 %v2090
    %v2948 = vunpack.c.l.b16 %v2091
    %v2949 = vunpack.c.h.b16 %v2091
    %v2950 = vunpack.c.l.b16 %v2092
    %v2951 = vunpack.c.h.b16 %v2092
    %v2952 = vunpack.c.l.b16 %v2093
    %v2953 = vunpack.c.h.b16 %v2093
    %v2954 = vunpack.c.l.b16 %v2094
    %v2955 = vunpack.c.h.b16 %v2094
    %v2956 = vunpack.c.l.b16 %v2095
    %v2957 = vunpack.c.h.b16 %v2095
    %v2958 = vunpack.c.l.b16 %v2096
    %v2959 = vunpack.c.h.b16 %v2096
    %v2960 = vunpack.c.l.b16 %v2097
    %v2961 = vunpack.c.h.b16 %v2097
    %v2962 = vunpack.c.l.b16 %v2098
    %v2963 = vunpack.c.h.b16 %v2098
    %v2964 = vunpack.c.l.b16 %v2099
    %v2965 = vunpack.c.h.b16 %v2099
    %v2966 = vunpack.c.l.b16 %v2100
    %v2967 = vunpack.c.h.b16 %v2100
    %v2968 = vunpack.c.l.b16 %v2101
    %v2969 = vunpack.c.h.b16 %v2101
    %v2970 = vunpack.c.l.b16 %v2102
    %v2971 = vunpack.c.h.b16 %v2102
    %v2972 = vunpack.c.l.b16 %v2103
    %v2973 = vunpack.c.h.b16 %v2103
    %v2974 = vunpack.c.l.b16 %v2104
    %v2975 = vunpack.c.h.b16 %v2104
    %v2976 = vunpack.c.l.b16 %v2105
    %v2977 = vunpack.c.h.b16 %v2105
    %v2978 = vunpack.c.l.b16 %v2106
    %v2979 = vunpack.c.h.b16 %v2106
    %v2980 = vunpack.c.l.b16 %v2107
    %v2981 = vunpack.c.h.b16 %v2107
    %v2982 = vunpack.c.l.b16 %v2108
    %v2983 = vunpack.c.h.b16 %v2108
    %v2984 = vunpack.c.l.b16 %v2109
    %v2985 = vunpack.c.h.b16 %v2109
    %v2986 = vunpack.c.l.b16 %v2110
    %v2987 = vunpack.c.h.b16 %v2110
    %v2988 = vunpack.c.l.b16 %v2111
    %v2989 = vunpack.c.h.b16 %v2111
    %v2990 = vunpack.c.l.b16 %v2112
    %v2991 = vunpack.c.h.b16 %v2112
    %v2992 = vunpack.c.l.b16 %v2113
    %v2993 = vunpack.c.h.b16 %v2113
    %v2994 = vunpack.c.l.b16 %v2114
    %v2995 = vunpack.c.h.b16 %v2114
    %v2996 = vunpack.c.l.b16 %v2115
    %v2997 = vunpack.c.h.b16 %v2115
    %v2998 = vunpack.c.l.b16 %v2116
    %v2999 = vunpack.c.h.b16 %v2116
    %v3000 = vunpack.c.l.b16 %v2117
    %v3001 = vunpack.c.h.b16 %v2117
    %v3002 = vunpack.c.l.b16 %v2118
    %v3003 = vunpack.c.h.b16 %v2118
    %v3004 = vunpack.c.l.b16 %v2119
    %v3005 = vunpack.c.h.b16 %v2119
    %v3006 = vunpack.c.l.b16 %v2120
    %v3007 = vunpack.c.h.b16 %v2120
    %v3008 = vunpack.c.l.b16 %v2121
    %v3009 = vunpack.c.h.b16 %v2121
    %v3010 = vunpack.c.l.b16 %v2122
    %v3011 = vunpack.c.h.b16 %v2122
    %v3012 = vunpack.c.l.b16 %v2123
    %v3013 = vunpack.c.h.b16 %v2123
    %v3014 = vunpack.c.l.b16 %v2124
    %v3015 = vunpack.c.h.b16 %v2124
    %v3016 = vunpack.c.l.b16 %v2125
    %v3017 = vunpack.c.h.b16 %v2125
    %v3018 = vunpack.c.l.b16 %v2126
    %v3019 = vunpack.c.h.b16 %v2126
    %v3020 = vunpack.c.l.b16 %v2127
    %v3021 = vunpack.c.h.b16 %v2127
    %v3022 = vunpack.c.l.b16 %v2128
    %v3023 = vunpack.c.h.b16 %v2128
    %v3024 = vunpack.c.l.b16 %v2129
    %v3025 = vunpack.c.h.b16 %v2129
    %v3026 = vunpack.c.l.b16 %v2130
    %v3027 = vunpack.c.h.b16 %v2130
    %v3028 = vunpack.c.l.b16 %v2131
    %v3029 = vunpack.c.h.b16 %v2131
    %v3030 = vunpack.c.l.b16 %v2132
    %v3031 = vunpack.c.h.b16 %v2132
    %v3032 = vunpack.c.l.b16 %v2133
    %v3033 = vunpack.c.h.b16 %v2133
    %v3034 = vunpack.c.l.b16 %v2134
    %v3035 = vunpack.c.h.b16 %v2134
    %v3036 = vunpack.c.l.b16 %v2135
    %v3037 = vunpack.c.h.b16 %v2135
    %v3038 = vunpack.c.l.b16 %v2136
    %v3039 = vunpack.c.h.b16 %v2136
    %v3040 = vunpack.c.l.b16 %v2137
    %v3041 = vunpack.c.h.b16 %v2137
    %v3042 = vunpack.c.l.b16 %v2138
    %v3043 = vunpack.c.h.b16 %v2138
    %v3044 = vunpack.c.l.b16 %v2139
    %v3045 = vunpack.c.h.b16 %v2139
    %v3046 = vunpack.c.l.b16 %v2140
    %v3047 = vunpack.c.h.b16 %v2140
    %v3048 = vunpack.c.l.b16 %v2141
    %v3049 = vunpack.c.h.b16 %v2141
    %v3050 = vunpack.c.l.b16 %v2142
    %v3051 = vunpack.c.h.b16 %v2142
    %v3052 = vunpack.c.l.b16 %v2143
    %v3053 = vunpack.c.h.b16 %v2143
    %v3054 = vunpack.c.l.b16 %v2144
    %v3055 = vunpack.c.h.b16 %v2144
    %v3056 = vunpack.c.l.b16 %v2145
    %v3057 = vunpack.c.h.b16 %v2145
    %v3058 = vunpack.c.l.b16 %v2146
    %v3059 = vunpack.c.h.b16 %v2146
    %v3060 = vunpack.c.l.b16 %v2147
    %v3061 = vunpack.c.h.b16 %v2147
    %v3062 = vunpack.c.l.b16 %v2148
    %v3063 = vunpack.c.h.b16 %v2148
    %v3064 = vunpack.c.l.b16 %v2149
    %v3065 = vunpack.c.h.b16 %v2149
    %v3066 = vunpack.c.l.b16 %v2150
    %v3067 = vunpack.c.h.b16 %v2150
    %v3068 = vunpack.c.l.b16 %v2151
    %v3069 = vunpack.c.h.b16 %v2151
    %v3070 = vunpack.c.l.b16 %v2152
    %v3071 = vunpack.c.h.b16 %v2152
    %v3072 = vunpack.c.l.b16 %v2153
    %v3073 = vunpack.c.h.b16 %v2153
    %v3074 = vunpack.c.l.b16 %v2154
    %v3075 = vunpack.c.h.b16 %v2154
    %v3076 = vunpack.c.l.b16 %v2155
    %v3077 = vunpack.c.h.b16 %v2155
    %v3078 = vunpack.c.l.b16 %v2156
    %v3079 = vunpack.c.h.b16 %v2156
    %v3080 = vunpack.c.l.b16 %v2157
    %v3081 = vunpack.c.h.b16 %v2157
    %v3082 = vunpack.c.l.b16 %v2158
    %v3083 = vunpack.c.h.b16 %v2158
    %v3084 = vunpack.c.l.b16 %v2159
    %v3085 = vunpack.c.h.b16 %v2159
    %v3086 = vunpack.c.l.b16 %v2160
    %v3087 = vunpack.c.h.b16 %v2160
    %v3088 = vunpack.c.l.b16 %v2161
    %v3089 = vunpack.c.h.b16 %v2161
    %v3090 = vunpack.c.l.b16 %v2162
    %v3091 = vunpack.c.h.b16 %v2162
    %v3092 = vunpack.c.l.b16 %v2163
    %v3093 = vunpack.c.h.b16 %v2163
    %v3094 = vunpack.c.l.b16 %v2164
    %v3095 = vunpack.c.h.b16 %v2164
    %v3096 = vunpack.c.l.b16 %v2165
    %v3097 = vunpack.c.h.b16 %v2165
    %v3098 = vunpack.c.l.b16 %v2166
    %v3099 = vunpack.c.h.b16 %v2166
    %v3100 = vunpack.c.l.b16 %v2167
    %v3101 = vunpack.c.h.b16 %v2167
    %v3102 = vunpack.c.l.b16 %v2168
    %v3103 = vunpack.c.h.b16 %v2168
    %v3104 = vunpack.c.l.b16 %v2169
    %v3105 = vunpack.c.h.b16 %v2169
    %v3106 = vunpack.c.l.b16 %v2170
    %v3107 = vunpack.c.h.b16 %v2170
    %v3108 = vunpack.c.l.b16 %v2171
    %v3109 = vunpack.c.h.b16 %v2171
    %v3110 = vunpack.c.l.b16 %v2172
    %v3111 = vunpack.c.h.b16 %v2172
    %v3112 = vunpack.c.l.b16 %v2173
    %v3113 = vunpack.c.h.b16 %v2173
    %v3114 = vunpack.c.l.b16 %v2174
    %v3115 = vunpack.c.h.b16 %v2174
    %v3116 = vunpack.c.l.b16 %v2175
    %v3117 = vunpack.c.h.b16 %v2175
    %v3118 = vunpack.c.l.b16 %v2176
    %v3119 = vunpack.c.h.b16 %v2176
    %v3120 = vunpack.c.l.b16 %v2177
    %v3121 = vunpack.c.h.b16 %v2177
    %v3122 = vunpack.c.l.b16 %v2178
    %v3123 = vunpack.c.h.b16 %v2178
    %v3124 = vunpack.c.l.b16 %v2179
    %v3125 = vunpack.c.h.b16 %v2179
    %v3126 = vunpack.c.l.b16 %v2180
    %v3127 = vunpack.c.h.b16 %v2180
    %v3128 = vunpack.c.l.b16 %v2181
    %v3129 = vunpack.c.h.b16 %v2181
    %v3130 = vunpack.c.l.b16 %v2182
    %v3131 = vunpack.c.h.b16 %v2182
    %v3132 = vunpack.c.l.b16 %v2183
    %v3133 = vunpack.c.h.b16 %v2183
    %v3134 = vunpack.c.l.b16 %v2184
    %v3135 = vunpack.c.h.b16 %v2184
    %v3136 = vunpack.c.l.b16 %v2185
    %v3137 = vunpack.c.h.b16 %v2185
    %v3138 = vunpack.c.l.b16 %v2186
    %v3139 = vunpack.c.h.b16 %v2186
    %v3140 = vunpack.c.l.b16 %v2187
    %v3141 = vunpack.c.h.b16 %v2187
    %v3142 = vunpack.c.l.b16 %v2188
    %v3143 = vunpack.c.h.b16 %v2188
    %v3144 = vunpack.c.l.b16 %v2189
    %v3145 = vunpack.c.h.b16 %v2189
    %v3146 = vunpack.c.l.b16 %v2190
    %v3147 = vunpack.c.h.b16 %v2190
    %v3148 = vunpack.c.l.b16 %v2191
    %v3149 = vunpack.c.h.b16 %v2191
    %v3150 = vunpack.c.l.b16 %v2192
    %v3151 = vunpack.c.h.b16 %v2192
    %v3152 = vunpack.c.l.b16 %v2193
    %v3153 = vunpack.c.h.b16 %v2193
    %v3154 = vunpack.c.l.b16 %v2194
    %v3155 = vunpack.c.h.b16 %v2194
    %v3156 = vunpack.c.l.b16 %v2195
    %v3157 = vunpack.c.h.b16 %v2195
    %v3158 = vunpack.c.l.b16 %v2196
    %v3159 = vunpack.c.h.b16 %v2196
    %v3160 = vunpack.c.l.b16 %v2197
    %v3161 = vunpack.c.h.b16 %v2197
    %v3162 = vunpack.c.l.b16 %v2198
    %v3163 = vunpack.c.h.b16 %v2198
    %v3164 = vunpack.c.l.b16 %v2199
    %v3165 = vunpack.c.h.b16 %v2199
    %v3166 = vunpack.c.l.b16 %v2200
    %v3167 = vunpack.c.h.b16 %v2200
    %v3168 = vunpack.c.l.b16 %v2201
    %v3169 = vunpack.c.h.b16 %v2201
    %v3170 = vunpack.c.l.b16 %v2202
    %v3171 = vunpack.c.h.b16 %v2202
    %v3172 = vunpack.c.l.b16 %v2203
    %v3173 = vunpack.c.h.b16 %v2203
    %v3174 = vunpack.c.l.b16 %v2204
    %v3175 = vunpack.c.h.b16 %v2204
    %v3176 = vunpack.c.l.b16 %v2205
    %v3177 = vunpack.c.h.b16 %v2205
    %v3178 = vunpack.c.l.b16 %v2206
    %v3179 = vunpack.c.h.b16 %v2206
    %v3180 = vunpack.c.l.b16 %v2207
    %v3181 = vunpack.c.h.b16 %v2207
    %v3182 = vunpack.c.l.b16 %v2208
    %v3183 = vunpack.c.h.b16 %v2208
    %v3184 = vunpack.c.l.b16 %v2209
    %v3185 = vunpack.c.h.b16 %v2209
    %v3186 = vunpack.c.l.b16 %v2210
    %v3187 = vunpack.c.h.b16 %v2210
    %v3188 = vunpack.c.l.b16 %v2211
    %v3189 = vunpack.c.h.b16 %v2211
    %v3190 = vunpack.c.l.b16 %v2212
    %v3191 = vunpack.c.h.b16 %v2212
    %v3192 = vunpack.c.l.b16 %v2213
    %v3193 = vunpack.c.h.b16 %v2213
    %v3194 = vunpack.c.l.b16 %v2214
    %v3195 = vunpack.c.h.b16 %v2214
    %v3196 = vunpack.c.l.b16 %v2215
    %v3197 = vunpack.c.h.b16 %v2215
    %v3198 = vunpack.c.l.b16 %v2216
    %v3199 = vunpack.c.h.b16 %v2216
    %v3200 = vunpack.c.l.b16 %v2217
    %v3201 = vunpack.c.h.b16 %v2217
    %v3202 = vunpack.c.l.b16 %v2218
    %v3203 = vunpack.c.h.b16 %v2218
    %v3204 = vunpack.c.l.b16 %v2219
    %v3205 = vunpack.c.h.b16 %v2219
    %v3206 = vunpack.c.l.b16 %v2220
    %v3207 = vunpack.c.h.b16 %v2220
    %v3208 = vunpack.c.l.b16 %v2221
    %v3209 = vunpack.c.h.b16 %v2221
    %v3210 = vunpack.c.l.b16 %v2222
    %v3211 = vunpack.c.h.b16 %v2222
    %v3212 = vunpack.c.l.b16 %v2223
    %v3213 = vunpack.c.h.b16 %v2223
    %v3214 = vunpack.c.l.b16 %v2224
    %v3215 = vunpack.c.h.b16 %v2224
    %v3216 = vunpack.c.l.b16 %v2225
    %v3217 = vunpack.c.h.b16 %v2225
    %v3218 = vunpack.c.l.b16 %v2226
    %v3219 = vunpack.c.h.b16 %v2226
    %v3220 = vunpack.c.l.b16 %v2227
    %v3221 = vunpack.c.h.b16 %v2227
    %v3222 = vunpack.c.l.b16 %v2228
    %v3223 = vunpack.c.h.b16 %v2228
    %v3224 = vunpack.c.l.b16 %v2229
    %v3225 = vunpack.c.h.b16 %v2229
    %v3226 = vunpack.c.l.b16 %v2230
    %v3227 = vunpack.c.h.b16 %v2230
    %v3228 = vunpack.c.l.b16 %v2231
    %v3229 = vunpack.c.h.b16 %v2231
    %v3230 = vunpack.c.l.b16 %v2232
    %v3231 = vunpack.c.h.b16 %v2232
    %v3232 = vunpack.c.l.b16 %v2233
    %v3233 = vunpack.c.h.b16 %v2233
    %v3234 = vunpack.c.l.b16 %v2234
    %v3235 = vunpack.c.h.b16 %v2234
    %v3236 = vunpack.c.l.b16 %v2235
    %v3237 = vunpack.c.h.b16 %v2235
    %v3238 = vunpack.c.l.b16 %v2236
    %v3239 = vunpack.c.h.b16 %v2236
    %v3240 = vunpack.c.l.b16 %v2237
    %v3241 = vunpack.c.h.b16 %v2237
    %v3242 = vunpack.c.l.b16 %v2238
    %v3243 = vunpack.c.h.b16 %v2238
    %v3244 = vunpack.c.l.b16 %v2239
    %v3245 = vunpack.c.h.b16 %v2239
    %v3246 = vunpack.c.l.b16 %v2240
    %v3247 = vunpack.c.h.b16 %v2240
    %v3248 = vunpack.c.l.b16 %v2241
    %v3249 = vunpack.c.h.b16 %v2241
    %v3250 = vunpack.c.l.b16 %v2242
    %v3251 = vunpack.c.h.b16 %v2242
    %v3252 = vunpack.c.l.b16 %v2243
    %v3253 = vunpack.c.h.b16 %v2243
    %v3254 = vunpack.c.l.b16 %v2244
    %v3255 = vunpack.c.h.b16 %v2244
    %v3256 = vunpack.c.l.b16 %v2245
    %v3257 = vunpack.c.h.b16 %v2245
    %v3258 = vunpack.c.l.b16 %v2246
    %v3259 = vunpack.c.h.b16 %v2246
    %v3260 = vunpack.c.l.b16 %v2247
    %v3261 = vunpack.c.h.b16 %v2247
    %v3262 = vunpack.c.l.b16 %v2248
    %v3263 = vunpack.c.h.b16 %v2248
    %v3264 = vunpack.c.l.b16 %v2249
    %v3265 = vunpack.c.h.b16 %v2249
    %v3266 = vunpack.c.l.b16 %v2250
    %v3267 = vunpack.c.h.b16 %v2250
    %v3268 = vunpack.c.l.b16 %v2251
    %v3269 = vunpack.c.h.b16 %v2251
    %v3270 = vunpack.c.l.b16 %v2252
    %v3271 = vunpack.c.h.b16 %v2252
    %v3272 = vunpack.c.l.b16 %v2253
    %v3273 = vunpack.c.h.b16 %v2253
    %v3274 = vunpack.c.l.b16 %v2254
    %v3275 = vunpack.c.h.b16 %v2254
    %v3276 = vunpack.c.l.b16 %v2255
    %v3277 = vunpack.c.h.b16 %v2255
    %v3278 = vunpack.c.l.b16 %v2256
    %v3279 = vunpack.c.h.b16 %v2256
    %v3280 = vunpack.c.l.b16 %v2257
    %v3281 = vunpack.c.h.b16 %v2257
    %v3282 = vunpack.c.l.b16 %v2258
    %v3283 = vunpack.c.h.b16 %v2258
    %v3284 = vunpack.c.l.b16 %v2259
    %v3285 = vunpack.c.h.b16 %v2259
    %v3286 = vunpack.c.l.b16 %v2260
    %v3287 = vunpack.c.h.b16 %v2260
    %v3288 = vunpack.c.l.b16 %v2261
    %v3289 = vunpack.c.h.b16 %v2261
    %v3290 = vunpack.c.l.b16 %v2262
    %v3291 = vunpack.c.h.b16 %v2262
    %v3292 = vunpack.c.l.b16 %v2263
    %v3293 = vunpack.c.h.b16 %v2263
    %v3294 = vunpack.c.l.b16 %v2264
    %v3295 = vunpack.c.h.b16 %v2264
    %v3296 = vunpack.c.l.b16 %v2265
    %v3297 = vunpack.c.h.b16 %v2265
    %v3298 = vunpack.c.l.b16 %v2266
    %v3299 = vunpack.c.h.b16 %v2266
    %v3300 = vunpack.c.l.b16 %v2267
    %v3301 = vunpack.c.h.b16 %v2267
    %v3302 = vunpack.c.l.b16 %v2268
    %v3303 = vunpack.c.h.b16 %v2268
    %v3304 = vunpack.c.l.b16 %v2269
    %v3305 = vunpack.c.h.b16 %v2269
    %v3306 = vunpack.c.l.b16 %v2270
    %v3307 = vunpack.c.h.b16 %v2270
    %v3308 = vunpack.c.l.b16 %v2271
    %v3309 = vunpack.c.h.b16 %v2271
    %v3310 = vunpack.c.l.b16 %v2272
    %v3311 = vunpack.c.h.b16 %v2272
    %v3312 = vunpack.c.l.b16 %v2273
    %v3313 = vunpack.c.h.b16 %v2273
    %v3314 = vunpack.c.l.b16 %v2274
    %v3315 = vunpack.c.h.b16 %v2274
    %v3316 = vunpack.c.l.b16 %v2275
    %v3317 = vunpack.c.h.b16 %v2275
    %v3318 = vunpack.c.l.b16 %v2276
    %v3319 = vunpack.c.h.b16 %v2276
    %v3320 = vunpack.c.l.b16 %v2277
    %v3321 = vunpack.c.h.b16 %v2277
    %v3322 = vpack.c.b16 %v2818, %v2810
    %v3323 = vpack.c.b16 %v2819, %v2811
    %v3324 = vpack.c.b16 %v2820, %v2812
    %v3325 = vpack.c.b16 %v2821, %v2813
    %v3326 = vpack.c.b16 %v2822, %v2814
    %v3327 = vpack.c.b16 %v2823, %v2815
    %v3328 = vpack.c.b16 %v2824, %v2816
    %v3329 = vpack.c.b16 %v2825, %v2817
    %v3330 = vpack.c.b16 %v2834, %v2826
    %v3331 = vpack.c.b16 %v2835, %v2827
    %v3332 = vpack.c.b16 %v2836, %v2828
    %v3333 = vpack.c.b16 %v2837, %v2829
    %v3334 = vpack.c.b16 %v2838, %v2830
    %v3335 = vpack.c.b16 %v2839, %v2831
    %v3336 = vpack.c.b16 %v2840, %v2832
    %v3337 = vpack.c.b16 %v2841, %v2833
    %v3338 = vpack.c.b16 %v2850, %v2842
    %v3339 = vpack.c.b16 %v2851, %v2843
    %v3340 = vpack.c.b16 %v2852, %v2844
    %v3341 = vpack.c.b16 %v2853, %v2845
    %v3342 = vpack.c.b16 %v2854, %v2846
    %v3343 = vpack.c.b16 %v2855, %v2847
    %v3344 = vpack.c.b16 %v2856, %v2848
    %v3345 = vpack.c.b16 %v2857, %v2849
    %v3346 = vpack.c.b16 %v2866, %v2858
    %v3347 = vpack.c.b16 %v2867, %v2859
    %v3348 = vpack.c.b16 %v2868, %v2860
    %v3349 = vpack.c.b16 %v2869, %v2861
    %v3350 = vpack.c.b16 %v2870, %v2862
    %v3351 = vpack.c.b16 %v2871, %v2863
    %v3352 = vpack.c.b16 %v2872, %v2864
    %v3353 = vpack.c.b16 %v2873, %v2865
    %v3354 = vpack.c.b16 %v2882, %v2874
    %v3355 = vpack.c.b16 %v2883, %v2875
    %v3356 = vpack.c.b16 %v2884, %v2876
    %v3357 = vpack.c.b16 %v2885, %v2877
    %v3358 = vpack.c.b16 %v2886, %v2878
    %v3359 = vpack.c.b16 %v2887, %v2879
    %v3360 = vpack.c.b16 %v2888, %v2880
    %v3361 = vpack.c.b16 %v2889, %v2881
    %v3362 = vpack.c.b16 %v2898, %v2890
    %v3363 = vpack.c.b16 %v2899, %v2891
    %v3364 = vpack.c.b16 %v2900, %v2892
    %v3365 = vpack.c.b16 %v2901, %v2893
    %v3366 = vpack.c.b16 %v2902, %v2894
    %v3367 = vpack.c.b16 %v2903, %v2895
    %v3368 = vpack.c.b16 %v2904, %v2896
    %v3369 = vpack.c.b16 %v2905, %v2897
    %v3370 = vpack.c.b16 %v2914, %v2906
    %v3371 = vpack.c.b16 %v2915, %v2907
    %v3372 = vpack.c.b16 %v2916, %v2908
    %v3373 = vpack.c.b16 %v2917, %v2909
    %v3374 = vpack.c.b16 %v2918, %v2910
    %v3375 = vpack.c.b16 %v2919, %v2911
    %v3376 = vpack.c.b16 %v2920, %v2912
    %v3377 = vpack.c.b16 %v2921, %v2913
    %v3378 = vpack.c.b16 %v2930, %v2922
    %v3379 = vpack.c.b16 %v2931, %v2923
    %v3380 = vpack.c.b16 %v2932, %v2924
    %v3381 = vpack.c.b16 %v2933, %v2925
    %v3382 = vpack.c.b16 %v2934, %v2926
    %v3383 = vpack.c.b16 %v2935, %v2927
    %v3384 = vpack.c.b16 %v2936, %v2928
    %v3385 = vpack.c.b16 %v2937, %v2929
    %v3386 = vpack.c.b16 %v2946, %v2938
    %v3387 = vpack.c.b16 %v2947, %v2939
    %v3388 = vpack.c.b16 %v2948, %v2940
    %v3389 = vpack.c.b16 %v2949, %v2941
    %v3390 = vpack.c.b16 %v2950, %v2942
    %v3391 = vpack.c.b16 %v2951, %v2943
    %v3392 = vpack.c.b16 %v2952, %v2944
    %v3393 = vpack.c.b16 %v2953, %v2945
    %v3394 = vpack.c.b16 %v2962, %v2954
    %v3395 = vpack.c.b16 %v2963, %v2955
    %v3396 = vpack.c.b16 %v2964, %v2956
    %v3397 = vpack.c.b16 %v2965, %v2957
    %v3398 = vpack.c.b16 %v2966, %v2958
    %v3399 = vpack.c.b16 %v2967, %v2959
    %v3400 = vpack.c.b16 %v2968, %v2960
    %v3401 = vpack.c.b16 %v2969, %v2961
    %v3402 = vpack.c.b16 %v2978, %v2970
    %v3403 = vpack.c.b16 %v2979, %v2971
    %v3404 = vpack.c.b16 %v2980, %v2972
    %v3405 = vpack.c.b16 %v2981, %v2973
    %v3406 = vpack.c.b16 %v2982, %v2974
    %v3407 = vpack.c.b16 %v2983, %v2975
    %v3408 = vpack.c.b16 %v2984, %v2976
    %v3409 = vpack.c.b16 %v2985, %v2977
    %v3410 = vpack.c.b16 %v2994, %v2986
    %v3411 = vpack.c.b16 %v2995, %v2987
    %v3412 = vpack.c.b16 %v2996, %v2988
    %v3413 = vpack.c.b16 %v2997, %v2989
    %v3414 = vpack.c.b16 %v2998, %v2990
    %v3415 = vpack.c.b16 %v2999, %v2991
    %v3416 = vpack.c.b16 %v3000, %v2992
    %v3417 = vpack.c.b16 %v3001, %v2993
    %v3418 = vpack.c.b16 %v3010, %v3002
    %v3419 = vpack.c.b16 %v3011, %v3003
    %v3420 = vpack.c.b16 %v3012, %v3004
    %v3421 = vpack.c.b16 %v3013, %v3005
    %v3422 = vpack.c.b16 %v3014, %v3006
    %v3423 = vpack.c.b16 %v3015, %v3007
    %v3424 = vpack.c.b16 %v3016, %v3008
    %v3425 = vpack.c.b16 %v3017, %v3009
    %v3426 = vpack.c.b16 %v3026, %v3018
    %v3427 = vpack.c.b16 %v3027, %v3019
    %v3428 = vpack.c.b16 %v3028, %v3020
    %v3429 = vpack.c.b16 %v3029, %v3021
    %v3430 = vpack.c.b16 %v3030, %v3022
    %v3431 = vpack.c.b16 %v3031, %v3023
    %v3432 = vpack.c.b16 %v3032, %v3024
    %v3433 = vpack.c.b16 %v3033, %v3025
    %v3434 = vpack.c.b16 %v3042, %v3034
    %v3435 = vpack.c.b16 %v3043, %v3035
    %v3436 = vpack.c.b16 %v3044, %v3036
    %v3437 = vpack.c.b16 %v3045, %v3037
    %v3438 = vpack.c.b16 %v3046, %v3038
    %v3439 = vpack.c.b16 %v3047, %v3039
    %v3440 = vpack.c.b16 %v3048, %v3040
    %v3441 = vpack.c.b16 %v3049, %v3041
    %v3442 = vpack.c.b16 %v3058, %v3050
    %v3443 = vpack.c.b16 %v3059, %v3051
    %v3444 = vpack.c.b16 %v3060, %v3052
    %v3445 = vpack.c.b16 %v3061, %v3053
    %v3446 = vpack.c.b16 %v3062, %v3054
    %v3447 = vpack.c.b16 %v3063, %v3055
    %v3448 = vpack.c.b16 %v3064, %v3056
    %v3449 = vpack.c.b16 %v3065, %v3057
    %v3450 = vpack.c.b16 %v3074, %v3066
    %v3451 = vpack.c.b16 %v3075, %v3067
    %v3452 = vpack.c.b16 %v3076, %v3068
    %v3453 = vpack.c.b16 %v3077, %v3069
    %v3454 = vpack.c.b16 %v3078, %v3070
    %v3455 = vpack.c.b16 %v3079, %v3071
    %v3456 = vpack.c.b16 %v3080, %v3072
    %v3457 = vpack.c.b16 %v3081, %v3073
    %v3458 = vpack.c.b16 %v3090, %v3082
    %v3459 = vpack.c.b16 %v3091, %v3083
    %v3460 = vpack.c.b16 %v3092, %v3084
    %v3461 = vpack.c.b16 %v3093, %v3085
    %v3462 = vpack.c.b16 %v3094, %v3086
    %v3463 = vpack.c.b16 %v3095, %v3087
    %v3464 = vpack.c.b16 %v3096, %v3088
    %v3465 = vpack.c.b16 %v3097, %v3089
    %v3466 = vpack.c.b16 %v3106, %v3098
    %v3467 = vpack.c.b16 %v3107, %v3099
    %v3468 = vpack.c.b16 %v3108, %v3100
    %v3469 = vpack.c.b16 %v3109, %v3101
    %v3470 = vpack.c.b16 %v3110, %v3102
    %v3471 = vpack.c.b16 %v3111, %v3103
    %v3472 = vpack.c.b16 %v3112, %v3104
    %v3473 = vpack.c.b16 %v3113, %v3105
    %v3474 = vpack.c.b16 %v3122, %v3114
    %v3475 = vpack.c.b16 %v3123, %v3115
    %v3476 = vpack.c.b16 %v3124, %v3116
    %v3477 = vpack.c.b16 %v3125, %v3117
    %v3478 = vpack.c.b16 %v3126, %v3118
    %v3479 = vpack.c.b16 %v3127, %v3119
    %v3480 = vpack.c.b16 %v3128, %v3120
    %v3481 = vpack.c.b16 %v3129, %v3121
    %v3482 = vpack.c.b16 %v3138, %v3130
    %v3483 = vpack.c.b16 %v3139, %v3131
    %v3484 = vpack.c.b16 %v3140, %v3132
    %v3485 = vpack.c.b16 %v3141, %v3133
    %v3486 = vpack.c.b16 %v3142, %v3134
    %v3487 = vpack.c.b16 %v3143, %v3135
    %v3488 = vpack.c.b16 %v3144, %v3136
    %v3489 = vpack.c.b16 %v3145, %v3137
    %v3490 = vpack.c.b16 %v3154, %v3146
    %v3491 = vpack.c.b16 %v3155, %v3147
    %v3492 = vpack.c.b16 %v3156, %v3148
    %v3493 = vpack.c.b16 %v3157, %v3149
    %v3494 = vpack.c.b16 %v3158, %v3150
    %v3495 = vpack.c.b16 %v3159, %v3151
    %v3496 = vpack.c.b16 %v3160, %v3152
    %v3497 = vpack.c.b16 %v3161, %v3153
    %v3498 = vpack.c.b16 %v3170, %v3162
    %v3499 = vpack.c.b16 %v3171, %v3163
    %v3500 = vpack.c.b16 %v3172, %v3164
    %v3501 = vpack.c.b16 %v3173, %v3165
    %v3502 = vpack.c.b16 %v3174, %v3166
    %v3503 = vpack.c.b16 %v3175, %v3167
    %v3504 = vpack.c.b16 %v3176, %v3168
    %v3505 = vpack.c.b16 %v3177, %v3169
    %v3506 = vpack.c.b16 %v3186, %v3178
    %v3507 = vpack.c.b16 %v3187, %v3179
    %v3508 = vpack.c.b16 %v3188, %v3180
    %v3509 = vpack.c.b16 %v3189, %v3181
    %v3510 = vpack.c.b16 %v3190, %v3182
    %v3511 = vpack.c.b16 %v3191, %v3183
    %v3512 = vpack.c.b16 %v3192, %v3184
    %v3513 = vpack.c.b16 %v3193, %v3185
    %v3514 = vpack.c.b16 %v3202, %v3194
    %v3515 = vpack.c.b16 %v3203, %v3195
    %v3516 = vpack.c.b16 %v3204, %v3196
    %v3517 = vpack.c.b16 %v3205, %v3197
    %v3518 = vpack.c.b16 %v3206, %v3198
    %v3519 = vpack.c.b16 %v3207, %v3199
    %v3520 = vpack.c.b16 %v3208, %v3200
    %v3521 = vpack.c.b16 %v3209, %v3201
    %v3522 = vpack.c.b16 %v3218, %v3210
    %v3523 = vpack.c.b16 %v3219, %v3211
    %v3524 = vpack.c.b16 %v3220, %v3212
    %v3525 = vpack.c.b16 %v3221, %v3213
    %v3526 = vpack.c.b16 %v3222, %v3214
    %v3527 = vpack.c.b16 %v3223, %v3215
    %v3528 = vpack.c.b16 %v3224, %v3216
    %v3529 = vpack.c.b16 %v3225, %v3217
    %v3530 = vpack.c.b16 %v3234, %v3226
    %v3531 = vpack.c.b16 %v3235, %v3227
    %v3532 = vpack.c.b16 %v3236, %v3228
    %v3533 = vpack.c.b16 %v3237, %v3229
    %v3534 = vpack.c.b16 %v3238, %v3230
    %v3535 = vpack.c.b16 %v3239, %v3231
    %v3536 = vpack.c.b16 %v3240, %v3232
    %v3537 = vpack.c.b16 %v3241, %v3233
    %v3538 = vpack.c.b16 %v3250, %v3242
    %v3539 = vpack.c.b16 %v3251, %v3243
    %v3540 = vpack.c.b16 %v3252, %v3244
    %v3541 = vpack.c.b16 %v3253, %v3245
    %v3542 = vpack.c.b16 %v3254, %v3246
    %v3543 = vpack.c.b16 %v3255, %v3247
    %v3544 = vpack.c.b16 %v3256, %v3248
    %v3545 = vpack.c.b16 %v3257, %v3249
    %v3546 = vpack.c.b16 %v3266, %v3258
    %v3547 = vpack.c.b16 %v3267, %v3259
    %v3548 = vpack.c.b16 %v3268, %v3260
    %v3549 = vpack.c.b16 %v3269, %v3261
    %v3550 = vpack.c.b16 %v3270, %v3262
    %v3551 = vpack.c.b16 %v3271, %v3263
    %v3552 = vpack.c.b16 %v3272, %v3264
    %v3553 = vpack.c.b16 %v3273, %v3265
    %v3554 = vpack.c.b16 %v3282, %v3274
    %v3555 = vpack.c.b16 %v3283, %v3275
    %v3556 = vpack.c.b16 %v3284, %v3276
    %v3557 = vpack.c.b16 %v3285, %v3277
    %v3558 = vpack.c.b16 %v3286, %v3278
    %v3559 = vpack.c.b16 %v3287, %v3279
    %v3560 = vpack.c.b16 %v3288, %v3280
    %v3561 = vpack.c.b16 %v3289, %v3281
    %v3562 = vpack.c.b16 %v3298, %v3290
    %v3563 = vpack.c.b16 %v3299, %v3291
    %v3564 = vpack.c.b16 %v3300, %v3292
    %v3565 = vpack.c.b16 %v3301, %v3293
    %v3566 = vpack.c.b16 %v3302, %v3294
    %v3567 = vpack.c.b16 %v3303, %v3295
    %v3568 = vpack.c.b16 %v3304, %v3296
    %v3569 = vpack.c.b16 %v3305, %v3297
    %v3570 = vpack.c.b16 %v3314, %v3306
    %v3571 = vpack.c.b16 %v3315, %v3307
    %v3572 = vpack.c.b16 %v3316, %v3308
    %v3573 = vpack.c.b16 %v3317, %v3309
    %v3574 = vpack.c.b16 %v3318, %v3310
    %v3575 = vpack.c.b16 %v3319, %v3311
    %v3576 = vpack.c.b16 %v3320, %v3312
    %v3577 = vpack.c.b16 %v3321, %v3313
    %3834 = vmatprep.subr.bf16.mxu0 %v3379
    %3835 = vmatpush1.bf16.msra.mxu0 %v3378
    %3836 = vmatprep.subr.bf16.mxu0 %v3371
    %3837 = vmatpush1.bf16.msra.mxu0 %v3370
    %3838 = vmatprep.subr.bf16.mxu0 %v3363
    %3839 = vmatpush1.bf16.msra.mxu0 %v3362
    %3840 = vmatprep.subr.bf16.mxu0 %v3355
    %3841 = vmatpush1.bf16.msra.mxu0 %v3354
    %3842 = vmatprep.subr.bf16.mxu0 %v3347
    %3843 = vmatpush1.bf16.msra.mxu0 %v3346
    %3844 = vmatprep.subr.bf16.mxu0 %v3339
    %3845 = vmatpush1.bf16.msra.mxu0 %v3338
    %3846 = vmatprep.subr.bf16.mxu0 %v3331
    %3847 = vmatpush1.bf16.msra.mxu0 %v3330
    %3848 = vmatprep.subr.bf16.mxu0 %v3323
    %3849 = vmatpush1.bf16.msra.mxu0 %v3322
    %3850 = vmatprep.subr.bf16.mxu0 %v3443
    %3851 = vmatpush2.bf16.msra.mxu0 %v3442
    %3852 = vmatprep.subr.bf16.mxu0 %v3435
    %3853 = vmatpush2.bf16.msra.mxu0 %v3434
    %3854 = vmatprep.subr.bf16.mxu0 %v3427
    %3855 = vmatpush2.bf16.msra.mxu0 %v3426
    %3856 = vmatprep.subr.bf16.mxu0 %v3419
    %3857 = vmatpush2.bf16.msra.mxu0 %v3418
    %3858 = vmatprep.subr.bf16.mxu0 %v3411
    %3859 = vmatpush2.bf16.msra.mxu0 %v3410
    %3860 = vmatprep.subr.bf16.mxu0 %v3403
    %3861 = vmatpush2.bf16.msra.mxu0 %v3402
    %3862 = vmatprep.subr.bf16.mxu0 %v3395
    %3863 = vmatpush2.bf16.msra.mxu0 %v3394
    %3864 = vmatprep.subr.bf16.mxu0 %v3387
    %3865 = vmatpush2.bf16.msra.mxu0 %v3386
    %3866 = vmatprep.mubr.bf16.mxu0 %v2547
    %3867 = vmatmul.mubr.bf16.gmra.mxu0 %v2546
    %v3868 = vpop.f32.mrf.mxu0
    %v3869 = vadd.f32 0.0, %v3868
    %v3870 = vpop.f32.mrf.mxu0
    %v3871 = vadd.f32 0.0, %v3870
    %v3872 = vpop.f32.mrf.mxu0
    %v3873 = vadd.f32 0.0, %v3872
    %v3874 = vpop.f32.mrf.mxu0
    %v3875 = vadd.f32 0.0, %v3874
    %3876 = vdwg.mxu0
    %3877 = vmatprep.subr.bf16.mxu0 %v3507
    %3878 = vmatpush1.bf16.msra.mxu0 %v3506
    %3879 = vmatprep.subr.bf16.mxu0 %v3499
    %3880 = vmatpush1.bf16.msra.mxu0 %v3498
    %3881 = vmatprep.subr.bf16.mxu0 %v3491
    %3882 = vmatpush1.bf16.msra.mxu0 %v3490
    %3883 = vmatprep.subr.bf16.mxu0 %v3483
    %3884 = vmatpush1.bf16.msra.mxu0 %v3482
    %3885 = vmatprep.subr.bf16.mxu0 %v3475
    %3886 = vmatpush1.bf16.msra.mxu0 %v3474
    %3887 = vmatprep.subr.bf16.mxu0 %v3467
    %3888 = vmatpush1.bf16.msra.mxu0 %v3466
    %3889 = vmatprep.subr.bf16.mxu0 %v3459
    %3890 = vmatpush1.bf16.msra.mxu0 %v3458
    %3891 = vmatprep.subr.bf16.mxu0 %v3451
    %3892 = vmatpush1.bf16.msra.mxu0 %v3450
    %3893 = vmatprep.subr.bf16.mxu0 %v3571
    %3894 = vmatpush2.bf16.msra.mxu0 %v3570
    %3895 = vmatprep.subr.bf16.mxu0 %v3563
    %3896 = vmatpush2.bf16.msra.mxu0 %v3562
    %3897 = vmatprep.subr.bf16.mxu0 %v3555
    %3898 = vmatpush2.bf16.msra.mxu0 %v3554
    %3899 = vmatprep.subr.bf16.mxu0 %v3547
    %3900 = vmatpush2.bf16.msra.mxu0 %v3546
    %3901 = vmatprep.subr.bf16.mxu0 %v3539
    %3902 = vmatpush2.bf16.msra.mxu0 %v3538
    %3903 = vmatprep.subr.bf16.mxu0 %v3531
    %3904 = vmatpush2.bf16.msra.mxu0 %v3530
    %3905 = vmatprep.subr.bf16.mxu0 %v3523
    %3906 = vmatpush2.bf16.msra.mxu0 %v3522
    %3907 = vmatprep.subr.bf16.mxu0 %v3515
    %3908 = vmatpush2.bf16.msra.mxu0 %v3514
    %3909 = vmatprep.mubr.bf16.mxu0 %v2549
    %3910 = vmatmul.mubr.bf16.gmra.mxu0 %v2548
    %v3911 = vpop.f32.mrf.mxu0
    %v3912 = vadd.f32 %v3869, %v3911
    %v3913 = vpop.f32.mrf.mxu0
    %v3914 = vadd.f32 %v3871, %v3913
    %v3915 = vpop.f32.mrf.mxu0
    %v3916 = vadd.f32 %v3873, %v3915
    %v3917 = vpop.f32.mrf.mxu0
    %v3918 = vadd.f32 %v3875, %v3917
    %3919 = vdwg.mxu0
    %3920 = vmatprep.subr.bf16.mxu0 %v3381
    %3921 = vmatpush1.bf16.msra.mxu0 %v3380
    %3922 = vmatprep.subr.bf16.mxu0 %v3373
    %3923 = vmatpush1.bf16.msra.mxu0 %v3372
    %3924 = vmatprep.subr.bf16.mxu0 %v3365
    %3925 = vmatpush1.bf16.msra.mxu0 %v3364
    %3926 = vmatprep.subr.bf16.mxu0 %v3357
    %3927 = vmatpush1.bf16.msra.mxu0 %v3356
    %3928 = vmatprep.subr.bf16.mxu0 %v3349
    %3929 = vmatpush1.bf16.msra.mxu0 %v3348
    %3930 = vmatprep.subr.bf16.mxu0 %v3341
    %3931 = vmatpush1.bf16.msra.mxu0 %v3340
    %3932 = vmatprep.subr.bf16.mxu0 %v3333
    %3933 = vmatpush1.bf16.msra.mxu0 %v3332
    %3934 = vmatprep.subr.bf16.mxu0 %v3325
    %3935 = vmatpush1.bf16.msra.mxu0 %v3324
    %3936 = vmatprep.subr.bf16.mxu0 %v3445
    %3937 = vmatpush2.bf16.msra.mxu0 %v3444
    %3938 = vmatprep.subr.bf16.mxu0 %v3437
    %3939 = vmatpush2.bf16.msra.mxu0 %v3436
    %3940 = vmatprep.subr.bf16.mxu0 %v3429
    %3941 = vmatpush2.bf16.msra.mxu0 %v3428
    %3942 = vmatprep.subr.bf16.mxu0 %v3421
    %3943 = vmatpush2.bf16.msra.mxu0 %v3420
    %3944 = vmatprep.subr.bf16.mxu0 %v3413
    %3945 = vmatpush2.bf16.msra.mxu0 %v3412
    %3946 = vmatprep.subr.bf16.mxu0 %v3405
    %3947 = vmatpush2.bf16.msra.mxu0 %v3404
    %3948 = vmatprep.subr.bf16.mxu0 %v3397
    %3949 = vmatpush2.bf16.msra.mxu0 %v3396
    %3950 = vmatprep.subr.bf16.mxu0 %v3389
    %3951 = vmatpush2.bf16.msra.mxu0 %v3388
    %3952 = vmatprep.mubr.bf16.mxu0 %v2547
    %3953 = vmatmul.mubr.bf16.gmra.mxu0 %v2546
    %v3954 = vpop.f32.mrf.mxu0
    %v3955 = vadd.f32 0.0, %v3954
    %v3956 = vpop.f32.mrf.mxu0
    %v3957 = vadd.f32 0.0, %v3956
    %v3958 = vpop.f32.mrf.mxu0
    %v3959 = vadd.f32 0.0, %v3958
    %v3960 = vpop.f32.mrf.mxu0
    %v3961 = vadd.f32 0.0, %v3960
    %3962 = vdwg.mxu0
    %3963 = vmatprep.subr.bf16.mxu0 %v3509
    %3964 = vmatpush1.bf16.msra.mxu0 %v3508
    %3965 = vmatprep.subr.bf16.mxu0 %v3501
    %3966 = vmatpush1.bf16.msra.mxu0 %v3500
    %3967 = vmatprep.subr.bf16.mxu0 %v3493
    %3968 = vmatpush1.bf16.msra.mxu0 %v3492
    %3969 = vmatprep.subr.bf16.mxu0 %v3485
    %3970 = vmatpush1.bf16.msra.mxu0 %v3484
    %3971 = vmatprep.subr.bf16.mxu0 %v3477
    %3972 = vmatpush1.bf16.msra.mxu0 %v3476
    %3973 = vmatprep.subr.bf16.mxu0 %v3469
    %3974 = vmatpush1.bf16.msra.mxu0 %v3468
    %3975 = vmatprep.subr.bf16.mxu0 %v3461
    %3976 = vmatpush1.bf16.msra.mxu0 %v3460
    %3977 = vmatprep.subr.bf16.mxu0 %v3453
    %3978 = vmatpush1.bf16.msra.mxu0 %v3452
    %3979 = vmatprep.subr.bf16.mxu0 %v3573
    %3980 = vmatpush2.bf16.msra.mxu0 %v3572
    %3981 = vmatprep.subr.bf16.mxu0 %v3565
    %3982 = vmatpush2.bf16.msra.mxu0 %v3564
    %3983 = vmatprep.subr.bf16.mxu0 %v3557
    %3984 = vmatpush2.bf16.msra.mxu0 %v3556
    %3985 = vmatprep.subr.bf16.mxu0 %v3549
    %3986 = vmatpush2.bf16.msra.mxu0 %v3548
    %3987 = vmatprep.subr.bf16.mxu0 %v3541
    %3988 = vmatpush2.bf16.msra.mxu0 %v3540
    %3989 = vmatprep.subr.bf16.mxu0 %v3533
    %3990 = vmatpush2.bf16.msra.mxu0 %v3532
    %3991 = vmatprep.subr.bf16.mxu0 %v3525
    %3992 = vmatpush2.bf16.msra.mxu0 %v3524
    %3993 = vmatprep.subr.bf16.mxu0 %v3517
    %3994 = vmatpush2.bf16.msra.mxu0 %v3516
    %3995 = vmatprep.mubr.bf16.mxu0 %v2549
    %3996 = vmatmul.mubr.bf16.gmra.mxu0 %v2548
    %v3997 = vpop.f32.mrf.mxu0
    %v3998 = vadd.f32 %v3955, %v3997
    %v3999 = vpop.f32.mrf.mxu0
    %v4000 = vadd.f32 %v3957, %v3999
    %v4001 = vpop.f32.mrf.mxu0
    %v4002 = vadd.f32 %v3959, %v4001
    %v4003 = vpop.f32.mrf.mxu0
    %v4004 = vadd.f32 %v3961, %v4003
    %4005 = vdwg.mxu0
    %4006 = vmatprep.subr.bf16.mxu0 %v3383
    %4007 = vmatpush1.bf16.msra.mxu0 %v3382
    %4008 = vmatprep.subr.bf16.mxu0 %v3375
    %4009 = vmatpush1.bf16.msra.mxu0 %v3374
    %4010 = vmatprep.subr.bf16.mxu0 %v3367
    %4011 = vmatpush1.bf16.msra.mxu0 %v3366
    %4012 = vmatprep.subr.bf16.mxu0 %v3359
    %4013 = vmatpush1.bf16.msra.mxu0 %v3358
    %4014 = vmatprep.subr.bf16.mxu0 %v3351
    %4015 = vmatpush1.bf16.msra.mxu0 %v3350
    %4016 = vmatprep.subr.bf16.mxu0 %v3343
    %4017 = vmatpush1.bf16.msra.mxu0 %v3342
    %4018 = vmatprep.subr.bf16.mxu0 %v3335
    %4019 = vmatpush1.bf16.msra.mxu0 %v3334
    %4020 = vmatprep.subr.bf16.mxu0 %v3327
    %4021 = vmatpush1.bf16.msra.mxu0 %v3326
    %4022 = vmatprep.subr.bf16.mxu0 %v3447
    %4023 = vmatpush2.bf16.msra.mxu0 %v3446
    %4024 = vmatprep.subr.bf16.mxu0 %v3439
    %4025 = vmatpush2.bf16.msra.mxu0 %v3438
    %4026 = vmatprep.subr.bf16.mxu0 %v3431
    %4027 = vmatpush2.bf16.msra.mxu0 %v3430
    %4028 = vmatprep.subr.bf16.mxu0 %v3423
    %4029 = vmatpush2.bf16.msra.mxu0 %v3422
    %4030 = vmatprep.subr.bf16.mxu0 %v3415
    %4031 = vmatpush2.bf16.msra.mxu0 %v3414
    %4032 = vmatprep.subr.bf16.mxu0 %v3407
    %4033 = vmatpush2.bf16.msra.mxu0 %v3406
    %4034 = vmatprep.subr.bf16.mxu0 %v3399
    %4035 = vmatpush2.bf16.msra.mxu0 %v3398
    %4036 = vmatprep.subr.bf16.mxu0 %v3391
    %4037 = vmatpush2.bf16.msra.mxu0 %v3390
    %4038 = vmatprep.mubr.bf16.mxu0 %v2547
    %4039 = vmatmul.mubr.bf16.gmra.mxu0 %v2546
    %v4040 = vpop.f32.mrf.mxu0
    %v4041 = vadd.f32 0.0, %v4040
    %v4042 = vpop.f32.mrf.mxu0
    %v4043 = vadd.f32 0.0, %v4042
    %v4044 = vpop.f32.mrf.mxu0
    %v4045 = vadd.f32 0.0, %v4044
    %v4046 = vpop.f32.mrf.mxu0
    %v4047 = vadd.f32 0.0, %v4046
    %4048 = vdwg.mxu0
    %4049 = vmatprep.subr.bf16.mxu0 %v3511
    %4050 = vmatpush1.bf16.msra.mxu0 %v3510
    %4051 = vmatprep.subr.bf16.mxu0 %v3503
    %4052 = vmatpush1.bf16.msra.mxu0 %v3502
    %4053 = vmatprep.subr.bf16.mxu0 %v3495
    %4054 = vmatpush1.bf16.msra.mxu0 %v3494
    %4055 = vmatprep.subr.bf16.mxu0 %v3487
    %4056 = vmatpush1.bf16.msra.mxu0 %v3486
    %4057 = vmatprep.subr.bf16.mxu0 %v3479
    %4058 = vmatpush1.bf16.msra.mxu0 %v3478
    %4059 = vmatprep.subr.bf16.mxu0 %v3471
    %4060 = vmatpush1.bf16.msra.mxu0 %v3470
    %4061 = vmatprep.subr.bf16.mxu0 %v3463
    %4062 = vmatpush1.bf16.msra.mxu0 %v3462
    %4063 = vmatprep.subr.bf16.mxu0 %v3455
    %4064 = vmatpush1.bf16.msra.mxu0 %v3454
    %4065 = vmatprep.subr.bf16.mxu0 %v3575
    %4066 = vmatpush2.bf16.msra.mxu0 %v3574
    %4067 = vmatprep.subr.bf16.mxu0 %v3567
    %4068 = vmatpush2.bf16.msra.mxu0 %v3566
    %4069 = vmatprep.subr.bf16.mxu0 %v3559
    %4070 = vmatpush2.bf16.msra.mxu0 %v3558
    %4071 = vmatprep.subr.bf16.mxu0 %v3551
    %4072 = vmatpush2.bf16.msra.mxu0 %v3550
    %4073 = vmatprep.subr.bf16.mxu0 %v3543
    %4074 = vmatpush2.bf16.msra.mxu0 %v3542
    %4075 = vmatprep.subr.bf16.mxu0 %v3535
    %4076 = vmatpush2.bf16.msra.mxu0 %v3534
    %4077 = vmatprep.subr.bf16.mxu0 %v3527
    %4078 = vmatpush2.bf16.msra.mxu0 %v3526
    %4079 = vmatprep.subr.bf16.mxu0 %v3519
    %4080 = vmatpush2.bf16.msra.mxu0 %v3518
    %4081 = vmatprep.mubr.bf16.mxu0 %v2549
    %4082 = vmatmul.mubr.bf16.gmra.mxu0 %v2548
    %v4083 = vpop.f32.mrf.mxu0
    %v4084 = vadd.f32 %v4041, %v4083
    %v4085 = vpop.f32.mrf.mxu0
    %v4086 = vadd.f32 %v4043, %v4085
    %v4087 = vpop.f32.mrf.mxu0
    %v4088 = vadd.f32 %v4045, %v4087
    %v4089 = vpop.f32.mrf.mxu0
    %v4090 = vadd.f32 %v4047, %v4089
    %4091 = vdwg.mxu0
    %4092 = vmatprep.subr.bf16.mxu0 %v3385
    %4093 = vmatpush1.bf16.msra.mxu0 %v3384
    %4094 = vmatprep.subr.bf16.mxu0 %v3377
    %4095 = vmatpush1.bf16.msra.mxu0 %v3376
    %4096 = vmatprep.subr.bf16.mxu0 %v3369
    %4097 = vmatpush1.bf16.msra.mxu0 %v3368
    %4098 = vmatprep.subr.bf16.mxu0 %v3361
    %4099 = vmatpush1.bf16.msra.mxu0 %v3360
    %4100 = vmatprep.subr.bf16.mxu0 %v3353
    %4101 = vmatpush1.bf16.msra.mxu0 %v3352
    %4102 = vmatprep.subr.bf16.mxu0 %v3345
    %4103 = vmatpush1.bf16.msra.mxu0 %v3344
    %4104 = vmatprep.subr.bf16.mxu0 %v3337
    %4105 = vmatpush1.bf16.msra.mxu0 %v3336
    %4106 = vmatprep.subr.bf16.mxu0 %v3329
    %4107 = vmatpush1.bf16.msra.mxu0 %v3328
    %4108 = vmatprep.subr.bf16.mxu0 %v3449
    %4109 = vmatpush2.bf16.msra.mxu0 %v3448
    %4110 = vmatprep.subr.bf16.mxu0 %v3441
    %4111 = vmatpush2.bf16.msra.mxu0 %v3440
    %4112 = vmatprep.subr.bf16.mxu0 %v3433
    %4113 = vmatpush2.bf16.msra.mxu0 %v3432
    %4114 = vmatprep.subr.bf16.mxu0 %v3425
    %4115 = vmatpush2.bf16.msra.mxu0 %v3424
    %4116 = vmatprep.subr.bf16.mxu0 %v3417
    %4117 = vmatpush2.bf16.msra.mxu0 %v3416
    %4118 = vmatprep.subr.bf16.mxu0 %v3409
    %4119 = vmatpush2.bf16.msra.mxu0 %v3408
    %4120 = vmatprep.subr.bf16.mxu0 %v3401
    %4121 = vmatpush2.bf16.msra.mxu0 %v3400
    %4122 = vmatprep.subr.bf16.mxu0 %v3393
    %4123 = vmatpush2.bf16.msra.mxu0 %v3392
    %4124 = vmatprep.mubr.bf16.mxu0 %v2547
    %4125 = vmatmul.mubr.bf16.gmra.mxu0 %v2546
    %v4126 = vpop.f32.mrf.mxu0
    %v4127 = vadd.f32 0.0, %v4126
    %v4128 = vpop.f32.mrf.mxu0
    %v4129 = vadd.f32 0.0, %v4128
    %v4130 = vpop.f32.mrf.mxu0
    %v4131 = vadd.f32 0.0, %v4130
    %v4132 = vpop.f32.mrf.mxu0
    %v4133 = vadd.f32 0.0, %v4132
    %4134 = vdwg.mxu0
    %4135 = vmatprep.subr.bf16.mxu0 %v3513
    %4136 = vmatpush1.bf16.msra.mxu0 %v3512
    %4137 = vmatprep.subr.bf16.mxu0 %v3505
    %4138 = vmatpush1.bf16.msra.mxu0 %v3504
    %4139 = vmatprep.subr.bf16.mxu0 %v3497
    %4140 = vmatpush1.bf16.msra.mxu0 %v3496
    %4141 = vmatprep.subr.bf16.mxu0 %v3489
    %4142 = vmatpush1.bf16.msra.mxu0 %v3488
    %4143 = vmatprep.subr.bf16.mxu0 %v3481
    %4144 = vmatpush1.bf16.msra.mxu0 %v3480
    %4145 = vmatprep.subr.bf16.mxu0 %v3473
    %4146 = vmatpush1.bf16.msra.mxu0 %v3472
    %4147 = vmatprep.subr.bf16.mxu0 %v3465
    %4148 = vmatpush1.bf16.msra.mxu0 %v3464
    %4149 = vmatprep.subr.bf16.mxu0 %v3457
    %4150 = vmatpush1.bf16.msra.mxu0 %v3456
    %4151 = vmatprep.subr.bf16.mxu0 %v3577
    %4152 = vmatpush2.bf16.msra.mxu0 %v3576
    %4153 = vmatprep.subr.bf16.mxu0 %v3569
    %4154 = vmatpush2.bf16.msra.mxu0 %v3568
    %4155 = vmatprep.subr.bf16.mxu0 %v3561
    %4156 = vmatpush2.bf16.msra.mxu0 %v3560
    %4157 = vmatprep.subr.bf16.mxu0 %v3553
    %4158 = vmatpush2.bf16.msra.mxu0 %v3552
    %4159 = vmatprep.subr.bf16.mxu0 %v3545
    %4160 = vmatpush2.bf16.msra.mxu0 %v3544
    %4161 = vmatprep.subr.bf16.mxu0 %v3537
    %4162 = vmatpush2.bf16.msra.mxu0 %v3536
    %4163 = vmatprep.subr.bf16.mxu0 %v3529
    %4164 = vmatpush2.bf16.msra.mxu0 %v3528
    %4165 = vmatprep.subr.bf16.mxu0 %v3521
    %4166 = vmatpush2.bf16.msra.mxu0 %v3520
    %4167 = vmatprep.mubr.bf16.mxu0 %v2549
    %4168 = vmatmul.mubr.bf16.gmra.mxu0 %v2548
    %v4169 = vpop.f32.mrf.mxu0
    %v4170 = vadd.f32 %v4127, %v4169
    %v4171 = vpop.f32.mrf.mxu0
    %v4172 = vadd.f32 %v4129, %v4171
    %v4173 = vpop.f32.mrf.mxu0
    %v4174 = vadd.f32 %v4131, %v4173
    %v4175 = vpop.f32.mrf.mxu0
    %v4176 = vadd.f32 %v4133, %v4175
    %4177 = vdwg.mxu0
    %v4182 = vunpack.c.l.b16 %v1746
    %v4183 = vunpack.c.h.b16 %v1746
    %v4184 = vunpack.c.l.b16 %v1747
    %v4185 = vunpack.c.h.b16 %v1747
    %v4186 = vunpack.c.l.b16 %v1748
    %v4187 = vunpack.c.h.b16 %v1748
    %v4188 = vunpack.c.l.b16 %v1749
    %v4189 = vunpack.c.h.b16 %v1749
    %v4190 = vpack.c.b16 %v4186, %v4182
    %v4191 = vpack.c.b16 %v4187, %v4183
    %v4192 = vpack.c.b16 %v4188, %v4184
    %v4193 = vpack.c.b16 %v4189, %v4185
    %v4454 = vunpack.c.l.b16 %v1766
    %v4455 = vunpack.c.h.b16 %v1766
    %v4456 = vunpack.c.l.b16 %v1767
    %v4457 = vunpack.c.h.b16 %v1767
    %v4458 = vunpack.c.l.b16 %v1768
    %v4459 = vunpack.c.h.b16 %v1768
    %v4460 = vunpack.c.l.b16 %v1769
    %v4461 = vunpack.c.h.b16 %v1769
    %v4462 = vunpack.c.l.b16 %v1770
    %v4463 = vunpack.c.h.b16 %v1770
    %v4464 = vunpack.c.l.b16 %v1771
    %v4465 = vunpack.c.h.b16 %v1771
    %v4466 = vunpack.c.l.b16 %v1772
    %v4467 = vunpack.c.h.b16 %v1772
    %v4468 = vunpack.c.l.b16 %v1773
    %v4469 = vunpack.c.h.b16 %v1773
    %v4470 = vunpack.c.l.b16 %v1774
    %v4471 = vunpack.c.h.b16 %v1774
    %v4472 = vunpack.c.l.b16 %v1775
    %v4473 = vunpack.c.h.b16 %v1775
    %v4474 = vunpack.c.l.b16 %v1776
    %v4475 = vunpack.c.h.b16 %v1776
    %v4476 = vunpack.c.l.b16 %v1777
    %v4477 = vunpack.c.h.b16 %v1777
    %v4478 = vunpack.c.l.b16 %v1778
    %v4479 = vunpack.c.h.b16 %v1778
    %v4480 = vunpack.c.l.b16 %v1779
    %v4481 = vunpack.c.h.b16 %v1779
    %v4482 = vunpack.c.l.b16 %v1780
    %v4483 = vunpack.c.h.b16 %v1780
    %v4484 = vunpack.c.l.b16 %v1781
    %v4485 = vunpack.c.h.b16 %v1781
    %v4486 = vunpack.c.l.b16 %v1782
    %v4487 = vunpack.c.h.b16 %v1782
    %v4488 = vunpack.c.l.b16 %v1783
    %v4489 = vunpack.c.h.b16 %v1783
    %v4490 = vunpack.c.l.b16 %v1784
    %v4491 = vunpack.c.h.b16 %v1784
    %v4492 = vunpack.c.l.b16 %v1785
    %v4493 = vunpack.c.h.b16 %v1785
    %v4494 = vunpack.c.l.b16 %v1786
    %v4495 = vunpack.c.h.b16 %v1786
    %v4496 = vunpack.c.l.b16 %v1787
    %v4497 = vunpack.c.h.b16 %v1787
    %v4498 = vunpack.c.l.b16 %v1788
    %v4499 = vunpack.c.h.b16 %v1788
    %v4500 = vunpack.c.l.b16 %v1789
    %v4501 = vunpack.c.h.b16 %v1789
    %v4502 = vunpack.c.l.b16 %v1790
    %v4503 = vunpack.c.h.b16 %v1790
    %v4504 = vunpack.c.l.b16 %v1791
    %v4505 = vunpack.c.h.b16 %v1791
    %v4506 = vunpack.c.l.b16 %v1792
    %v4507 = vunpack.c.h.b16 %v1792
    %v4508 = vunpack.c.l.b16 %v1793
    %v4509 = vunpack.c.h.b16 %v1793
    %v4510 = vunpack.c.l.b16 %v1794
    %v4511 = vunpack.c.h.b16 %v1794
    %v4512 = vunpack.c.l.b16 %v1795
    %v4513 = vunpack.c.h.b16 %v1795
    %v4514 = vunpack.c.l.b16 %v1796
    %v4515 = vunpack.c.h.b16 %v1796
    %v4516 = vunpack.c.l.b16 %v1797
    %v4517 = vunpack.c.h.b16 %v1797
    %v4518 = vunpack.c.l.b16 %v1798
    %v4519 = vunpack.c.h.b16 %v1798
    %v4520 = vunpack.c.l.b16 %v1799
    %v4521 = vunpack.c.h.b16 %v1799
    %v4522 = vunpack.c.l.b16 %v1800
    %v4523 = vunpack.c.h.b16 %v1800
    %v4524 = vunpack.c.l.b16 %v1801
    %v4525 = vunpack.c.h.b16 %v1801
    %v4526 = vunpack.c.l.b16 %v1802
    %v4527 = vunpack.c.h.b16 %v1802
    %v4528 = vunpack.c.l.b16 %v1803
    %v4529 = vunpack.c.h.b16 %v1803
    %v4530 = vunpack.c.l.b16 %v1804
    %v4531 = vunpack.c.h.b16 %v1804
    %v4532 = vunpack.c.l.b16 %v1805
    %v4533 = vunpack.c.h.b16 %v1805
    %v4534 = vunpack.c.l.b16 %v1806
    %v4535 = vunpack.c.h.b16 %v1806
    %v4536 = vunpack.c.l.b16 %v1807
    %v4537 = vunpack.c.h.b16 %v1807
    %v4538 = vunpack.c.l.b16 %v1808
    %v4539 = vunpack.c.h.b16 %v1808
    %v4540 = vunpack.c.l.b16 %v1809
    %v4541 = vunpack.c.h.b16 %v1809
    %v4542 = vunpack.c.l.b16 %v1810
    %v4543 = vunpack.c.h.b16 %v1810
    %v4544 = vunpack.c.l.b16 %v1811
    %v4545 = vunpack.c.h.b16 %v1811
    %v4546 = vunpack.c.l.b16 %v1812
    %v4547 = vunpack.c.h.b16 %v1812
    %v4548 = vunpack.c.l.b16 %v1813
    %v4549 = vunpack.c.h.b16 %v1813
    %v4550 = vunpack.c.l.b16 %v1814
    %v4551 = vunpack.c.h.b16 %v1814
    %v4552 = vunpack.c.l.b16 %v1815
    %v4553 = vunpack.c.h.b16 %v1815
    %v4554 = vunpack.c.l.b16 %v1816
    %v4555 = vunpack.c.h.b16 %v1816
    %v4556 = vunpack.c.l.b16 %v1817
    %v4557 = vunpack.c.h.b16 %v1817
    %v4558 = vunpack.c.l.b16 %v1818
    %v4559 = vunpack.c.h.b16 %v1818
    %v4560 = vunpack.c.l.b16 %v1819
    %v4561 = vunpack.c.h.b16 %v1819
    %v4562 = vunpack.c.l.b16 %v1820
    %v4563 = vunpack.c.h.b16 %v1820
    %v4564 = vunpack.c.l.b16 %v1821
    %v4565 = vunpack.c.h.b16 %v1821
    %v4566 = vunpack.c.l.b16 %v1822
    %v4567 = vunpack.c.h.b16 %v1822
    %v4568 = vunpack.c.l.b16 %v1823
    %v4569 = vunpack.c.h.b16 %v1823
    %v4570 = vunpack.c.l.b16 %v1824
    %v4571 = vunpack.c.h.b16 %v1824
    %v4572 = vunpack.c.l.b16 %v1825
    %v4573 = vunpack.c.h.b16 %v1825
    %v4574 = vunpack.c.l.b16 %v1826
    %v4575 = vunpack.c.h.b16 %v1826
    %v4576 = vunpack.c.l.b16 %v1827
    %v4577 = vunpack.c.h.b16 %v1827
    %v4578 = vunpack.c.l.b16 %v1828
    %v4579 = vunpack.c.h.b16 %v1828
    %v4580 = vunpack.c.l.b16 %v1829
    %v4581 = vunpack.c.h.b16 %v1829
    %v4582 = vunpack.c.l.b16 %v1830
    %v4583 = vunpack.c.h.b16 %v1830
    %v4584 = vunpack.c.l.b16 %v1831
    %v4585 = vunpack.c.h.b16 %v1831
    %v4586 = vunpack.c.l.b16 %v1832
    %v4587 = vunpack.c.h.b16 %v1832
    %v4588 = vunpack.c.l.b16 %v1833
    %v4589 = vunpack.c.h.b16 %v1833
    %v4590 = vunpack.c.l.b16 %v1834
    %v4591 = vunpack.c.h.b16 %v1834
    %v4592 = vunpack.c.l.b16 %v1835
    %v4593 = vunpack.c.h.b16 %v1835
    %v4594 = vunpack.c.l.b16 %v1836
    %v4595 = vunpack.c.h.b16 %v1836
    %v4596 = vunpack.c.l.b16 %v1837
    %v4597 = vunpack.c.h.b16 %v1837
    %v4598 = vunpack.c.l.b16 %v1838
    %v4599 = vunpack.c.h.b16 %v1838
    %v4600 = vunpack.c.l.b16 %v1839
    %v4601 = vunpack.c.h.b16 %v1839
    %v4602 = vunpack.c.l.b16 %v1840
    %v4603 = vunpack.c.h.b16 %v1840
    %v4604 = vunpack.c.l.b16 %v1841
    %v4605 = vunpack.c.h.b16 %v1841
    %v4606 = vunpack.c.l.b16 %v1842
    %v4607 = vunpack.c.h.b16 %v1842
    %v4608 = vunpack.c.l.b16 %v1843
    %v4609 = vunpack.c.h.b16 %v1843
    %v4610 = vunpack.c.l.b16 %v1844
    %v4611 = vunpack.c.h.b16 %v1844
    %v4612 = vunpack.c.l.b16 %v1845
    %v4613 = vunpack.c.h.b16 %v1845
    %v4614 = vunpack.c.l.b16 %v1846
    %v4615 = vunpack.c.h.b16 %v1846
    %v4616 = vunpack.c.l.b16 %v1847
    %v4617 = vunpack.c.h.b16 %v1847
    %v4618 = vunpack.c.l.b16 %v1848
    %v4619 = vunpack.c.h.b16 %v1848
    %v4620 = vunpack.c.l.b16 %v1849
    %v4621 = vunpack.c.h.b16 %v1849
    %v4622 = vunpack.c.l.b16 %v1850
    %v4623 = vunpack.c.h.b16 %v1850
    %v4624 = vunpack.c.l.b16 %v1851
    %v4625 = vunpack.c.h.b16 %v1851
    %v4626 = vunpack.c.l.b16 %v1852
    %v4627 = vunpack.c.h.b16 %v1852
    %v4628 = vunpack.c.l.b16 %v1853
    %v4629 = vunpack.c.h.b16 %v1853
    %v4630 = vunpack.c.l.b16 %v1854
    %v4631 = vunpack.c.h.b16 %v1854
    %v4632 = vunpack.c.l.b16 %v1855
    %v4633 = vunpack.c.h.b16 %v1855
    %v4634 = vunpack.c.l.b16 %v1856
    %v4635 = vunpack.c.h.b16 %v1856
    %v4636 = vunpack.c.l.b16 %v1857
    %v4637 = vunpack.c.h.b16 %v1857
    %v4638 = vunpack.c.l.b16 %v1858
    %v4639 = vunpack.c.h.b16 %v1858
    %v4640 = vunpack.c.l.b16 %v1859
    %v4641 = vunpack.c.h.b16 %v1859
    %v4642 = vunpack.c.l.b16 %v1860
    %v4643 = vunpack.c.h.b16 %v1860
    %v4644 = vunpack.c.l.b16 %v1861
    %v4645 = vunpack.c.h.b16 %v1861
    %v4646 = vunpack.c.l.b16 %v1862
    %v4647 = vunpack.c.h.b16 %v1862
    %v4648 = vunpack.c.l.b16 %v1863
    %v4649 = vunpack.c.h.b16 %v1863
    %v4650 = vunpack.c.l.b16 %v1864
    %v4651 = vunpack.c.h.b16 %v1864
    %v4652 = vunpack.c.l.b16 %v1865
    %v4653 = vunpack.c.h.b16 %v1865
    %v4654 = vunpack.c.l.b16 %v1866
    %v4655 = vunpack.c.h.b16 %v1866
    %v4656 = vunpack.c.l.b16 %v1867
    %v4657 = vunpack.c.h.b16 %v1867
    %v4658 = vunpack.c.l.b16 %v1868
    %v4659 = vunpack.c.h.b16 %v1868
    %v4660 = vunpack.c.l.b16 %v1869
    %v4661 = vunpack.c.h.b16 %v1869
    %v4662 = vunpack.c.l.b16 %v1870
    %v4663 = vunpack.c.h.b16 %v1870
    %v4664 = vunpack.c.l.b16 %v1871
    %v4665 = vunpack.c.h.b16 %v1871
    %v4666 = vunpack.c.l.b16 %v1872
    %v4667 = vunpack.c.h.b16 %v1872
    %v4668 = vunpack.c.l.b16 %v1873
    %v4669 = vunpack.c.h.b16 %v1873
    %v4670 = vunpack.c.l.b16 %v1874
    %v4671 = vunpack.c.h.b16 %v1874
    %v4672 = vunpack.c.l.b16 %v1875
    %v4673 = vunpack.c.h.b16 %v1875
    %v4674 = vunpack.c.l.b16 %v1876
    %v4675 = vunpack.c.h.b16 %v1876
    %v4676 = vunpack.c.l.b16 %v1877
    %v4677 = vunpack.c.h.b16 %v1877
    %v4678 = vunpack.c.l.b16 %v1878
    %v4679 = vunpack.c.h.b16 %v1878
    %v4680 = vunpack.c.l.b16 %v1879
    %v4681 = vunpack.c.h.b16 %v1879
    %v4682 = vunpack.c.l.b16 %v1880
    %v4683 = vunpack.c.h.b16 %v1880
    %v4684 = vunpack.c.l.b16 %v1881
    %v4685 = vunpack.c.h.b16 %v1881
    %v4686 = vunpack.c.l.b16 %v1882
    %v4687 = vunpack.c.h.b16 %v1882
    %v4688 = vunpack.c.l.b16 %v1883
    %v4689 = vunpack.c.h.b16 %v1883
    %v4690 = vunpack.c.l.b16 %v1884
    %v4691 = vunpack.c.h.b16 %v1884
    %v4692 = vunpack.c.l.b16 %v1885
    %v4693 = vunpack.c.h.b16 %v1885
    %v4694 = vunpack.c.l.b16 %v1886
    %v4695 = vunpack.c.h.b16 %v1886
    %v4696 = vunpack.c.l.b16 %v1887
    %v4697 = vunpack.c.h.b16 %v1887
    %v4698 = vunpack.c.l.b16 %v1888
    %v4699 = vunpack.c.h.b16 %v1888
    %v4700 = vunpack.c.l.b16 %v1889
    %v4701 = vunpack.c.h.b16 %v1889
    %v4702 = vunpack.c.l.b16 %v1890
    %v4703 = vunpack.c.h.b16 %v1890
    %v4704 = vunpack.c.l.b16 %v1891
    %v4705 = vunpack.c.h.b16 %v1891
    %v4706 = vunpack.c.l.b16 %v1892
    %v4707 = vunpack.c.h.b16 %v1892
    %v4708 = vunpack.c.l.b16 %v1893
    %v4709 = vunpack.c.h.b16 %v1893
    %v4710 = vunpack.c.l.b16 %v1894
    %v4711 = vunpack.c.h.b16 %v1894
    %v4712 = vunpack.c.l.b16 %v1895
    %v4713 = vunpack.c.h.b16 %v1895
    %v4714 = vunpack.c.l.b16 %v1896
    %v4715 = vunpack.c.h.b16 %v1896
    %v4716 = vunpack.c.l.b16 %v1897
    %v4717 = vunpack.c.h.b16 %v1897
    %v4718 = vunpack.c.l.b16 %v1898
    %v4719 = vunpack.c.h.b16 %v1898
    %v4720 = vunpack.c.l.b16 %v1899
    %v4721 = vunpack.c.h.b16 %v1899
    %v4722 = vunpack.c.l.b16 %v1900
    %v4723 = vunpack.c.h.b16 %v1900
    %v4724 = vunpack.c.l.b16 %v1901
    %v4725 = vunpack.c.h.b16 %v1901
    %v4726 = vunpack.c.l.b16 %v1902
    %v4727 = vunpack.c.h.b16 %v1902
    %v4728 = vunpack.c.l.b16 %v1903
    %v4729 = vunpack.c.h.b16 %v1903
    %v4730 = vunpack.c.l.b16 %v1904
    %v4731 = vunpack.c.h.b16 %v1904
    %v4732 = vunpack.c.l.b16 %v1905
    %v4733 = vunpack.c.h.b16 %v1905
    %v4734 = vunpack.c.l.b16 %v1906
    %v4735 = vunpack.c.h.b16 %v1906
    %v4736 = vunpack.c.l.b16 %v1907
    %v4737 = vunpack.c.h.b16 %v1907
    %v4738 = vunpack.c.l.b16 %v1908
    %v4739 = vunpack.c.h.b16 %v1908
    %v4740 = vunpack.c.l.b16 %v1909
    %v4741 = vunpack.c.h.b16 %v1909
    %v4742 = vunpack.c.l.b16 %v1910
    %v4743 = vunpack.c.h.b16 %v1910
    %v4744 = vunpack.c.l.b16 %v1911
    %v4745 = vunpack.c.h.b16 %v1911
    %v4746 = vunpack.c.l.b16 %v1912
    %v4747 = vunpack.c.h.b16 %v1912
    %v4748 = vunpack.c.l.b16 %v1913
    %v4749 = vunpack.c.h.b16 %v1913
    %v4750 = vunpack.c.l.b16 %v1914
    %v4751 = vunpack.c.h.b16 %v1914
    %v4752 = vunpack.c.l.b16 %v1915
    %v4753 = vunpack.c.h.b16 %v1915
    %v4754 = vunpack.c.l.b16 %v1916
    %v4755 = vunpack.c.h.b16 %v1916
    %v4756 = vunpack.c.l.b16 %v1917
    %v4757 = vunpack.c.h.b16 %v1917
    %v4758 = vunpack.c.l.b16 %v1918
    %v4759 = vunpack.c.h.b16 %v1918
    %v4760 = vunpack.c.l.b16 %v1919
    %v4761 = vunpack.c.h.b16 %v1919
    %v4762 = vunpack.c.l.b16 %v1920
    %v4763 = vunpack.c.h.b16 %v1920
    %v4764 = vunpack.c.l.b16 %v1921
    %v4765 = vunpack.c.h.b16 %v1921
    %v4766 = vunpack.c.l.b16 %v1922
    %v4767 = vunpack.c.h.b16 %v1922
    %v4768 = vunpack.c.l.b16 %v1923
    %v4769 = vunpack.c.h.b16 %v1923
    %v4770 = vunpack.c.l.b16 %v1924
    %v4771 = vunpack.c.h.b16 %v1924
    %v4772 = vunpack.c.l.b16 %v1925
    %v4773 = vunpack.c.h.b16 %v1925
    %v4774 = vunpack.c.l.b16 %v1926
    %v4775 = vunpack.c.h.b16 %v1926
    %v4776 = vunpack.c.l.b16 %v1927
    %v4777 = vunpack.c.h.b16 %v1927
    %v4778 = vunpack.c.l.b16 %v1928
    %v4779 = vunpack.c.h.b16 %v1928
    %v4780 = vunpack.c.l.b16 %v1929
    %v4781 = vunpack.c.h.b16 %v1929
    %v4782 = vunpack.c.l.b16 %v1930
    %v4783 = vunpack.c.h.b16 %v1930
    %v4784 = vunpack.c.l.b16 %v1931
    %v4785 = vunpack.c.h.b16 %v1931
    %v4786 = vunpack.c.l.b16 %v1932
    %v4787 = vunpack.c.h.b16 %v1932
    %v4788 = vunpack.c.l.b16 %v1933
    %v4789 = vunpack.c.h.b16 %v1933
    %v4790 = vunpack.c.l.b16 %v1934
    %v4791 = vunpack.c.h.b16 %v1934
    %v4792 = vunpack.c.l.b16 %v1935
    %v4793 = vunpack.c.h.b16 %v1935
    %v4794 = vunpack.c.l.b16 %v1936
    %v4795 = vunpack.c.h.b16 %v1936
    %v4796 = vunpack.c.l.b16 %v1937
    %v4797 = vunpack.c.h.b16 %v1937
    %v4798 = vunpack.c.l.b16 %v1938
    %v4799 = vunpack.c.h.b16 %v1938
    %v4800 = vunpack.c.l.b16 %v1939
    %v4801 = vunpack.c.h.b16 %v1939
    %v4802 = vunpack.c.l.b16 %v1940
    %v4803 = vunpack.c.h.b16 %v1940
    %v4804 = vunpack.c.l.b16 %v1941
    %v4805 = vunpack.c.h.b16 %v1941
    %v4806 = vunpack.c.l.b16 %v1942
    %v4807 = vunpack.c.h.b16 %v1942
    %v4808 = vunpack.c.l.b16 %v1943
    %v4809 = vunpack.c.h.b16 %v1943
    %v4810 = vunpack.c.l.b16 %v1944
    %v4811 = vunpack.c.h.b16 %v1944
    %v4812 = vunpack.c.l.b16 %v1945
    %v4813 = vunpack.c.h.b16 %v1945
    %v4814 = vunpack.c.l.b16 %v1946
    %v4815 = vunpack.c.h.b16 %v1946
    %v4816 = vunpack.c.l.b16 %v1947
    %v4817 = vunpack.c.h.b16 %v1947
    %v4818 = vunpack.c.l.b16 %v1948
    %v4819 = vunpack.c.h.b16 %v1948
    %v4820 = vunpack.c.l.b16 %v1949
    %v4821 = vunpack.c.h.b16 %v1949
    %v4822 = vunpack.c.l.b16 %v1950
    %v4823 = vunpack.c.h.b16 %v1950
    %v4824 = vunpack.c.l.b16 %v1951
    %v4825 = vunpack.c.h.b16 %v1951
    %v4826 = vunpack.c.l.b16 %v1952
    %v4827 = vunpack.c.h.b16 %v1952
    %v4828 = vunpack.c.l.b16 %v1953
    %v4829 = vunpack.c.h.b16 %v1953
    %v4830 = vunpack.c.l.b16 %v1954
    %v4831 = vunpack.c.h.b16 %v1954
    %v4832 = vunpack.c.l.b16 %v1955
    %v4833 = vunpack.c.h.b16 %v1955
    %v4834 = vunpack.c.l.b16 %v1956
    %v4835 = vunpack.c.h.b16 %v1956
    %v4836 = vunpack.c.l.b16 %v1957
    %v4837 = vunpack.c.h.b16 %v1957
    %v4838 = vunpack.c.l.b16 %v1958
    %v4839 = vunpack.c.h.b16 %v1958
    %v4840 = vunpack.c.l.b16 %v1959
    %v4841 = vunpack.c.h.b16 %v1959
    %v4842 = vunpack.c.l.b16 %v1960
    %v4843 = vunpack.c.h.b16 %v1960
    %v4844 = vunpack.c.l.b16 %v1961
    %v4845 = vunpack.c.h.b16 %v1961
    %v4846 = vunpack.c.l.b16 %v1962
    %v4847 = vunpack.c.h.b16 %v1962
    %v4848 = vunpack.c.l.b16 %v1963
    %v4849 = vunpack.c.h.b16 %v1963
    %v4850 = vunpack.c.l.b16 %v1964
    %v4851 = vunpack.c.h.b16 %v1964
    %v4852 = vunpack.c.l.b16 %v1965
    %v4853 = vunpack.c.h.b16 %v1965
    %v4854 = vunpack.c.l.b16 %v1966
    %v4855 = vunpack.c.h.b16 %v1966
    %v4856 = vunpack.c.l.b16 %v1967
    %v4857 = vunpack.c.h.b16 %v1967
    %v4858 = vunpack.c.l.b16 %v1968
    %v4859 = vunpack.c.h.b16 %v1968
    %v4860 = vunpack.c.l.b16 %v1969
    %v4861 = vunpack.c.h.b16 %v1969
    %v4862 = vunpack.c.l.b16 %v1970
    %v4863 = vunpack.c.h.b16 %v1970
    %v4864 = vunpack.c.l.b16 %v1971
    %v4865 = vunpack.c.h.b16 %v1971
    %v4866 = vunpack.c.l.b16 %v1972
    %v4867 = vunpack.c.h.b16 %v1972
    %v4868 = vunpack.c.l.b16 %v1973
    %v4869 = vunpack.c.h.b16 %v1973
    %v4870 = vunpack.c.l.b16 %v1974
    %v4871 = vunpack.c.h.b16 %v1974
    %v4872 = vunpack.c.l.b16 %v1975
    %v4873 = vunpack.c.h.b16 %v1975
    %v4874 = vunpack.c.l.b16 %v1976
    %v4875 = vunpack.c.h.b16 %v1976
    %v4876 = vunpack.c.l.b16 %v1977
    %v4877 = vunpack.c.h.b16 %v1977
    %v4878 = vunpack.c.l.b16 %v1978
    %v4879 = vunpack.c.h.b16 %v1978
    %v4880 = vunpack.c.l.b16 %v1979
    %v4881 = vunpack.c.h.b16 %v1979
    %v4882 = vunpack.c.l.b16 %v1980
    %v4883 = vunpack.c.h.b16 %v1980
    %v4884 = vunpack.c.l.b16 %v1981
    %v4885 = vunpack.c.h.b16 %v1981
    %v4886 = vunpack.c.l.b16 %v1982
    %v4887 = vunpack.c.h.b16 %v1982
    %v4888 = vunpack.c.l.b16 %v1983
    %v4889 = vunpack.c.h.b16 %v1983
    %v4890 = vunpack.c.l.b16 %v1984
    %v4891 = vunpack.c.h.b16 %v1984
    %v4892 = vunpack.c.l.b16 %v1985
    %v4893 = vunpack.c.h.b16 %v1985
    %v4894 = vunpack.c.l.b16 %v1986
    %v4895 = vunpack.c.h.b16 %v1986
    %v4896 = vunpack.c.l.b16 %v1987
    %v4897 = vunpack.c.h.b16 %v1987
    %v4898 = vunpack.c.l.b16 %v1988
    %v4899 = vunpack.c.h.b16 %v1988
    %v4900 = vunpack.c.l.b16 %v1989
    %v4901 = vunpack.c.h.b16 %v1989
    %v4902 = vunpack.c.l.b16 %v1990
    %v4903 = vunpack.c.h.b16 %v1990
    %v4904 = vunpack.c.l.b16 %v1991
    %v4905 = vunpack.c.h.b16 %v1991
    %v4906 = vunpack.c.l.b16 %v1992
    %v4907 = vunpack.c.h.b16 %v1992
    %v4908 = vunpack.c.l.b16 %v1993
    %v4909 = vunpack.c.h.b16 %v1993
    %v4910 = vunpack.c.l.b16 %v1994
    %v4911 = vunpack.c.h.b16 %v1994
    %v4912 = vunpack.c.l.b16 %v1995
    %v4913 = vunpack.c.h.b16 %v1995
    %v4914 = vunpack.c.l.b16 %v1996
    %v4915 = vunpack.c.h.b16 %v1996
    %v4916 = vunpack.c.l.b16 %v1997
    %v4917 = vunpack.c.h.b16 %v1997
    %v4918 = vunpack.c.l.b16 %v1998
    %v4919 = vunpack.c.h.b16 %v1998
    %v4920 = vunpack.c.l.b16 %v1999
    %v4921 = vunpack.c.h.b16 %v1999
    %v4922 = vunpack.c.l.b16 %v2000
    %v4923 = vunpack.c.h.b16 %v2000
    %v4924 = vunpack.c.l.b16 %v2001
    %v4925 = vunpack.c.h.b16 %v2001
    %v4926 = vunpack.c.l.b16 %v2002
    %v4927 = vunpack.c.h.b16 %v2002
    %v4928 = vunpack.c.l.b16 %v2003
    %v4929 = vunpack.c.h.b16 %v2003
    %v4930 = vunpack.c.l.b16 %v2004
    %v4931 = vunpack.c.h.b16 %v2004
    %v4932 = vunpack.c.l.b16 %v2005
    %v4933 = vunpack.c.h.b16 %v2005
    %v4934 = vunpack.c.l.b16 %v2006
    %v4935 = vunpack.c.h.b16 %v2006
    %v4936 = vunpack.c.l.b16 %v2007
    %v4937 = vunpack.c.h.b16 %v2007
    %v4938 = vunpack.c.l.b16 %v2008
    %v4939 = vunpack.c.h.b16 %v2008
    %v4940 = vunpack.c.l.b16 %v2009
    %v4941 = vunpack.c.h.b16 %v2009
    %v4942 = vunpack.c.l.b16 %v2010
    %v4943 = vunpack.c.h.b16 %v2010
    %v4944 = vunpack.c.l.b16 %v2011
    %v4945 = vunpack.c.h.b16 %v2011
    %v4946 = vunpack.c.l.b16 %v2012
    %v4947 = vunpack.c.h.b16 %v2012
    %v4948 = vunpack.c.l.b16 %v2013
    %v4949 = vunpack.c.h.b16 %v2013
    %v4950 = vunpack.c.l.b16 %v2014
    %v4951 = vunpack.c.h.b16 %v2014
    %v4952 = vunpack.c.l.b16 %v2015
    %v4953 = vunpack.c.h.b16 %v2015
    %v4954 = vunpack.c.l.b16 %v2016
    %v4955 = vunpack.c.h.b16 %v2016
    %v4956 = vunpack.c.l.b16 %v2017
    %v4957 = vunpack.c.h.b16 %v2017
    %v4958 = vunpack.c.l.b16 %v2018
    %v4959 = vunpack.c.h.b16 %v2018
    %v4960 = vunpack.c.l.b16 %v2019
    %v4961 = vunpack.c.h.b16 %v2019
    %v4962 = vunpack.c.l.b16 %v2020
    %v4963 = vunpack.c.h.b16 %v2020
    %v4964 = vunpack.c.l.b16 %v2021
    %v4965 = vunpack.c.h.b16 %v2021
    %v4966 = vpack.c.b16 %v4462, %v4454
    %v4967 = vpack.c.b16 %v4463, %v4455
    %v4968 = vpack.c.b16 %v4464, %v4456
    %v4969 = vpack.c.b16 %v4465, %v4457
    %v4970 = vpack.c.b16 %v4466, %v4458
    %v4971 = vpack.c.b16 %v4467, %v4459
    %v4972 = vpack.c.b16 %v4468, %v4460
    %v4973 = vpack.c.b16 %v4469, %v4461
    %v4974 = vpack.c.b16 %v4478, %v4470
    %v4975 = vpack.c.b16 %v4479, %v4471
    %v4976 = vpack.c.b16 %v4480, %v4472
    %v4977 = vpack.c.b16 %v4481, %v4473
    %v4978 = vpack.c.b16 %v4482, %v4474
    %v4979 = vpack.c.b16 %v4483, %v4475
    %v4980 = vpack.c.b16 %v4484, %v4476
    %v4981 = vpack.c.b16 %v4485, %v4477
    %v4982 = vpack.c.b16 %v4494, %v4486
    %v4983 = vpack.c.b16 %v4495, %v4487
    %v4984 = vpack.c.b16 %v4496, %v4488
    %v4985 = vpack.c.b16 %v4497, %v4489
    %v4986 = vpack.c.b16 %v4498, %v4490
    %v4987 = vpack.c.b16 %v4499, %v4491
    %v4988 = vpack.c.b16 %v4500, %v4492
    %v4989 = vpack.c.b16 %v4501, %v4493
    %v4990 = vpack.c.b16 %v4510, %v4502
    %v4991 = vpack.c.b16 %v4511, %v4503
    %v4992 = vpack.c.b16 %v4512, %v4504
    %v4993 = vpack.c.b16 %v4513, %v4505
    %v4994 = vpack.c.b16 %v4514, %v4506
    %v4995 = vpack.c.b16 %v4515, %v4507
    %v4996 = vpack.c.b16 %v4516, %v4508
    %v4997 = vpack.c.b16 %v4517, %v4509
    %v4998 = vpack.c.b16 %v4526, %v4518
    %v4999 = vpack.c.b16 %v4527, %v4519
    %v5000 = vpack.c.b16 %v4528, %v4520
    %v5001 = vpack.c.b16 %v4529, %v4521
    %v5002 = vpack.c.b16 %v4530, %v4522
    %v5003 = vpack.c.b16 %v4531, %v4523
    %v5004 = vpack.c.b16 %v4532, %v4524
    %v5005 = vpack.c.b16 %v4533, %v4525
    %v5006 = vpack.c.b16 %v4542, %v4534
    %v5007 = vpack.c.b16 %v4543, %v4535
    %v5008 = vpack.c.b16 %v4544, %v4536
    %v5009 = vpack.c.b16 %v4545, %v4537
    %v5010 = vpack.c.b16 %v4546, %v4538
    %v5011 = vpack.c.b16 %v4547, %v4539
    %v5012 = vpack.c.b16 %v4548, %v4540
    %v5013 = vpack.c.b16 %v4549, %v4541
    %v5014 = vpack.c.b16 %v4558, %v4550
    %v5015 = vpack.c.b16 %v4559, %v4551
    %v5016 = vpack.c.b16 %v4560, %v4552
    %v5017 = vpack.c.b16 %v4561, %v4553
    %v5018 = vpack.c.b16 %v4562, %v4554
    %v5019 = vpack.c.b16 %v4563, %v4555
    %v5020 = vpack.c.b16 %v4564, %v4556
    %v5021 = vpack.c.b16 %v4565, %v4557
    %v5022 = vpack.c.b16 %v4574, %v4566
    %v5023 = vpack.c.b16 %v4575, %v4567
    %v5024 = vpack.c.b16 %v4576, %v4568
    %v5025 = vpack.c.b16 %v4577, %v4569
    %v5026 = vpack.c.b16 %v4578, %v4570
    %v5027 = vpack.c.b16 %v4579, %v4571
    %v5028 = vpack.c.b16 %v4580, %v4572
    %v5029 = vpack.c.b16 %v4581, %v4573
    %v5030 = vpack.c.b16 %v4590, %v4582
    %v5031 = vpack.c.b16 %v4591, %v4583
    %v5032 = vpack.c.b16 %v4592, %v4584
    %v5033 = vpack.c.b16 %v4593, %v4585
    %v5034 = vpack.c.b16 %v4594, %v4586
    %v5035 = vpack.c.b16 %v4595, %v4587
    %v5036 = vpack.c.b16 %v4596, %v4588
    %v5037 = vpack.c.b16 %v4597, %v4589
    %v5038 = vpack.c.b16 %v4606, %v4598
    %v5039 = vpack.c.b16 %v4607, %v4599
    %v5040 = vpack.c.b16 %v4608, %v4600
    %v5041 = vpack.c.b16 %v4609, %v4601
    %v5042 = vpack.c.b16 %v4610, %v4602
    %v5043 = vpack.c.b16 %v4611, %v4603
    %v5044 = vpack.c.b16 %v4612, %v4604
    %v5045 = vpack.c.b16 %v4613, %v4605
    %v5046 = vpack.c.b16 %v4622, %v4614
    %v5047 = vpack.c.b16 %v4623, %v4615
    %v5048 = vpack.c.b16 %v4624, %v4616
    %v5049 = vpack.c.b16 %v4625, %v4617
    %v5050 = vpack.c.b16 %v4626, %v4618
    %v5051 = vpack.c.b16 %v4627, %v4619
    %v5052 = vpack.c.b16 %v4628, %v4620
    %v5053 = vpack.c.b16 %v4629, %v4621
    %v5054 = vpack.c.b16 %v4638, %v4630
    %v5055 = vpack.c.b16 %v4639, %v4631
    %v5056 = vpack.c.b16 %v4640, %v4632
    %v5057 = vpack.c.b16 %v4641, %v4633
    %v5058 = vpack.c.b16 %v4642, %v4634
    %v5059 = vpack.c.b16 %v4643, %v4635
    %v5060 = vpack.c.b16 %v4644, %v4636
    %v5061 = vpack.c.b16 %v4645, %v4637
    %v5062 = vpack.c.b16 %v4654, %v4646
    %v5063 = vpack.c.b16 %v4655, %v4647
    %v5064 = vpack.c.b16 %v4656, %v4648
    %v5065 = vpack.c.b16 %v4657, %v4649
    %v5066 = vpack.c.b16 %v4658, %v4650
    %v5067 = vpack.c.b16 %v4659, %v4651
    %v5068 = vpack.c.b16 %v4660, %v4652
    %v5069 = vpack.c.b16 %v4661, %v4653
    %v5070 = vpack.c.b16 %v4670, %v4662
    %v5071 = vpack.c.b16 %v4671, %v4663
    %v5072 = vpack.c.b16 %v4672, %v4664
    %v5073 = vpack.c.b16 %v4673, %v4665
    %v5074 = vpack.c.b16 %v4674, %v4666
    %v5075 = vpack.c.b16 %v4675, %v4667
    %v5076 = vpack.c.b16 %v4676, %v4668
    %v5077 = vpack.c.b16 %v4677, %v4669
    %v5078 = vpack.c.b16 %v4686, %v4678
    %v5079 = vpack.c.b16 %v4687, %v4679
    %v5080 = vpack.c.b16 %v4688, %v4680
    %v5081 = vpack.c.b16 %v4689, %v4681
    %v5082 = vpack.c.b16 %v4690, %v4682
    %v5083 = vpack.c.b16 %v4691, %v4683
    %v5084 = vpack.c.b16 %v4692, %v4684
    %v5085 = vpack.c.b16 %v4693, %v4685
    %v5086 = vpack.c.b16 %v4702, %v4694
    %v5087 = vpack.c.b16 %v4703, %v4695
    %v5088 = vpack.c.b16 %v4704, %v4696
    %v5089 = vpack.c.b16 %v4705, %v4697
    %v5090 = vpack.c.b16 %v4706, %v4698
    %v5091 = vpack.c.b16 %v4707, %v4699
    %v5092 = vpack.c.b16 %v4708, %v4700
    %v5093 = vpack.c.b16 %v4709, %v4701
    %v5094 = vpack.c.b16 %v4718, %v4710
    %v5095 = vpack.c.b16 %v4719, %v4711
    %v5096 = vpack.c.b16 %v4720, %v4712
    %v5097 = vpack.c.b16 %v4721, %v4713
    %v5098 = vpack.c.b16 %v4722, %v4714
    %v5099 = vpack.c.b16 %v4723, %v4715
    %v5100 = vpack.c.b16 %v4724, %v4716
    %v5101 = vpack.c.b16 %v4725, %v4717
    %v5102 = vpack.c.b16 %v4734, %v4726
    %v5103 = vpack.c.b16 %v4735, %v4727
    %v5104 = vpack.c.b16 %v4736, %v4728
    %v5105 = vpack.c.b16 %v4737, %v4729
    %v5106 = vpack.c.b16 %v4738, %v4730
    %v5107 = vpack.c.b16 %v4739, %v4731
    %v5108 = vpack.c.b16 %v4740, %v4732
    %v5109 = vpack.c.b16 %v4741, %v4733
    %v5110 = vpack.c.b16 %v4750, %v4742
    %v5111 = vpack.c.b16 %v4751, %v4743
    %v5112 = vpack.c.b16 %v4752, %v4744
    %v5113 = vpack.c.b16 %v4753, %v4745
    %v5114 = vpack.c.b16 %v4754, %v4746
    %v5115 = vpack.c.b16 %v4755, %v4747
    %v5116 = vpack.c.b16 %v4756, %v4748
    %v5117 = vpack.c.b16 %v4757, %v4749
    %v5118 = vpack.c.b16 %v4766, %v4758
    %v5119 = vpack.c.b16 %v4767, %v4759
    %v5120 = vpack.c.b16 %v4768, %v4760
    %v5121 = vpack.c.b16 %v4769, %v4761
    %v5122 = vpack.c.b16 %v4770, %v4762
    %v5123 = vpack.c.b16 %v4771, %v4763
    %v5124 = vpack.c.b16 %v4772, %v4764
    %v5125 = vpack.c.b16 %v4773, %v4765
    %v5126 = vpack.c.b16 %v4782, %v4774
    %v5127 = vpack.c.b16 %v4783, %v4775
    %v5128 = vpack.c.b16 %v4784, %v4776
    %v5129 = vpack.c.b16 %v4785, %v4777
    %v5130 = vpack.c.b16 %v4786, %v4778
    %v5131 = vpack.c.b16 %v4787, %v4779
    %v5132 = vpack.c.b16 %v4788, %v4780
    %v5133 = vpack.c.b16 %v4789, %v4781
    %v5134 = vpack.c.b16 %v4798, %v4790
    %v5135 = vpack.c.b16 %v4799, %v4791
    %v5136 = vpack.c.b16 %v4800, %v4792
    %v5137 = vpack.c.b16 %v4801, %v4793
    %v5138 = vpack.c.b16 %v4802, %v4794
    %v5139 = vpack.c.b16 %v4803, %v4795
    %v5140 = vpack.c.b16 %v4804, %v4796
    %v5141 = vpack.c.b16 %v4805, %v4797
    %v5142 = vpack.c.b16 %v4814, %v4806
    %v5143 = vpack.c.b16 %v4815, %v4807
    %v5144 = vpack.c.b16 %v4816, %v4808
    %v5145 = vpack.c.b16 %v4817, %v4809
    %v5146 = vpack.c.b16 %v4818, %v4810
    %v5147 = vpack.c.b16 %v4819, %v4811
    %v5148 = vpack.c.b16 %v4820, %v4812
    %v5149 = vpack.c.b16 %v4821, %v4813
    %v5150 = vpack.c.b16 %v4830, %v4822
    %v5151 = vpack.c.b16 %v4831, %v4823
    %v5152 = vpack.c.b16 %v4832, %v4824
    %v5153 = vpack.c.b16 %v4833, %v4825
    %v5154 = vpack.c.b16 %v4834, %v4826
    %v5155 = vpack.c.b16 %v4835, %v4827
    %v5156 = vpack.c.b16 %v4836, %v4828
    %v5157 = vpack.c.b16 %v4837, %v4829
    %v5158 = vpack.c.b16 %v4846, %v4838
    %v5159 = vpack.c.b16 %v4847, %v4839
    %v5160 = vpack.c.b16 %v4848, %v4840
    %v5161 = vpack.c.b16 %v4849, %v4841
    %v5162 = vpack.c.b16 %v4850, %v4842
    %v5163 = vpack.c.b16 %v4851, %v4843
    %v5164 = vpack.c.b16 %v4852, %v4844
    %v5165 = vpack.c.b16 %v4853, %v4845
    %v5166 = vpack.c.b16 %v4862, %v4854
    %v5167 = vpack.c.b16 %v4863, %v4855
    %v5168 = vpack.c.b16 %v4864, %v4856
    %v5169 = vpack.c.b16 %v4865, %v4857
    %v5170 = vpack.c.b16 %v4866, %v4858
    %v5171 = vpack.c.b16 %v4867, %v4859
    %v5172 = vpack.c.b16 %v4868, %v4860
    %v5173 = vpack.c.b16 %v4869, %v4861
    %v5174 = vpack.c.b16 %v4878, %v4870
    %v5175 = vpack.c.b16 %v4879, %v4871
    %v5176 = vpack.c.b16 %v4880, %v4872
    %v5177 = vpack.c.b16 %v4881, %v4873
    %v5178 = vpack.c.b16 %v4882, %v4874
    %v5179 = vpack.c.b16 %v4883, %v4875
    %v5180 = vpack.c.b16 %v4884, %v4876
    %v5181 = vpack.c.b16 %v4885, %v4877
    %v5182 = vpack.c.b16 %v4894, %v4886
    %v5183 = vpack.c.b16 %v4895, %v4887
    %v5184 = vpack.c.b16 %v4896, %v4888
    %v5185 = vpack.c.b16 %v4897, %v4889
    %v5186 = vpack.c.b16 %v4898, %v4890
    %v5187 = vpack.c.b16 %v4899, %v4891
    %v5188 = vpack.c.b16 %v4900, %v4892
    %v5189 = vpack.c.b16 %v4901, %v4893
    %v5190 = vpack.c.b16 %v4910, %v4902
    %v5191 = vpack.c.b16 %v4911, %v4903
    %v5192 = vpack.c.b16 %v4912, %v4904
    %v5193 = vpack.c.b16 %v4913, %v4905
    %v5194 = vpack.c.b16 %v4914, %v4906
    %v5195 = vpack.c.b16 %v4915, %v4907
    %v5196 = vpack.c.b16 %v4916, %v4908
    %v5197 = vpack.c.b16 %v4917, %v4909
    %v5198 = vpack.c.b16 %v4926, %v4918
    %v5199 = vpack.c.b16 %v4927, %v4919
    %v5200 = vpack.c.b16 %v4928, %v4920
    %v5201 = vpack.c.b16 %v4929, %v4921
    %v5202 = vpack.c.b16 %v4930, %v4922
    %v5203 = vpack.c.b16 %v4931, %v4923
    %v5204 = vpack.c.b16 %v4932, %v4924
    %v5205 = vpack.c.b16 %v4933, %v4925
    %v5206 = vpack.c.b16 %v4942, %v4934
    %v5207 = vpack.c.b16 %v4943, %v4935
    %v5208 = vpack.c.b16 %v4944, %v4936
    %v5209 = vpack.c.b16 %v4945, %v4937
    %v5210 = vpack.c.b16 %v4946, %v4938
    %v5211 = vpack.c.b16 %v4947, %v4939
    %v5212 = vpack.c.b16 %v4948, %v4940
    %v5213 = vpack.c.b16 %v4949, %v4941
    %v5214 = vpack.c.b16 %v4958, %v4950
    %v5215 = vpack.c.b16 %v4959, %v4951
    %v5216 = vpack.c.b16 %v4960, %v4952
    %v5217 = vpack.c.b16 %v4961, %v4953
    %v5218 = vpack.c.b16 %v4962, %v4954
    %v5219 = vpack.c.b16 %v4963, %v4955
    %v5220 = vpack.c.b16 %v4964, %v4956
    %v5221 = vpack.c.b16 %v4965, %v4957
    %5478 = vmatprep.subr.bf16.mxu0 %v5023
    %5479 = vmatpush1.bf16.msra.mxu0 %v5022
    %5480 = vmatprep.subr.bf16.mxu0 %v5015
    %5481 = vmatpush1.bf16.msra.mxu0 %v5014
    %5482 = vmatprep.subr.bf16.mxu0 %v5007
    %5483 = vmatpush1.bf16.msra.mxu0 %v5006
    %5484 = vmatprep.subr.bf16.mxu0 %v4999
    %5485 = vmatpush1.bf16.msra.mxu0 %v4998
    %5486 = vmatprep.subr.bf16.mxu0 %v4991
    %5487 = vmatpush1.bf16.msra.mxu0 %v4990
    %5488 = vmatprep.subr.bf16.mxu0 %v4983
    %5489 = vmatpush1.bf16.msra.mxu0 %v4982
    %5490 = vmatprep.subr.bf16.mxu0 %v4975
    %5491 = vmatpush1.bf16.msra.mxu0 %v4974
    %5492 = vmatprep.subr.bf16.mxu0 %v4967
    %5493 = vmatpush1.bf16.msra.mxu0 %v4966
    %5494 = vmatprep.subr.bf16.mxu0 %v5087
    %5495 = vmatpush2.bf16.msra.mxu0 %v5086
    %5496 = vmatprep.subr.bf16.mxu0 %v5079
    %5497 = vmatpush2.bf16.msra.mxu0 %v5078
    %5498 = vmatprep.subr.bf16.mxu0 %v5071
    %5499 = vmatpush2.bf16.msra.mxu0 %v5070
    %5500 = vmatprep.subr.bf16.mxu0 %v5063
    %5501 = vmatpush2.bf16.msra.mxu0 %v5062
    %5502 = vmatprep.subr.bf16.mxu0 %v5055
    %5503 = vmatpush2.bf16.msra.mxu0 %v5054
    %5504 = vmatprep.subr.bf16.mxu0 %v5047
    %5505 = vmatpush2.bf16.msra.mxu0 %v5046
    %5506 = vmatprep.subr.bf16.mxu0 %v5039
    %5507 = vmatpush2.bf16.msra.mxu0 %v5038
    %5508 = vmatprep.subr.bf16.mxu0 %v5031
    %5509 = vmatpush2.bf16.msra.mxu0 %v5030
    %5510 = vmatprep.mubr.bf16.mxu0 %v4191
    %5511 = vmatmul.mubr.bf16.gmra.mxu0 %v4190
    %v5512 = vpop.f32.mrf.mxu0
    %v5513 = vadd.f32 %v3912, %v5512
    %v5514 = vpop.f32.mrf.mxu0
    %v5515 = vadd.f32 %v3914, %v5514
    %v5516 = vpop.f32.mrf.mxu0
    %v5517 = vadd.f32 %v3916, %v5516
    %v5518 = vpop.f32.mrf.mxu0
    %v5519 = vadd.f32 %v3918, %v5518
    %5520 = vdwg.mxu0
    %5521 = vmatprep.subr.bf16.mxu0 %v5151
    %5522 = vmatpush1.bf16.msra.mxu0 %v5150
    %5523 = vmatprep.subr.bf16.mxu0 %v5143
    %5524 = vmatpush1.bf16.msra.mxu0 %v5142
    %5525 = vmatprep.subr.bf16.mxu0 %v5135
    %5526 = vmatpush1.bf16.msra.mxu0 %v5134
    %5527 = vmatprep.subr.bf16.mxu0 %v5127
    %5528 = vmatpush1.bf16.msra.mxu0 %v5126
    %5529 = vmatprep.subr.bf16.mxu0 %v5119
    %5530 = vmatpush1.bf16.msra.mxu0 %v5118
    %5531 = vmatprep.subr.bf16.mxu0 %v5111
    %5532 = vmatpush1.bf16.msra.mxu0 %v5110
    %5533 = vmatprep.subr.bf16.mxu0 %v5103
    %5534 = vmatpush1.bf16.msra.mxu0 %v5102
    %5535 = vmatprep.subr.bf16.mxu0 %v5095
    %5536 = vmatpush1.bf16.msra.mxu0 %v5094
    %5537 = vmatprep.subr.bf16.mxu0 %v5215
    %5538 = vmatpush2.bf16.msra.mxu0 %v5214
    %5539 = vmatprep.subr.bf16.mxu0 %v5207
    %5540 = vmatpush2.bf16.msra.mxu0 %v5206
    %5541 = vmatprep.subr.bf16.mxu0 %v5199
    %5542 = vmatpush2.bf16.msra.mxu0 %v5198
    %5543 = vmatprep.subr.bf16.mxu0 %v5191
    %5544 = vmatpush2.bf16.msra.mxu0 %v5190
    %5545 = vmatprep.subr.bf16.mxu0 %v5183
    %5546 = vmatpush2.bf16.msra.mxu0 %v5182
    %5547 = vmatprep.subr.bf16.mxu0 %v5175
    %5548 = vmatpush2.bf16.msra.mxu0 %v5174
    %5549 = vmatprep.subr.bf16.mxu0 %v5167
    %5550 = vmatpush2.bf16.msra.mxu0 %v5166
    %5551 = vmatprep.subr.bf16.mxu0 %v5159
    %5552 = vmatpush2.bf16.msra.mxu0 %v5158
    %5553 = vmatprep.mubr.bf16.mxu0 %v4193
    %5554 = vmatmul.mubr.bf16.gmra.mxu0 %v4192
    %v5555 = vpop.f32.mrf.mxu0
    %v5556 = vadd.f32 %v5513, %v5555
    %v5557 = vpop.f32.mrf.mxu0
    %v5558 = vadd.f32 %v5515, %v5557
    %v5559 = vpop.f32.mrf.mxu0
    %v5560 = vadd.f32 %v5517, %v5559
    %v5561 = vpop.f32.mrf.mxu0
    %v5562 = vadd.f32 %v5519, %v5561
    %5563 = vdwg.mxu0
    %5564 = vmatprep.subr.bf16.mxu0 %v5025
    %5565 = vmatpush1.bf16.msra.mxu0 %v5024
    %5566 = vmatprep.subr.bf16.mxu0 %v5017
    %5567 = vmatpush1.bf16.msra.mxu0 %v5016
    %5568 = vmatprep.subr.bf16.mxu0 %v5009
    %5569 = vmatpush1.bf16.msra.mxu0 %v5008
    %5570 = vmatprep.subr.bf16.mxu0 %v5001
    %5571 = vmatpush1.bf16.msra.mxu0 %v5000
    %5572 = vmatprep.subr.bf16.mxu0 %v4993
    %5573 = vmatpush1.bf16.msra.mxu0 %v4992
    %5574 = vmatprep.subr.bf16.mxu0 %v4985
    %5575 = vmatpush1.bf16.msra.mxu0 %v4984
    %5576 = vmatprep.subr.bf16.mxu0 %v4977
    %5577 = vmatpush1.bf16.msra.mxu0 %v4976
    %5578 = vmatprep.subr.bf16.mxu0 %v4969
    %5579 = vmatpush1.bf16.msra.mxu0 %v4968
    %5580 = vmatprep.subr.bf16.mxu0 %v5089
    %5581 = vmatpush2.bf16.msra.mxu0 %v5088
    %5582 = vmatprep.subr.bf16.mxu0 %v5081
    %5583 = vmatpush2.bf16.msra.mxu0 %v5080
    %5584 = vmatprep.subr.bf16.mxu0 %v5073
    %5585 = vmatpush2.bf16.msra.mxu0 %v5072
    %5586 = vmatprep.subr.bf16.mxu0 %v5065
    %5587 = vmatpush2.bf16.msra.mxu0 %v5064
    %5588 = vmatprep.subr.bf16.mxu0 %v5057
    %5589 = vmatpush2.bf16.msra.mxu0 %v5056
    %5590 = vmatprep.subr.bf16.mxu0 %v5049
    %5591 = vmatpush2.bf16.msra.mxu0 %v5048
    %5592 = vmatprep.subr.bf16.mxu0 %v5041
    %5593 = vmatpush2.bf16.msra.mxu0 %v5040
    %5594 = vmatprep.subr.bf16.mxu0 %v5033
    %5595 = vmatpush2.bf16.msra.mxu0 %v5032
    %5596 = vmatprep.mubr.bf16.mxu0 %v4191
    %5597 = vmatmul.mubr.bf16.gmra.mxu0 %v4190
    %v5598 = vpop.f32.mrf.mxu0
    %v5599 = vadd.f32 %v3998, %v5598
    %v5600 = vpop.f32.mrf.mxu0
    %v5601 = vadd.f32 %v4000, %v5600
    %v5602 = vpop.f32.mrf.mxu0
    %v5603 = vadd.f32 %v4002, %v5602
    %v5604 = vpop.f32.mrf.mxu0
    %v5605 = vadd.f32 %v4004, %v5604
    %5606 = vdwg.mxu0
    %5607 = vmatprep.subr.bf16.mxu0 %v5153
    %5608 = vmatpush1.bf16.msra.mxu0 %v5152
    %5609 = vmatprep.subr.bf16.mxu0 %v5145
    %5610 = vmatpush1.bf16.msra.mxu0 %v5144
    %5611 = vmatprep.subr.bf16.mxu0 %v5137
    %5612 = vmatpush1.bf16.msra.mxu0 %v5136
    %5613 = vmatprep.subr.bf16.mxu0 %v5129
    %5614 = vmatpush1.bf16.msra.mxu0 %v5128
    %5615 = vmatprep.subr.bf16.mxu0 %v5121
    %5616 = vmatpush1.bf16.msra.mxu0 %v5120
    %5617 = vmatprep.subr.bf16.mxu0 %v5113
    %5618 = vmatpush1.bf16.msra.mxu0 %v5112
    %5619 = vmatprep.subr.bf16.mxu0 %v5105
    %5620 = vmatpush1.bf16.msra.mxu0 %v5104
    %5621 = vmatprep.subr.bf16.mxu0 %v5097
    %5622 = vmatpush1.bf16.msra.mxu0 %v5096
    %5623 = vmatprep.subr.bf16.mxu0 %v5217
    %5624 = vmatpush2.bf16.msra.mxu0 %v5216
    %5625 = vmatprep.subr.bf16.mxu0 %v5209
    %5626 = vmatpush2.bf16.msra.mxu0 %v5208
    %5627 = vmatprep.subr.bf16.mxu0 %v5201
    %5628 = vmatpush2.bf16.msra.mxu0 %v5200
    %5629 = vmatprep.subr.bf16.mxu0 %v5193
    %5630 = vmatpush2.bf16.msra.mxu0 %v5192
    %5631 = vmatprep.subr.bf16.mxu0 %v5185
    %5632 = vmatpush2.bf16.msra.mxu0 %v5184
    %5633 = vmatprep.subr.bf16.mxu0 %v5177
    %5634 = vmatpush2.bf16.msra.mxu0 %v5176
    %5635 = vmatprep.subr.bf16.mxu0 %v5169
    %5636 = vmatpush2.bf16.msra.mxu0 %v5168
    %5637 = vmatprep.subr.bf16.mxu0 %v5161
    %5638 = vmatpush2.bf16.msra.mxu0 %v5160
    %5639 = vmatprep.mubr.bf16.mxu0 %v4193
    %5640 = vmatmul.mubr.bf16.gmra.mxu0 %v4192
    %v5641 = vpop.f32.mrf.mxu0
    %v5642 = vadd.f32 %v5599, %v5641
    %v5643 = vpop.f32.mrf.mxu0
    %v5644 = vadd.f32 %v5601, %v5643
    %v5645 = vpop.f32.mrf.mxu0
    %v5646 = vadd.f32 %v5603, %v5645
    %v5647 = vpop.f32.mrf.mxu0
    %v5648 = vadd.f32 %v5605, %v5647
    %5649 = vdwg.mxu0
    %5650 = vmatprep.subr.bf16.mxu0 %v5027
    %5651 = vmatpush1.bf16.msra.mxu0 %v5026
    %5652 = vmatprep.subr.bf16.mxu0 %v5019
    %5653 = vmatpush1.bf16.msra.mxu0 %v5018
    %5654 = vmatprep.subr.bf16.mxu0 %v5011
    %5655 = vmatpush1.bf16.msra.mxu0 %v5010
    %5656 = vmatprep.subr.bf16.mxu0 %v5003
    %5657 = vmatpush1.bf16.msra.mxu0 %v5002
    %5658 = vmatprep.subr.bf16.mxu0 %v4995
    %5659 = vmatpush1.bf16.msra.mxu0 %v4994
    %5660 = vmatprep.subr.bf16.mxu0 %v4987
    %5661 = vmatpush1.bf16.msra.mxu0 %v4986
    %5662 = vmatprep.subr.bf16.mxu0 %v4979
    %5663 = vmatpush1.bf16.msra.mxu0 %v4978
    %5664 = vmatprep.subr.bf16.mxu0 %v4971
    %5665 = vmatpush1.bf16.msra.mxu0 %v4970
    %5666 = vmatprep.subr.bf16.mxu0 %v5091
    %5667 = vmatpush2.bf16.msra.mxu0 %v5090
    %5668 = vmatprep.subr.bf16.mxu0 %v5083
    %5669 = vmatpush2.bf16.msra.mxu0 %v5082
    %5670 = vmatprep.subr.bf16.mxu0 %v5075
    %5671 = vmatpush2.bf16.msra.mxu0 %v5074
    %5672 = vmatprep.subr.bf16.mxu0 %v5067
    %5673 = vmatpush2.bf16.msra.mxu0 %v5066
    %5674 = vmatprep.subr.bf16.mxu0 %v5059
    %5675 = vmatpush2.bf16.msra.mxu0 %v5058
    %5676 = vmatprep.subr.bf16.mxu0 %v5051
    %5677 = vmatpush2.bf16.msra.mxu0 %v5050
    %5678 = vmatprep.subr.bf16.mxu0 %v5043
    %5679 = vmatpush2.bf16.msra.mxu0 %v5042
    %5680 = vmatprep.subr.bf16.mxu0 %v5035
    %5681 = vmatpush2.bf16.msra.mxu0 %v5034
    %5682 = vmatprep.mubr.bf16.mxu0 %v4191
    %5683 = vmatmul.mubr.bf16.gmra.mxu0 %v4190
    %v5684 = vpop.f32.mrf.mxu0
    %v5685 = vadd.f32 %v4084, %v5684
    %v5686 = vpop.f32.mrf.mxu0
    %v5687 = vadd.f32 %v4086, %v5686
    %v5688 = vpop.f32.mrf.mxu0
    %v5689 = vadd.f32 %v4088, %v5688
    %v5690 = vpop.f32.mrf.mxu0
    %v5691 = vadd.f32 %v4090, %v5690
    %5692 = vdwg.mxu0
    %5693 = vmatprep.subr.bf16.mxu0 %v5155
    %5694 = vmatpush1.bf16.msra.mxu0 %v5154
    %5695 = vmatprep.subr.bf16.mxu0 %v5147
    %5696 = vmatpush1.bf16.msra.mxu0 %v5146
    %5697 = vmatprep.subr.bf16.mxu0 %v5139
    %5698 = vmatpush1.bf16.msra.mxu0 %v5138
    %5699 = vmatprep.subr.bf16.mxu0 %v5131
    %5700 = vmatpush1.bf16.msra.mxu0 %v5130
    %5701 = vmatprep.subr.bf16.mxu0 %v5123
    %5702 = vmatpush1.bf16.msra.mxu0 %v5122
    %5703 = vmatprep.subr.bf16.mxu0 %v5115
    %5704 = vmatpush1.bf16.msra.mxu0 %v5114
    %5705 = vmatprep.subr.bf16.mxu0 %v5107
    %5706 = vmatpush1.bf16.msra.mxu0 %v5106
    %5707 = vmatprep.subr.bf16.mxu0 %v5099
    %5708 = vmatpush1.bf16.msra.mxu0 %v5098
    %5709 = vmatprep.subr.bf16.mxu0 %v5219
    %5710 = vmatpush2.bf16.msra.mxu0 %v5218
    %5711 = vmatprep.subr.bf16.mxu0 %v5211
    %5712 = vmatpush2.bf16.msra.mxu0 %v5210
    %5713 = vmatprep.subr.bf16.mxu0 %v5203
    %5714 = vmatpush2.bf16.msra.mxu0 %v5202
    %5715 = vmatprep.subr.bf16.mxu0 %v5195
    %5716 = vmatpush2.bf16.msra.mxu0 %v5194
    %5717 = vmatprep.subr.bf16.mxu0 %v5187
    %5718 = vmatpush2.bf16.msra.mxu0 %v5186
    %5719 = vmatprep.subr.bf16.mxu0 %v5179
    %5720 = vmatpush2.bf16.msra.mxu0 %v5178
    %5721 = vmatprep.subr.bf16.mxu0 %v5171
    %5722 = vmatpush2.bf16.msra.mxu0 %v5170
    %5723 = vmatprep.subr.bf16.mxu0 %v5163
    %5724 = vmatpush2.bf16.msra.mxu0 %v5162
    %5725 = vmatprep.mubr.bf16.mxu0 %v4193
    %5726 = vmatmul.mubr.bf16.gmra.mxu0 %v4192
    %v5727 = vpop.f32.mrf.mxu0
    %v5728 = vadd.f32 %v5685, %v5727
    %v5729 = vpop.f32.mrf.mxu0
    %v5730 = vadd.f32 %v5687, %v5729
    %v5731 = vpop.f32.mrf.mxu0
    %v5732 = vadd.f32 %v5689, %v5731
    %v5733 = vpop.f32.mrf.mxu0
    %v5734 = vadd.f32 %v5691, %v5733
    %5735 = vdwg.mxu0
    %5736 = vmatprep.subr.bf16.mxu0 %v5029
    %5737 = vmatpush1.bf16.msra.mxu0 %v5028
    %5738 = vmatprep.subr.bf16.mxu0 %v5021
    %5739 = vmatpush1.bf16.msra.mxu0 %v5020
    %5740 = vmatprep.subr.bf16.mxu0 %v5013
    %5741 = vmatpush1.bf16.msra.mxu0 %v5012
    %5742 = vmatprep.subr.bf16.mxu0 %v5005
    %5743 = vmatpush1.bf16.msra.mxu0 %v5004
    %5744 = vmatprep.subr.bf16.mxu0 %v4997
    %5745 = vmatpush1.bf16.msra.mxu0 %v4996
    %5746 = vmatprep.subr.bf16.mxu0 %v4989
    %5747 = vmatpush1.bf16.msra.mxu0 %v4988
    %5748 = vmatprep.subr.bf16.mxu0 %v4981
    %5749 = vmatpush1.bf16.msra.mxu0 %v4980
    %5750 = vmatprep.subr.bf16.mxu0 %v4973
    %5751 = vmatpush1.bf16.msra.mxu0 %v4972
    %5752 = vmatprep.subr.bf16.mxu0 %v5093
    %5753 = vmatpush2.bf16.msra.mxu0 %v5092
    %5754 = vmatprep.subr.bf16.mxu0 %v5085
    %5755 = vmatpush2.bf16.msra.mxu0 %v5084
    %5756 = vmatprep.subr.bf16.mxu0 %v5077
    %5757 = vmatpush2.bf16.msra.mxu0 %v5076
    %5758 = vmatprep.subr.bf16.mxu0 %v5069
    %5759 = vmatpush2.bf16.msra.mxu0 %v5068
    %5760 = vmatprep.subr.bf16.mxu0 %v5061
    %5761 = vmatpush2.bf16.msra.mxu0 %v5060
    %5762 = vmatprep.subr.bf16.mxu0 %v5053
    %5763 = vmatpush2.bf16.msra.mxu0 %v5052
    %5764 = vmatprep.subr.bf16.mxu0 %v5045
    %5765 = vmatpush2.bf16.msra.mxu0 %v5044
    %5766 = vmatprep.subr.bf16.mxu0 %v5037
    %5767 = vmatpush2.bf16.msra.mxu0 %v5036
    %5768 = vmatprep.mubr.bf16.mxu0 %v4191
    %5769 = vmatmul.mubr.bf16.gmra.mxu0 %v4190
    %v5770 = vpop.f32.mrf.mxu0
    %v5771 = vadd.f32 %v4170, %v5770
    %v5772 = vpop.f32.mrf.mxu0
    %v5773 = vadd.f32 %v4172, %v5772
    %v5774 = vpop.f32.mrf.mxu0
    %v5775 = vadd.f32 %v4174, %v5774
    %v5776 = vpop.f32.mrf.mxu0
    %v5777 = vadd.f32 %v4176, %v5776
    %5778 = vdwg.mxu0
    %5779 = vmatprep.subr.bf16.mxu0 %v5157
    %5780 = vmatpush1.bf16.msra.mxu0 %v5156
    %5781 = vmatprep.subr.bf16.mxu0 %v5149
    %5782 = vmatpush1.bf16.msra.mxu0 %v5148
    %5783 = vmatprep.subr.bf16.mxu0 %v5141
    %5784 = vmatpush1.bf16.msra.mxu0 %v5140
    %5785 = vmatprep.subr.bf16.mxu0 %v5133
    %5786 = vmatpush1.bf16.msra.mxu0 %v5132
    %5787 = vmatprep.subr.bf16.mxu0 %v5125
    %5788 = vmatpush1.bf16.msra.mxu0 %v5124
    %5789 = vmatprep.subr.bf16.mxu0 %v5117
    %5790 = vmatpush1.bf16.msra.mxu0 %v5116
    %5791 = vmatprep.subr.bf16.mxu0 %v5109
    %5792 = vmatpush1.bf16.msra.mxu0 %v5108
    %5793 = vmatprep.subr.bf16.mxu0 %v5101
    %5794 = vmatpush1.bf16.msra.mxu0 %v5100
    %5795 = vmatprep.subr.bf16.mxu0 %v5221
    %5796 = vmatpush2.bf16.msra.mxu0 %v5220
    %5797 = vmatprep.subr.bf16.mxu0 %v5213
    %5798 = vmatpush2.bf16.msra.mxu0 %v5212
    %5799 = vmatprep.subr.bf16.mxu0 %v5205
    %5800 = vmatpush2.bf16.msra.mxu0 %v5204
    %5801 = vmatprep.subr.bf16.mxu0 %v5197
    %5802 = vmatpush2.bf16.msra.mxu0 %v5196
    %5803 = vmatprep.subr.bf16.mxu0 %v5189
    %5804 = vmatpush2.bf16.msra.mxu0 %v5188
    %5805 = vmatprep.subr.bf16.mxu0 %v5181
    %5806 = vmatpush2.bf16.msra.mxu0 %v5180
    %5807 = vmatprep.subr.bf16.mxu0 %v5173
    %5808 = vmatpush2.bf16.msra.mxu0 %v5172
    %5809 = vmatprep.subr.bf16.mxu0 %v5165
    %5810 = vmatpush2.bf16.msra.mxu0 %v5164
    %5811 = vmatprep.mubr.bf16.mxu0 %v4193
    %5812 = vmatmul.mubr.bf16.gmra.mxu0 %v4192
    %v5813 = vpop.f32.mrf.mxu0
    %v5814 = vadd.f32 %v5771, %v5813
    %v5815 = vpop.f32.mrf.mxu0
    %v5816 = vadd.f32 %v5773, %v5815
    %v5817 = vpop.f32.mrf.mxu0
    %v5818 = vadd.f32 %v5775, %v5817
    %v5819 = vpop.f32.mrf.mxu0
    %v5820 = vadd.f32 %v5777, %v5819
    %5821 = vdwg.mxu0
    %v5828 = vunpack.c.l.b16 %v1754
    %v5829 = vunpack.c.h.b16 %v1754
    %v5830 = vunpack.c.l.b16 %v1755
    %v5831 = vunpack.c.h.b16 %v1755
    %v5832 = vunpack.c.l.b16 %v1756
    %v5833 = vunpack.c.h.b16 %v1756
    %v5834 = vunpack.c.l.b16 %v1757
    %v5835 = vunpack.c.h.b16 %v1757
    %v5836 = vunpack.c.l.b16 %v1758
    %v5837 = vunpack.c.h.b16 %v1758
    %v5838 = vunpack.c.l.b16 %v1759
    %v5839 = vunpack.c.h.b16 %v1759
    %v5840 = vpack.c.b16 %v5832, %v5828
    %v5841 = vpack.c.b16 %v5833, %v5829
    %v5842 = vpack.c.b16 %v5834, %v5830
    %v5843 = vpack.c.b16 %v5835, %v5831
    %v5844 = vpack.c.b16 %v5836, %v5836
    %v5845 = vpack.c.b16 %v5837, %v5837
    %v5846 = vpack.c.b16 %v5838, %v5838
    %v5847 = vpack.c.b16 %v5839, %v5839
    %vm5848 = vsmask.f32 7424
    %v5850 = vshrl.u32 %v5840, 16
    %v5852 = vshll.u32 %v5840, 16
    %v5854 = vrot.slane %v5852, 1
    %v5855 = vor.u32 %v5850, %v5854
    %v5857 = vshll.u32 %v5844, 16
    %v5859 = vrot.slane %v5857, 1
    %v5860 = vsel %vm5848, %v5855, %v5859
    %v5862 = vshrl.u32 %v5841, 16
    %v5864 = vshll.u32 %v5841, 16
    %v5866 = vrot.slane %v5864, 1
    %v5867 = vor.u32 %v5862, %v5866
    %v5869 = vshll.u32 %v5845, 16
    %v5871 = vrot.slane %v5869, 1
    %v5872 = vsel %vm5848, %v5867, %v5871
    %v5874 = vshrl.u32 %v5842, 16
    %v5876 = vshll.u32 %v5842, 16
    %v5878 = vrot.slane %v5876, 1
    %v5879 = vor.u32 %v5874, %v5878
    %v5881 = vshll.u32 %v5846, 16
    %v5883 = vrot.slane %v5881, 1
    %v5884 = vsel %vm5848, %v5879, %v5883
    %v5886 = vshrl.u32 %v5843, 16
    %v5888 = vshll.u32 %v5843, 16
    %v5890 = vrot.slane %v5888, 1
    %v5891 = vor.u32 %v5886, %v5890
    %v5893 = vshll.u32 %v5847, 16
    %v5895 = vrot.slane %v5893, 1
    %v5896 = vsel %vm5848, %v5891, %v5895
    %v6157 = vunpack.c.l.b16 %v2278
    %v6158 = vunpack.c.h.b16 %v2278
    %v6159 = vunpack.c.l.b16 %v2279
    %v6160 = vunpack.c.h.b16 %v2279
    %v6161 = vunpack.c.l.b16 %v2280
    %v6162 = vunpack.c.h.b16 %v2280
    %v6163 = vunpack.c.l.b16 %v2281
    %v6164 = vunpack.c.h.b16 %v2281
    %v6165 = vunpack.c.l.b16 %v2282
    %v6166 = vunpack.c.h.b16 %v2282
    %v6167 = vunpack.c.l.b16 %v2283
    %v6168 = vunpack.c.h.b16 %v2283
    %v6169 = vunpack.c.l.b16 %v2284
    %v6170 = vunpack.c.h.b16 %v2284
    %v6171 = vunpack.c.l.b16 %v2285
    %v6172 = vunpack.c.h.b16 %v2285
    %v6173 = vunpack.c.l.b16 %v2286
    %v6174 = vunpack.c.h.b16 %v2286
    %v6175 = vunpack.c.l.b16 %v2287
    %v6176 = vunpack.c.h.b16 %v2287
    %v6177 = vunpack.c.l.b16 %v2288
    %v6178 = vunpack.c.h.b16 %v2288
    %v6179 = vunpack.c.l.b16 %v2289
    %v6180 = vunpack.c.h.b16 %v2289
    %v6181 = vunpack.c.l.b16 %v2290
    %v6182 = vunpack.c.h.b16 %v2290
    %v6183 = vunpack.c.l.b16 %v2291
    %v6184 = vunpack.c.h.b16 %v2291
    %v6185 = vunpack.c.l.b16 %v2292
    %v6186 = vunpack.c.h.b16 %v2292
    %v6187 = vunpack.c.l.b16 %v2293
    %v6188 = vunpack.c.h.b16 %v2293
    %v6189 = vunpack.c.l.b16 %v2294
    %v6190 = vunpack.c.h.b16 %v2294
    %v6191 = vunpack.c.l.b16 %v2295
    %v6192 = vunpack.c.h.b16 %v2295
    %v6193 = vunpack.c.l.b16 %v2296
    %v6194 = vunpack.c.h.b16 %v2296
    %v6195 = vunpack.c.l.b16 %v2297
    %v6196 = vunpack.c.h.b16 %v2297
    %v6197 = vunpack.c.l.b16 %v2298
    %v6198 = vunpack.c.h.b16 %v2298
    %v6199 = vunpack.c.l.b16 %v2299
    %v6200 = vunpack.c.h.b16 %v2299
    %v6201 = vunpack.c.l.b16 %v2300
    %v6202 = vunpack.c.h.b16 %v2300
    %v6203 = vunpack.c.l.b16 %v2301
    %v6204 = vunpack.c.h.b16 %v2301
    %v6205 = vunpack.c.l.b16 %v2302
    %v6206 = vunpack.c.h.b16 %v2302
    %v6207 = vunpack.c.l.b16 %v2303
    %v6208 = vunpack.c.h.b16 %v2303
    %v6209 = vunpack.c.l.b16 %v2304
    %v6210 = vunpack.c.h.b16 %v2304
    %v6211 = vunpack.c.l.b16 %v2305
    %v6212 = vunpack.c.h.b16 %v2305
    %v6213 = vunpack.c.l.b16 %v2306
    %v6214 = vunpack.c.h.b16 %v2306
    %v6215 = vunpack.c.l.b16 %v2307
    %v6216 = vunpack.c.h.b16 %v2307
    %v6217 = vunpack.c.l.b16 %v2308
    %v6218 = vunpack.c.h.b16 %v2308
    %v6219 = vunpack.c.l.b16 %v2309
    %v6220 = vunpack.c.h.b16 %v2309
    %v6221 = vunpack.c.l.b16 %v2310
    %v6222 = vunpack.c.h.b16 %v2310
    %v6223 = vunpack.c.l.b16 %v2311
    %v6224 = vunpack.c.h.b16 %v2311
    %v6225 = vunpack.c.l.b16 %v2312
    %v6226 = vunpack.c.h.b16 %v2312
    %v6227 = vunpack.c.l.b16 %v2313
    %v6228 = vunpack.c.h.b16 %v2313
    %v6229 = vunpack.c.l.b16 %v2314
    %v6230 = vunpack.c.h.b16 %v2314
    %v6231 = vunpack.c.l.b16 %v2315
    %v6232 = vunpack.c.h.b16 %v2315
    %v6233 = vunpack.c.l.b16 %v2316
    %v6234 = vunpack.c.h.b16 %v2316
    %v6235 = vunpack.c.l.b16 %v2317
    %v6236 = vunpack.c.h.b16 %v2317
    %v6237 = vunpack.c.l.b16 %v2318
    %v6238 = vunpack.c.h.b16 %v2318
    %v6239 = vunpack.c.l.b16 %v2319
    %v6240 = vunpack.c.h.b16 %v2319
    %v6241 = vunpack.c.l.b16 %v2320
    %v6242 = vunpack.c.h.b16 %v2320
    %v6243 = vunpack.c.l.b16 %v2321
    %v6244 = vunpack.c.h.b16 %v2321
    %v6245 = vunpack.c.l.b16 %v2322
    %v6246 = vunpack.c.h.b16 %v2322
    %v6247 = vunpack.c.l.b16 %v2323
    %v6248 = vunpack.c.h.b16 %v2323
    %v6249 = vunpack.c.l.b16 %v2324
    %v6250 = vunpack.c.h.b16 %v2324
    %v6251 = vunpack.c.l.b16 %v2325
    %v6252 = vunpack.c.h.b16 %v2325
    %v6253 = vunpack.c.l.b16 %v2326
    %v6254 = vunpack.c.h.b16 %v2326
    %v6255 = vunpack.c.l.b16 %v2327
    %v6256 = vunpack.c.h.b16 %v2327
    %v6257 = vunpack.c.l.b16 %v2328
    %v6258 = vunpack.c.h.b16 %v2328
    %v6259 = vunpack.c.l.b16 %v2329
    %v6260 = vunpack.c.h.b16 %v2329
    %v6261 = vunpack.c.l.b16 %v2330
    %v6262 = vunpack.c.h.b16 %v2330
    %v6263 = vunpack.c.l.b16 %v2331
    %v6264 = vunpack.c.h.b16 %v2331
    %v6265 = vunpack.c.l.b16 %v2332
    %v6266 = vunpack.c.h.b16 %v2332
    %v6267 = vunpack.c.l.b16 %v2333
    %v6268 = vunpack.c.h.b16 %v2333
    %v6269 = vunpack.c.l.b16 %v2334
    %v6270 = vunpack.c.h.b16 %v2334
    %v6271 = vunpack.c.l.b16 %v2335
    %v6272 = vunpack.c.h.b16 %v2335
    %v6273 = vunpack.c.l.b16 %v2336
    %v6274 = vunpack.c.h.b16 %v2336
    %v6275 = vunpack.c.l.b16 %v2337
    %v6276 = vunpack.c.h.b16 %v2337
    %v6277 = vunpack.c.l.b16 %v2338
    %v6278 = vunpack.c.h.b16 %v2338
    %v6279 = vunpack.c.l.b16 %v2339
    %v6280 = vunpack.c.h.b16 %v2339
    %v6281 = vunpack.c.l.b16 %v2340
    %v6282 = vunpack.c.h.b16 %v2340
    %v6283 = vunpack.c.l.b16 %v2341
    %v6284 = vunpack.c.h.b16 %v2341
    %v6285 = vunpack.c.l.b16 %v2342
    %v6286 = vunpack.c.h.b16 %v2342
    %v6287 = vunpack.c.l.b16 %v2343
    %v6288 = vunpack.c.h.b16 %v2343
    %v6289 = vunpack.c.l.b16 %v2344
    %v6290 = vunpack.c.h.b16 %v2344
    %v6291 = vunpack.c.l.b16 %v2345
    %v6292 = vunpack.c.h.b16 %v2345
    %v6293 = vunpack.c.l.b16 %v2346
    %v6294 = vunpack.c.h.b16 %v2346
    %v6295 = vunpack.c.l.b16 %v2347
    %v6296 = vunpack.c.h.b16 %v2347
    %v6297 = vunpack.c.l.b16 %v2348
    %v6298 = vunpack.c.h.b16 %v2348
    %v6299 = vunpack.c.l.b16 %v2349
    %v6300 = vunpack.c.h.b16 %v2349
    %v6301 = vunpack.c.l.b16 %v2350
    %v6302 = vunpack.c.h.b16 %v2350
    %v6303 = vunpack.c.l.b16 %v2351
    %v6304 = vunpack.c.h.b16 %v2351
    %v6305 = vunpack.c.l.b16 %v2352
    %v6306 = vunpack.c.h.b16 %v2352
    %v6307 = vunpack.c.l.b16 %v2353
    %v6308 = vunpack.c.h.b16 %v2353
    %v6309 = vunpack.c.l.b16 %v2354
    %v6310 = vunpack.c.h.b16 %v2354
    %v6311 = vunpack.c.l.b16 %v2355
    %v6312 = vunpack.c.h.b16 %v2355
    %v6313 = vunpack.c.l.b16 %v2356
    %v6314 = vunpack.c.h.b16 %v2356
    %v6315 = vunpack.c.l.b16 %v2357
    %v6316 = vunpack.c.h.b16 %v2357
    %v6317 = vunpack.c.l.b16 %v2358
    %v6318 = vunpack.c.h.b16 %v2358
    %v6319 = vunpack.c.l.b16 %v2359
    %v6320 = vunpack.c.h.b16 %v2359
    %v6321 = vunpack.c.l.b16 %v2360
    %v6322 = vunpack.c.h.b16 %v2360
    %v6323 = vunpack.c.l.b16 %v2361
    %v6324 = vunpack.c.h.b16 %v2361
    %v6325 = vunpack.c.l.b16 %v2362
    %v6326 = vunpack.c.h.b16 %v2362
    %v6327 = vunpack.c.l.b16 %v2363
    %v6328 = vunpack.c.h.b16 %v2363
    %v6329 = vunpack.c.l.b16 %v2364
    %v6330 = vunpack.c.h.b16 %v2364
    %v6331 = vunpack.c.l.b16 %v2365
    %v6332 = vunpack.c.h.b16 %v2365
    %v6333 = vunpack.c.l.b16 %v2366
    %v6334 = vunpack.c.h.b16 %v2366
    %v6335 = vunpack.c.l.b16 %v2367
    %v6336 = vunpack.c.h.b16 %v2367
    %v6337 = vunpack.c.l.b16 %v2368
    %v6338 = vunpack.c.h.b16 %v2368
    %v6339 = vunpack.c.l.b16 %v2369
    %v6340 = vunpack.c.h.b16 %v2369
    %v6341 = vunpack.c.l.b16 %v2370
    %v6342 = vunpack.c.h.b16 %v2370
    %v6343 = vunpack.c.l.b16 %v2371
    %v6344 = vunpack.c.h.b16 %v2371
    %v6345 = vunpack.c.l.b16 %v2372
    %v6346 = vunpack.c.h.b16 %v2372
    %v6347 = vunpack.c.l.b16 %v2373
    %v6348 = vunpack.c.h.b16 %v2373
    %v6349 = vunpack.c.l.b16 %v2374
    %v6350 = vunpack.c.h.b16 %v2374
    %v6351 = vunpack.c.l.b16 %v2375
    %v6352 = vunpack.c.h.b16 %v2375
    %v6353 = vunpack.c.l.b16 %v2376
    %v6354 = vunpack.c.h.b16 %v2376
    %v6355 = vunpack.c.l.b16 %v2377
    %v6356 = vunpack.c.h.b16 %v2377
    %v6357 = vunpack.c.l.b16 %v2378
    %v6358 = vunpack.c.h.b16 %v2378
    %v6359 = vunpack.c.l.b16 %v2379
    %v6360 = vunpack.c.h.b16 %v2379
    %v6361 = vunpack.c.l.b16 %v2380
    %v6362 = vunpack.c.h.b16 %v2380
    %v6363 = vunpack.c.l.b16 %v2381
    %v6364 = vunpack.c.h.b16 %v2381
    %v6365 = vunpack.c.l.b16 %v2382
    %v6366 = vunpack.c.h.b16 %v2382
    %v6367 = vunpack.c.l.b16 %v2383
    %v6368 = vunpack.c.h.b16 %v2383
    %v6369 = vunpack.c.l.b16 %v2384
    %v6370 = vunpack.c.h.b16 %v2384
    %v6371 = vunpack.c.l.b16 %v2385
    %v6372 = vunpack.c.h.b16 %v2385
    %v6373 = vunpack.c.l.b16 %v2386
    %v6374 = vunpack.c.h.b16 %v2386
    %v6375 = vunpack.c.l.b16 %v2387
    %v6376 = vunpack.c.h.b16 %v2387
    %v6377 = vunpack.c.l.b16 %v2388
    %v6378 = vunpack.c.h.b16 %v2388
    %v6379 = vunpack.c.l.b16 %v2389
    %v6380 = vunpack.c.h.b16 %v2389
    %v6381 = vunpack.c.l.b16 %v2390
    %v6382 = vunpack.c.h.b16 %v2390
    %v6383 = vunpack.c.l.b16 %v2391
    %v6384 = vunpack.c.h.b16 %v2391
    %v6385 = vunpack.c.l.b16 %v2392
    %v6386 = vunpack.c.h.b16 %v2392
    %v6387 = vunpack.c.l.b16 %v2393
    %v6388 = vunpack.c.h.b16 %v2393
    %v6389 = vunpack.c.l.b16 %v2394
    %v6390 = vunpack.c.h.b16 %v2394
    %v6391 = vunpack.c.l.b16 %v2395
    %v6392 = vunpack.c.h.b16 %v2395
    %v6393 = vunpack.c.l.b16 %v2396
    %v6394 = vunpack.c.h.b16 %v2396
    %v6395 = vunpack.c.l.b16 %v2397
    %v6396 = vunpack.c.h.b16 %v2397
    %v6397 = vunpack.c.l.b16 %v2398
    %v6398 = vunpack.c.h.b16 %v2398
    %v6399 = vunpack.c.l.b16 %v2399
    %v6400 = vunpack.c.h.b16 %v2399
    %v6401 = vunpack.c.l.b16 %v2400
    %v6402 = vunpack.c.h.b16 %v2400
    %v6403 = vunpack.c.l.b16 %v2401
    %v6404 = vunpack.c.h.b16 %v2401
    %v6405 = vunpack.c.l.b16 %v2402
    %v6406 = vunpack.c.h.b16 %v2402
    %v6407 = vunpack.c.l.b16 %v2403
    %v6408 = vunpack.c.h.b16 %v2403
    %v6409 = vunpack.c.l.b16 %v2404
    %v6410 = vunpack.c.h.b16 %v2404
    %v6411 = vunpack.c.l.b16 %v2405
    %v6412 = vunpack.c.h.b16 %v2405
    %v6413 = vunpack.c.l.b16 %v2406
    %v6414 = vunpack.c.h.b16 %v2406
    %v6415 = vunpack.c.l.b16 %v2407
    %v6416 = vunpack.c.h.b16 %v2407
    %v6417 = vunpack.c.l.b16 %v2408
    %v6418 = vunpack.c.h.b16 %v2408
    %v6419 = vunpack.c.l.b16 %v2409
    %v6420 = vunpack.c.h.b16 %v2409
    %v6421 = vunpack.c.l.b16 %v2410
    %v6422 = vunpack.c.h.b16 %v2410
    %v6423 = vunpack.c.l.b16 %v2411
    %v6424 = vunpack.c.h.b16 %v2411
    %v6425 = vunpack.c.l.b16 %v2412
    %v6426 = vunpack.c.h.b16 %v2412
    %v6427 = vunpack.c.l.b16 %v2413
    %v6428 = vunpack.c.h.b16 %v2413
    %v6429 = vunpack.c.l.b16 %v2414
    %v6430 = vunpack.c.h.b16 %v2414
    %v6431 = vunpack.c.l.b16 %v2415
    %v6432 = vunpack.c.h.b16 %v2415
    %v6433 = vunpack.c.l.b16 %v2416
    %v6434 = vunpack.c.h.b16 %v2416
    %v6435 = vunpack.c.l.b16 %v2417
    %v6436 = vunpack.c.h.b16 %v2417
    %v6437 = vunpack.c.l.b16 %v2418
    %v6438 = vunpack.c.h.b16 %v2418
    %v6439 = vunpack.c.l.b16 %v2419
    %v6440 = vunpack.c.h.b16 %v2419
    %v6441 = vunpack.c.l.b16 %v2420
    %v6442 = vunpack.c.h.b16 %v2420
    %v6443 = vunpack.c.l.b16 %v2421
    %v6444 = vunpack.c.h.b16 %v2421
    %v6445 = vunpack.c.l.b16 %v2422
    %v6446 = vunpack.c.h.b16 %v2422
    %v6447 = vunpack.c.l.b16 %v2423
    %v6448 = vunpack.c.h.b16 %v2423
    %v6449 = vunpack.c.l.b16 %v2424
    %v6450 = vunpack.c.h.b16 %v2424
    %v6451 = vunpack.c.l.b16 %v2425
    %v6452 = vunpack.c.h.b16 %v2425
    %v6453 = vunpack.c.l.b16 %v2426
    %v6454 = vunpack.c.h.b16 %v2426
    %v6455 = vunpack.c.l.b16 %v2427
    %v6456 = vunpack.c.h.b16 %v2427
    %v6457 = vunpack.c.l.b16 %v2428
    %v6458 = vunpack.c.h.b16 %v2428
    %v6459 = vunpack.c.l.b16 %v2429
    %v6460 = vunpack.c.h.b16 %v2429
    %v6461 = vunpack.c.l.b16 %v2430
    %v6462 = vunpack.c.h.b16 %v2430
    %v6463 = vunpack.c.l.b16 %v2431
    %v6464 = vunpack.c.h.b16 %v2431
    %v6465 = vunpack.c.l.b16 %v2432
    %v6466 = vunpack.c.h.b16 %v2432
    %v6467 = vunpack.c.l.b16 %v2433
    %v6468 = vunpack.c.h.b16 %v2433
    %v6469 = vunpack.c.l.b16 %v2434
    %v6470 = vunpack.c.h.b16 %v2434
    %v6471 = vunpack.c.l.b16 %v2435
    %v6472 = vunpack.c.h.b16 %v2435
    %v6473 = vunpack.c.l.b16 %v2436
    %v6474 = vunpack.c.h.b16 %v2436
    %v6475 = vunpack.c.l.b16 %v2437
    %v6476 = vunpack.c.h.b16 %v2437
    %v6477 = vunpack.c.l.b16 %v2438
    %v6478 = vunpack.c.h.b16 %v2438
    %v6479 = vunpack.c.l.b16 %v2439
    %v6480 = vunpack.c.h.b16 %v2439
    %v6481 = vunpack.c.l.b16 %v2440
    %v6482 = vunpack.c.h.b16 %v2440
    %v6483 = vunpack.c.l.b16 %v2441
    %v6484 = vunpack.c.h.b16 %v2441
    %v6485 = vunpack.c.l.b16 %v2442
    %v6486 = vunpack.c.h.b16 %v2442
    %v6487 = vunpack.c.l.b16 %v2443
    %v6488 = vunpack.c.h.b16 %v2443
    %v6489 = vunpack.c.l.b16 %v2444
    %v6490 = vunpack.c.h.b16 %v2444
    %v6491 = vunpack.c.l.b16 %v2445
    %v6492 = vunpack.c.h.b16 %v2445
    %v6493 = vunpack.c.l.b16 %v2446
    %v6494 = vunpack.c.h.b16 %v2446
    %v6495 = vunpack.c.l.b16 %v2447
    %v6496 = vunpack.c.h.b16 %v2447
    %v6497 = vunpack.c.l.b16 %v2448
    %v6498 = vunpack.c.h.b16 %v2448
    %v6499 = vunpack.c.l.b16 %v2449
    %v6500 = vunpack.c.h.b16 %v2449
    %v6501 = vunpack.c.l.b16 %v2450
    %v6502 = vunpack.c.h.b16 %v2450
    %v6503 = vunpack.c.l.b16 %v2451
    %v6504 = vunpack.c.h.b16 %v2451
    %v6505 = vunpack.c.l.b16 %v2452
    %v6506 = vunpack.c.h.b16 %v2452
    %v6507 = vunpack.c.l.b16 %v2453
    %v6508 = vunpack.c.h.b16 %v2453
    %v6509 = vunpack.c.l.b16 %v2454
    %v6510 = vunpack.c.h.b16 %v2454
    %v6511 = vunpack.c.l.b16 %v2455
    %v6512 = vunpack.c.h.b16 %v2455
    %v6513 = vunpack.c.l.b16 %v2456
    %v6514 = vunpack.c.h.b16 %v2456
    %v6515 = vunpack.c.l.b16 %v2457
    %v6516 = vunpack.c.h.b16 %v2457
    %v6517 = vunpack.c.l.b16 %v2458
    %v6518 = vunpack.c.h.b16 %v2458
    %v6519 = vunpack.c.l.b16 %v2459
    %v6520 = vunpack.c.h.b16 %v2459
    %v6521 = vunpack.c.l.b16 %v2460
    %v6522 = vunpack.c.h.b16 %v2460
    %v6523 = vunpack.c.l.b16 %v2461
    %v6524 = vunpack.c.h.b16 %v2461
    %v6525 = vunpack.c.l.b16 %v2462
    %v6526 = vunpack.c.h.b16 %v2462
    %v6527 = vunpack.c.l.b16 %v2463
    %v6528 = vunpack.c.h.b16 %v2463
    %v6529 = vunpack.c.l.b16 %v2464
    %v6530 = vunpack.c.h.b16 %v2464
    %v6531 = vunpack.c.l.b16 %v2465
    %v6532 = vunpack.c.h.b16 %v2465
    %v6533 = vunpack.c.l.b16 %v2466
    %v6534 = vunpack.c.h.b16 %v2466
    %v6535 = vunpack.c.l.b16 %v2467
    %v6536 = vunpack.c.h.b16 %v2467
    %v6537 = vunpack.c.l.b16 %v2468
    %v6538 = vunpack.c.h.b16 %v2468
    %v6539 = vunpack.c.l.b16 %v2469
    %v6540 = vunpack.c.h.b16 %v2469
    %v6541 = vunpack.c.l.b16 %v2470
    %v6542 = vunpack.c.h.b16 %v2470
    %v6543 = vunpack.c.l.b16 %v2471
    %v6544 = vunpack.c.h.b16 %v2471
    %v6545 = vunpack.c.l.b16 %v2472
    %v6546 = vunpack.c.h.b16 %v2472
    %v6547 = vunpack.c.l.b16 %v2473
    %v6548 = vunpack.c.h.b16 %v2473
    %v6549 = vunpack.c.l.b16 %v2474
    %v6550 = vunpack.c.h.b16 %v2474
    %v6551 = vunpack.c.l.b16 %v2475
    %v6552 = vunpack.c.h.b16 %v2475
    %v6553 = vunpack.c.l.b16 %v2476
    %v6554 = vunpack.c.h.b16 %v2476
    %v6555 = vunpack.c.l.b16 %v2477
    %v6556 = vunpack.c.h.b16 %v2477
    %v6557 = vunpack.c.l.b16 %v2478
    %v6558 = vunpack.c.h.b16 %v2478
    %v6559 = vunpack.c.l.b16 %v2479
    %v6560 = vunpack.c.h.b16 %v2479
    %v6561 = vunpack.c.l.b16 %v2480
    %v6562 = vunpack.c.h.b16 %v2480
    %v6563 = vunpack.c.l.b16 %v2481
    %v6564 = vunpack.c.h.b16 %v2481
    %v6565 = vunpack.c.l.b16 %v2482
    %v6566 = vunpack.c.h.b16 %v2482
    %v6567 = vunpack.c.l.b16 %v2483
    %v6568 = vunpack.c.h.b16 %v2483
    %v6569 = vunpack.c.l.b16 %v2484
    %v6570 = vunpack.c.h.b16 %v2484
    %v6571 = vunpack.c.l.b16 %v2485
    %v6572 = vunpack.c.h.b16 %v2485
    %v6573 = vunpack.c.l.b16 %v2486
    %v6574 = vunpack.c.h.b16 %v2486
    %v6575 = vunpack.c.l.b16 %v2487
    %v6576 = vunpack.c.h.b16 %v2487
    %v6577 = vunpack.c.l.b16 %v2488
    %v6578 = vunpack.c.h.b16 %v2488
    %v6579 = vunpack.c.l.b16 %v2489
    %v6580 = vunpack.c.h.b16 %v2489
    %v6581 = vunpack.c.l.b16 %v2490
    %v6582 = vunpack.c.h.b16 %v2490
    %v6583 = vunpack.c.l.b16 %v2491
    %v6584 = vunpack.c.h.b16 %v2491
    %v6585 = vunpack.c.l.b16 %v2492
    %v6586 = vunpack.c.h.b16 %v2492
    %v6587 = vunpack.c.l.b16 %v2493
    %v6588 = vunpack.c.h.b16 %v2493
    %v6589 = vunpack.c.l.b16 %v2494
    %v6590 = vunpack.c.h.b16 %v2494
    %v6591 = vunpack.c.l.b16 %v2495
    %v6592 = vunpack.c.h.b16 %v2495
    %v6593 = vunpack.c.l.b16 %v2496
    %v6594 = vunpack.c.h.b16 %v2496
    %v6595 = vunpack.c.l.b16 %v2497
    %v6596 = vunpack.c.h.b16 %v2497
    %v6597 = vunpack.c.l.b16 %v2498
    %v6598 = vunpack.c.h.b16 %v2498
    %v6599 = vunpack.c.l.b16 %v2499
    %v6600 = vunpack.c.h.b16 %v2499
    %v6601 = vunpack.c.l.b16 %v2500
    %v6602 = vunpack.c.h.b16 %v2500
    %v6603 = vunpack.c.l.b16 %v2501
    %v6604 = vunpack.c.h.b16 %v2501
    %v6605 = vunpack.c.l.b16 %v2502
    %v6606 = vunpack.c.h.b16 %v2502
    %v6607 = vunpack.c.l.b16 %v2503
    %v6608 = vunpack.c.h.b16 %v2503
    %v6609 = vunpack.c.l.b16 %v2504
    %v6610 = vunpack.c.h.b16 %v2504
    %v6611 = vunpack.c.l.b16 %v2505
    %v6612 = vunpack.c.h.b16 %v2505
    %v6613 = vunpack.c.l.b16 %v2506
    %v6614 = vunpack.c.h.b16 %v2506
    %v6615 = vunpack.c.l.b16 %v2507
    %v6616 = vunpack.c.h.b16 %v2507
    %v6617 = vunpack.c.l.b16 %v2508
    %v6618 = vunpack.c.h.b16 %v2508
    %v6619 = vunpack.c.l.b16 %v2509
    %v6620 = vunpack.c.h.b16 %v2509
    %v6621 = vunpack.c.l.b16 %v2510
    %v6622 = vunpack.c.h.b16 %v2510
    %v6623 = vunpack.c.l.b16 %v2511
    %v6624 = vunpack.c.h.b16 %v2511
    %v6625 = vunpack.c.l.b16 %v2512
    %v6626 = vunpack.c.h.b16 %v2512
    %v6627 = vunpack.c.l.b16 %v2513
    %v6628 = vunpack.c.h.b16 %v2513
    %v6629 = vunpack.c.l.b16 %v2514
    %v6630 = vunpack.c.h.b16 %v2514
    %v6631 = vunpack.c.l.b16 %v2515
    %v6632 = vunpack.c.h.b16 %v2515
    %v6633 = vunpack.c.l.b16 %v2516
    %v6634 = vunpack.c.h.b16 %v2516
    %v6635 = vunpack.c.l.b16 %v2517
    %v6636 = vunpack.c.h.b16 %v2517
    %v6637 = vunpack.c.l.b16 %v2518
    %v6638 = vunpack.c.h.b16 %v2518
    %v6639 = vunpack.c.l.b16 %v2519
    %v6640 = vunpack.c.h.b16 %v2519
    %v6641 = vunpack.c.l.b16 %v2520
    %v6642 = vunpack.c.h.b16 %v2520
    %v6643 = vunpack.c.l.b16 %v2521
    %v6644 = vunpack.c.h.b16 %v2521
    %v6645 = vunpack.c.l.b16 %v2522
    %v6646 = vunpack.c.h.b16 %v2522
    %v6647 = vunpack.c.l.b16 %v2523
    %v6648 = vunpack.c.h.b16 %v2523
    %v6649 = vunpack.c.l.b16 %v2524
    %v6650 = vunpack.c.h.b16 %v2524
    %v6651 = vunpack.c.l.b16 %v2525
    %v6652 = vunpack.c.h.b16 %v2525
    %v6653 = vunpack.c.l.b16 %v2526
    %v6654 = vunpack.c.h.b16 %v2526
    %v6655 = vunpack.c.l.b16 %v2527
    %v6656 = vunpack.c.h.b16 %v2527
    %v6657 = vunpack.c.l.b16 %v2528
    %v6658 = vunpack.c.h.b16 %v2528
    %v6659 = vunpack.c.l.b16 %v2529
    %v6660 = vunpack.c.h.b16 %v2529
    %v6661 = vunpack.c.l.b16 %v2530
    %v6662 = vunpack.c.h.b16 %v2530
    %v6663 = vunpack.c.l.b16 %v2531
    %v6664 = vunpack.c.h.b16 %v2531
    %v6665 = vunpack.c.l.b16 %v2532
    %v6666 = vunpack.c.h.b16 %v2532
    %v6667 = vunpack.c.l.b16 %v2533
    %v6668 = vunpack.c.h.b16 %v2533
    %v6669 = vpack.c.b16 %v6165, %v6157
    %v6670 = vpack.c.b16 %v6166, %v6158
    %v6671 = vpack.c.b16 %v6167, %v6159
    %v6672 = vpack.c.b16 %v6168, %v6160
    %v6673 = vpack.c.b16 %v6169, %v6161
    %v6674 = vpack.c.b16 %v6170, %v6162
    %v6675 = vpack.c.b16 %v6171, %v6163
    %v6676 = vpack.c.b16 %v6172, %v6164
    %v6677 = vpack.c.b16 %v6181, %v6173
    %v6678 = vpack.c.b16 %v6182, %v6174
    %v6679 = vpack.c.b16 %v6183, %v6175
    %v6680 = vpack.c.b16 %v6184, %v6176
    %v6681 = vpack.c.b16 %v6185, %v6177
    %v6682 = vpack.c.b16 %v6186, %v6178
    %v6683 = vpack.c.b16 %v6187, %v6179
    %v6684 = vpack.c.b16 %v6188, %v6180
    %v6685 = vpack.c.b16 %v6197, %v6189
    %v6686 = vpack.c.b16 %v6198, %v6190
    %v6687 = vpack.c.b16 %v6199, %v6191
    %v6688 = vpack.c.b16 %v6200, %v6192
    %v6689 = vpack.c.b16 %v6201, %v6193
    %v6690 = vpack.c.b16 %v6202, %v6194
    %v6691 = vpack.c.b16 %v6203, %v6195
    %v6692 = vpack.c.b16 %v6204, %v6196
    %v6693 = vpack.c.b16 %v6213, %v6205
    %v6694 = vpack.c.b16 %v6214, %v6206
    %v6695 = vpack.c.b16 %v6215, %v6207
    %v6696 = vpack.c.b16 %v6216, %v6208
    %v6697 = vpack.c.b16 %v6217, %v6209
    %v6698 = vpack.c.b16 %v6218, %v6210
    %v6699 = vpack.c.b16 %v6219, %v6211
    %v6700 = vpack.c.b16 %v6220, %v6212
    %v6701 = vpack.c.b16 %v6229, %v6221
    %v6702 = vpack.c.b16 %v6230, %v6222
    %v6703 = vpack.c.b16 %v6231, %v6223
    %v6704 = vpack.c.b16 %v6232, %v6224
    %v6705 = vpack.c.b16 %v6233, %v6225
    %v6706 = vpack.c.b16 %v6234, %v6226
    %v6707 = vpack.c.b16 %v6235, %v6227
    %v6708 = vpack.c.b16 %v6236, %v6228
    %v6709 = vpack.c.b16 %v6245, %v6237
    %v6710 = vpack.c.b16 %v6246, %v6238
    %v6711 = vpack.c.b16 %v6247, %v6239
    %v6712 = vpack.c.b16 %v6248, %v6240
    %v6713 = vpack.c.b16 %v6249, %v6241
    %v6714 = vpack.c.b16 %v6250, %v6242
    %v6715 = vpack.c.b16 %v6251, %v6243
    %v6716 = vpack.c.b16 %v6252, %v6244
    %v6717 = vpack.c.b16 %v6261, %v6253
    %v6718 = vpack.c.b16 %v6262, %v6254
    %v6719 = vpack.c.b16 %v6263, %v6255
    %v6720 = vpack.c.b16 %v6264, %v6256
    %v6721 = vpack.c.b16 %v6265, %v6257
    %v6722 = vpack.c.b16 %v6266, %v6258
    %v6723 = vpack.c.b16 %v6267, %v6259
    %v6724 = vpack.c.b16 %v6268, %v6260
    %v6725 = vpack.c.b16 %v6277, %v6269
    %v6726 = vpack.c.b16 %v6278, %v6270
    %v6727 = vpack.c.b16 %v6279, %v6271
    %v6728 = vpack.c.b16 %v6280, %v6272
    %v6729 = vpack.c.b16 %v6281, %v6273
    %v6730 = vpack.c.b16 %v6282, %v6274
    %v6731 = vpack.c.b16 %v6283, %v6275
    %v6732 = vpack.c.b16 %v6284, %v6276
    %v6733 = vpack.c.b16 %v6293, %v6285
    %v6734 = vpack.c.b16 %v6294, %v6286
    %v6735 = vpack.c.b16 %v6295, %v6287
    %v6736 = vpack.c.b16 %v6296, %v6288
    %v6737 = vpack.c.b16 %v6297, %v6289
    %v6738 = vpack.c.b16 %v6298, %v6290
    %v6739 = vpack.c.b16 %v6299, %v6291
    %v6740 = vpack.c.b16 %v6300, %v6292
    %v6741 = vpack.c.b16 %v6309, %v6301
    %v6742 = vpack.c.b16 %v6310, %v6302
    %v6743 = vpack.c.b16 %v6311, %v6303
    %v6744 = vpack.c.b16 %v6312, %v6304
    %v6745 = vpack.c.b16 %v6313, %v6305
    %v6746 = vpack.c.b16 %v6314, %v6306
    %v6747 = vpack.c.b16 %v6315, %v6307
    %v6748 = vpack.c.b16 %v6316, %v6308
    %v6749 = vpack.c.b16 %v6325, %v6317
    %v6750 = vpack.c.b16 %v6326, %v6318
    %v6751 = vpack.c.b16 %v6327, %v6319
    %v6752 = vpack.c.b16 %v6328, %v6320
    %v6753 = vpack.c.b16 %v6329, %v6321
    %v6754 = vpack.c.b16 %v6330, %v6322
    %v6755 = vpack.c.b16 %v6331, %v6323
    %v6756 = vpack.c.b16 %v6332, %v6324
    %v6757 = vpack.c.b16 %v6341, %v6333
    %v6758 = vpack.c.b16 %v6342, %v6334
    %v6759 = vpack.c.b16 %v6343, %v6335
    %v6760 = vpack.c.b16 %v6344, %v6336
    %v6761 = vpack.c.b16 %v6345, %v6337
    %v6762 = vpack.c.b16 %v6346, %v6338
    %v6763 = vpack.c.b16 %v6347, %v6339
    %v6764 = vpack.c.b16 %v6348, %v6340
    %v6765 = vpack.c.b16 %v6357, %v6349
    %v6766 = vpack.c.b16 %v6358, %v6350
    %v6767 = vpack.c.b16 %v6359, %v6351
    %v6768 = vpack.c.b16 %v6360, %v6352
    %v6769 = vpack.c.b16 %v6361, %v6353
    %v6770 = vpack.c.b16 %v6362, %v6354
    %v6771 = vpack.c.b16 %v6363, %v6355
    %v6772 = vpack.c.b16 %v6364, %v6356
    %v6773 = vpack.c.b16 %v6373, %v6365
    %v6774 = vpack.c.b16 %v6374, %v6366
    %v6775 = vpack.c.b16 %v6375, %v6367
    %v6776 = vpack.c.b16 %v6376, %v6368
    %v6777 = vpack.c.b16 %v6377, %v6369
    %v6778 = vpack.c.b16 %v6378, %v6370
    %v6779 = vpack.c.b16 %v6379, %v6371
    %v6780 = vpack.c.b16 %v6380, %v6372
    %v6781 = vpack.c.b16 %v6389, %v6381
    %v6782 = vpack.c.b16 %v6390, %v6382
    %v6783 = vpack.c.b16 %v6391, %v6383
    %v6784 = vpack.c.b16 %v6392, %v6384
    %v6785 = vpack.c.b16 %v6393, %v6385
    %v6786 = vpack.c.b16 %v6394, %v6386
    %v6787 = vpack.c.b16 %v6395, %v6387
    %v6788 = vpack.c.b16 %v6396, %v6388
    %v6789 = vpack.c.b16 %v6405, %v6397
    %v6790 = vpack.c.b16 %v6406, %v6398
    %v6791 = vpack.c.b16 %v6407, %v6399
    %v6792 = vpack.c.b16 %v6408, %v6400
    %v6793 = vpack.c.b16 %v6409, %v6401
    %v6794 = vpack.c.b16 %v6410, %v6402
    %v6795 = vpack.c.b16 %v6411, %v6403
    %v6796 = vpack.c.b16 %v6412, %v6404
    %v6797 = vpack.c.b16 %v6421, %v6413
    %v6798 = vpack.c.b16 %v6422, %v6414
    %v6799 = vpack.c.b16 %v6423, %v6415
    %v6800 = vpack.c.b16 %v6424, %v6416
    %v6801 = vpack.c.b16 %v6425, %v6417
    %v6802 = vpack.c.b16 %v6426, %v6418
    %v6803 = vpack.c.b16 %v6427, %v6419
    %v6804 = vpack.c.b16 %v6428, %v6420
    %v6805 = vpack.c.b16 %v6437, %v6429
    %v6806 = vpack.c.b16 %v6438, %v6430
    %v6807 = vpack.c.b16 %v6439, %v6431
    %v6808 = vpack.c.b16 %v6440, %v6432
    %v6809 = vpack.c.b16 %v6441, %v6433
    %v6810 = vpack.c.b16 %v6442, %v6434
    %v6811 = vpack.c.b16 %v6443, %v6435
    %v6812 = vpack.c.b16 %v6444, %v6436
    %v6813 = vpack.c.b16 %v6453, %v6445
    %v6814 = vpack.c.b16 %v6454, %v6446
    %v6815 = vpack.c.b16 %v6455, %v6447
    %v6816 = vpack.c.b16 %v6456, %v6448
    %v6817 = vpack.c.b16 %v6457, %v6449
    %v6818 = vpack.c.b16 %v6458, %v6450
    %v6819 = vpack.c.b16 %v6459, %v6451
    %v6820 = vpack.c.b16 %v6460, %v6452
    %v6821 = vpack.c.b16 %v6469, %v6461
    %v6822 = vpack.c.b16 %v6470, %v6462
    %v6823 = vpack.c.b16 %v6471, %v6463
    %v6824 = vpack.c.b16 %v6472, %v6464
    %v6825 = vpack.c.b16 %v6473, %v6465
    %v6826 = vpack.c.b16 %v6474, %v6466
    %v6827 = vpack.c.b16 %v6475, %v6467
    %v6828 = vpack.c.b16 %v6476, %v6468
    %v6829 = vpack.c.b16 %v6485, %v6477
    %v6830 = vpack.c.b16 %v6486, %v6478
    %v6831 = vpack.c.b16 %v6487, %v6479
    %v6832 = vpack.c.b16 %v6488, %v6480
    %v6833 = vpack.c.b16 %v6489, %v6481
    %v6834 = vpack.c.b16 %v6490, %v6482
    %v6835 = vpack.c.b16 %v6491, %v6483
    %v6836 = vpack.c.b16 %v6492, %v6484
    %v6837 = vpack.c.b16 %v6501, %v6493
    %v6838 = vpack.c.b16 %v6502, %v6494
    %v6839 = vpack.c.b16 %v6503, %v6495
    %v6840 = vpack.c.b16 %v6504, %v6496
    %v6841 = vpack.c.b16 %v6505, %v6497
    %v6842 = vpack.c.b16 %v6506, %v6498
    %v6843 = vpack.c.b16 %v6507, %v6499
    %v6844 = vpack.c.b16 %v6508, %v6500
    %v6845 = vpack.c.b16 %v6517, %v6509
    %v6846 = vpack.c.b16 %v6518, %v6510
    %v6847 = vpack.c.b16 %v6519, %v6511
    %v6848 = vpack.c.b16 %v6520, %v6512
    %v6849 = vpack.c.b16 %v6521, %v6513
    %v6850 = vpack.c.b16 %v6522, %v6514
    %v6851 = vpack.c.b16 %v6523, %v6515
    %v6852 = vpack.c.b16 %v6524, %v6516
    %v6853 = vpack.c.b16 %v6533, %v6525
    %v6854 = vpack.c.b16 %v6534, %v6526
    %v6855 = vpack.c.b16 %v6535, %v6527
    %v6856 = vpack.c.b16 %v6536, %v6528
    %v6857 = vpack.c.b16 %v6537, %v6529
    %v6858 = vpack.c.b16 %v6538, %v6530
    %v6859 = vpack.c.b16 %v6539, %v6531
    %v6860 = vpack.c.b16 %v6540, %v6532
    %v6861 = vpack.c.b16 %v6549, %v6541
    %v6862 = vpack.c.b16 %v6550, %v6542
    %v6863 = vpack.c.b16 %v6551, %v6543
    %v6864 = vpack.c.b16 %v6552, %v6544
    %v6865 = vpack.c.b16 %v6553, %v6545
    %v6866 = vpack.c.b16 %v6554, %v6546
    %v6867 = vpack.c.b16 %v6555, %v6547
    %v6868 = vpack.c.b16 %v6556, %v6548
    %v6869 = vpack.c.b16 %v6565, %v6557
    %v6870 = vpack.c.b16 %v6566, %v6558
    %v6871 = vpack.c.b16 %v6567, %v6559
    %v6872 = vpack.c.b16 %v6568, %v6560
    %v6873 = vpack.c.b16 %v6569, %v6561
    %v6874 = vpack.c.b16 %v6570, %v6562
    %v6875 = vpack.c.b16 %v6571, %v6563
    %v6876 = vpack.c.b16 %v6572, %v6564
    %v6877 = vpack.c.b16 %v6581, %v6573
    %v6878 = vpack.c.b16 %v6582, %v6574
    %v6879 = vpack.c.b16 %v6583, %v6575
    %v6880 = vpack.c.b16 %v6584, %v6576
    %v6881 = vpack.c.b16 %v6585, %v6577
    %v6882 = vpack.c.b16 %v6586, %v6578
    %v6883 = vpack.c.b16 %v6587, %v6579
    %v6884 = vpack.c.b16 %v6588, %v6580
    %v6885 = vpack.c.b16 %v6597, %v6589
    %v6886 = vpack.c.b16 %v6598, %v6590
    %v6887 = vpack.c.b16 %v6599, %v6591
    %v6888 = vpack.c.b16 %v6600, %v6592
    %v6889 = vpack.c.b16 %v6601, %v6593
    %v6890 = vpack.c.b16 %v6602, %v6594
    %v6891 = vpack.c.b16 %v6603, %v6595
    %v6892 = vpack.c.b16 %v6604, %v6596
    %v6893 = vpack.c.b16 %v6613, %v6605
    %v6894 = vpack.c.b16 %v6614, %v6606
    %v6895 = vpack.c.b16 %v6615, %v6607
    %v6896 = vpack.c.b16 %v6616, %v6608
    %v6897 = vpack.c.b16 %v6617, %v6609
    %v6898 = vpack.c.b16 %v6618, %v6610
    %v6899 = vpack.c.b16 %v6619, %v6611
    %v6900 = vpack.c.b16 %v6620, %v6612
    %v6901 = vpack.c.b16 %v6629, %v6621
    %v6902 = vpack.c.b16 %v6630, %v6622
    %v6903 = vpack.c.b16 %v6631, %v6623
    %v6904 = vpack.c.b16 %v6632, %v6624
    %v6905 = vpack.c.b16 %v6633, %v6625
    %v6906 = vpack.c.b16 %v6634, %v6626
    %v6907 = vpack.c.b16 %v6635, %v6627
    %v6908 = vpack.c.b16 %v6636, %v6628
    %v6909 = vpack.c.b16 %v6645, %v6637
    %v6910 = vpack.c.b16 %v6646, %v6638
    %v6911 = vpack.c.b16 %v6647, %v6639
    %v6912 = vpack.c.b16 %v6648, %v6640
    %v6913 = vpack.c.b16 %v6649, %v6641
    %v6914 = vpack.c.b16 %v6650, %v6642
    %v6915 = vpack.c.b16 %v6651, %v6643
    %v6916 = vpack.c.b16 %v6652, %v6644
    %v6917 = vpack.c.b16 %v6661, %v6653
    %v6918 = vpack.c.b16 %v6662, %v6654
    %v6919 = vpack.c.b16 %v6663, %v6655
    %v6920 = vpack.c.b16 %v6664, %v6656
    %v6921 = vpack.c.b16 %v6665, %v6657
    %v6922 = vpack.c.b16 %v6666, %v6658
    %v6923 = vpack.c.b16 %v6667, %v6659
    %v6924 = vpack.c.b16 %v6668, %v6660
    %7181 = vmatprep.subr.bf16.mxu0 %v6726
    %7182 = vmatpush1.bf16.msra.mxu0 %v6725
    %7183 = vmatprep.subr.bf16.mxu0 %v6718
    %7184 = vmatpush1.bf16.msra.mxu0 %v6717
    %7185 = vmatprep.subr.bf16.mxu0 %v6710
    %7186 = vmatpush1.bf16.msra.mxu0 %v6709
    %7187 = vmatprep.subr.bf16.mxu0 %v6702
    %7188 = vmatpush1.bf16.msra.mxu0 %v6701
    %7189 = vmatprep.subr.bf16.mxu0 %v6694
    %7190 = vmatpush1.bf16.msra.mxu0 %v6693
    %7191 = vmatprep.subr.bf16.mxu0 %v6686
    %7192 = vmatpush1.bf16.msra.mxu0 %v6685
    %7193 = vmatprep.subr.bf16.mxu0 %v6678
    %7194 = vmatpush1.bf16.msra.mxu0 %v6677
    %7195 = vmatprep.subr.bf16.mxu0 %v6670
    %7196 = vmatpush1.bf16.msra.mxu0 %v6669
    %7197 = vmatprep.subr.bf16.mxu0 %v6790
    %7198 = vmatpush2.bf16.msra.mxu0 %v6789
    %7199 = vmatprep.subr.bf16.mxu0 %v6782
    %7200 = vmatpush2.bf16.msra.mxu0 %v6781
    %7201 = vmatprep.subr.bf16.mxu0 %v6774
    %7202 = vmatpush2.bf16.msra.mxu0 %v6773
    %7203 = vmatprep.subr.bf16.mxu0 %v6766
    %7204 = vmatpush2.bf16.msra.mxu0 %v6765
    %7205 = vmatprep.subr.bf16.mxu0 %v6758
    %7206 = vmatpush2.bf16.msra.mxu0 %v6757
    %7207 = vmatprep.subr.bf16.mxu0 %v6750
    %7208 = vmatpush2.bf16.msra.mxu0 %v6749
    %7209 = vmatprep.subr.bf16.mxu0 %v6742
    %7210 = vmatpush2.bf16.msra.mxu0 %v6741
    %7211 = vmatprep.subr.bf16.mxu0 %v6734
    %7212 = vmatpush2.bf16.msra.mxu0 %v6733
    %7213 = vmatprep.mubr.bf16.mxu0 %v5872
    %7214 = vmatmul.mubr.bf16.gmra.mxu0 %v5860
    %v7215 = vpop.f32.mrf.mxu0
    %v7216 = vadd.f32 0.0, %v7215
    %v7217 = vpop.f32.mrf.mxu0
    %v7218 = vadd.f32 0.0, %v7217
    %v7219 = vpop.f32.mrf.mxu0
    %v7220 = vadd.f32 0.0, %v7219
    %v7221 = vpop.f32.mrf.mxu0
    %v7222 = vadd.f32 0.0, %v7221
    %7223 = vdwg.mxu0
    %7224 = vmatprep.subr.bf16.mxu0 %v6854
    %7225 = vmatpush1.bf16.msra.mxu0 %v6853
    %7226 = vmatprep.subr.bf16.mxu0 %v6846
    %7227 = vmatpush1.bf16.msra.mxu0 %v6845
    %7228 = vmatprep.subr.bf16.mxu0 %v6838
    %7229 = vmatpush1.bf16.msra.mxu0 %v6837
    %7230 = vmatprep.subr.bf16.mxu0 %v6830
    %7231 = vmatpush1.bf16.msra.mxu0 %v6829
    %7232 = vmatprep.subr.bf16.mxu0 %v6822
    %7233 = vmatpush1.bf16.msra.mxu0 %v6821
    %7234 = vmatprep.subr.bf16.mxu0 %v6814
    %7235 = vmatpush1.bf16.msra.mxu0 %v6813
    %7236 = vmatprep.subr.bf16.mxu0 %v6806
    %7237 = vmatpush1.bf16.msra.mxu0 %v6805
    %7238 = vmatprep.subr.bf16.mxu0 %v6798
    %7239 = vmatpush1.bf16.msra.mxu0 %v6797
    %7240 = vmatprep.subr.bf16.mxu0 %v6918
    %7241 = vmatpush2.bf16.msra.mxu0 %v6917
    %7242 = vmatprep.subr.bf16.mxu0 %v6910
    %7243 = vmatpush2.bf16.msra.mxu0 %v6909
    %7244 = vmatprep.subr.bf16.mxu0 %v6902
    %7245 = vmatpush2.bf16.msra.mxu0 %v6901
    %7246 = vmatprep.subr.bf16.mxu0 %v6894
    %7247 = vmatpush2.bf16.msra.mxu0 %v6893
    %7248 = vmatprep.subr.bf16.mxu0 %v6886
    %7249 = vmatpush2.bf16.msra.mxu0 %v6885
    %7250 = vmatprep.subr.bf16.mxu0 %v6878
    %7251 = vmatpush2.bf16.msra.mxu0 %v6877
    %7252 = vmatprep.subr.bf16.mxu0 %v6870
    %7253 = vmatpush2.bf16.msra.mxu0 %v6869
    %7254 = vmatprep.subr.bf16.mxu0 %v6862
    %7255 = vmatpush2.bf16.msra.mxu0 %v6861
    %7256 = vmatprep.mubr.bf16.mxu0 %v5896
    %7257 = vmatmul.mubr.bf16.gmra.mxu0 %v5884
    %v7258 = vpop.f32.mrf.mxu0
    %v7259 = vadd.f32 %v7216, %v7258
    %v7260 = vpop.f32.mrf.mxu0
    %v7261 = vadd.f32 %v7218, %v7260
    %v7262 = vpop.f32.mrf.mxu0
    %v7263 = vadd.f32 %v7220, %v7262
    %v7264 = vpop.f32.mrf.mxu0
    %v7265 = vadd.f32 %v7222, %v7264
    %7266 = vdwg.mxu0
    %7267 = vmatprep.subr.bf16.mxu0 %v6728
    %7268 = vmatpush1.bf16.msra.mxu0 %v6727
    %7269 = vmatprep.subr.bf16.mxu0 %v6720
    %7270 = vmatpush1.bf16.msra.mxu0 %v6719
    %7271 = vmatprep.subr.bf16.mxu0 %v6712
    %7272 = vmatpush1.bf16.msra.mxu0 %v6711
    %7273 = vmatprep.subr.bf16.mxu0 %v6704
    %7274 = vmatpush1.bf16.msra.mxu0 %v6703
    %7275 = vmatprep.subr.bf16.mxu0 %v6696
    %7276 = vmatpush1.bf16.msra.mxu0 %v6695
    %7277 = vmatprep.subr.bf16.mxu0 %v6688
    %7278 = vmatpush1.bf16.msra.mxu0 %v6687
    %7279 = vmatprep.subr.bf16.mxu0 %v6680
    %7280 = vmatpush1.bf16.msra.mxu0 %v6679
    %7281 = vmatprep.subr.bf16.mxu0 %v6672
    %7282 = vmatpush1.bf16.msra.mxu0 %v6671
    %7283 = vmatprep.subr.bf16.mxu0 %v6792
    %7284 = vmatpush2.bf16.msra.mxu0 %v6791
    %7285 = vmatprep.subr.bf16.mxu0 %v6784
    %7286 = vmatpush2.bf16.msra.mxu0 %v6783
    %7287 = vmatprep.subr.bf16.mxu0 %v6776
    %7288 = vmatpush2.bf16.msra.mxu0 %v6775
    %7289 = vmatprep.subr.bf16.mxu0 %v6768
    %7290 = vmatpush2.bf16.msra.mxu0 %v6767
    %7291 = vmatprep.subr.bf16.mxu0 %v6760
    %7292 = vmatpush2.bf16.msra.mxu0 %v6759
    %7293 = vmatprep.subr.bf16.mxu0 %v6752
    %7294 = vmatpush2.bf16.msra.mxu0 %v6751
    %7295 = vmatprep.subr.bf16.mxu0 %v6744
    %7296 = vmatpush2.bf16.msra.mxu0 %v6743
    %7297 = vmatprep.subr.bf16.mxu0 %v6736
    %7298 = vmatpush2.bf16.msra.mxu0 %v6735
    %7299 = vmatprep.mubr.bf16.mxu0 %v5872
    %7300 = vmatmul.mubr.bf16.gmra.mxu0 %v5860
    %v7301 = vpop.f32.mrf.mxu0
    %v7302 = vadd.f32 0.0, %v7301
    %v7303 = vpop.f32.mrf.mxu0
    %v7304 = vadd.f32 0.0, %v7303
    %v7305 = vpop.f32.mrf.mxu0
    %v7306 = vadd.f32 0.0, %v7305
    %v7307 = vpop.f32.mrf.mxu0
    %v7308 = vadd.f32 0.0, %v7307
    %7309 = vdwg.mxu0
    %7310 = vmatprep.subr.bf16.mxu0 %v6856
    %7311 = vmatpush1.bf16.msra.mxu0 %v6855
    %7312 = vmatprep.subr.bf16.mxu0 %v6848
    %7313 = vmatpush1.bf16.msra.mxu0 %v6847
    %7314 = vmatprep.subr.bf16.mxu0 %v6840
    %7315 = vmatpush1.bf16.msra.mxu0 %v6839
    %7316 = vmatprep.subr.bf16.mxu0 %v6832
    %7317 = vmatpush1.bf16.msra.mxu0 %v6831
    %7318 = vmatprep.subr.bf16.mxu0 %v6824
    %7319 = vmatpush1.bf16.msra.mxu0 %v6823
    %7320 = vmatprep.subr.bf16.mxu0 %v6816
    %7321 = vmatpush1.bf16.msra.mxu0 %v6815
    %7322 = vmatprep.subr.bf16.mxu0 %v6808
    %7323 = vmatpush1.bf16.msra.mxu0 %v6807
    %7324 = vmatprep.subr.bf16.mxu0 %v6800
    %7325 = vmatpush1.bf16.msra.mxu0 %v6799
    %7326 = vmatprep.subr.bf16.mxu0 %v6920
    %7327 = vmatpush2.bf16.msra.mxu0 %v6919
    %7328 = vmatprep.subr.bf16.mxu0 %v6912
    %7329 = vmatpush2.bf16.msra.mxu0 %v6911
    %7330 = vmatprep.subr.bf16.mxu0 %v6904
    %7331 = vmatpush2.bf16.msra.mxu0 %v6903
    %7332 = vmatprep.subr.bf16.mxu0 %v6896
    %7333 = vmatpush2.bf16.msra.mxu0 %v6895
    %7334 = vmatprep.subr.bf16.mxu0 %v6888
    %7335 = vmatpush2.bf16.msra.mxu0 %v6887
    %7336 = vmatprep.subr.bf16.mxu0 %v6880
    %7337 = vmatpush2.bf16.msra.mxu0 %v6879
    %7338 = vmatprep.subr.bf16.mxu0 %v6872
    %7339 = vmatpush2.bf16.msra.mxu0 %v6871
    %7340 = vmatprep.subr.bf16.mxu0 %v6864
    %7341 = vmatpush2.bf16.msra.mxu0 %v6863
    %7342 = vmatprep.mubr.bf16.mxu0 %v5896
    %7343 = vmatmul.mubr.bf16.gmra.mxu0 %v5884
    %v7344 = vpop.f32.mrf.mxu0
    %v7345 = vadd.f32 %v7302, %v7344
    %v7346 = vpop.f32.mrf.mxu0
    %v7347 = vadd.f32 %v7304, %v7346
    %v7348 = vpop.f32.mrf.mxu0
    %v7349 = vadd.f32 %v7306, %v7348
    %v7350 = vpop.f32.mrf.mxu0
    %v7351 = vadd.f32 %v7308, %v7350
    %7352 = vdwg.mxu0
    %7353 = vmatprep.subr.bf16.mxu0 %v6730
    %7354 = vmatpush1.bf16.msra.mxu0 %v6729
    %7355 = vmatprep.subr.bf16.mxu0 %v6722
    %7356 = vmatpush1.bf16.msra.mxu0 %v6721
    %7357 = vmatprep.subr.bf16.mxu0 %v6714
    %7358 = vmatpush1.bf16.msra.mxu0 %v6713
    %7359 = vmatprep.subr.bf16.mxu0 %v6706
    %7360 = vmatpush1.bf16.msra.mxu0 %v6705
    %7361 = vmatprep.subr.bf16.mxu0 %v6698
    %7362 = vmatpush1.bf16.msra.mxu0 %v6697
    %7363 = vmatprep.subr.bf16.mxu0 %v6690
    %7364 = vmatpush1.bf16.msra.mxu0 %v6689
    %7365 = vmatprep.subr.bf16.mxu0 %v6682
    %7366 = vmatpush1.bf16.msra.mxu0 %v6681
    %7367 = vmatprep.subr.bf16.mxu0 %v6674
    %7368 = vmatpush1.bf16.msra.mxu0 %v6673
    %7369 = vmatprep.subr.bf16.mxu0 %v6794
    %7370 = vmatpush2.bf16.msra.mxu0 %v6793
    %7371 = vmatprep.subr.bf16.mxu0 %v6786
    %7372 = vmatpush2.bf16.msra.mxu0 %v6785
    %7373 = vmatprep.subr.bf16.mxu0 %v6778
    %7374 = vmatpush2.bf16.msra.mxu0 %v6777
    %7375 = vmatprep.subr.bf16.mxu0 %v6770
    %7376 = vmatpush2.bf16.msra.mxu0 %v6769
    %7377 = vmatprep.subr.bf16.mxu0 %v6762
    %7378 = vmatpush2.bf16.msra.mxu0 %v6761
    %7379 = vmatprep.subr.bf16.mxu0 %v6754
    %7380 = vmatpush2.bf16.msra.mxu0 %v6753
    %7381 = vmatprep.subr.bf16.mxu0 %v6746
    %7382 = vmatpush2.bf16.msra.mxu0 %v6745
    %7383 = vmatprep.subr.bf16.mxu0 %v6738
    %7384 = vmatpush2.bf16.msra.mxu0 %v6737
    %7385 = vmatprep.mubr.bf16.mxu0 %v5872
    %7386 = vmatmul.mubr.bf16.gmra.mxu0 %v5860
    %v7387 = vpop.f32.mrf.mxu0
    %v7388 = vadd.f32 0.0, %v7387
    %v7389 = vpop.f32.mrf.mxu0
    %v7390 = vadd.f32 0.0, %v7389
    %v7391 = vpop.f32.mrf.mxu0
    %v7392 = vadd.f32 0.0, %v7391
    %v7393 = vpop.f32.mrf.mxu0
    %v7394 = vadd.f32 0.0, %v7393
    %7395 = vdwg.mxu0
    %7396 = vmatprep.subr.bf16.mxu0 %v6858
    %7397 = vmatpush1.bf16.msra.mxu0 %v6857
    %7398 = vmatprep.subr.bf16.mxu0 %v6850
    %7399 = vmatpush1.bf16.msra.mxu0 %v6849
    %7400 = vmatprep.subr.bf16.mxu0 %v6842
    %7401 = vmatpush1.bf16.msra.mxu0 %v6841
    %7402 = vmatprep.subr.bf16.mxu0 %v6834
    %7403 = vmatpush1.bf16.msra.mxu0 %v6833
    %7404 = vmatprep.subr.bf16.mxu0 %v6826
    %7405 = vmatpush1.bf16.msra.mxu0 %v6825
    %7406 = vmatprep.subr.bf16.mxu0 %v6818
    %7407 = vmatpush1.bf16.msra.mxu0 %v6817
    %7408 = vmatprep.subr.bf16.mxu0 %v6810
    %7409 = vmatpush1.bf16.msra.mxu0 %v6809
    %7410 = vmatprep.subr.bf16.mxu0 %v6802
    %7411 = vmatpush1.bf16.msra.mxu0 %v6801
    %7412 = vmatprep.subr.bf16.mxu0 %v6922
    %7413 = vmatpush2.bf16.msra.mxu0 %v6921
    %7414 = vmatprep.subr.bf16.mxu0 %v6914
    %7415 = vmatpush2.bf16.msra.mxu0 %v6913
    %7416 = vmatprep.subr.bf16.mxu0 %v6906
    %7417 = vmatpush2.bf16.msra.mxu0 %v6905
    %7418 = vmatprep.subr.bf16.mxu0 %v6898
    %7419 = vmatpush2.bf16.msra.mxu0 %v6897
    %7420 = vmatprep.subr.bf16.mxu0 %v6890
    %7421 = vmatpush2.bf16.msra.mxu0 %v6889
    %7422 = vmatprep.subr.bf16.mxu0 %v6882
    %7423 = vmatpush2.bf16.msra.mxu0 %v6881
    %7424 = vmatprep.subr.bf16.mxu0 %v6874
    %7425 = vmatpush2.bf16.msra.mxu0 %v6873
    %7426 = vmatprep.subr.bf16.mxu0 %v6866
    %7427 = vmatpush2.bf16.msra.mxu0 %v6865
    %7428 = vmatprep.mubr.bf16.mxu0 %v5896
    %7429 = vmatmul.mubr.bf16.gmra.mxu0 %v5884
    %v7430 = vpop.f32.mrf.mxu0
    %v7431 = vadd.f32 %v7388, %v7430
    %v7432 = vpop.f32.mrf.mxu0
    %v7433 = vadd.f32 %v7390, %v7432
    %v7434 = vpop.f32.mrf.mxu0
    %v7435 = vadd.f32 %v7392, %v7434
    %v7436 = vpop.f32.mrf.mxu0
    %v7437 = vadd.f32 %v7394, %v7436
    %7438 = vdwg.mxu0
    %7439 = vmatprep.subr.bf16.mxu0 %v6732
    %7440 = vmatpush1.bf16.msra.mxu0 %v6731
    %7441 = vmatprep.subr.bf16.mxu0 %v6724
    %7442 = vmatpush1.bf16.msra.mxu0 %v6723
    %7443 = vmatprep.subr.bf16.mxu0 %v6716
    %7444 = vmatpush1.bf16.msra.mxu0 %v6715
    %7445 = vmatprep.subr.bf16.mxu0 %v6708
    %7446 = vmatpush1.bf16.msra.mxu0 %v6707
    %7447 = vmatprep.subr.bf16.mxu0 %v6700
    %7448 = vmatpush1.bf16.msra.mxu0 %v6699
    %7449 = vmatprep.subr.bf16.mxu0 %v6692
    %7450 = vmatpush1.bf16.msra.mxu0 %v6691
    %7451 = vmatprep.subr.bf16.mxu0 %v6684
    %7452 = vmatpush1.bf16.msra.mxu0 %v6683
    %7453 = vmatprep.subr.bf16.mxu0 %v6676
    %7454 = vmatpush1.bf16.msra.mxu0 %v6675
    %7455 = vmatprep.subr.bf16.mxu0 %v6796
    %7456 = vmatpush2.bf16.msra.mxu0 %v6795
    %7457 = vmatprep.subr.bf16.mxu0 %v6788
    %7458 = vmatpush2.bf16.msra.mxu0 %v6787
    %7459 = vmatprep.subr.bf16.mxu0 %v6780
    %7460 = vmatpush2.bf16.msra.mxu0 %v6779
    %7461 = vmatprep.subr.bf16.mxu0 %v6772
    %7462 = vmatpush2.bf16.msra.mxu0 %v6771
    %7463 = vmatprep.subr.bf16.mxu0 %v6764
    %7464 = vmatpush2.bf16.msra.mxu0 %v6763
    %7465 = vmatprep.subr.bf16.mxu0 %v6756
    %7466 = vmatpush2.bf16.msra.mxu0 %v6755
    %7467 = vmatprep.subr.bf16.mxu0 %v6748
    %7468 = vmatpush2.bf16.msra.mxu0 %v6747
    %7469 = vmatprep.subr.bf16.mxu0 %v6740
    %7470 = vmatpush2.bf16.msra.mxu0 %v6739
    %7471 = vmatprep.mubr.bf16.mxu0 %v5872
    %7472 = vmatmul.mubr.bf16.gmra.mxu0 %v5860
    %v7473 = vpop.f32.mrf.mxu0
    %v7474 = vadd.f32 0.0, %v7473
    %v7475 = vpop.f32.mrf.mxu0
    %v7476 = vadd.f32 0.0, %v7475
    %v7477 = vpop.f32.mrf.mxu0
    %v7478 = vadd.f32 0.0, %v7477
    %v7479 = vpop.f32.mrf.mxu0
    %v7480 = vadd.f32 0.0, %v7479
    %7481 = vdwg.mxu0
    %7482 = vmatprep.subr.bf16.mxu0 %v6860
    %7483 = vmatpush1.bf16.msra.mxu0 %v6859
    %7484 = vmatprep.subr.bf16.mxu0 %v6852
    %7485 = vmatpush1.bf16.msra.mxu0 %v6851
    %7486 = vmatprep.subr.bf16.mxu0 %v6844
    %7487 = vmatpush1.bf16.msra.mxu0 %v6843
    %7488 = vmatprep.subr.bf16.mxu0 %v6836
    %7489 = vmatpush1.bf16.msra.mxu0 %v6835
    %7490 = vmatprep.subr.bf16.mxu0 %v6828
    %7491 = vmatpush1.bf16.msra.mxu0 %v6827
    %7492 = vmatprep.subr.bf16.mxu0 %v6820
    %7493 = vmatpush1.bf16.msra.mxu0 %v6819
    %7494 = vmatprep.subr.bf16.mxu0 %v6812
    %7495 = vmatpush1.bf16.msra.mxu0 %v6811
    %7496 = vmatprep.subr.bf16.mxu0 %v6804
    %7497 = vmatpush1.bf16.msra.mxu0 %v6803
    %7498 = vmatprep.subr.bf16.mxu0 %v6924
    %7499 = vmatpush2.bf16.msra.mxu0 %v6923
    %7500 = vmatprep.subr.bf16.mxu0 %v6916
    %7501 = vmatpush2.bf16.msra.mxu0 %v6915
    %7502 = vmatprep.subr.bf16.mxu0 %v6908
    %7503 = vmatpush2.bf16.msra.mxu0 %v6907
    %7504 = vmatprep.subr.bf16.mxu0 %v6900
    %7505 = vmatpush2.bf16.msra.mxu0 %v6899
    %7506 = vmatprep.subr.bf16.mxu0 %v6892
    %7507 = vmatpush2.bf16.msra.mxu0 %v6891
    %7508 = vmatprep.subr.bf16.mxu0 %v6884
    %7509 = vmatpush2.bf16.msra.mxu0 %v6883
    %7510 = vmatprep.subr.bf16.mxu0 %v6876
    %7511 = vmatpush2.bf16.msra.mxu0 %v6875
    %7512 = vmatprep.subr.bf16.mxu0 %v6868
    %7513 = vmatpush2.bf16.msra.mxu0 %v6867
    %7514 = vmatprep.mubr.bf16.mxu0 %v5896
    %7515 = vmatmul.mubr.bf16.gmra.mxu0 %v5884
    %v7516 = vpop.f32.mrf.mxu0
    %v7517 = vadd.f32 %v7474, %v7516
    %v7518 = vpop.f32.mrf.mxu0
    %v7519 = vadd.f32 %v7476, %v7518
    %v7520 = vpop.f32.mrf.mxu0
    %v7521 = vadd.f32 %v7478, %v7520
    %v7522 = vpop.f32.mrf.mxu0
    %v7523 = vadd.f32 %v7480, %v7522
    %7524 = vdwg.mxu0
    %v7525 = vadd.f32 %v5556, %v7259
    %v7526 = vadd.f32 %v5558, %v7261
    %v7527 = vadd.f32 %v5642, %v7345
    %v7528 = vadd.f32 %v5644, %v7347
    %v7529 = vadd.f32 %v5728, %v7431
    %v7530 = vadd.f32 %v5730, %v7433
    %v7531 = vadd.f32 %v5814, %v7517
    %v7532 = vadd.f32 %v5816, %v7519
    %v7533 = vadd.f32 %v5560, %v7263
    %v7534 = vadd.f32 %v5562, %v7265
    %v7535 = vadd.f32 %v5646, %v7349
    %v7536 = vadd.f32 %v5648, %v7351
    %v7537 = vadd.f32 %v5732, %v7435
    %v7538 = vadd.f32 %v5734, %v7437
    %v7539 = vadd.f32 %v5818, %v7521
    %v7540 = vadd.f32 %v5820, %v7523
    %7541 = vmatprep.subr.bf16.mxu0 %v3379
    %7542 = vmatpush1.bf16.msra.mxu0 %v3378
    %7543 = vmatprep.subr.bf16.mxu0 %v3371
    %7544 = vmatpush1.bf16.msra.mxu0 %v3370
    %7545 = vmatprep.subr.bf16.mxu0 %v3363
    %7546 = vmatpush1.bf16.msra.mxu0 %v3362
    %7547 = vmatprep.subr.bf16.mxu0 %v3355
    %7548 = vmatpush1.bf16.msra.mxu0 %v3354
    %7549 = vmatprep.subr.bf16.mxu0 %v3347
    %7550 = vmatpush1.bf16.msra.mxu0 %v3346
    %7551 = vmatprep.subr.bf16.mxu0 %v3339
    %7552 = vmatpush1.bf16.msra.mxu0 %v3338
    %7553 = vmatprep.subr.bf16.mxu0 %v3331
    %7554 = vmatpush1.bf16.msra.mxu0 %v3330
    %7555 = vmatprep.subr.bf16.mxu0 %v3323
    %7556 = vmatpush1.bf16.msra.mxu0 %v3322
    %7557 = vmatprep.subr.bf16.mxu0 %v3443
    %7558 = vmatpush2.bf16.msra.mxu0 %v3442
    %7559 = vmatprep.subr.bf16.mxu0 %v3435
    %7560 = vmatpush2.bf16.msra.mxu0 %v3434
    %7561 = vmatprep.subr.bf16.mxu0 %v3427
    %7562 = vmatpush2.bf16.msra.mxu0 %v3426
    %7563 = vmatprep.subr.bf16.mxu0 %v3419
    %7564 = vmatpush2.bf16.msra.mxu0 %v3418
    %7565 = vmatprep.subr.bf16.mxu0 %v3411
    %7566 = vmatpush2.bf16.msra.mxu0 %v3410
    %7567 = vmatprep.subr.bf16.mxu0 %v3403
    %7568 = vmatpush2.bf16.msra.mxu0 %v3402
    %7569 = vmatprep.subr.bf16.mxu0 %v3395
    %7570 = vmatpush2.bf16.msra.mxu0 %v3394
    %7571 = vmatprep.subr.bf16.mxu0 %v3387
    %7572 = vmatpush2.bf16.msra.mxu0 %v3386
    %7573 = vmatprep.mubr.bf16.mxu0 %v5872
    %7574 = vmatmul.mubr.bf16.gmra.mxu0 %v5860
    %v7575 = vpop.f32.mrf.mxu0
    %v7576 = vadd.f32 0.0, %v7575
    %v7577 = vpop.f32.mrf.mxu0
    %v7578 = vadd.f32 0.0, %v7577
    %v7579 = vpop.f32.mrf.mxu0
    %v7580 = vadd.f32 0.0, %v7579
    %v7581 = vpop.f32.mrf.mxu0
    %v7582 = vadd.f32 0.0, %v7581
    %7583 = vdwg.mxu0
    %7584 = vmatprep.subr.bf16.mxu0 %v3507
    %7585 = vmatpush1.bf16.msra.mxu0 %v3506
    %7586 = vmatprep.subr.bf16.mxu0 %v3499
    %7587 = vmatpush1.bf16.msra.mxu0 %v3498
    %7588 = vmatprep.subr.bf16.mxu0 %v3491
    %7589 = vmatpush1.bf16.msra.mxu0 %v3490
    %7590 = vmatprep.subr.bf16.mxu0 %v3483
    %7591 = vmatpush1.bf16.msra.mxu0 %v3482
    %7592 = vmatprep.subr.bf16.mxu0 %v3475
    %7593 = vmatpush1.bf16.msra.mxu0 %v3474
    %7594 = vmatprep.subr.bf16.mxu0 %v3467
    %7595 = vmatpush1.bf16.msra.mxu0 %v3466
    %7596 = vmatprep.subr.bf16.mxu0 %v3459
    %7597 = vmatpush1.bf16.msra.mxu0 %v3458
    %7598 = vmatprep.subr.bf16.mxu0 %v3451
    %7599 = vmatpush1.bf16.msra.mxu0 %v3450
    %7600 = vmatprep.subr.bf16.mxu0 %v3571
    %7601 = vmatpush2.bf16.msra.mxu0 %v3570
    %7602 = vmatprep.subr.bf16.mxu0 %v3563
    %7603 = vmatpush2.bf16.msra.mxu0 %v3562
    %7604 = vmatprep.subr.bf16.mxu0 %v3555
    %7605 = vmatpush2.bf16.msra.mxu0 %v3554
    %7606 = vmatprep.subr.bf16.mxu0 %v3547
    %7607 = vmatpush2.bf16.msra.mxu0 %v3546
    %7608 = vmatprep.subr.bf16.mxu0 %v3539
    %7609 = vmatpush2.bf16.msra.mxu0 %v3538
    %7610 = vmatprep.subr.bf16.mxu0 %v3531
    %7611 = vmatpush2.bf16.msra.mxu0 %v3530
    %7612 = vmatprep.subr.bf16.mxu0 %v3523
    %7613 = vmatpush2.bf16.msra.mxu0 %v3522
    %7614 = vmatprep.subr.bf16.mxu0 %v3515
    %7615 = vmatpush2.bf16.msra.mxu0 %v3514
    %7616 = vmatprep.mubr.bf16.mxu0 %v5896
    %7617 = vmatmul.mubr.bf16.gmra.mxu0 %v5884
    %v7618 = vpop.f32.mrf.mxu0
    %v7619 = vadd.f32 %v7576, %v7618
    %v7620 = vpop.f32.mrf.mxu0
    %v7621 = vadd.f32 %v7578, %v7620
    %v7622 = vpop.f32.mrf.mxu0
    %v7623 = vadd.f32 %v7580, %v7622
    %v7624 = vpop.f32.mrf.mxu0
    %v7625 = vadd.f32 %v7582, %v7624
    %7626 = vdwg.mxu0
    %7627 = vmatprep.subr.bf16.mxu0 %v3381
    %7628 = vmatpush1.bf16.msra.mxu0 %v3380
    %7629 = vmatprep.subr.bf16.mxu0 %v3373
    %7630 = vmatpush1.bf16.msra.mxu0 %v3372
    %7631 = vmatprep.subr.bf16.mxu0 %v3365
    %7632 = vmatpush1.bf16.msra.mxu0 %v3364
    %7633 = vmatprep.subr.bf16.mxu0 %v3357
    %7634 = vmatpush1.bf16.msra.mxu0 %v3356
    %7635 = vmatprep.subr.bf16.mxu0 %v3349
    %7636 = vmatpush1.bf16.msra.mxu0 %v3348
    %7637 = vmatprep.subr.bf16.mxu0 %v3341
    %7638 = vmatpush1.bf16.msra.mxu0 %v3340
    %7639 = vmatprep.subr.bf16.mxu0 %v3333
    %7640 = vmatpush1.bf16.msra.mxu0 %v3332
    %7641 = vmatprep.subr.bf16.mxu0 %v3325
    %7642 = vmatpush1.bf16.msra.mxu0 %v3324
    %7643 = vmatprep.subr.bf16.mxu0 %v3445
    %7644 = vmatpush2.bf16.msra.mxu0 %v3444
    %7645 = vmatprep.subr.bf16.mxu0 %v3437
    %7646 = vmatpush2.bf16.msra.mxu0 %v3436
    %7647 = vmatprep.subr.bf16.mxu0 %v3429
    %7648 = vmatpush2.bf16.msra.mxu0 %v3428
    %7649 = vmatprep.subr.bf16.mxu0 %v3421
    %7650 = vmatpush2.bf16.msra.mxu0 %v3420
    %7651 = vmatprep.subr.bf16.mxu0 %v3413
    %7652 = vmatpush2.bf16.msra.mxu0 %v3412
    %7653 = vmatprep.subr.bf16.mxu0 %v3405
    %7654 = vmatpush2.bf16.msra.mxu0 %v3404
    %7655 = vmatprep.subr.bf16.mxu0 %v3397
    %7656 = vmatpush2.bf16.msra.mxu0 %v3396
    %7657 = vmatprep.subr.bf16.mxu0 %v3389
    %7658 = vmatpush2.bf16.msra.mxu0 %v3388
    %7659 = vmatprep.mubr.bf16.mxu0 %v5872
    %7660 = vmatmul.mubr.bf16.gmra.mxu0 %v5860
    %v7661 = vpop.f32.mrf.mxu0
    %v7662 = vadd.f32 0.0, %v7661
    %v7663 = vpop.f32.mrf.mxu0
    %v7664 = vadd.f32 0.0, %v7663
    %v7665 = vpop.f32.mrf.mxu0
    %v7666 = vadd.f32 0.0, %v7665
    %v7667 = vpop.f32.mrf.mxu0
    %v7668 = vadd.f32 0.0, %v7667
    %7669 = vdwg.mxu0
    %7670 = vmatprep.subr.bf16.mxu0 %v3509
    %7671 = vmatpush1.bf16.msra.mxu0 %v3508
    %7672 = vmatprep.subr.bf16.mxu0 %v3501
    %7673 = vmatpush1.bf16.msra.mxu0 %v3500
    %7674 = vmatprep.subr.bf16.mxu0 %v3493
    %7675 = vmatpush1.bf16.msra.mxu0 %v3492
    %7676 = vmatprep.subr.bf16.mxu0 %v3485
    %7677 = vmatpush1.bf16.msra.mxu0 %v3484
    %7678 = vmatprep.subr.bf16.mxu0 %v3477
    %7679 = vmatpush1.bf16.msra.mxu0 %v3476
    %7680 = vmatprep.subr.bf16.mxu0 %v3469
    %7681 = vmatpush1.bf16.msra.mxu0 %v3468
    %7682 = vmatprep.subr.bf16.mxu0 %v3461
    %7683 = vmatpush1.bf16.msra.mxu0 %v3460
    %7684 = vmatprep.subr.bf16.mxu0 %v3453
    %7685 = vmatpush1.bf16.msra.mxu0 %v3452
    %7686 = vmatprep.subr.bf16.mxu0 %v3573
    %7687 = vmatpush2.bf16.msra.mxu0 %v3572
    %7688 = vmatprep.subr.bf16.mxu0 %v3565
    %7689 = vmatpush2.bf16.msra.mxu0 %v3564
    %7690 = vmatprep.subr.bf16.mxu0 %v3557
    %7691 = vmatpush2.bf16.msra.mxu0 %v3556
    %7692 = vmatprep.subr.bf16.mxu0 %v3549
    %7693 = vmatpush2.bf16.msra.mxu0 %v3548
    %7694 = vmatprep.subr.bf16.mxu0 %v3541
    %7695 = vmatpush2.bf16.msra.mxu0 %v3540
    %7696 = vmatprep.subr.bf16.mxu0 %v3533
    %7697 = vmatpush2.bf16.msra.mxu0 %v3532
    %7698 = vmatprep.subr.bf16.mxu0 %v3525
    %7699 = vmatpush2.bf16.msra.mxu0 %v3524
    %7700 = vmatprep.subr.bf16.mxu0 %v3517
    %7701 = vmatpush2.bf16.msra.mxu0 %v3516
    %7702 = vmatprep.mubr.bf16.mxu0 %v5896
    %7703 = vmatmul.mubr.bf16.gmra.mxu0 %v5884
    %v7704 = vpop.f32.mrf.mxu0
    %v7705 = vadd.f32 %v7662, %v7704
    %v7706 = vpop.f32.mrf.mxu0
    %v7707 = vadd.f32 %v7664, %v7706
    %v7708 = vpop.f32.mrf.mxu0
    %v7709 = vadd.f32 %v7666, %v7708
    %v7710 = vpop.f32.mrf.mxu0
    %v7711 = vadd.f32 %v7668, %v7710
    %7712 = vdwg.mxu0
    %7713 = vmatprep.subr.bf16.mxu0 %v3383
    %7714 = vmatpush1.bf16.msra.mxu0 %v3382
    %7715 = vmatprep.subr.bf16.mxu0 %v3375
    %7716 = vmatpush1.bf16.msra.mxu0 %v3374
    %7717 = vmatprep.subr.bf16.mxu0 %v3367
    %7718 = vmatpush1.bf16.msra.mxu0 %v3366
    %7719 = vmatprep.subr.bf16.mxu0 %v3359
    %7720 = vmatpush1.bf16.msra.mxu0 %v3358
    %7721 = vmatprep.subr.bf16.mxu0 %v3351
    %7722 = vmatpush1.bf16.msra.mxu0 %v3350
    %7723 = vmatprep.subr.bf16.mxu0 %v3343
    %7724 = vmatpush1.bf16.msra.mxu0 %v3342
    %7725 = vmatprep.subr.bf16.mxu0 %v3335
    %7726 = vmatpush1.bf16.msra.mxu0 %v3334
    %7727 = vmatprep.subr.bf16.mxu0 %v3327
    %7728 = vmatpush1.bf16.msra.mxu0 %v3326
    %7729 = vmatprep.subr.bf16.mxu0 %v3447
    %7730 = vmatpush2.bf16.msra.mxu0 %v3446
    %7731 = vmatprep.subr.bf16.mxu0 %v3439
    %7732 = vmatpush2.bf16.msra.mxu0 %v3438
    %7733 = vmatprep.subr.bf16.mxu0 %v3431
    %7734 = vmatpush2.bf16.msra.mxu0 %v3430
    %7735 = vmatprep.subr.bf16.mxu0 %v3423
    %7736 = vmatpush2.bf16.msra.mxu0 %v3422
    %7737 = vmatprep.subr.bf16.mxu0 %v3415
    %7738 = vmatpush2.bf16.msra.mxu0 %v3414
    %7739 = vmatprep.subr.bf16.mxu0 %v3407
    %7740 = vmatpush2.bf16.msra.mxu0 %v3406
    %7741 = vmatprep.subr.bf16.mxu0 %v3399
    %7742 = vmatpush2.bf16.msra.mxu0 %v3398
    %7743 = vmatprep.subr.bf16.mxu0 %v3391
    %7744 = vmatpush2.bf16.msra.mxu0 %v3390
    %7745 = vmatprep.mubr.bf16.mxu0 %v5872
    %7746 = vmatmul.mubr.bf16.gmra.mxu0 %v5860
    %v7747 = vpop.f32.mrf.mxu0
    %v7748 = vadd.f32 0.0, %v7747
    %v7749 = vpop.f32.mrf.mxu0
    %v7750 = vadd.f32 0.0, %v7749
    %v7751 = vpop.f32.mrf.mxu0
    %v7752 = vadd.f32 0.0, %v7751
    %v7753 = vpop.f32.mrf.mxu0
    %v7754 = vadd.f32 0.0, %v7753
    %7755 = vdwg.mxu0
    %7756 = vmatprep.subr.bf16.mxu0 %v3511
    %7757 = vmatpush1.bf16.msra.mxu0 %v3510
    %7758 = vmatprep.subr.bf16.mxu0 %v3503
    %7759 = vmatpush1.bf16.msra.mxu0 %v3502
    %7760 = vmatprep.subr.bf16.mxu0 %v3495
    %7761 = vmatpush1.bf16.msra.mxu0 %v3494
    %7762 = vmatprep.subr.bf16.mxu0 %v3487
    %7763 = vmatpush1.bf16.msra.mxu0 %v3486
    %7764 = vmatprep.subr.bf16.mxu0 %v3479
    %7765 = vmatpush1.bf16.msra.mxu0 %v3478
    %7766 = vmatprep.subr.bf16.mxu0 %v3471
    %7767 = vmatpush1.bf16.msra.mxu0 %v3470
    %7768 = vmatprep.subr.bf16.mxu0 %v3463
    %7769 = vmatpush1.bf16.msra.mxu0 %v3462
    %7770 = vmatprep.subr.bf16.mxu0 %v3455
    %7771 = vmatpush1.bf16.msra.mxu0 %v3454
    %7772 = vmatprep.subr.bf16.mxu0 %v3575
    %7773 = vmatpush2.bf16.msra.mxu0 %v3574
    %7774 = vmatprep.subr.bf16.mxu0 %v3567
    %7775 = vmatpush2.bf16.msra.mxu0 %v3566
    %7776 = vmatprep.subr.bf16.mxu0 %v3559
    %7777 = vmatpush2.bf16.msra.mxu0 %v3558
    %7778 = vmatprep.subr.bf16.mxu0 %v3551
    %7779 = vmatpush2.bf16.msra.mxu0 %v3550
    %7780 = vmatprep.subr.bf16.mxu0 %v3543
    %7781 = vmatpush2.bf16.msra.mxu0 %v3542
    %7782 = vmatprep.subr.bf16.mxu0 %v3535
    %7783 = vmatpush2.bf16.msra.mxu0 %v3534
    %7784 = vmatprep.subr.bf16.mxu0 %v3527
    %7785 = vmatpush2.bf16.msra.mxu0 %v3526
    %7786 = vmatprep.subr.bf16.mxu0 %v3519
    %7787 = vmatpush2.bf16.msra.mxu0 %v3518
    %7788 = vmatprep.mubr.bf16.mxu0 %v5896
    %7789 = vmatmul.mubr.bf16.gmra.mxu0 %v5884
    %v7790 = vpop.f32.mrf.mxu0
    %v7791 = vadd.f32 %v7748, %v7790
    %v7792 = vpop.f32.mrf.mxu0
    %v7793 = vadd.f32 %v7750, %v7792
    %v7794 = vpop.f32.mrf.mxu0
    %v7795 = vadd.f32 %v7752, %v7794
    %v7796 = vpop.f32.mrf.mxu0
    %v7797 = vadd.f32 %v7754, %v7796
    %7798 = vdwg.mxu0
    %7799 = vmatprep.subr.bf16.mxu0 %v3385
    %7800 = vmatpush1.bf16.msra.mxu0 %v3384
    %7801 = vmatprep.subr.bf16.mxu0 %v3377
    %7802 = vmatpush1.bf16.msra.mxu0 %v3376
    %7803 = vmatprep.subr.bf16.mxu0 %v3369
    %7804 = vmatpush1.bf16.msra.mxu0 %v3368
    %7805 = vmatprep.subr.bf16.mxu0 %v3361
    %7806 = vmatpush1.bf16.msra.mxu0 %v3360
    %7807 = vmatprep.subr.bf16.mxu0 %v3353
    %7808 = vmatpush1.bf16.msra.mxu0 %v3352
    %7809 = vmatprep.subr.bf16.mxu0 %v3345
    %7810 = vmatpush1.bf16.msra.mxu0 %v3344
    %7811 = vmatprep.subr.bf16.mxu0 %v3337
    %7812 = vmatpush1.bf16.msra.mxu0 %v3336
    %7813 = vmatprep.subr.bf16.mxu0 %v3329
    %7814 = vmatpush1.bf16.msra.mxu0 %v3328
    %7815 = vmatprep.subr.bf16.mxu0 %v3449
    %7816 = vmatpush2.bf16.msra.mxu0 %v3448
    %7817 = vmatprep.subr.bf16.mxu0 %v3441
    %7818 = vmatpush2.bf16.msra.mxu0 %v3440
    %7819 = vmatprep.subr.bf16.mxu0 %v3433
    %7820 = vmatpush2.bf16.msra.mxu0 %v3432
    %7821 = vmatprep.subr.bf16.mxu0 %v3425
    %7822 = vmatpush2.bf16.msra.mxu0 %v3424
    %7823 = vmatprep.subr.bf16.mxu0 %v3417
    %7824 = vmatpush2.bf16.msra.mxu0 %v3416
    %7825 = vmatprep.subr.bf16.mxu0 %v3409
    %7826 = vmatpush2.bf16.msra.mxu0 %v3408
    %7827 = vmatprep.subr.bf16.mxu0 %v3401
    %7828 = vmatpush2.bf16.msra.mxu0 %v3400
    %7829 = vmatprep.subr.bf16.mxu0 %v3393
    %7830 = vmatpush2.bf16.msra.mxu0 %v3392
    %7831 = vmatprep.mubr.bf16.mxu0 %v5872
    %7832 = vmatmul.mubr.bf16.gmra.mxu0 %v5860
    %v7833 = vpop.f32.mrf.mxu0
    %v7834 = vadd.f32 0.0, %v7833
    %v7835 = vpop.f32.mrf.mxu0
    %v7836 = vadd.f32 0.0, %v7835
    %v7837 = vpop.f32.mrf.mxu0
    %v7838 = vadd.f32 0.0, %v7837
    %v7839 = vpop.f32.mrf.mxu0
    %v7840 = vadd.f32 0.0, %v7839
    %7841 = vdwg.mxu0
    %7842 = vmatprep.subr.bf16.mxu0 %v3513
    %7843 = vmatpush1.bf16.msra.mxu0 %v3512
    %7844 = vmatprep.subr.bf16.mxu0 %v3505
    %7845 = vmatpush1.bf16.msra.mxu0 %v3504
    %7846 = vmatprep.subr.bf16.mxu0 %v3497
    %7847 = vmatpush1.bf16.msra.mxu0 %v3496
    %7848 = vmatprep.subr.bf16.mxu0 %v3489
    %7849 = vmatpush1.bf16.msra.mxu0 %v3488
    %7850 = vmatprep.subr.bf16.mxu0 %v3481
    %7851 = vmatpush1.bf16.msra.mxu0 %v3480
    %7852 = vmatprep.subr.bf16.mxu0 %v3473
    %7853 = vmatpush1.bf16.msra.mxu0 %v3472
    %7854 = vmatprep.subr.bf16.mxu0 %v3465
    %7855 = vmatpush1.bf16.msra.mxu0 %v3464
    %7856 = vmatprep.subr.bf16.mxu0 %v3457
    %7857 = vmatpush1.bf16.msra.mxu0 %v3456
    %7858 = vmatprep.subr.bf16.mxu0 %v3577
    %7859 = vmatpush2.bf16.msra.mxu0 %v3576
    %7860 = vmatprep.subr.bf16.mxu0 %v3569
    %7861 = vmatpush2.bf16.msra.mxu0 %v3568
    %7862 = vmatprep.subr.bf16.mxu0 %v3561
    %7863 = vmatpush2.bf16.msra.mxu0 %v3560
    %7864 = vmatprep.subr.bf16.mxu0 %v3553
    %7865 = vmatpush2.bf16.msra.mxu0 %v3552
    %7866 = vmatprep.subr.bf16.mxu0 %v3545
    %7867 = vmatpush2.bf16.msra.mxu0 %v3544
    %7868 = vmatprep.subr.bf16.mxu0 %v3537
    %7869 = vmatpush2.bf16.msra.mxu0 %v3536
    %7870 = vmatprep.subr.bf16.mxu0 %v3529
    %7871 = vmatpush2.bf16.msra.mxu0 %v3528
    %7872 = vmatprep.subr.bf16.mxu0 %v3521
    %7873 = vmatpush2.bf16.msra.mxu0 %v3520
    %7874 = vmatprep.mubr.bf16.mxu0 %v5896
    %7875 = vmatmul.mubr.bf16.gmra.mxu0 %v5884
    %v7876 = vpop.f32.mrf.mxu0
    %v7877 = vadd.f32 %v7834, %v7876
    %v7878 = vpop.f32.mrf.mxu0
    %v7879 = vadd.f32 %v7836, %v7878
    %v7880 = vpop.f32.mrf.mxu0
    %v7881 = vadd.f32 %v7838, %v7880
    %v7882 = vpop.f32.mrf.mxu0
    %v7883 = vadd.f32 %v7840, %v7882
    %7884 = vdwg.mxu0
    %7885 = vmatprep.subr.bf16.mxu0 %v5023
    %7886 = vmatpush1.bf16.msra.mxu0 %v5022
    %7887 = vmatprep.subr.bf16.mxu0 %v5015
    %7888 = vmatpush1.bf16.msra.mxu0 %v5014
    %7889 = vmatprep.subr.bf16.mxu0 %v5007
    %7890 = vmatpush1.bf16.msra.mxu0 %v5006
    %7891 = vmatprep.subr.bf16.mxu0 %v4999
    %7892 = vmatpush1.bf16.msra.mxu0 %v4998
    %7893 = vmatprep.subr.bf16.mxu0 %v4991
    %7894 = vmatpush1.bf16.msra.mxu0 %v4990
    %7895 = vmatprep.subr.bf16.mxu0 %v4983
    %7896 = vmatpush1.bf16.msra.mxu0 %v4982
    %7897 = vmatprep.subr.bf16.mxu0 %v4975
    %7898 = vmatpush1.bf16.msra.mxu0 %v4974
    %7899 = vmatprep.subr.bf16.mxu0 %v4967
    %7900 = vmatpush1.bf16.msra.mxu0 %v4966
    %7901 = vmatprep.subr.bf16.mxu0 %v5087
    %7902 = vmatpush2.bf16.msra.mxu0 %v5086
    %7903 = vmatprep.subr.bf16.mxu0 %v5079
    %7904 = vmatpush2.bf16.msra.mxu0 %v5078
    %7905 = vmatprep.subr.bf16.mxu0 %v5071
    %7906 = vmatpush2.bf16.msra.mxu0 %v5070
    %7907 = vmatprep.subr.bf16.mxu0 %v5063
    %7908 = vmatpush2.bf16.msra.mxu0 %v5062
    %7909 = vmatprep.subr.bf16.mxu0 %v5055
    %7910 = vmatpush2.bf16.msra.mxu0 %v5054
    %7911 = vmatprep.subr.bf16.mxu0 %v5047
    %7912 = vmatpush2.bf16.msra.mxu0 %v5046
    %7913 = vmatprep.subr.bf16.mxu0 %v5039
    %7914 = vmatpush2.bf16.msra.mxu0 %v5038
    %7915 = vmatprep.subr.bf16.mxu0 %v5031
    %7916 = vmatpush2.bf16.msra.mxu0 %v5030
    %7917 = vmatprep.mubr.bf16.mxu0 %v2547
    %7918 = vmatmul.mubr.bf16.gmra.mxu0 %v2546
    %v7919 = vpop.f32.mrf.mxu0
    %v7920 = vadd.f32 %v7619, %v7919
    %v7921 = vpop.f32.mrf.mxu0
    %v7922 = vadd.f32 %v7621, %v7921
    %v7923 = vpop.f32.mrf.mxu0
    %v7924 = vadd.f32 %v7623, %v7923
    %v7925 = vpop.f32.mrf.mxu0
    %v7926 = vadd.f32 %v7625, %v7925
    %7927 = vdwg.mxu0
    %7928 = vmatprep.subr.bf16.mxu0 %v5151
    %7929 = vmatpush1.bf16.msra.mxu0 %v5150
    %7930 = vmatprep.subr.bf16.mxu0 %v5143
    %7931 = vmatpush1.bf16.msra.mxu0 %v5142
    %7932 = vmatprep.subr.bf16.mxu0 %v5135
    %7933 = vmatpush1.bf16.msra.mxu0 %v5134
    %7934 = vmatprep.subr.bf16.mxu0 %v5127
    %7935 = vmatpush1.bf16.msra.mxu0 %v5126
    %7936 = vmatprep.subr.bf16.mxu0 %v5119
    %7937 = vmatpush1.bf16.msra.mxu0 %v5118
    %7938 = vmatprep.subr.bf16.mxu0 %v5111
    %7939 = vmatpush1.bf16.msra.mxu0 %v5110
    %7940 = vmatprep.subr.bf16.mxu0 %v5103
    %7941 = vmatpush1.bf16.msra.mxu0 %v5102
    %7942 = vmatprep.subr.bf16.mxu0 %v5095
    %7943 = vmatpush1.bf16.msra.mxu0 %v5094
    %7944 = vmatprep.subr.bf16.mxu0 %v5215
    %7945 = vmatpush2.bf16.msra.mxu0 %v5214
    %7946 = vmatprep.subr.bf16.mxu0 %v5207
    %7947 = vmatpush2.bf16.msra.mxu0 %v5206
    %7948 = vmatprep.subr.bf16.mxu0 %v5199
    %7949 = vmatpush2.bf16.msra.mxu0 %v5198
    %7950 = vmatprep.subr.bf16.mxu0 %v5191
    %7951 = vmatpush2.bf16.msra.mxu0 %v5190
    %7952 = vmatprep.subr.bf16.mxu0 %v5183
    %7953 = vmatpush2.bf16.msra.mxu0 %v5182
    %7954 = vmatprep.subr.bf16.mxu0 %v5175
    %7955 = vmatpush2.bf16.msra.mxu0 %v5174
    %7956 = vmatprep.subr.bf16.mxu0 %v5167
    %7957 = vmatpush2.bf16.msra.mxu0 %v5166
    %7958 = vmatprep.subr.bf16.mxu0 %v5159
    %7959 = vmatpush2.bf16.msra.mxu0 %v5158
    %7960 = vmatprep.mubr.bf16.mxu0 %v2549
    %7961 = vmatmul.mubr.bf16.gmra.mxu0 %v2548
    %v7962 = vpop.f32.mrf.mxu0
    %v7963 = vadd.f32 %v7920, %v7962
    %v7964 = vpop.f32.mrf.mxu0
    %v7965 = vadd.f32 %v7922, %v7964
    %v7966 = vpop.f32.mrf.mxu0
    %v7967 = vadd.f32 %v7924, %v7966
    %v7968 = vpop.f32.mrf.mxu0
    %v7969 = vadd.f32 %v7926, %v7968
    %7970 = vdwg.mxu0
    %7971 = vmatprep.subr.bf16.mxu0 %v5025
    %7972 = vmatpush1.bf16.msra.mxu0 %v5024
    %7973 = vmatprep.subr.bf16.mxu0 %v5017
    %7974 = vmatpush1.bf16.msra.mxu0 %v5016
    %7975 = vmatprep.subr.bf16.mxu0 %v5009
    %7976 = vmatpush1.bf16.msra.mxu0 %v5008
    %7977 = vmatprep.subr.bf16.mxu0 %v5001
    %7978 = vmatpush1.bf16.msra.mxu0 %v5000
    %7979 = vmatprep.subr.bf16.mxu0 %v4993
    %7980 = vmatpush1.bf16.msra.mxu0 %v4992
    %7981 = vmatprep.subr.bf16.mxu0 %v4985
    %7982 = vmatpush1.bf16.msra.mxu0 %v4984
    %7983 = vmatprep.subr.bf16.mxu0 %v4977
    %7984 = vmatpush1.bf16.msra.mxu0 %v4976
    %7985 = vmatprep.subr.bf16.mxu0 %v4969
    %7986 = vmatpush1.bf16.msra.mxu0 %v4968
    %7987 = vmatprep.subr.bf16.mxu0 %v5089
    %7988 = vmatpush2.bf16.msra.mxu0 %v5088
    %7989 = vmatprep.subr.bf16.mxu0 %v5081
    %7990 = vmatpush2.bf16.msra.mxu0 %v5080
    %7991 = vmatprep.subr.bf16.mxu0 %v5073
    %7992 = vmatpush2.bf16.msra.mxu0 %v5072
    %7993 = vmatprep.subr.bf16.mxu0 %v5065
    %7994 = vmatpush2.bf16.msra.mxu0 %v5064
    %7995 = vmatprep.subr.bf16.mxu0 %v5057
    %7996 = vmatpush2.bf16.msra.mxu0 %v5056
    %7997 = vmatprep.subr.bf16.mxu0 %v5049
    %7998 = vmatpush2.bf16.msra.mxu0 %v5048
    %7999 = vmatprep.subr.bf16.mxu0 %v5041
    %8000 = vmatpush2.bf16.msra.mxu0 %v5040
    %8001 = vmatprep.subr.bf16.mxu0 %v5033
    %8002 = vmatpush2.bf16.msra.mxu0 %v5032
    %8003 = vmatprep.mubr.bf16.mxu0 %v2547
    %8004 = vmatmul.mubr.bf16.gmra.mxu0 %v2546
    %v8005 = vpop.f32.mrf.mxu0
    %v8006 = vadd.f32 %v7705, %v8005
    %v8007 = vpop.f32.mrf.mxu0
    %v8008 = vadd.f32 %v7707, %v8007
    %v8009 = vpop.f32.mrf.mxu0
    %v8010 = vadd.f32 %v7709, %v8009
    %v8011 = vpop.f32.mrf.mxu0
    %v8012 = vadd.f32 %v7711, %v8011
    %8013 = vdwg.mxu0
    %8014 = vmatprep.subr.bf16.mxu0 %v5153
    %8015 = vmatpush1.bf16.msra.mxu0 %v5152
    %8016 = vmatprep.subr.bf16.mxu0 %v5145
    %8017 = vmatpush1.bf16.msra.mxu0 %v5144
    %8018 = vmatprep.subr.bf16.mxu0 %v5137
    %8019 = vmatpush1.bf16.msra.mxu0 %v5136
    %8020 = vmatprep.subr.bf16.mxu0 %v5129
    %8021 = vmatpush1.bf16.msra.mxu0 %v5128
    %8022 = vmatprep.subr.bf16.mxu0 %v5121
    %8023 = vmatpush1.bf16.msra.mxu0 %v5120
    %8024 = vmatprep.subr.bf16.mxu0 %v5113
    %8025 = vmatpush1.bf16.msra.mxu0 %v5112
    %8026 = vmatprep.subr.bf16.mxu0 %v5105
    %8027 = vmatpush1.bf16.msra.mxu0 %v5104
    %8028 = vmatprep.subr.bf16.mxu0 %v5097
    %8029 = vmatpush1.bf16.msra.mxu0 %v5096
    %8030 = vmatprep.subr.bf16.mxu0 %v5217
    %8031 = vmatpush2.bf16.msra.mxu0 %v5216
    %8032 = vmatprep.subr.bf16.mxu0 %v5209
    %8033 = vmatpush2.bf16.msra.mxu0 %v5208
    %8034 = vmatprep.subr.bf16.mxu0 %v5201
    %8035 = vmatpush2.bf16.msra.mxu0 %v5200
    %8036 = vmatprep.subr.bf16.mxu0 %v5193
    %8037 = vmatpush2.bf16.msra.mxu0 %v5192
    %8038 = vmatprep.subr.bf16.mxu0 %v5185
    %8039 = vmatpush2.bf16.msra.mxu0 %v5184
    %8040 = vmatprep.subr.bf16.mxu0 %v5177
    %8041 = vmatpush2.bf16.msra.mxu0 %v5176
    %8042 = vmatprep.subr.bf16.mxu0 %v5169
    %8043 = vmatpush2.bf16.msra.mxu0 %v5168
    %8044 = vmatprep.subr.bf16.mxu0 %v5161
    %8045 = vmatpush2.bf16.msra.mxu0 %v5160
    %8046 = vmatprep.mubr.bf16.mxu0 %v2549
    %8047 = vmatmul.mubr.bf16.gmra.mxu0 %v2548
    %v8048 = vpop.f32.mrf.mxu0
    %v8049 = vadd.f32 %v8006, %v8048
    %v8050 = vpop.f32.mrf.mxu0
    %v8051 = vadd.f32 %v8008, %v8050
    %v8052 = vpop.f32.mrf.mxu0
    %v8053 = vadd.f32 %v8010, %v8052
    %v8054 = vpop.f32.mrf.mxu0
    %v8055 = vadd.f32 %v8012, %v8054
    %8056 = vdwg.mxu0
    %8057 = vmatprep.subr.bf16.mxu0 %v5027
    %8058 = vmatpush1.bf16.msra.mxu0 %v5026
    %8059 = vmatprep.subr.bf16.mxu0 %v5019
    %8060 = vmatpush1.bf16.msra.mxu0 %v5018
    %8061 = vmatprep.subr.bf16.mxu0 %v5011
    %8062 = vmatpush1.bf16.msra.mxu0 %v5010
    %8063 = vmatprep.subr.bf16.mxu0 %v5003
    %8064 = vmatpush1.bf16.msra.mxu0 %v5002
    %8065 = vmatprep.subr.bf16.mxu0 %v4995
    %8066 = vmatpush1.bf16.msra.mxu0 %v4994
    %8067 = vmatprep.subr.bf16.mxu0 %v4987
    %8068 = vmatpush1.bf16.msra.mxu0 %v4986
    %8069 = vmatprep.subr.bf16.mxu0 %v4979
    %8070 = vmatpush1.bf16.msra.mxu0 %v4978
    %8071 = vmatprep.subr.bf16.mxu0 %v4971
    %8072 = vmatpush1.bf16.msra.mxu0 %v4970
    %8073 = vmatprep.subr.bf16.mxu0 %v5091
    %8074 = vmatpush2.bf16.msra.mxu0 %v5090
    %8075 = vmatprep.subr.bf16.mxu0 %v5083
    %8076 = vmatpush2.bf16.msra.mxu0 %v5082
    %8077 = vmatprep.subr.bf16.mxu0 %v5075
    %8078 = vmatpush2.bf16.msra.mxu0 %v5074
    %8079 = vmatprep.subr.bf16.mxu0 %v5067
    %8080 = vmatpush2.bf16.msra.mxu0 %v5066
    %8081 = vmatprep.subr.bf16.mxu0 %v5059
    %8082 = vmatpush2.bf16.msra.mxu0 %v5058
    %8083 = vmatprep.subr.bf16.mxu0 %v5051
    %8084 = vmatpush2.bf16.msra.mxu0 %v5050
    %8085 = vmatprep.subr.bf16.mxu0 %v5043
    %8086 = vmatpush2.bf16.msra.mxu0 %v5042
    %8087 = vmatprep.subr.bf16.mxu0 %v5035
    %8088 = vmatpush2.bf16.msra.mxu0 %v5034
    %8089 = vmatprep.mubr.bf16.mxu0 %v2547
    %8090 = vmatmul.mubr.bf16.gmra.mxu0 %v2546
    %v8091 = vpop.f32.mrf.mxu0
    %v8092 = vadd.f32 %v7791, %v8091
    %v8093 = vpop.f32.mrf.mxu0
    %v8094 = vadd.f32 %v7793, %v8093
    %v8095 = vpop.f32.mrf.mxu0
    %v8096 = vadd.f32 %v7795, %v8095
    %v8097 = vpop.f32.mrf.mxu0
    %v8098 = vadd.f32 %v7797, %v8097
    %8099 = vdwg.mxu0
    %8100 = vmatprep.subr.bf16.mxu0 %v5155
    %8101 = vmatpush1.bf16.msra.mxu0 %v5154
    %8102 = vmatprep.subr.bf16.mxu0 %v5147
    %8103 = vmatpush1.bf16.msra.mxu0 %v5146
    %8104 = vmatprep.subr.bf16.mxu0 %v5139
    %8105 = vmatpush1.bf16.msra.mxu0 %v5138
    %8106 = vmatprep.subr.bf16.mxu0 %v5131
    %8107 = vmatpush1.bf16.msra.mxu0 %v5130
    %8108 = vmatprep.subr.bf16.mxu0 %v5123
    %8109 = vmatpush1.bf16.msra.mxu0 %v5122
    %8110 = vmatprep.subr.bf16.mxu0 %v5115
    %8111 = vmatpush1.bf16.msra.mxu0 %v5114
    %8112 = vmatprep.subr.bf16.mxu0 %v5107
    %8113 = vmatpush1.bf16.msra.mxu0 %v5106
    %8114 = vmatprep.subr.bf16.mxu0 %v5099
    %8115 = vmatpush1.bf16.msra.mxu0 %v5098
    %8116 = vmatprep.subr.bf16.mxu0 %v5219
    %8117 = vmatpush2.bf16.msra.mxu0 %v5218
    %8118 = vmatprep.subr.bf16.mxu0 %v5211
    %8119 = vmatpush2.bf16.msra.mxu0 %v5210
    %8120 = vmatprep.subr.bf16.mxu0 %v5203
    %8121 = vmatpush2.bf16.msra.mxu0 %v5202
    %8122 = vmatprep.subr.bf16.mxu0 %v5195
    %8123 = vmatpush2.bf16.msra.mxu0 %v5194
    %8124 = vmatprep.subr.bf16.mxu0 %v5187
    %8125 = vmatpush2.bf16.msra.mxu0 %v5186
    %8126 = vmatprep.subr.bf16.mxu0 %v5179
    %8127 = vmatpush2.bf16.msra.mxu0 %v5178
    %8128 = vmatprep.subr.bf16.mxu0 %v5171
    %8129 = vmatpush2.bf16.msra.mxu0 %v5170
    %8130 = vmatprep.subr.bf16.mxu0 %v5163
    %8131 = vmatpush2.bf16.msra.mxu0 %v5162
    %8132 = vmatprep.mubr.bf16.mxu0 %v2549
    %8133 = vmatmul.mubr.bf16.gmra.mxu0 %v2548
    %v8134 = vpop.f32.mrf.mxu0
    %v8135 = vadd.f32 %v8092, %v8134
    %v8136 = vpop.f32.mrf.mxu0
    %v8137 = vadd.f32 %v8094, %v8136
    %v8138 = vpop.f32.mrf.mxu0
    %v8139 = vadd.f32 %v8096, %v8138
    %v8140 = vpop.f32.mrf.mxu0
    %v8141 = vadd.f32 %v8098, %v8140
    %8142 = vdwg.mxu0
    %8143 = vmatprep.subr.bf16.mxu0 %v5029
    %8144 = vmatpush1.bf16.msra.mxu0 %v5028
    %8145 = vmatprep.subr.bf16.mxu0 %v5021
    %8146 = vmatpush1.bf16.msra.mxu0 %v5020
    %8147 = vmatprep.subr.bf16.mxu0 %v5013
    %8148 = vmatpush1.bf16.msra.mxu0 %v5012
    %8149 = vmatprep.subr.bf16.mxu0 %v5005
    %8150 = vmatpush1.bf16.msra.mxu0 %v5004
    %8151 = vmatprep.subr.bf16.mxu0 %v4997
    %8152 = vmatpush1.bf16.msra.mxu0 %v4996
    %8153 = vmatprep.subr.bf16.mxu0 %v4989
    %8154 = vmatpush1.bf16.msra.mxu0 %v4988
    %8155 = vmatprep.subr.bf16.mxu0 %v4981
    %8156 = vmatpush1.bf16.msra.mxu0 %v4980
    %8157 = vmatprep.subr.bf16.mxu0 %v4973
    %8158 = vmatpush1.bf16.msra.mxu0 %v4972
    %8159 = vmatprep.subr.bf16.mxu0 %v5093
    %8160 = vmatpush2.bf16.msra.mxu0 %v5092
    %8161 = vmatprep.subr.bf16.mxu0 %v5085
    %8162 = vmatpush2.bf16.msra.mxu0 %v5084
    %8163 = vmatprep.subr.bf16.mxu0 %v5077
    %8164 = vmatpush2.bf16.msra.mxu0 %v5076
    %8165 = vmatprep.subr.bf16.mxu0 %v5069
    %8166 = vmatpush2.bf16.msra.mxu0 %v5068
    %8167 = vmatprep.subr.bf16.mxu0 %v5061
    %8168 = vmatpush2.bf16.msra.mxu0 %v5060
    %8169 = vmatprep.subr.bf16.mxu0 %v5053
    %8170 = vmatpush2.bf16.msra.mxu0 %v5052
    %8171 = vmatprep.subr.bf16.mxu0 %v5045
    %8172 = vmatpush2.bf16.msra.mxu0 %v5044
    %8173 = vmatprep.subr.bf16.mxu0 %v5037
    %8174 = vmatpush2.bf16.msra.mxu0 %v5036
    %8175 = vmatprep.mubr.bf16.mxu0 %v2547
    %8176 = vmatmul.mubr.bf16.gmra.mxu0 %v2546
    %v8177 = vpop.f32.mrf.mxu0
    %v8178 = vadd.f32 %v7877, %v8177
    %v8179 = vpop.f32.mrf.mxu0
    %v8180 = vadd.f32 %v7879, %v8179
    %v8181 = vpop.f32.mrf.mxu0
    %v8182 = vadd.f32 %v7881, %v8181
    %v8183 = vpop.f32.mrf.mxu0
    %v8184 = vadd.f32 %v7883, %v8183
    %8185 = vdwg.mxu0
    %8186 = vmatprep.subr.bf16.mxu0 %v5157
    %8187 = vmatpush1.bf16.msra.mxu0 %v5156
    %8188 = vmatprep.subr.bf16.mxu0 %v5149
    %8189 = vmatpush1.bf16.msra.mxu0 %v5148
    %8190 = vmatprep.subr.bf16.mxu0 %v5141
    %8191 = vmatpush1.bf16.msra.mxu0 %v5140
    %8192 = vmatprep.subr.bf16.mxu0 %v5133
    %8193 = vmatpush1.bf16.msra.mxu0 %v5132
    %8194 = vmatprep.subr.bf16.mxu0 %v5125
    %8195 = vmatpush1.bf16.msra.mxu0 %v5124
    %8196 = vmatprep.subr.bf16.mxu0 %v5117
    %8197 = vmatpush1.bf16.msra.mxu0 %v5116
    %8198 = vmatprep.subr.bf16.mxu0 %v5109
    %8199 = vmatpush1.bf16.msra.mxu0 %v5108
    %8200 = vmatprep.subr.bf16.mxu0 %v5101
    %8201 = vmatpush1.bf16.msra.mxu0 %v5100
    %8202 = vmatprep.subr.bf16.mxu0 %v5221
    %8203 = vmatpush2.bf16.msra.mxu0 %v5220
    %8204 = vmatprep.subr.bf16.mxu0 %v5213
    %8205 = vmatpush2.bf16.msra.mxu0 %v5212
    %8206 = vmatprep.subr.bf16.mxu0 %v5205
    %8207 = vmatpush2.bf16.msra.mxu0 %v5204
    %8208 = vmatprep.subr.bf16.mxu0 %v5197
    %8209 = vmatpush2.bf16.msra.mxu0 %v5196
    %8210 = vmatprep.subr.bf16.mxu0 %v5189
    %8211 = vmatpush2.bf16.msra.mxu0 %v5188
    %8212 = vmatprep.subr.bf16.mxu0 %v5181
    %8213 = vmatpush2.bf16.msra.mxu0 %v5180
    %8214 = vmatprep.subr.bf16.mxu0 %v5173
    %8215 = vmatpush2.bf16.msra.mxu0 %v5172
    %8216 = vmatprep.subr.bf16.mxu0 %v5165
    %8217 = vmatpush2.bf16.msra.mxu0 %v5164
    %8218 = vmatprep.mubr.bf16.mxu0 %v2549
    %8219 = vmatmul.mubr.bf16.gmra.mxu0 %v2548
    %v8220 = vpop.f32.mrf.mxu0
    %v8221 = vadd.f32 %v8178, %v8220
    %v8222 = vpop.f32.mrf.mxu0
    %v8223 = vadd.f32 %v8180, %v8222
    %v8224 = vpop.f32.mrf.mxu0
    %v8225 = vadd.f32 %v8182, %v8224
    %v8226 = vpop.f32.mrf.mxu0
    %v8227 = vadd.f32 %v8184, %v8226
    %8228 = vdwg.mxu0
    %v8235 = vunpack.c.l.b16 %v1760
    %v8236 = vunpack.c.h.b16 %v1760
    %v8237 = vunpack.c.l.b16 %v1761
    %v8238 = vunpack.c.h.b16 %v1761
    %v8239 = vunpack.c.l.b16 %v1762
    %v8240 = vunpack.c.h.b16 %v1762
    %v8241 = vunpack.c.l.b16 %v1763
    %v8242 = vunpack.c.h.b16 %v1763
    %v8243 = vunpack.c.l.b16 %v1764
    %v8244 = vunpack.c.h.b16 %v1764
    %v8245 = vunpack.c.l.b16 %v1765
    %v8246 = vunpack.c.h.b16 %v1765
    %v8247 = vpack.c.b16 %v8239, %v8235
    %v8248 = vpack.c.b16 %v8240, %v8236
    %v8249 = vpack.c.b16 %v8241, %v8237
    %v8250 = vpack.c.b16 %v8242, %v8238
    %v8251 = vpack.c.b16 %v8243, %v8243
    %v8252 = vpack.c.b16 %v8244, %v8244
    %v8253 = vpack.c.b16 %v8245, %v8245
    %v8254 = vpack.c.b16 %v8246, %v8246
    %v8256 = vshrl.u32 %v8247, 16
    %v8258 = vshll.u32 %v8247, 16
    %v8260 = vrot.slane %v8258, 1
    %v8261 = vor.u32 %v8256, %v8260
    %v8263 = vshll.u32 %v8251, 16
    %v8265 = vrot.slane %v8263, 1
    %v8266 = vsel %vm5848, %v8261, %v8265
    %v8268 = vshrl.u32 %v8248, 16
    %v8270 = vshll.u32 %v8248, 16
    %v8272 = vrot.slane %v8270, 1
    %v8273 = vor.u32 %v8268, %v8272
    %v8275 = vshll.u32 %v8252, 16
    %v8277 = vrot.slane %v8275, 1
    %v8278 = vsel %vm5848, %v8273, %v8277
    %v8280 = vshrl.u32 %v8249, 16
    %v8282 = vshll.u32 %v8249, 16
    %v8284 = vrot.slane %v8282, 1
    %v8285 = vor.u32 %v8280, %v8284
    %v8287 = vshll.u32 %v8253, 16
    %v8289 = vrot.slane %v8287, 1
    %v8290 = vsel %vm5848, %v8285, %v8289
    %v8292 = vshrl.u32 %v8250, 16
    %v8294 = vshll.u32 %v8250, 16
    %v8296 = vrot.slane %v8294, 1
    %v8297 = vor.u32 %v8292, %v8296
    %v8299 = vshll.u32 %v8254, 16
    %v8301 = vrot.slane %v8299, 1
    %v8302 = vsel %vm5848, %v8297, %v8301
    %8307 = vmatprep.subr.bf16.mxu0 %v6726
    %8308 = vmatpush1.bf16.msra.mxu0 %v6725
    %8309 = vmatprep.subr.bf16.mxu0 %v6718
    %8310 = vmatpush1.bf16.msra.mxu0 %v6717
    %8311 = vmatprep.subr.bf16.mxu0 %v6710
    %8312 = vmatpush1.bf16.msra.mxu0 %v6709
    %8313 = vmatprep.subr.bf16.mxu0 %v6702
    %8314 = vmatpush1.bf16.msra.mxu0 %v6701
    %8315 = vmatprep.subr.bf16.mxu0 %v6694
    %8316 = vmatpush1.bf16.msra.mxu0 %v6693
    %8317 = vmatprep.subr.bf16.mxu0 %v6686
    %8318 = vmatpush1.bf16.msra.mxu0 %v6685
    %8319 = vmatprep.subr.bf16.mxu0 %v6678
    %8320 = vmatpush1.bf16.msra.mxu0 %v6677
    %8321 = vmatprep.subr.bf16.mxu0 %v6670
    %8322 = vmatpush1.bf16.msra.mxu0 %v6669
    %8323 = vmatprep.subr.bf16.mxu0 %v6790
    %8324 = vmatpush2.bf16.msra.mxu0 %v6789
    %8325 = vmatprep.subr.bf16.mxu0 %v6782
    %8326 = vmatpush2.bf16.msra.mxu0 %v6781
    %8327 = vmatprep.subr.bf16.mxu0 %v6774
    %8328 = vmatpush2.bf16.msra.mxu0 %v6773
    %8329 = vmatprep.subr.bf16.mxu0 %v6766
    %8330 = vmatpush2.bf16.msra.mxu0 %v6765
    %8331 = vmatprep.subr.bf16.mxu0 %v6758
    %8332 = vmatpush2.bf16.msra.mxu0 %v6757
    %8333 = vmatprep.subr.bf16.mxu0 %v6750
    %8334 = vmatpush2.bf16.msra.mxu0 %v6749
    %8335 = vmatprep.subr.bf16.mxu0 %v6742
    %8336 = vmatpush2.bf16.msra.mxu0 %v6741
    %8337 = vmatprep.subr.bf16.mxu0 %v6734
    %8338 = vmatpush2.bf16.msra.mxu0 %v6733
    %8339 = vmatprep.mubr.bf16.mxu0 %v8278
    %8340 = vmatmul.mubr.bf16.gmra.mxu0 %v8266
    %v8341 = vpop.f32.mrf.mxu0
    %v8342 = vadd.f32 0.0, %v8341
    %v8343 = vpop.f32.mrf.mxu0
    %v8344 = vadd.f32 0.0, %v8343
    %v8345 = vpop.f32.mrf.mxu0
    %v8346 = vadd.f32 0.0, %v8345
    %v8347 = vpop.f32.mrf.mxu0
    %v8348 = vadd.f32 0.0, %v8347
    %8349 = vdwg.mxu0
    %8350 = vmatprep.subr.bf16.mxu0 %v6854
    %8351 = vmatpush1.bf16.msra.mxu0 %v6853
    %8352 = vmatprep.subr.bf16.mxu0 %v6846
    %8353 = vmatpush1.bf16.msra.mxu0 %v6845
    %8354 = vmatprep.subr.bf16.mxu0 %v6838
    %8355 = vmatpush1.bf16.msra.mxu0 %v6837
    %8356 = vmatprep.subr.bf16.mxu0 %v6830
    %8357 = vmatpush1.bf16.msra.mxu0 %v6829
    %8358 = vmatprep.subr.bf16.mxu0 %v6822
    %8359 = vmatpush1.bf16.msra.mxu0 %v6821
    %8360 = vmatprep.subr.bf16.mxu0 %v6814
    %8361 = vmatpush1.bf16.msra.mxu0 %v6813
    %8362 = vmatprep.subr.bf16.mxu0 %v6806
    %8363 = vmatpush1.bf16.msra.mxu0 %v6805
    %8364 = vmatprep.subr.bf16.mxu0 %v6798
    %8365 = vmatpush1.bf16.msra.mxu0 %v6797
    %8366 = vmatprep.subr.bf16.mxu0 %v6918
    %8367 = vmatpush2.bf16.msra.mxu0 %v6917
    %8368 = vmatprep.subr.bf16.mxu0 %v6910
    %8369 = vmatpush2.bf16.msra.mxu0 %v6909
    %8370 = vmatprep.subr.bf16.mxu0 %v6902
    %8371 = vmatpush2.bf16.msra.mxu0 %v6901
    %8372 = vmatprep.subr.bf16.mxu0 %v6894
    %8373 = vmatpush2.bf16.msra.mxu0 %v6893
    %8374 = vmatprep.subr.bf16.mxu0 %v6886
    %8375 = vmatpush2.bf16.msra.mxu0 %v6885
    %8376 = vmatprep.subr.bf16.mxu0 %v6878
    %8377 = vmatpush2.bf16.msra.mxu0 %v6877
    %8378 = vmatprep.subr.bf16.mxu0 %v6870
    %8379 = vmatpush2.bf16.msra.mxu0 %v6869
    %8380 = vmatprep.subr.bf16.mxu0 %v6862
    %8381 = vmatpush2.bf16.msra.mxu0 %v6861
    %8382 = vmatprep.mubr.bf16.mxu0 %v8302
    %8383 = vmatmul.mubr.bf16.gmra.mxu0 %v8290
    %v8384 = vpop.f32.mrf.mxu0
    %v8385 = vadd.f32 %v8342, %v8384
    %v8386 = vpop.f32.mrf.mxu0
    %v8387 = vadd.f32 %v8344, %v8386
    %v8388 = vpop.f32.mrf.mxu0
    %v8389 = vadd.f32 %v8346, %v8388
    %v8390 = vpop.f32.mrf.mxu0
    %v8391 = vadd.f32 %v8348, %v8390
    %8392 = vdwg.mxu0
    %8393 = vmatprep.subr.bf16.mxu0 %v6728
    %8394 = vmatpush1.bf16.msra.mxu0 %v6727
    %8395 = vmatprep.subr.bf16.mxu0 %v6720
    %8396 = vmatpush1.bf16.msra.mxu0 %v6719
    %8397 = vmatprep.subr.bf16.mxu0 %v6712
    %8398 = vmatpush1.bf16.msra.mxu0 %v6711
    %8399 = vmatprep.subr.bf16.mxu0 %v6704
    %8400 = vmatpush1.bf16.msra.mxu0 %v6703
    %8401 = vmatprep.subr.bf16.mxu0 %v6696
    %8402 = vmatpush1.bf16.msra.mxu0 %v6695
    %8403 = vmatprep.subr.bf16.mxu0 %v6688
    %8404 = vmatpush1.bf16.msra.mxu0 %v6687
    %8405 = vmatprep.subr.bf16.mxu0 %v6680
    %8406 = vmatpush1.bf16.msra.mxu0 %v6679
    %8407 = vmatprep.subr.bf16.mxu0 %v6672
    %8408 = vmatpush1.bf16.msra.mxu0 %v6671
    %8409 = vmatprep.subr.bf16.mxu0 %v6792
    %8410 = vmatpush2.bf16.msra.mxu0 %v6791
    %8411 = vmatprep.subr.bf16.mxu0 %v6784
    %8412 = vmatpush2.bf16.msra.mxu0 %v6783
    %8413 = vmatprep.subr.bf16.mxu0 %v6776
    %8414 = vmatpush2.bf16.msra.mxu0 %v6775
    %8415 = vmatprep.subr.bf16.mxu0 %v6768
    %8416 = vmatpush2.bf16.msra.mxu0 %v6767
    %8417 = vmatprep.subr.bf16.mxu0 %v6760
    %8418 = vmatpush2.bf16.msra.mxu0 %v6759
    %8419 = vmatprep.subr.bf16.mxu0 %v6752
    %8420 = vmatpush2.bf16.msra.mxu0 %v6751
    %8421 = vmatprep.subr.bf16.mxu0 %v6744
    %8422 = vmatpush2.bf16.msra.mxu0 %v6743
    %8423 = vmatprep.subr.bf16.mxu0 %v6736
    %8424 = vmatpush2.bf16.msra.mxu0 %v6735
    %8425 = vmatprep.mubr.bf16.mxu0 %v8278
    %8426 = vmatmul.mubr.bf16.gmra.mxu0 %v8266
    %v8427 = vpop.f32.mrf.mxu0
    %v8428 = vadd.f32 0.0, %v8427
    %v8429 = vpop.f32.mrf.mxu0
    %v8430 = vadd.f32 0.0, %v8429
    %v8431 = vpop.f32.mrf.mxu0
    %v8432 = vadd.f32 0.0, %v8431
    %v8433 = vpop.f32.mrf.mxu0
    %v8434 = vadd.f32 0.0, %v8433
    %8435 = vdwg.mxu0
    %8436 = vmatprep.subr.bf16.mxu0 %v6856
    %8437 = vmatpush1.bf16.msra.mxu0 %v6855
    %8438 = vmatprep.subr.bf16.mxu0 %v6848
    %8439 = vmatpush1.bf16.msra.mxu0 %v6847
    %8440 = vmatprep.subr.bf16.mxu0 %v6840
    %8441 = vmatpush1.bf16.msra.mxu0 %v6839
    %8442 = vmatprep.subr.bf16.mxu0 %v6832
    %8443 = vmatpush1.bf16.msra.mxu0 %v6831
    %8444 = vmatprep.subr.bf16.mxu0 %v6824
    %8445 = vmatpush1.bf16.msra.mxu0 %v6823
    %8446 = vmatprep.subr.bf16.mxu0 %v6816
    %8447 = vmatpush1.bf16.msra.mxu0 %v6815
    %8448 = vmatprep.subr.bf16.mxu0 %v6808
    %8449 = vmatpush1.bf16.msra.mxu0 %v6807
    %8450 = vmatprep.subr.bf16.mxu0 %v6800
    %8451 = vmatpush1.bf16.msra.mxu0 %v6799
    %8452 = vmatprep.subr.bf16.mxu0 %v6920
    %8453 = vmatpush2.bf16.msra.mxu0 %v6919
    %8454 = vmatprep.subr.bf16.mxu0 %v6912
    %8455 = vmatpush2.bf16.msra.mxu0 %v6911
    %8456 = vmatprep.subr.bf16.mxu0 %v6904
    %8457 = vmatpush2.bf16.msra.mxu0 %v6903
    %8458 = vmatprep.subr.bf16.mxu0 %v6896
    %8459 = vmatpush2.bf16.msra.mxu0 %v6895
    %8460 = vmatprep.subr.bf16.mxu0 %v6888
    %8461 = vmatpush2.bf16.msra.mxu0 %v6887
    %8462 = vmatprep.subr.bf16.mxu0 %v6880
    %8463 = vmatpush2.bf16.msra.mxu0 %v6879
    %8464 = vmatprep.subr.bf16.mxu0 %v6872
    %8465 = vmatpush2.bf16.msra.mxu0 %v6871
    %8466 = vmatprep.subr.bf16.mxu0 %v6864
    %8467 = vmatpush2.bf16.msra.mxu0 %v6863
    %8468 = vmatprep.mubr.bf16.mxu0 %v8302
    %8469 = vmatmul.mubr.bf16.gmra.mxu0 %v8290
    %v8470 = vpop.f32.mrf.mxu0
    %v8471 = vadd.f32 %v8428, %v8470
    %v8472 = vpop.f32.mrf.mxu0
    %v8473 = vadd.f32 %v8430, %v8472
    %v8474 = vpop.f32.mrf.mxu0
    %v8475 = vadd.f32 %v8432, %v8474
    %v8476 = vpop.f32.mrf.mxu0
    %v8477 = vadd.f32 %v8434, %v8476
    %8478 = vdwg.mxu0
    %8479 = vmatprep.subr.bf16.mxu0 %v6730
    %8480 = vmatpush1.bf16.msra.mxu0 %v6729
    %8481 = vmatprep.subr.bf16.mxu0 %v6722
    %8482 = vmatpush1.bf16.msra.mxu0 %v6721
    %8483 = vmatprep.subr.bf16.mxu0 %v6714
    %8484 = vmatpush1.bf16.msra.mxu0 %v6713
    %8485 = vmatprep.subr.bf16.mxu0 %v6706
    %8486 = vmatpush1.bf16.msra.mxu0 %v6705
    %8487 = vmatprep.subr.bf16.mxu0 %v6698
    %8488 = vmatpush1.bf16.msra.mxu0 %v6697
    %8489 = vmatprep.subr.bf16.mxu0 %v6690
    %8490 = vmatpush1.bf16.msra.mxu0 %v6689
    %8491 = vmatprep.subr.bf16.mxu0 %v6682
    %8492 = vmatpush1.bf16.msra.mxu0 %v6681
    %8493 = vmatprep.subr.bf16.mxu0 %v6674
    %8494 = vmatpush1.bf16.msra.mxu0 %v6673
    %8495 = vmatprep.subr.bf16.mxu0 %v6794
    %8496 = vmatpush2.bf16.msra.mxu0 %v6793
    %8497 = vmatprep.subr.bf16.mxu0 %v6786
    %8498 = vmatpush2.bf16.msra.mxu0 %v6785
    %8499 = vmatprep.subr.bf16.mxu0 %v6778
    %8500 = vmatpush2.bf16.msra.mxu0 %v6777
    %8501 = vmatprep.subr.bf16.mxu0 %v6770
    %8502 = vmatpush2.bf16.msra.mxu0 %v6769
    %8503 = vmatprep.subr.bf16.mxu0 %v6762
    %8504 = vmatpush2.bf16.msra.mxu0 %v6761
    %8505 = vmatprep.subr.bf16.mxu0 %v6754
    %8506 = vmatpush2.bf16.msra.mxu0 %v6753
    %8507 = vmatprep.subr.bf16.mxu0 %v6746
    %8508 = vmatpush2.bf16.msra.mxu0 %v6745
    %8509 = vmatprep.subr.bf16.mxu0 %v6738
    %8510 = vmatpush2.bf16.msra.mxu0 %v6737
    %8511 = vmatprep.mubr.bf16.mxu0 %v8278
    %8512 = vmatmul.mubr.bf16.gmra.mxu0 %v8266
    %v8513 = vpop.f32.mrf.mxu0
    %v8514 = vadd.f32 0.0, %v8513
    %v8515 = vpop.f32.mrf.mxu0
    %v8516 = vadd.f32 0.0, %v8515
    %v8517 = vpop.f32.mrf.mxu0
    %v8518 = vadd.f32 0.0, %v8517
    %v8519 = vpop.f32.mrf.mxu0
    %v8520 = vadd.f32 0.0, %v8519
    %8521 = vdwg.mxu0
    %8522 = vmatprep.subr.bf16.mxu0 %v6858
    %8523 = vmatpush1.bf16.msra.mxu0 %v6857
    %8524 = vmatprep.subr.bf16.mxu0 %v6850
    %8525 = vmatpush1.bf16.msra.mxu0 %v6849
    %8526 = vmatprep.subr.bf16.mxu0 %v6842
    %8527 = vmatpush1.bf16.msra.mxu0 %v6841
    %8528 = vmatprep.subr.bf16.mxu0 %v6834
    %8529 = vmatpush1.bf16.msra.mxu0 %v6833
    %8530 = vmatprep.subr.bf16.mxu0 %v6826
    %8531 = vmatpush1.bf16.msra.mxu0 %v6825
    %8532 = vmatprep.subr.bf16.mxu0 %v6818
    %8533 = vmatpush1.bf16.msra.mxu0 %v6817
    %8534 = vmatprep.subr.bf16.mxu0 %v6810
    %8535 = vmatpush1.bf16.msra.mxu0 %v6809
    %8536 = vmatprep.subr.bf16.mxu0 %v6802
    %8537 = vmatpush1.bf16.msra.mxu0 %v6801
    %8538 = vmatprep.subr.bf16.mxu0 %v6922
    %8539 = vmatpush2.bf16.msra.mxu0 %v6921
    %8540 = vmatprep.subr.bf16.mxu0 %v6914
    %8541 = vmatpush2.bf16.msra.mxu0 %v6913
    %8542 = vmatprep.subr.bf16.mxu0 %v6906
    %8543 = vmatpush2.bf16.msra.mxu0 %v6905
    %8544 = vmatprep.subr.bf16.mxu0 %v6898
    %8545 = vmatpush2.bf16.msra.mxu0 %v6897
    %8546 = vmatprep.subr.bf16.mxu0 %v6890
    %8547 = vmatpush2.bf16.msra.mxu0 %v6889
    %8548 = vmatprep.subr.bf16.mxu0 %v6882
    %8549 = vmatpush2.bf16.msra.mxu0 %v6881
    %8550 = vmatprep.subr.bf16.mxu0 %v6874
    %8551 = vmatpush2.bf16.msra.mxu0 %v6873
    %8552 = vmatprep.subr.bf16.mxu0 %v6866
    %8553 = vmatpush2.bf16.msra.mxu0 %v6865
    %8554 = vmatprep.mubr.bf16.mxu0 %v8302
    %8555 = vmatmul.mubr.bf16.gmra.mxu0 %v8290
    %v8556 = vpop.f32.mrf.mxu0
    %v8557 = vadd.f32 %v8514, %v8556
    %v8558 = vpop.f32.mrf.mxu0
    %v8559 = vadd.f32 %v8516, %v8558
    %v8560 = vpop.f32.mrf.mxu0
    %v8561 = vadd.f32 %v8518, %v8560
    %v8562 = vpop.f32.mrf.mxu0
    %v8563 = vadd.f32 %v8520, %v8562
    %8564 = vdwg.mxu0
    %8565 = vmatprep.subr.bf16.mxu0 %v6732
    %8566 = vmatpush1.bf16.msra.mxu0 %v6731
    %8567 = vmatprep.subr.bf16.mxu0 %v6724
    %8568 = vmatpush1.bf16.msra.mxu0 %v6723
    %8569 = vmatprep.subr.bf16.mxu0 %v6716
    %8570 = vmatpush1.bf16.msra.mxu0 %v6715
    %8571 = vmatprep.subr.bf16.mxu0 %v6708
    %8572 = vmatpush1.bf16.msra.mxu0 %v6707
    %8573 = vmatprep.subr.bf16.mxu0 %v6700
    %8574 = vmatpush1.bf16.msra.mxu0 %v6699
    %8575 = vmatprep.subr.bf16.mxu0 %v6692
    %8576 = vmatpush1.bf16.msra.mxu0 %v6691
    %8577 = vmatprep.subr.bf16.mxu0 %v6684
    %8578 = vmatpush1.bf16.msra.mxu0 %v6683
    %8579 = vmatprep.subr.bf16.mxu0 %v6676
    %8580 = vmatpush1.bf16.msra.mxu0 %v6675
    %8581 = vmatprep.subr.bf16.mxu0 %v6796
    %8582 = vmatpush2.bf16.msra.mxu0 %v6795
    %8583 = vmatprep.subr.bf16.mxu0 %v6788
    %8584 = vmatpush2.bf16.msra.mxu0 %v6787
    %8585 = vmatprep.subr.bf16.mxu0 %v6780
    %8586 = vmatpush2.bf16.msra.mxu0 %v6779
    %8587 = vmatprep.subr.bf16.mxu0 %v6772
    %8588 = vmatpush2.bf16.msra.mxu0 %v6771
    %8589 = vmatprep.subr.bf16.mxu0 %v6764
    %8590 = vmatpush2.bf16.msra.mxu0 %v6763
    %8591 = vmatprep.subr.bf16.mxu0 %v6756
    %8592 = vmatpush2.bf16.msra.mxu0 %v6755
    %8593 = vmatprep.subr.bf16.mxu0 %v6748
    %8594 = vmatpush2.bf16.msra.mxu0 %v6747
    %8595 = vmatprep.subr.bf16.mxu0 %v6740
    %8596 = vmatpush2.bf16.msra.mxu0 %v6739
    %8597 = vmatprep.mubr.bf16.mxu0 %v8278
    %8598 = vmatmul.mubr.bf16.gmra.mxu0 %v8266
    %v8599 = vpop.f32.mrf.mxu0
    %v8600 = vadd.f32 0.0, %v8599
    %v8601 = vpop.f32.mrf.mxu0
    %v8602 = vadd.f32 0.0, %v8601
    %v8603 = vpop.f32.mrf.mxu0
    %v8604 = vadd.f32 0.0, %v8603
    %v8605 = vpop.f32.mrf.mxu0
    %v8606 = vadd.f32 0.0, %v8605
    %8607 = vdwg.mxu0
    %8608 = vmatprep.subr.bf16.mxu0 %v6860
    %8609 = vmatpush1.bf16.msra.mxu0 %v6859
    %8610 = vmatprep.subr.bf16.mxu0 %v6852
    %8611 = vmatpush1.bf16.msra.mxu0 %v6851
    %8612 = vmatprep.subr.bf16.mxu0 %v6844
    %8613 = vmatpush1.bf16.msra.mxu0 %v6843
    %8614 = vmatprep.subr.bf16.mxu0 %v6836
    %8615 = vmatpush1.bf16.msra.mxu0 %v6835
    %8616 = vmatprep.subr.bf16.mxu0 %v6828
    %8617 = vmatpush1.bf16.msra.mxu0 %v6827
    %8618 = vmatprep.subr.bf16.mxu0 %v6820
    %8619 = vmatpush1.bf16.msra.mxu0 %v6819
    %8620 = vmatprep.subr.bf16.mxu0 %v6812
    %8621 = vmatpush1.bf16.msra.mxu0 %v6811
    %8622 = vmatprep.subr.bf16.mxu0 %v6804
    %8623 = vmatpush1.bf16.msra.mxu0 %v6803
    %8624 = vmatprep.subr.bf16.mxu0 %v6924
    %8625 = vmatpush2.bf16.msra.mxu0 %v6923
    %8626 = vmatprep.subr.bf16.mxu0 %v6916
    %8627 = vmatpush2.bf16.msra.mxu0 %v6915
    %8628 = vmatprep.subr.bf16.mxu0 %v6908
    %8629 = vmatpush2.bf16.msra.mxu0 %v6907
    %8630 = vmatprep.subr.bf16.mxu0 %v6900
    %8631 = vmatpush2.bf16.msra.mxu0 %v6899
    %8632 = vmatprep.subr.bf16.mxu0 %v6892
    %8633 = vmatpush2.bf16.msra.mxu0 %v6891
    %8634 = vmatprep.subr.bf16.mxu0 %v6884
    %8635 = vmatpush2.bf16.msra.mxu0 %v6883
    %8636 = vmatprep.subr.bf16.mxu0 %v6876
    %8637 = vmatpush2.bf16.msra.mxu0 %v6875
    %8638 = vmatprep.subr.bf16.mxu0 %v6868
    %8639 = vmatpush2.bf16.msra.mxu0 %v6867
    %8640 = vmatprep.mubr.bf16.mxu0 %v8302
    %8641 = vmatmul.mubr.bf16.gmra.mxu0 %v8290
    %v8642 = vpop.f32.mrf.mxu0
    %v8643 = vadd.f32 %v8600, %v8642
    %v8644 = vpop.f32.mrf.mxu0
    %v8645 = vadd.f32 %v8602, %v8644
    %v8646 = vpop.f32.mrf.mxu0
    %v8647 = vadd.f32 %v8604, %v8646
    %v8648 = vpop.f32.mrf.mxu0
    %v8649 = vadd.f32 %v8606, %v8648
    %8650 = vdwg.mxu0
    %v8651 = vadd.f32 %v7963, %v8385
    %v8652 = vadd.f32 %v7965, %v8387
    %v8653 = vadd.f32 %v8049, %v8471
    %v8654 = vadd.f32 %v8051, %v8473
    %v8655 = vadd.f32 %v8135, %v8557
    %v8656 = vadd.f32 %v8137, %v8559
    %v8657 = vadd.f32 %v8221, %v8643
    %v8658 = vadd.f32 %v8223, %v8645
    %v8659 = vadd.f32 %v7967, %v8389
    %v8660 = vadd.f32 %v7969, %v8391
    %v8661 = vadd.f32 %v8053, %v8475
    %v8662 = vadd.f32 %v8055, %v8477
    %v8663 = vadd.f32 %v8139, %v8561
    %v8664 = vadd.f32 %v8141, %v8563
    %v8665 = vadd.f32 %v8225, %v8647
    %v8666 = vadd.f32 %v8227, %v8649
    %v8667 = vld [vmem:[%s8] sm:$0xf]
    %v8668 = vmax.f32 %v7525, %v7529
    %v8669 = vmax.f32 %v7526, %v7530
    %v8670 = vmax.f32 %v7527, %v7531
    %v8671 = vmax.f32 %v7528, %v7532
    %v8672 = vmax.f32 %v7533, %v7537
    %v8673 = vmax.f32 %v7534, %v7538
    %v8674 = vmax.f32 %v7535, %v7539
    %v8675 = vmax.f32 %v7536, %v7540
    %v8676 = vmax.f32 %v8651, %v8655
    %v8677 = vmax.f32 %v8652, %v8656
    %v8678 = vmax.f32 %v8653, %v8657
    %v8679 = vmax.f32 %v8654, %v8658
    %v8680 = vmax.f32 %v8659, %v8663
    %v8681 = vmax.f32 %v8660, %v8664
    %v8682 = vmax.f32 %v8661, %v8665
    %v8683 = vmax.f32 %v8662, %v8666
    %v8684 = vmax.f32 %v8668, %v8676
    %v8685 = vmax.f32 %v8669, %v8677
    %v8686 = vmax.f32 %v8670, %v8678
    %v8687 = vmax.f32 %v8671, %v8679
    %v8688 = vmax.f32 %v8672, %v8680
    %v8689 = vmax.f32 %v8673, %v8681
    %v8690 = vmax.f32 %v8674, %v8682
    %v8691 = vmax.f32 %v8675, %v8683
    %v8693 = vlaneseq
    %v8694 = vshrl.u32 %v8693, 7
    %v8695 = vsub.s32 0, %v8694
    %v8696 = vrot.slane %v8667, %v8695
    %v8697 = vlaneseq
    %v8698 = vshrl.u32 %v8697, 7
    %v8699 = vsub.s32 1, %v8698
    %v8700 = vrot.slane %v8667, %v8699
    %v8701 = vlaneseq
    %v8702 = vshrl.u32 %v8701, 7
    %v8703 = vsub.s32 2, %v8702
    %v8704 = vrot.slane %v8667, %v8703
    %v8705 = vlaneseq
    %v8706 = vshrl.u32 %v8705, 7
    %v8707 = vsub.s32 3, %v8706
    %v8708 = vrot.slane %v8667, %v8707
    %v8713 = vadd.f32 %v8684, %v8696
    %v8714 = vadd.f32 %v8685, %v8700
    %v8715 = vadd.f32 %v8686, %v8704
    %v8716 = vadd.f32 %v8687, %v8708
    %v8717 = vadd.f32 %v8688, %v8696
    %v8718 = vadd.f32 %v8689, %v8700
    %v8719 = vadd.f32 %v8690, %v8704
    %v8720 = vadd.f32 %v8691, %v8708
    %v8721 = vmax.f32 %v8713, 0.0
    %v8722 = vmax.f32 %v8714, 0.0
    %v8723 = vmax.f32 %v8715, 0.0
    %v8724 = vmax.f32 %v8716, 0.0
    %v8725 = vmax.f32 %v8717, 0.0
    %v8726 = vmax.f32 %v8718, 0.0
    %v8727 = vmax.f32 %v8719, 0.0
    %v8728 = vmax.f32 %v8720, 0.0
    %v8729 = vsel %vm1602, 0.0, %v8721
    %v8730 = vsel %vm1602, 0.0, %v8722
    %v8731 = vsel %vm1602, 0.0, %v8723
    %v8732 = vsel %vm1602, 0.0, %v8724
    %v8733 = vsel %vm1603, 0.0, %v8725
    %v8734 = vsel %vm1603, 0.0, %v8726
    %v8735 = vsel %vm1603, 0.0, %v8727
    %v8736 = vsel %vm1603, 0.0, %v8728
    %v8737 = vpack.c.bf16 %v8733, %v8729
    %v8738 = vpack.c.bf16 %v8734, %v8730
    %v8739 = vpack.c.bf16 %v8735, %v8731
    %v8740 = vpack.c.bf16 %v8736, %v8732
    %v8745 = vunpack.c.l.b16 %v8737
    %v8746 = vunpack.c.l.b16 %v8738
    %v8747 = vunpack.c.l.b16 %v8739
    %v8748 = vunpack.c.l.b16 %v8740
    %v8749 = vunpack.c.h.b16 %v8737
    %v8750 = vunpack.c.h.b16 %v8738
    %v8751 = vunpack.c.h.b16 %v8739
    %v8752 = vunpack.c.h.b16 %v8740
    %v8753 = vpack.c.b16 %v8746, %v8745
    %v8754 = vpack.c.b16 %v8748, %v8747
    %v8755 = vpack.c.b16 %v8750, %v8749
    %v8756 = vpack.c.b16 %v8752, %v8751
    %8761 = vst [vmem:[%s9] sm:$0xff] %v8753
    %8762 = vst [vmem:[%s9 + $0x8] sm:$0xff] %v8754
    %8763 = vst [vmem:[%s9 + $0x10] sm:$0xff] %v8755
    %8764 = vst [vmem:[%s9 + $0x18] sm:$0xff] %v8756
    // Predicated region
    $region54: #{convnet_forward.2} parent=1 // pred_check
      _
    $region55: #{convnet_forward.2} parent=1 // pred_check_branch
      %8766 = sbr.rel (0) target = $region57
    $region56: #{convnet_forward.2} parent=1 // pred_region
      _
    $region57: #{convnet_forward.2} parent=1 // pred_fallthru
      _
    // Predicated region
    $region58: #{convnet_forward.2} parent=1 // pred_check
      _
    $region59: #{convnet_forward.2} parent=1 // pred_check_branch
      %8768 = sbr.rel (0) target = $region61
    $region60: #{convnet_forward.2} parent=1 // pred_region
      _
    $region61: #{convnet_forward.2} parent=1 // pred_fallthru
      _
    %8769 = vsyncpa [#allocation5], 1
    %8770 = vsyncpa [#allocation7], 1
    %8771 = vsyncpa [#allocation10], 1

</llo_original>
